<compile_context>
chip_gen: v5e
topology: v5e:2x2
jax: 0.10.0
libtpu: 0.0.40
codegen_flags: <defaults>
</compile_context>

<pallas_src>
import functools

import jax
import jax.numpy as jnp
from jax.experimental import pallas as pl
from jax.experimental.pallas import tpu as pltpu


def _round_up(x, m):
    return (x + m - 1) // m * m


# ----------------------------------------------------------------------------
# Tile heuristics
# ----------------------------------------------------------------------------
_SMALL_M = 16                      # "flat" FC GEMMs (M == batch size)
_VMEM_LIMIT = 48 * 1024 * 1024     # safe on v7x's 64 MiB physical VMEM
_TILE_BUDGET = 12 * 1024 * 1024    # double-buffered in/out tile footprint


def _fc_tiles(K, N):
    """Tiles for flat GEMMs (tiny M, weight streaming): large TK / TN."""
    Kr = _round_up(K, 128)
    Nr = _round_up(N, 128)
    TK = Kr if Kr <= 4096 else 4096
    TN = Nr if Nr <= 2048 else 2048
    # Keep >=2 parallel N tiles so v7x's second TensorCore has work while the
    # long K reduction streams the weight.
    if Kr > 8192 and Nr >= 256:
        TN = min(TN, max(128, (Nr // 2) // 128 * 128))
    # Cap the double-buffered weight tile at ~8 MB.
    while TK > 512 and 2 * TK * TN * 2 > 8 * 1024 * 1024:
        TK //= 2
    return TK, TN


def _tall_tiles(M, K, N, out_bytes):
    """Tiles for tall im2col GEMMs (huge M, small K/N): big TM, full K block."""
    TK = K                                      # full K: no K padding in HBM
    TN = min(_round_up(N, 128), 512)
    Mr = _round_up(M, 16)
    tk_lanes = _round_up(TK, 128)               # VMEM lane padding of K dim

    def fits(tm):
        fp = 2 * (tm * tk_lanes * 2 + tk_lanes * TN * 2 + tm * TN * out_bytes)
        return fp + tm * TN * 4 <= _TILE_BUDGET

    if fits(Mr):
        TM = Mr
    else:
        TM = 256
        for cand in (2048, 1024, 512):
            if cand <= Mr and fits(cand):
                TM = cand
                break
    return TM, TK, TN


# ----------------------------------------------------------------------------
# Pallas kernels
# ----------------------------------------------------------------------------
def _apply_act(y, activation):
    if activation == "relu":
        return jnp.maximum(y, 0.0)
    if activation == "sigmoid":
        return jax.nn.sigmoid(y)
    return y


def _gemm_kernel_single(x_ref, w_ref, b_ref, o_ref, *, activation):
    """Single K block: no accumulator scratch, write output directly."""
    y = jnp.dot(x_ref[...], w_ref[...], preferred_element_type=jnp.float32)
    y = _apply_act(y + b_ref[...], activation)
    o_ref[...] = y.astype(o_ref.dtype)


def _gemm_kernel_acc(x_ref, w_ref, b_ref, o_ref, acc_ref, *, activation, nk):
    """Tiled K reduction with f32 VMEM accumulator."""
    @pl.when(pl.program_id(2) == 0)
    def _init():
        acc_ref[...] = jnp.zeros_like(acc_ref)

    acc_ref[...] += jnp.dot(x_ref[...], w_ref[...],
                            preferred_element_type=jnp.float32)

    @pl.when(pl.program_id(2) == nk - 1)
    def _finalize():
        y = _apply_act(acc_ref[...] + b_ref[...], activation)
        o_ref[...] = y.astype(o_ref.dtype)


def fused_gemm(x, w, b, activation="none", out_dtype=jnp.float32):
    """act(x @ w + b).  x:(M,K), w:(K,N) (may be pre-padded bf16), b:(N,)."""
    M, K = x.shape
    N = b.shape[0]
    out_bytes = jnp.dtype(out_dtype).itemsize

    if M <= _SMALL_M:
        TM = _round_up(M, 16)
        TK, TN = _fc_tiles(K, N)
    else:
        TM, TK, TN = _tall_tiles(M, K, N, out_bytes)

    Mp = _round_up(M, TM)
    Kp = _round_up(K, TK)
    Np = _round_up(N, TN)
    nk = Kp // TK
    nj = Np // TN

    xb = x if x.dtype == jnp.bfloat16 else x.astype(jnp.bfloat16)
    if xb.shape != (Mp, Kp):
        xb = jnp.pad(xb, ((0, Mp - M), (0, Kp - K)))
    wb = w if w.dtype == jnp.bfloat16 else w.astype(jnp.bfloat16)
    if wb.shape != (Kp, Np):
        wb = jnp.pad(wb, ((0, Kp - wb.shape[0]), (0, Np - wb.shape[1])))
    bp = b.astype(jnp.float32).reshape(1, N)
    if Np != N:
        bp = jnp.pad(bp, ((0, 0), (0, Np - N)))

    w_spec = pl.BlockSpec((TK, TN), lambda i, j, k: (k, j))
    if M <= _SMALL_M and (nk > 1 or nj > 1):
        # weight-streaming FC GEMM: deepen the weight pipeline
        w_spec = pl.BlockSpec((TK, TN), lambda i, j, k: (k, j),
                              pipeline_mode=pl.Buffered(3))

    in_specs = [pl.BlockSpec((TM, TK), lambda i, j, k: (i, k)),
                w_spec,
                pl.BlockSpec((1, TN), lambda i, j, k: (0, j))]
    out_spec = pl.BlockSpec((TM, TN), lambda i, j, k: (i, j))
    common = dict(
        out_shape=jax.ShapeDtypeStruct((Mp, Np), out_dtype),
        compiler_params=pltpu.CompilerParams(
            dimension_semantics=("parallel", "parallel", "arbitrary"),
            vmem_limit_bytes=_VMEM_LIMIT,
        ),
    )

    if nk == 1:
        out = pl.pallas_call(
            functools.partial(_gemm_kernel_single, activation=activation),
            grid_spec=pltpu.PrefetchScalarGridSpec(
                num_scalar_prefetch=0, grid=(Mp // TM, nj, 1),
                in_specs=in_specs, out_specs=out_spec),
            **common)(xb, wb, bp)
    else:
        out = pl.pallas_call(
            functools.partial(_gemm_kernel_acc, activation=activation, nk=nk),
            grid_spec=pltpu.PrefetchScalarGridSpec(
                num_scalar_prefetch=0, grid=(Mp // TM, nj, nk),
                in_specs=in_specs, out_specs=out_spec,
                scratch_shapes=[pltpu.VMEM((TM, TN), jnp.float32)]),
            **common)(xb, wb, bp)

    if (Mp, Np) != (M, N):
        out = out[:M, :N]
    return out


def _head_kernel(h_ref, w_ref, b_ref, eps_ref, mu_ref, lv_ref, z_ref):
    """fc21 + fc22 + reparameterize fused (tiny, single VMEM block)."""
    h = h_ref[...]
    mu = jnp.dot(h, w_ref[0], preferred_element_type=jnp.float32) + b_ref[0]
    lv = jnp.dot(h, w_ref[1], preferred_element_type=jnp.float32) + b_ref[1]
    mu_ref[...] = mu
    lv_ref[...] = lv
    z_ref[...] = mu + eps_ref[...] * jnp.exp(0.5 * lv)


def mu_logvar_reparam(h, w, b, eps):
    M = h.shape[0]
    L = w.shape[2]
    vmem = pl.BlockSpec(memory_space=pltpu.MemorySpace.VMEM)
    sds = jax.ShapeDtypeStruct((M, L), jnp.float32)
    return pl.pallas_call(
        _head_kernel,
        out_shape=(sds, sds, sds),
        in_specs=[vmem, vmem, vmem, vmem],
        out_specs=(vmem, vmem, vmem),
    )(h, w, b, eps)


# ----------------------------------------------------------------------------
# Conv / ConvTranspose glue (NHWC im2col in plain JAX, GEMM in Pallas)
# ----------------------------------------------------------------------------
def _im2col_nhwc(x, kh, kw, stride):
    N, H, W, C = x.shape
    OH = (H - kh) // stride + 1
    OW = (W - kw) // stride + 1
    cols = []
    for i in range(kh):
        for j in range(kw):
            cols.append(x[:, i:i + stride * OH:stride,
                          j:j + stride * OW:stride, :])
    p = jnp.stack(cols, axis=3)                      # (N, OH, OW, KH*KW, C)
    return p.reshape(N * OH * OW, kh * kw * C), OH, OW


def _conv2d(x, wg, bias, kh, kw, stride, activation, out_dtype):
    N = x.shape[0]
    patches, OH, OW = _im2col_nhwc(x, kh, kw, stride)
    y = fused_gemm(patches, wg, bias, activation, out_dtype)
    return y.reshape(N, OH, OW, -1)


def _conv_transpose2d(x, wg, bias, meta, activation, out_dtype):
    """Packed sub-pixel ConvTranspose2d: one GEMM for all stride^2 parities."""
    s, KH, KW, Mh, Mw, OC = meta
    N, IH, IW, _ = x.shape
    OH = (IH - 1) * s + KH
    OW = (IW - 1) * s + KW
    xpad = jnp.pad(x, ((0, 0), (Mh - 1, Mh - 1), (Mw - 1, Mw - 1), (0, 0)))
    patches, QH, QW = _im2col_nhwc(xpad, Mh, Mw, 1)      # QH = IH + Mh - 1
    y = fused_gemm(patches, wg, bias, activation, out_dtype)
    y = y.reshape(N, QH, QW, s, s, OC)
    y = y.transpose(0, 1, 3, 2, 4, 5).reshape(N, QH * s, QW * s, OC)
    return y[:, :OH, :OW, :]                             # drop parity padding


# ----------------------------------------------------------------------------
# Init-time parameter preparation (weight prep happens exactly once)
# ----------------------------------------------------------------------------
def _bn_fold(gamma, beta, mean, var, eps=1e-5):
    s = gamma / jnp.sqrt(var + eps)
    return s, beta - mean * s


def _prep_fc_weight(w_kn):
    """bf16-cast + pre-pad a (K, N) FC weight to its streaming tile grid."""
    K, N = w_kn.shape
    TK, TN = _fc_tiles(K, N)
    Kp, Np = _round_up(K, TK), _round_up(N, TN)
    wb = w_kn.astype(jnp.bfloat16)
    if (Kp, Np) != (K, N):
        wb = jnp.pad(wb, ((0, Kp - K), (0, Np - N)))
    return wb


def prepare_params(p):
    prep, cfg = {}, {}

    def conv(name, w, b, stride, bn=None):
        OC, IC, kh, kw = w.shape
        wg = w.transpose(2, 3, 1, 0).reshape(kh * kw * IC, OC).astype(jnp.float32)
        bb = b.astype(jnp.float32)
        if bn is not None:
            s, t = _bn_fold(bn["gamma"], bn["beta"], bn["mean"], bn["var"])
            wg = wg * s[None, :]
            bb = bb * s + t
        prep[name + "_w"] = wg.astype(jnp.bfloat16)
        prep[name + "_b"] = bb
        cfg[name] = (kh, kw, stride)

    conv("conv1", p["conv1_w"], p["conv1_b"], 1, p["bn1"])
    conv("conv2", p["conv2_w"], p["conv2_b"], 2, p["bn2"])
    conv("conv3", p["conv3_w"], p["conv3_b"], 1, p["bn3"])
    conv("conv4", p["conv4_w"], p["conv4_b"], 2, p["bn4"])

    # Flatten/UnFlatten CHW <-> HWC permutation folded into the FC weights so
    # activations stay NHWC end-to-end.
    flat = p["fc_enc_w"].shape[1]
    C = p["conv4_w"].shape[0]
    hw = int(round((flat // C) ** 0.5))
    idx = jnp.arange(flat).reshape(C, hw, hw).transpose(1, 2, 0).reshape(-1)

    s, t = _bn_fold(**p["bn_fc"])
    w_fc = (p["fc_enc_w"].T.astype(jnp.float32) * s[None, :])[idx, :]
    prep["fc_enc_w"] = _prep_fc_weight(w_fc)
    prep["fc_enc_b"] = p["fc_enc_b"].astype(jnp.float32) * s + t

    latent = p["fc21_b"].shape[0]
    prep["head_w"] = jnp.stack([p["fc21_w"].T, p["fc22_w"].T]).astype(jnp.bfloat16)
    prep["head_b"] = jnp.stack([p["fc21_b"], p["fc22_b"]]).astype(jnp.float32)[:, None, :]

    prep["dec_fc1_w"] = _prep_fc_weight(p["dec_fc1_w"].T.astype(jnp.float32))
    prep["dec_fc1_b"] = p["dec_fc1_b"].astype(jnp.float32)
    prep["dec_fc2_w"] = _prep_fc_weight(p["dec_fc2_w"].T.astype(jnp.float32)[:, idx])
    prep["dec_fc2_b"] = p["dec_fc2_b"][idx].astype(jnp.float32)

    def deconv(name, w, b, stride):
        IC, OC, KH, KW = w.shape
        Mh = -(-KH // stride)
        Mw = -(-KW // stride)
        blocks = []
        for rh in range(stride):
            for rw in range(stride):
                wsub = w[:, :, rh::stride, rw::stride]
                mh, mw = wsub.shape[2], wsub.shape[3]
                wp = jnp.pad(wsub, ((0, 0), (0, 0), (0, Mh - mh), (0, Mw - mw)))
                wf = jnp.flip(wp, axis=(2, 3))
                blocks.append(wf.transpose(2, 3, 0, 1).reshape(Mh * Mw * IC, OC))
        prep[name + "_w"] = jnp.concatenate(blocks, axis=1).astype(jnp.bfloat16)
        prep[name + "_b"] = jnp.tile(b.astype(jnp.float32), stride * stride)
        cfg[name] = (stride, KH, KW, Mh, Mw, OC)

    deconv("deconv1", p["deconv1_w"], p["deconv1_b"], 2)
    deconv("deconv2", p["deconv2_w"], p["deconv2_b"], 2)
    deconv("deconv3", p["deconv3_w"], p["deconv3_b"], 1)
    deconv("deconv4", p["deconv4_w"], p["deconv4_b"], 1)

    cfg["latent"] = latent
    cfg["unflatten"] = (hw, C)
    return prep, cfg


def build_forward(raw_params):
    prep, cfg = prepare_params(raw_params)

    def forward(p, x, eps_key):
        N = x.shape[0]
        # --- encoder (NHWC, bf16 activations end-to-end) ---
        h = x.transpose(0, 2, 3, 1).astype(jnp.bfloat16)
        for name in ("conv1", "conv2", "conv3", "conv4"):
            kh, kw, stride = cfg[name]
            h = _conv2d(h, p[name + "_w"], p[name + "_b"], kh, kw, stride,
                        "relu", jnp.bfloat16)
        h = h.reshape(N, -1)                          # NHWC flatten (weights permuted)
        h = fused_gemm(h, p["fc_enc_w"], p["fc_enc_b"], "relu", jnp.bfloat16)

        # --- fc21 / fc22 / reparameterize fused into one kernel ---
        eps = jax.random.normal(eps_key, (N, cfg["latent"]), jnp.float32)
        mu, logvar, z = mu_logvar_reparam(h, p["head_w"], p["head_b"], eps)

        # --- decoder ---
        d = fused_gemm(z, p["dec_fc1_w"], p["dec_fc1_b"], "relu", jnp.bfloat16)
        d = fused_gemm(d, p["dec_fc2_w"], p["dec_fc2_b"], "relu", jnp.bfloat16)
        hw, C = cfg["unflatten"]
        d = d.reshape(N, hw, hw, C)                   # already HWC (weights permuted)
        for name in ("deconv1", "deconv2", "deconv3", "deconv4"):
            act = "sigmoid" if name == "deconv4" else "relu"
            odt = jnp.float32 if name == "deconv4" else jnp.bfloat16
            d = _conv_transpose2d(d, p[name + "_w"], p[name + "_b"],
                                  cfg[name], act, odt)
        return d.transpose(0, 3, 1, 2), mu, logvar    # back to NCHW

    return prep, jax.jit(forward)


# ----------------------------------------------------------------------------
# Deterministic parameter init (same architecture as VAE_Xray, scaled down)
# ----------------------------------------------------------------------------
def init_params(key, latent, img_hw):
    it = iter(jax.random.split(key, 64))

    def nrm(shape, scale=0.05):
        return (scale * jax.random.normal(next(it), shape)).astype(jnp.float32)

    def bn(c):
        return dict(
            gamma=(1.0 + 0.1 * jax.random.normal(next(it), (c,))).astype(jnp.float32),
            beta=(0.1 * jax.random.normal(next(it), (c,))).astype(jnp.float32),
            mean=(0.1 * jax.random.normal(next(it), (c,))).astype(jnp.float32),
            var=jax.random.uniform(next(it), (c,), jnp.float32, 0.5, 1.5),
        )

    # encoder spatial trace (same ops as the 244x244 original, scaled down)
    s1 = img_hw - 2
    s2 = (s1 - 3) // 2 + 1
    s3 = s2 - 2
    s4 = (s3 - 3) // 2 + 1
    flat = 128 * s4 * s4

    return {
        "conv1_w": nrm((16, 1, 3, 3)), "conv1_b": nrm((16,)), "bn1": bn(16),
        "conv2_w": nrm((32, 16, 3, 3)), "conv2_b": nrm((32,)), "bn2": bn(32),
        "conv3_w": nrm((64, 32, 3, 3)), "conv3_b": nrm((64,)), "bn3": bn(64),
        "conv4_w": nrm((128, 64, 3, 3)), "conv4_b": nrm((128,)), "bn4": bn(128),
        "fc_enc_w": nrm((256, flat)), "fc_enc_b": nrm((256,)), "bn_fc": bn(256),
        "fc21_w": nrm((latent, 256)), "fc21_b": nrm((latent,)),
        "fc22_w": nrm((latent, 256)), "fc22_b": nrm((latent,)),
        "dec_fc1_w": nrm((256, latent)), "dec_fc1_b": nrm((256,)),
        "dec_fc2_w": nrm((flat, 256)), "dec_fc2_b": nrm((flat,)),
        "deconv1_w": nrm((128, 64, 5, 5)), "deconv1_b": nrm((64,)),
        "deconv2_w": nrm((64, 32, 4, 4)), "deconv2_b": nrm((32,)),
        "deconv3_w": nrm((32, 16, 4, 4)), "deconv3_b": nrm((16,)),
        "deconv4_w": nrm((16, 1, 2, 2)), "deconv4_b": nrm((1,)),
    }


if __name__ == "__main__":
    key = jax.random.PRNGKey(0)
    pkey, xkey, ekey = jax.random.split(key, 3)

    # small shapes consistent with the module: same architecture, 20x20 image,
    # latent=8 (the 244x244 / latent=50 original is just a bigger instance).
    N, H, W, latent = 2, 20, 20, 8
    raw = init_params(pkey, latent=latent, img_hw=H)
    x = jax.random.normal(xkey, (N, 1, H, W), jnp.float32)

    prep, fwd = build_forward(raw)
    recon, mu, logvar = fwd(prep, x, ekey)
    jax.block_until_ready((recon, mu, logvar))

    assert recon.shape == (N, 1, H, W)
    assert mu.shape == (N, latent) and logvar.shape == (N, latent)
    print("KERNEL_OK")
</pallas_src>

<mosaic_0001>
module attributes {stable_mosaic.version = 11 : i64} {
  func.func @_gemm_kernel_single(%arg0: i32, %arg1: i32, %arg2: i32, %arg3: memref<656x9xbf16, #tpu.memory_space<vmem>>, %arg4: memref<9x128xbf16, #tpu.memory_space<vmem>>, %arg5: memref<1x128xf32, #tpu.memory_space<vmem>>, %arg6: memref<656x128xbf16, #tpu.memory_space<vmem>>) attributes {dimension_semantics = [#tpu.dimension_semantics<parallel>, #tpu.dimension_semantics<parallel>, #tpu.dimension_semantics<arbitrary>], iteration_bounds = array<i64: 1, 1, 1>, scalar_prefetch = 0 : i64, scratch_operands = 0 : i64, tpu.core_type = #tpu.core_type<tc>, window_params = [{transform_indices = @transform_0, window_bounds = array<i64: 656, 9>}, {transform_indices = @transform_1, window_bounds = array<i64: 9, 128>}, {transform_indices = @transform_2, window_bounds = array<i64: 1, 128>}, {transform_indices = @transform_3, window_bounds = array<i64: 656, 128>}]} {
    %c0 = arith.constant 0 : index
    %c0_0 = arith.constant 0 : index
    %0 = vector.load %arg3[%c0, %c0_0] : memref<656x9xbf16, #tpu.memory_space<vmem>>, vector<656x9xbf16>
    %c0_1 = arith.constant 0 : index
    %c0_2 = arith.constant 0 : index
    %1 = vector.load %arg4[%c0_1, %c0_2] : memref<9x128xbf16, #tpu.memory_space<vmem>>, vector<9x128xbf16>
    %cst = arith.constant dense<0.000000e+00> : vector<656x128xf32>
    %2 = tpu.matmul %0, %1, %cst {dimension_numbers = #tpu.dot_dimension_numbers<[1], [0], [0], [1], [0, 0, 1, 1], [], []>} : vector<656x9xbf16>, vector<9x128xbf16>, vector<656x128xf32> -> vector<656x128xf32>
    %c0_3 = arith.constant 0 : index
    %c0_4 = arith.constant 0 : index
    %3 = vector.load %arg5[%c0_3, %c0_4] : memref<1x128xf32, #tpu.memory_space<vmem>>, vector<1x128xf32>
    %4 = vector.broadcast %3 : vector<1x128xf32> to vector<656x128xf32>
    %5 = arith.addf %2, %4 : vector<656x128xf32>
    %cst_5 = arith.constant 0.000000e+00 : f32
    %6 = vector.broadcast %cst_5 : f32 to vector<656x128xf32>
    %7 = arith.maximumf %5, %6 : vector<656x128xf32>
    %8 = arith.truncf %7 : vector<656x128xf32> to vector<656x128xbf16>
    %c0_6 = arith.constant 0 : index
    %c0_7 = arith.constant 0 : index
    %9 = vector.load %arg6[%c0_6, %c0_7] : memref<656x128xbf16, #tpu.memory_space<vmem>>, vector<656x128xbf16>
    tpu.vector_store %arg6[%c0_6, %c0_7], %8 {strides = array<i32>} : memref<656x128xbf16, #tpu.memory_space<vmem>>, vector<656x128xbf16>,
    return
  }
  func.func @transform_0(%arg0: i32, %arg1: i32, %arg2: i32) -> (i32, i32) {
    %c0_i32 = arith.constant 0 : i32
    return %arg0, %arg2 : i32, i32
  }
  func.func @transform_1(%arg0: i32, %arg1: i32, %arg2: i32) -> (i32, i32) {
    %c0_i32 = arith.constant 0 : i32
    return %arg2, %arg1 : i32, i32
  }
  func.func @transform_2(%arg0: i32, %arg1: i32, %arg2: i32) -> (i32, i32) {
    %c0_i32 = arith.constant 0 : i32
    %c0_i32_0 = arith.constant 0 : i32
    return %c0_i32, %arg1 : i32, i32
  }
  func.func @transform_3(%arg0: i32, %arg1: i32, %arg2: i32) -> (i32, i32) {
    %c0_i32 = arith.constant 0 : i32
    return %arg0, %arg1 : i32, i32
  }
}

module attributes {stable_mosaic.version = 11 : i64} {
  func.func @_gemm_kernel_single(%arg0: i32, %arg1: i32, %arg2: i32, %arg3: memref<128x144xbf16, #tpu.memory_space<vmem>>, %arg4: memref<144x128xbf16, #tpu.memory_space<vmem>>, %arg5: memref<1x128xf32, #tpu.memory_space<vmem>>, %arg6: memref<128x128xbf16, #tpu.memory_space<vmem>>) attributes {dimension_semantics = [#tpu.dimension_semantics<parallel>, #tpu.dimension_semantics<parallel>, #tpu.dimension_semantics<arbitrary>], iteration_bounds = array<i64: 1, 1, 1>, scalar_prefetch = 0 : i64, scratch_operands = 0 : i64, tpu.core_type = #tpu.core_type<tc>, window_params = [{transform_indices = @transform_0, window_bounds = array<i64: 128, 144>}, {transform_indices = @transform_1, window_bounds = array<i64: 144, 128>}, {transform_indices = @transform_2, window_bounds = array<i64: 1, 128>}, {transform_indices = @transform_3, window_bounds = array<i64: 128, 128>}]} {
    %c0 = arith.constant 0 : index
    %c0_0 = arith.constant 0 : index
    %0 = vector.load %arg3[%c0, %c0_0] : memref<128x144xbf16, #tpu.memory_space<vmem>>, vector<128x144xbf16>
    %c0_1 = arith.constant 0 : index
    %c0_2 = arith.constant 0 : index
    %1 = vector.load %arg4[%c0_1, %c0_2] : memref<144x128xbf16, #tpu.memory_space<vmem>>, vector<144x128xbf16>
    %cst = arith.constant dense<0.000000e+00> : vector<128x128xf32>
    %2 = tpu.matmul %0, %1, %cst {dimension_numbers = #tpu.dot_dimension_numbers<[1], [0], [0], [1], [0, 0, 1, 1], [], []>} : vector<128x144xbf16>, vector<144x128xbf16>, vector<128x128xf32> -> vector<128x128xf32>
    %c0_3 = arith.constant 0 : index
    %c0_4 = arith.constant 0 : index
    %3 = vector.load %arg5[%c0_3, %c0_4] : memref<1x128xf32, #tpu.memory_space<vmem>>, vector<1x128xf32>
    %4 = vector.broadcast %3 : vector<1x128xf32> to vector<128x128xf32>
    %5 = arith.addf %2, %4 : vector<128x128xf32>
    %cst_5 = arith.constant 0.000000e+00 : f32
    %6 = vector.broadcast %cst_5 : f32 to vector<128x128xf32>
    %7 = arith.maximumf %5, %6 : vector<128x128xf32>
    %8 = arith.truncf %7 : vector<128x128xf32> to vector<128x128xbf16>
    %c0_6 = arith.constant 0 : index
    %c0_7 = arith.constant 0 : index
    %9 = vector.load %arg6[%c0_6, %c0_7] : memref<128x128xbf16, #tpu.memory_space<vmem>>, vector<128x128xbf16>
    tpu.vector_store %arg6[%c0_6, %c0_7], %8 {strides = array<i32>} : memref<128x128xbf16, #tpu.memory_space<vmem>>, vector<128x128xbf16>,
    return
  }
  func.func @transform_0(%arg0: i32, %arg1: i32, %arg2: i32) -> (i32, i32) {
    %c0_i32 = arith.constant 0 : i32
    return %arg0, %arg2 : i32, i32
  }
  func.func @transform_1(%arg0: i32, %arg1: i32, %arg2: i32) -> (i32, i32) {
    %c0_i32 = arith.constant 0 : i32
    return %arg2, %arg1 : i32, i32
  }
  func.func @transform_2(%arg0: i32, %arg1: i32, %arg2: i32) -> (i32, i32) {
    %c0_i32 = arith.constant 0 : i32
    %c0_i32_0 = arith.constant 0 : i32
    return %c0_i32, %arg1 : i32, i32
  }
  func.func @transform_3(%arg0: i32, %arg1: i32, %arg2: i32) -> (i32, i32) {
    %c0_i32 = arith.constant 0 : i32
    return %arg0, %arg1 : i32, i32
  }
}

module attributes {stable_mosaic.version = 11 : i64} {
  func.func @_gemm_kernel_single(%arg0: i32, %arg1: i32, %arg2: i32, %arg3: memref<80x288xbf16, #tpu.memory_space<vmem>>, %arg4: memref<288x128xbf16, #tpu.memory_space<vmem>>, %arg5: memref<1x128xf32, #tpu.memory_space<vmem>>, %arg6: memref<80x128xbf16, #tpu.memory_space<vmem>>) attributes {dimension_semantics = [#tpu.dimension_semantics<parallel>, #tpu.dimension_semantics<parallel>, #tpu.dimension_semantics<arbitrary>], iteration_bounds = array<i64: 1, 1, 1>, scalar_prefetch = 0 : i64, scratch_operands = 0 : i64, tpu.core_type = #tpu.core_type<tc>, window_params = [{transform_indices = @transform_0, window_bounds = array<i64: 80, 288>}, {transform_indices = @transform_1, window_bounds = array<i64: 288, 128>}, {transform_indices = @transform_2, window_bounds = array<i64: 1, 128>}, {transform_indices = @transform_3, window_bounds = array<i64: 80, 128>}]} {
    %c0 = arith.constant 0 : index
    %c0_0 = arith.constant 0 : index
    %0 = vector.load %arg3[%c0, %c0_0] : memref<80x288xbf16, #tpu.memory_space<vmem>>, vector<80x288xbf16>
    %c0_1 = arith.constant 0 : index
    %c0_2 = arith.constant 0 : index
    %1 = vector.load %arg4[%c0_1, %c0_2] : memref<288x128xbf16, #tpu.memory_space<vmem>>, vector<288x128xbf16>
    %cst = arith.constant dense<0.000000e+00> : vector<80x128xf32>
    %2 = tpu.matmul %0, %1, %cst {dimension_numbers = #tpu.dot_dimension_numbers<[1], [0], [0], [1], [0, 0, 1, 1], [], []>} : vector<80x288xbf16>, vector<288x128xbf16>, vector<80x128xf32> -> vector<80x128xf32>
    %c0_3 = arith.constant 0 : index
    %c0_4 = arith.constant 0 : index
    %3 = vector.load %arg5[%c0_3, %c0_4] : memref<1x128xf32, #tpu.memory_space<vmem>>, vector<1x128xf32>
    %4 = vector.broadcast %3 : vector<1x128xf32> to vector<80x128xf32>
    %5 = arith.addf %2, %4 : vector<80x128xf32>
    %cst_5 = arith.constant 0.000000e+00 : f32
    %6 = vector.broadcast %cst_5 : f32 to vector<80x128xf32>
    %7 = arith.maximumf %5, %6 : vector<80x128xf32>
    %8 = arith.truncf %7 : vector<80x128xf32> to vector<80x128xbf16>
    %c0_6 = arith.constant 0 : index
    %c0_7 = arith.constant 0 : index
    %9 = vector.load %arg6[%c0_6, %c0_7] : memref<80x128xbf16, #tpu.memory_space<vmem>>, vector<80x128xbf16>
    tpu.vector_store %arg6[%c0_6, %c0_7], %8 {strides = array<i32>} : memref<80x128xbf16, #tpu.memory_space<vmem>>, vector<80x128xbf16>,
    return
  }
  func.func @transform_0(%arg0: i32, %arg1: i32, %arg2: i32) -> (i32, i32) {
    %c0_i32 = arith.constant 0 : i32
    return %arg0, %arg2 : i32, i32
  }
  func.func @transform_1(%arg0: i32, %arg1: i32, %arg2: i32) -> (i32, i32) {
    %c0_i32 = arith.constant 0 : i32
    return %arg2, %arg1 : i32, i32
  }
  func.func @transform_2(%arg0: i32, %arg1: i32, %arg2: i32) -> (i32, i32) {
    %c0_i32 = arith.constant 0 : i32
    %c0_i32_0 = arith.constant 0 : i32
    return %c0_i32, %arg1 : i32, i32
  }
  func.func @transform_3(%arg0: i32, %arg1: i32, %arg2: i32) -> (i32, i32) {
    %c0_i32 = arith.constant 0 : i32
    return %arg0, %arg1 : i32, i32
  }
}

module attributes {stable_mosaic.version = 11 : i64} {
  func.func @_gemm_kernel_single(%arg0: i32, %arg1: i32, %arg2: i32, %arg3: memref<16x640xbf16, #tpu.memory_space<vmem>>, %arg4: memref<640x128xbf16, #tpu.memory_space<vmem>>, %arg5: memref<1x128xf32, #tpu.memory_space<vmem>>, %arg6: memref<16x128xbf16, #tpu.memory_space<vmem>>) attributes {dimension_semantics = [#tpu.dimension_semantics<parallel>, #tpu.dimension_semantics<parallel>, #tpu.dimension_semantics<arbitrary>], iteration_bounds = array<i64: 1, 1, 1>, scalar_prefetch = 0 : i64, scratch_operands = 0 : i64, tpu.core_type = #tpu.core_type<tc>, window_params = [{transform_indices = @transform_0, window_bounds = array<i64: 16, 640>}, {transform_indices = @transform_1, window_bounds = array<i64: 640, 128>}, {transform_indices = @transform_2, window_bounds = array<i64: 1, 128>}, {transform_indices = @transform_3, window_bounds = array<i64: 16, 128>}]} {
    %c0 = arith.constant 0 : index
    %c0_0 = arith.constant 0 : index
    %0 = vector.load %arg3[%c0, %c0_0] : memref<16x640xbf16, #tpu.memory_space<vmem>>, vector<16x640xbf16>
    %c0_1 = arith.constant 0 : index
    %c0_2 = arith.constant 0 : index
    %1 = vector.load %arg4[%c0_1, %c0_2] : memref<640x128xbf16, #tpu.memory_space<vmem>>, vector<640x128xbf16>
    %cst = arith.constant dense<0.000000e+00> : vector<16x128xf32>
    %2 = tpu.matmul %0, %1, %cst {dimension_numbers = #tpu.dot_dimension_numbers<[1], [0], [0], [1], [0, 0, 1, 1], [], []>} : vector<16x640xbf16>, vector<640x128xbf16>, vector<16x128xf32> -> vector<16x128xf32>
    %c0_3 = arith.constant 0 : index
    %c0_4 = arith.constant 0 : index
    %3 = vector.load %arg5[%c0_3, %c0_4] : memref<1x128xf32, #tpu.memory_space<vmem>>, vector<1x128xf32>
    %4 = vector.broadcast %3 : vector<1x128xf32> to vector<16x128xf32>
    %5 = arith.addf %2, %4 : vector<16x128xf32>
    %cst_5 = arith.constant 0.000000e+00 : f32
    %6 = vector.broadcast %cst_5 : f32 to vector<16x128xf32>
    %7 = arith.maximumf %5, %6 : vector<16x128xf32>
    %8 = arith.truncf %7 : vector<16x128xf32> to vector<16x128xbf16>
    %c0_6 = arith.constant 0 : index
    %c0_7 = arith.constant 0 : index
    %9 = vector.load %arg6[%c0_6, %c0_7] : memref<16x128xbf16, #tpu.memory_space<vmem>>, vector<16x128xbf16>
    tpu.vector_store %arg6[%c0_6, %c0_7], %8 {strides = array<i32>} : memref<16x128xbf16, #tpu.memory_space<vmem>>, vector<16x128xbf16>,
    return
  }
  func.func @transform_0(%arg0: i32, %arg1: i32, %arg2: i32) -> (i32, i32) {
    %c0_i32 = arith.constant 0 : i32
    return %arg0, %arg2 : i32, i32
  }
  func.func @transform_1(%arg0: i32, %arg1: i32, %arg2: i32) -> (i32, i32) {
    %c0_i32 = arith.constant 0 : i32
    return %arg2, %arg1 : i32, i32
  }
  func.func @transform_2(%arg0: i32, %arg1: i32, %arg2: i32) -> (i32, i32) {
    %c0_i32 = arith.constant 0 : i32
    %c0_i32_0 = arith.constant 0 : i32
    return %c0_i32, %arg1 : i32, i32
  }
  func.func @transform_3(%arg0: i32, %arg1: i32, %arg2: i32) -> (i32, i32) {
    %c0_i32 = arith.constant 0 : i32
    return %arg0, %arg1 : i32, i32
  }
}

module attributes {stable_mosaic.version = 11 : i64} {
  func.func @_head_kernel(%arg0: memref<2x256xbf16, #tpu.memory_space<vmem>>, %arg1: memref<2x256x8xbf16, #tpu.memory_space<vmem>>, %arg2: memref<2x1x8xf32, #tpu.memory_space<vmem>>, %arg3: memref<2x8xf32, #tpu.memory_space<vmem>>, %arg4: memref<2x8xf32, #tpu.memory_space<vmem>>, %arg5: memref<2x8xf32, #tpu.memory_space<vmem>>, %arg6: memref<2x8xf32, #tpu.memory_space<vmem>>) attributes {dimension_semantics = [], scalar_prefetch = 0 : i64, scratch_operands = 0 : i64, tpu.core_type = #tpu.core_type<tc>} {
    %c0 = arith.constant 0 : index
    %c0_0 = arith.constant 0 : index
    %0 = vector.load %arg0[%c0, %c0_0] : memref<2x256xbf16, #tpu.memory_space<vmem>>, vector<2x256xbf16>
    %c0_1 = arith.constant 0 : index
    %c0_2 = arith.constant 0 : index
    %c0_3 = arith.constant 0 : index
    %1 = vector.load %arg1[%c0_1, %c0_2, %c0_3] : memref<2x256x8xbf16, #tpu.memory_space<vmem>>, vector<1x256x8xbf16>
    %2 = vector.shape_cast %1 : vector<1x256x8xbf16> to vector<256x8xbf16>
    %cst = arith.constant dense<0.000000e+00> : vector<2x8xf32>
    %3 = tpu.matmul %0, %2, %cst {dimension_numbers = #tpu.dot_dimension_numbers<[1], [0], [0], [1], [0, 0, 1, 1], [], []>} : vector<2x256xbf16>, vector<256x8xbf16>, vector<2x8xf32> -> vector<2x8xf32>
    %c0_4 = arith.constant 0 : index
    %c0_5 = arith.constant 0 : index
    %c0_6 = arith.constant 0 : index
    %4 = vector.load %arg2[%c0_4, %c0_5, %c0_6] : memref<2x1x8xf32, #tpu.memory_space<vmem>>, vector<1x1x8xf32>
    %5 = vector.shape_cast %4 : vector<1x1x8xf32> to vector<1x8xf32>
    %6 = vector.broadcast %5 : vector<1x8xf32> to vector<2x8xf32>
    %7 = arith.addf %3, %6 : vector<2x8xf32>
    %c1 = arith.constant 1 : index
    %c0_7 = arith.constant 0 : index
    %c0_8 = arith.constant 0 : index
    %8 = vector.load %arg1[%c1, %c0_7, %c0_8] : memref<2x256x8xbf16, #tpu.memory_space<vmem>>, vector<1x256x8xbf16>
    %9 = vector.shape_cast %8 : vector<1x256x8xbf16> to vector<256x8xbf16>
    %cst_9 = arith.constant dense<0.000000e+00> : vector<2x8xf32>
    %10 = tpu.matmul %0, %9, %cst_9 {dimension_numbers = #tpu.dot_dimension_numbers<[1], [0], [0], [1], [0, 0, 1, 1], [], []>} : vector<2x256xbf16>, vector<256x8xbf16>, vector<2x8xf32> -> vector<2x8xf32>
    %c1_10 = arith.constant 1 : index
    %c0_11 = arith.constant 0 : index
    %c0_12 = arith.constant 0 : index
    %11 = vector.load %arg2[%c1_10, %c0_11, %c0_12] : memref<2x1x8xf32, #tpu.memory_space<vmem>>, vector<1x1x8xf32>
    %12 = vector.shape_cast %11 : vector<1x1x8xf32> to vector<1x8xf32>
    %13 = vector.broadcast %12 : vector<1x8xf32> to vector<2x8xf32>
    %14 = arith.addf %10, %13 : vector<2x8xf32>
    %c0_13 = arith.constant 0 : index
    %c0_14 = arith.constant 0 : index
    %15 = vector.load %arg4[%c0_13, %c0_14] : memref<2x8xf32, #tpu.memory_space<vmem>>, vector<2x8xf32>
    tpu.vector_store %arg4[%c0_13, %c0_14], %7 {strides = array<i32>} : memref<2x8xf32, #tpu.memory_space<vmem>>, vector<2x8xf32>,
    %c0_15 = arith.constant 0 : index
    %c0_16 = arith.constant 0 : index
    %16 = vector.load %arg5[%c0_15, %c0_16] : memref<2x8xf32, #tpu.memory_space<vmem>>, vector<2x8xf32>
    tpu.vector_store %arg5[%c0_15, %c0_16], %14 {strides = array<i32>} : memref<2x8xf32, #tpu.memory_space<vmem>>, vector<2x8xf32>,
    %c0_17 = arith.constant 0 : index
    %c0_18 = arith.constant 0 : index
    %17 = vector.load %arg3[%c0_17, %c0_18] : memref<2x8xf32, #tpu.memory_space<vmem>>, vector<2x8xf32>
    %cst_19 = arith.constant 5.000000e-01 : f32
    %18 = vector.broadcast %cst_19 : f32 to vector<2x8xf32>
    %19 = arith.mulf %18, %14 : vector<2x8xf32>
    %20 = math.exp %19 : vector<2x8xf32>
    %21 = arith.mulf %17, %20 : vector<2x8xf32>
    %22 = arith.addf %7, %21 : vector<2x8xf32>
    %c0_20 = arith.constant 0 : index
    %c0_21 = arith.constant 0 : index
    %23 = vector.load %arg6[%c0_20, %c0_21] : memref<2x8xf32, #tpu.memory_space<vmem>>, vector<2x8xf32>
    tpu.vector_store %arg6[%c0_20, %c0_21], %22 {strides = array<i32>} : memref<2x8xf32, #tpu.memory_space<vmem>>, vector<2x8xf32>,
    return
  }
}

module attributes {stable_mosaic.version = 11 : i64} {
  func.func @_gemm_kernel_single(%arg0: i32, %arg1: i32, %arg2: i32, %arg3: memref<16x512xbf16, #tpu.memory_space<vmem>>, %arg4: memref<512x256xbf16, #tpu.memory_space<vmem>>, %arg5: memref<1x256xf32, #tpu.memory_space<vmem>>, %arg6: memref<16x256xbf16, #tpu.memory_space<vmem>>) attributes {dimension_semantics = [#tpu.dimension_semantics<parallel>, #tpu.dimension_semantics<parallel>, #tpu.dimension_semantics<arbitrary>], iteration_bounds = array<i64: 1, 1, 1>, scalar_prefetch = 0 : i64, scratch_operands = 0 : i64, tpu.core_type = #tpu.core_type<tc>, window_params = [{transform_indices = @transform_0, window_bounds = array<i64: 16, 512>}, {transform_indices = @transform_1, window_bounds = array<i64: 512, 256>}, {transform_indices = @transform_2, window_bounds = array<i64: 1, 256>}, {transform_indices = @transform_3, window_bounds = array<i64: 16, 256>}]} {
    %c0 = arith.constant 0 : index
    %c0_0 = arith.constant 0 : index
    %0 = vector.load %arg3[%c0, %c0_0] : memref<16x512xbf16, #tpu.memory_space<vmem>>, vector<16x512xbf16>
    %c0_1 = arith.constant 0 : index
    %c0_2 = arith.constant 0 : index
    %1 = vector.load %arg4[%c0_1, %c0_2] : memref<512x256xbf16, #tpu.memory_space<vmem>>, vector<512x256xbf16>
    %cst = arith.constant dense<0.000000e+00> : vector<16x256xf32>
    %2 = tpu.matmul %0, %1, %cst {dimension_numbers = #tpu.dot_dimension_numbers<[1], [0], [0], [1], [0, 0, 1, 1], [], []>} : vector<16x512xbf16>, vector<512x256xbf16>, vector<16x256xf32> -> vector<16x256xf32>
    %c0_3 = arith.constant 0 : index
    %c0_4 = arith.constant 0 : index
    %3 = vector.load %arg5[%c0_3, %c0_4] : memref<1x256xf32, #tpu.memory_space<vmem>>, vector<1x256xf32>
    %4 = vector.broadcast %3 : vector<1x256xf32> to vector<16x256xf32>
    %5 = arith.addf %2, %4 : vector<16x256xf32>
    %cst_5 = arith.constant 0.000000e+00 : f32
    %6 = vector.broadcast %cst_5 : f32 to vector<16x256xf32>
    %7 = arith.maximumf %5, %6 : vector<16x256xf32>
    %8 = arith.truncf %7 : vector<16x256xf32> to vector<16x256xbf16>
    %c0_6 = arith.constant 0 : index
    %c0_7 = arith.constant 0 : index
    %9 = vector.load %arg6[%c0_6, %c0_7] : memref<16x256xbf16, #tpu.memory_space<vmem>>, vector<16x256xbf16>
    tpu.vector_store %arg6[%c0_6, %c0_7], %8 {strides = array<i32>} : memref<16x256xbf16, #tpu.memory_space<vmem>>, vector<16x256xbf16>,
    return
  }
  func.func @transform_0(%arg0: i32, %arg1: i32, %arg2: i32) -> (i32, i32) {
    %c0_i32 = arith.constant 0 : i32
    return %arg0, %arg2 : i32, i32
  }
  func.func @transform_1(%arg0: i32, %arg1: i32, %arg2: i32) -> (i32, i32) {
    %c0_i32 = arith.constant 0 : i32
    return %arg2, %arg1 : i32, i32
  }
  func.func @transform_2(%arg0: i32, %arg1: i32, %arg2: i32) -> (i32, i32) {
    %c0_i32 = arith.constant 0 : i32
    %c0_i32_0 = arith.constant 0 : i32
    return %c0_i32, %arg1 : i32, i32
  }
  func.func @transform_3(%arg0: i32, %arg1: i32, %arg2: i32) -> (i32, i32) {
    %c0_i32 = arith.constant 0 : i32
    return %arg0, %arg1 : i32, i32
  }
}

module attributes {stable_mosaic.version = 11 : i64} {
  func.func @_gemm_kernel_single(%arg0: i32, %arg1: i32, %arg2: i32, %arg3: memref<16x128xbf16, #tpu.memory_space<vmem>>, %arg4: memref<128x256xbf16, #tpu.memory_space<vmem>>, %arg5: memref<1x256xf32, #tpu.memory_space<vmem>>, %arg6: memref<16x256xbf16, #tpu.memory_space<vmem>>) attributes {dimension_semantics = [#tpu.dimension_semantics<parallel>, #tpu.dimension_semantics<parallel>, #tpu.dimension_semantics<arbitrary>], iteration_bounds = array<i64: 1, 1, 1>, scalar_prefetch = 0 : i64, scratch_operands = 0 : i64, tpu.core_type = #tpu.core_type<tc>, window_params = [{transform_indices = @transform_0, window_bounds = array<i64: 16, 128>}, {transform_indices = @transform_1, window_bounds = array<i64: 128, 256>}, {transform_indices = @transform_2, window_bounds = array<i64: 1, 256>}, {transform_indices = @transform_3, window_bounds = array<i64: 16, 256>}]} {
    %c0 = arith.constant 0 : index
    %c0_0 = arith.constant 0 : index
    %0 = vector.load %arg3[%c0, %c0_0] : memref<16x128xbf16, #tpu.memory_space<vmem>>, vector<16x128xbf16>
    %c0_1 = arith.constant 0 : index
    %c0_2 = arith.constant 0 : index
    %1 = vector.load %arg4[%c0_1, %c0_2] : memref<128x256xbf16, #tpu.memory_space<vmem>>, vector<128x256xbf16>
    %cst = arith.constant dense<0.000000e+00> : vector<16x256xf32>
    %2 = tpu.matmul %0, %1, %cst {dimension_numbers = #tpu.dot_dimension_numbers<[1], [0], [0], [1], [0, 0, 1, 1], [], []>} : vector<16x128xbf16>, vector<128x256xbf16>, vector<16x256xf32> -> vector<16x256xf32>
    %c0_3 = arith.constant 0 : index
    %c0_4 = arith.constant 0 : index
    %3 = vector.load %arg5[%c0_3, %c0_4] : memref<1x256xf32, #tpu.memory_space<vmem>>, vector<1x256xf32>
    %4 = vector.broadcast %3 : vector<1x256xf32> to vector<16x256xf32>
    %5 = arith.addf %2, %4 : vector<16x256xf32>
    %cst_5 = arith.constant 0.000000e+00 : f32
    %6 = vector.broadcast %cst_5 : f32 to vector<16x256xf32>
    %7 = arith.maximumf %5, %6 : vector<16x256xf32>
    %8 = arith.truncf %7 : vector<16x256xf32> to vector<16x256xbf16>
    %c0_6 = arith.constant 0 : index
    %c0_7 = arith.constant 0 : index
    %9 = vector.load %arg6[%c0_6, %c0_7] : memref<16x256xbf16, #tpu.memory_space<vmem>>, vector<16x256xbf16>
    tpu.vector_store %arg6[%c0_6, %c0_7], %8 {strides = array<i32>} : memref<16x256xbf16, #tpu.memory_space<vmem>>, vector<16x256xbf16>,
    return
  }
  func.func @transform_0(%arg0: i32, %arg1: i32, %arg2: i32) -> (i32, i32) {
    %c0_i32 = arith.constant 0 : i32
    return %arg0, %arg2 : i32, i32
  }
  func.func @transform_1(%arg0: i32, %arg1: i32, %arg2: i32) -> (i32, i32) {
    %c0_i32 = arith.constant 0 : i32
    return %arg2, %arg1 : i32, i32
  }
  func.func @transform_2(%arg0: i32, %arg1: i32, %arg2: i32) -> (i32, i32) {
    %c0_i32 = arith.constant 0 : i32
    %c0_i32_0 = arith.constant 0 : i32
    return %c0_i32, %arg1 : i32, i32
  }
  func.func @transform_3(%arg0: i32, %arg1: i32, %arg2: i32) -> (i32, i32) {
    %c0_i32 = arith.constant 0 : i32
    return %arg0, %arg1 : i32, i32
  }
}

module attributes {stable_mosaic.version = 11 : i64} {
  func.func @_gemm_kernel_single(%arg0: i32, %arg1: i32, %arg2: i32, %arg3: memref<16x256xbf16, #tpu.memory_space<vmem>>, %arg4: memref<256x512xbf16, #tpu.memory_space<vmem>>, %arg5: memref<1x512xf32, #tpu.memory_space<vmem>>, %arg6: memref<16x512xbf16, #tpu.memory_space<vmem>>) attributes {dimension_semantics = [#tpu.dimension_semantics<parallel>, #tpu.dimension_semantics<parallel>, #tpu.dimension_semantics<arbitrary>], iteration_bounds = array<i64: 1, 1, 1>, scalar_prefetch = 0 : i64, scratch_operands = 0 : i64, tpu.core_type = #tpu.core_type<tc>, window_params = [{transform_indices = @transform_0, window_bounds = array<i64: 16, 256>}, {transform_indices = @transform_1, window_bounds = array<i64: 256, 512>}, {transform_indices = @transform_2, window_bounds = array<i64: 1, 512>}, {transform_indices = @transform_3, window_bounds = array<i64: 16, 512>}]} {
    %c0 = arith.constant 0 : index
    %c0_0 = arith.constant 0 : index
    %0 = vector.load %arg3[%c0, %c0_0] : memref<16x256xbf16, #tpu.memory_space<vmem>>, vector<16x256xbf16>
    %c0_1 = arith.constant 0 : index
    %c0_2 = arith.constant 0 : index
    %1 = vector.load %arg4[%c0_1, %c0_2] : memref<256x512xbf16, #tpu.memory_space<vmem>>, vector<256x512xbf16>
    %cst = arith.constant dense<0.000000e+00> : vector<16x512xf32>
    %2 = tpu.matmul %0, %1, %cst {dimension_numbers = #tpu.dot_dimension_numbers<[1], [0], [0], [1], [0, 0, 1, 1], [], []>} : vector<16x256xbf16>, vector<256x512xbf16>, vector<16x512xf32> -> vector<16x512xf32>
    %c0_3 = arith.constant 0 : index
    %c0_4 = arith.constant 0 : index
    %3 = vector.load %arg5[%c0_3, %c0_4] : memref<1x512xf32, #tpu.memory_space<vmem>>, vector<1x512xf32>
    %4 = vector.broadcast %3 : vector<1x512xf32> to vector<16x512xf32>
    %5 = arith.addf %2, %4 : vector<16x512xf32>
    %cst_5 = arith.constant 0.000000e+00 : f32
    %6 = vector.broadcast %cst_5 : f32 to vector<16x512xf32>
    %7 = arith.maximumf %5, %6 : vector<16x512xf32>
    %8 = arith.truncf %7 : vector<16x512xf32> to vector<16x512xbf16>
    %c0_6 = arith.constant 0 : index
    %c0_7 = arith.constant 0 : index
    %9 = vector.load %arg6[%c0_6, %c0_7] : memref<16x512xbf16, #tpu.memory_space<vmem>>, vector<16x512xbf16>
    tpu.vector_store %arg6[%c0_6, %c0_7], %8 {strides = array<i32>} : memref<16x512xbf16, #tpu.memory_space<vmem>>, vector<16x512xbf16>,
    return
  }
  func.func @transform_0(%arg0: i32, %arg1: i32, %arg2: i32) -> (i32, i32) {
    %c0_i32 = arith.constant 0 : i32
    return %arg0, %arg2 : i32, i32
  }
  func.func @transform_1(%arg0: i32, %arg1: i32, %arg2: i32) -> (i32, i32) {
    %c0_i32 = arith.constant 0 : i32
    return %arg2, %arg1 : i32, i32
  }
  func.func @transform_2(%arg0: i32, %arg1: i32, %arg2: i32) -> (i32, i32) {
    %c0_i32 = arith.constant 0 : i32
    %c0_i32_0 = arith.constant 0 : i32
    return %c0_i32, %arg1 : i32, i32
  }
  func.func @transform_3(%arg0: i32, %arg1: i32, %arg2: i32) -> (i32, i32) {
    %c0_i32 = arith.constant 0 : i32
    return %arg0, %arg1 : i32, i32
  }
}

module attributes {stable_mosaic.version = 11 : i64} {
  func.func @_gemm_kernel_single(%arg0: i32, %arg1: i32, %arg2: i32, %arg3: memref<32x1152xbf16, #tpu.memory_space<vmem>>, %arg4: memref<1152x256xbf16, #tpu.memory_space<vmem>>, %arg5: memref<1x256xf32, #tpu.memory_space<vmem>>, %arg6: memref<32x256xbf16, #tpu.memory_space<vmem>>) attributes {dimension_semantics = [#tpu.dimension_semantics<parallel>, #tpu.dimension_semantics<parallel>, #tpu.dimension_semantics<arbitrary>], iteration_bounds = array<i64: 1, 1, 1>, scalar_prefetch = 0 : i64, scratch_operands = 0 : i64, tpu.core_type = #tpu.core_type<tc>, window_params = [{transform_indices = @transform_0, window_bounds = array<i64: 32, 1152>}, {transform_indices = @transform_1, window_bounds = array<i64: 1152, 256>}, {transform_indices = @transform_2, window_bounds = array<i64: 1, 256>}, {transform_indices = @transform_3, window_bounds = array<i64: 32, 256>}]} {
    %c0 = arith.constant 0 : index
    %c0_0 = arith.constant 0 : index
    %0 = vector.load %arg3[%c0, %c0_0] : memref<32x1152xbf16, #tpu.memory_space<vmem>>, vector<32x1152xbf16>
    %c0_1 = arith.constant 0 : index
    %c0_2 = arith.constant 0 : index
    %1 = vector.load %arg4[%c0_1, %c0_2] : memref<1152x256xbf16, #tpu.memory_space<vmem>>, vector<1152x256xbf16>
    %cst = arith.constant dense<0.000000e+00> : vector<32x256xf32>
    %2 = tpu.matmul %0, %1, %cst {dimension_numbers = #tpu.dot_dimension_numbers<[1], [0], [0], [1], [0, 0, 1, 1], [], []>} : vector<32x1152xbf16>, vector<1152x256xbf16>, vector<32x256xf32> -> vector<32x256xf32>
    %c0_3 = arith.constant 0 : index
    %c0_4 = arith.constant 0 : index
    %3 = vector.load %arg5[%c0_3, %c0_4] : memref<1x256xf32, #tpu.memory_space<vmem>>, vector<1x256xf32>
    %4 = vector.broadcast %3 : vector<1x256xf32> to vector<32x256xf32>
    %5 = arith.addf %2, %4 : vector<32x256xf32>
    %cst_5 = arith.constant 0.000000e+00 : f32
    %6 = vector.broadcast %cst_5 : f32 to vector<32x256xf32>
    %7 = arith.maximumf %5, %6 : vector<32x256xf32>
    %8 = arith.truncf %7 : vector<32x256xf32> to vector<32x256xbf16>
    %c0_6 = arith.constant 0 : index
    %c0_7 = arith.constant 0 : index
    %9 = vector.load %arg6[%c0_6, %c0_7] : memref<32x256xbf16, #tpu.memory_space<vmem>>, vector<32x256xbf16>
    tpu.vector_store %arg6[%c0_6, %c0_7], %8 {strides = array<i32>} : memref<32x256xbf16, #tpu.memory_space<vmem>>, vector<32x256xbf16>,
    return
  }
  func.func @transform_0(%arg0: i32, %arg1: i32, %arg2: i32) -> (i32, i32) {
    %c0_i32 = arith.constant 0 : i32
    return %arg0, %arg2 : i32, i32
  }
  func.func @transform_1(%arg0: i32, %arg1: i32, %arg2: i32) -> (i32, i32) {
    %c0_i32 = arith.constant 0 : i32
    return %arg2, %arg1 : i32, i32
  }
  func.func @transform_2(%arg0: i32, %arg1: i32, %arg2: i32) -> (i32, i32) {
    %c0_i32 = arith.constant 0 : i32
    %c0_i32_0 = arith.constant 0 : i32
    return %c0_i32, %arg1 : i32, i32
  }
  func.func @transform_3(%arg0: i32, %arg1: i32, %arg2: i32) -> (i32, i32) {
    %c0_i32 = arith.constant 0 : i32
    return %arg0, %arg1 : i32, i32
  }
}

module attributes {stable_mosaic.version = 11 : i64} {
  func.func @_gemm_kernel_single(%arg0: i32, %arg1: i32, %arg2: i32, %arg3: memref<128x256xbf16, #tpu.memory_space<vmem>>, %arg4: memref<256x128xbf16, #tpu.memory_space<vmem>>, %arg5: memref<1x128xf32, #tpu.memory_space<vmem>>, %arg6: memref<128x128xbf16, #tpu.memory_space<vmem>>) attributes {dimension_semantics = [#tpu.dimension_semantics<parallel>, #tpu.dimension_semantics<parallel>, #tpu.dimension_semantics<arbitrary>], iteration_bounds = array<i64: 1, 1, 1>, scalar_prefetch = 0 : i64, scratch_operands = 0 : i64, tpu.core_type = #tpu.core_type<tc>, window_params = [{transform_indices = @transform_0, window_bounds = array<i64: 128, 256>}, {transform_indices = @transform_1, window_bounds = array<i64: 256, 128>}, {transform_indices = @transform_2, window_bounds = array<i64: 1, 128>}, {transform_indices = @transform_3, window_bounds = array<i64: 128, 128>}]} {
    %c0 = arith.constant 0 : index
    %c0_0 = arith.constant 0 : index
    %0 = vector.load %arg3[%c0, %c0_0] : memref<128x256xbf16, #tpu.memory_space<vmem>>, vector<128x256xbf16>
    %c0_1 = arith.constant 0 : index
    %c0_2 = arith.constant 0 : index
    %1 = vector.load %arg4[%c0_1, %c0_2] : memref<256x128xbf16, #tpu.memory_space<vmem>>, vector<256x128xbf16>
    %cst = arith.constant dense<0.000000e+00> : vector<128x128xf32>
    %2 = tpu.matmul %0, %1, %cst {dimension_numbers = #tpu.dot_dimension_numbers<[1], [0], [0], [1], [0, 0, 1, 1], [], []>} : vector<128x256xbf16>, vector<256x128xbf16>, vector<128x128xf32> -> vector<128x128xf32>
    %c0_3 = arith.constant 0 : index
    %c0_4 = arith.constant 0 : index
    %3 = vector.load %arg5[%c0_3, %c0_4] : memref<1x128xf32, #tpu.memory_space<vmem>>, vector<1x128xf32>
    %4 = vector.broadcast %3 : vector<1x128xf32> to vector<128x128xf32>
    %5 = arith.addf %2, %4 : vector<128x128xf32>
    %cst_5 = arith.constant 0.000000e+00 : f32
    %6 = vector.broadcast %cst_5 : f32 to vector<128x128xf32>
    %7 = arith.maximumf %5, %6 : vector<128x128xf32>
    %8 = arith.truncf %7 : vector<128x128xf32> to vector<128x128xbf16>
    %c0_6 = arith.constant 0 : index
    %c0_7 = arith.constant 0 : index
    %9 = vector.load %arg6[%c0_6, %c0_7] : memref<128x128xbf16, #tpu.memory_space<vmem>>, vector<128x128xbf16>
    tpu.vector_store %arg6[%c0_6, %c0_7], %8 {strides = array<i32>} : memref<128x128xbf16, #tpu.memory_space<vmem>>, vector<128x128xbf16>,
    return
  }
  func.func @transform_0(%arg0: i32, %arg1: i32, %arg2: i32) -> (i32, i32) {
    %c0_i32 = arith.constant 0 : i32
    return %arg0, %arg2 : i32, i32
  }
  func.func @transform_1(%arg0: i32, %arg1: i32, %arg2: i32) -> (i32, i32) {
    %c0_i32 = arith.constant 0 : i32
    return %arg2, %arg1 : i32, i32
  }
  func.func @transform_2(%arg0: i32, %arg1: i32, %arg2: i32) -> (i32, i32) {
    %c0_i32 = arith.constant 0 : i32
    %c0_i32_0 = arith.constant 0 : i32
    return %c0_i32, %arg1 : i32, i32
  }
  func.func @transform_3(%arg0: i32, %arg1: i32, %arg2: i32) -> (i32, i32) {
    %c0_i32 = arith.constant 0 : i32
    return %arg0, %arg1 : i32, i32
  }
}

module attributes {stable_mosaic.version = 11 : i64} {
  func.func @_gemm_kernel_single(%arg0: i32, %arg1: i32, %arg2: i32, %arg3: memref<736x512xbf16, #tpu.memory_space<vmem>>, %arg4: memref<512x128xbf16, #tpu.memory_space<vmem>>, %arg5: memref<1x128xf32, #tpu.memory_space<vmem>>, %arg6: memref<736x128xbf16, #tpu.memory_space<vmem>>) attributes {dimension_semantics = [#tpu.dimension_semantics<parallel>, #tpu.dimension_semantics<parallel>, #tpu.dimension_semantics<arbitrary>], iteration_bounds = array<i64: 1, 1, 1>, scalar_prefetch = 0 : i64, scratch_operands = 0 : i64, tpu.core_type = #tpu.core_type<tc>, window_params = [{transform_indices = @transform_0, window_bounds = array<i64: 736, 512>}, {transform_indices = @transform_1, window_bounds = array<i64: 512, 128>}, {transform_indices = @transform_2, window_bounds = array<i64: 1, 128>}, {transform_indices = @transform_3, window_bounds = array<i64: 736, 128>}]} {
    %c0 = arith.constant 0 : index
    %c0_0 = arith.constant 0 : index
    %0 = vector.load %arg3[%c0, %c0_0] : memref<736x512xbf16, #tpu.memory_space<vmem>>, vector<736x512xbf16>
    %c0_1 = arith.constant 0 : index
    %c0_2 = arith.constant 0 : index
    %1 = vector.load %arg4[%c0_1, %c0_2] : memref<512x128xbf16, #tpu.memory_space<vmem>>, vector<512x128xbf16>
    %cst = arith.constant dense<0.000000e+00> : vector<736x128xf32>
    %2 = tpu.matmul %0, %1, %cst {dimension_numbers = #tpu.dot_dimension_numbers<[1], [0], [0], [1], [0, 0, 1, 1], [], []>} : vector<736x512xbf16>, vector<512x128xbf16>, vector<736x128xf32> -> vector<736x128xf32>
    %c0_3 = arith.constant 0 : index
    %c0_4 = arith.constant 0 : index
    %3 = vector.load %arg5[%c0_3, %c0_4] : memref<1x128xf32, #tpu.memory_space<vmem>>, vector<1x128xf32>
    %4 = vector.broadcast %3 : vector<1x128xf32> to vector<736x128xf32>
    %5 = arith.addf %2, %4 : vector<736x128xf32>
    %cst_5 = arith.constant 0.000000e+00 : f32
    %6 = vector.broadcast %cst_5 : f32 to vector<736x128xf32>
    %7 = arith.maximumf %5, %6 : vector<736x128xf32>
    %8 = arith.truncf %7 : vector<736x128xf32> to vector<736x128xbf16>
    %c0_6 = arith.constant 0 : index
    %c0_7 = arith.constant 0 : index
    %9 = vector.load %arg6[%c0_6, %c0_7] : memref<736x128xbf16, #tpu.memory_space<vmem>>, vector<736x128xbf16>
    tpu.vector_store %arg6[%c0_6, %c0_7], %8 {strides = array<i32>} : memref<736x128xbf16, #tpu.memory_space<vmem>>, vector<736x128xbf16>,
    return
  }
  func.func @transform_0(%arg0: i32, %arg1: i32, %arg2: i32) -> (i32, i32) {
    %c0_i32 = arith.constant 0 : i32
    return %arg0, %arg2 : i32, i32
  }
  func.func @transform_1(%arg0: i32, %arg1: i32, %arg2: i32) -> (i32, i32) {
    %c0_i32 = arith.constant 0 : i32
    return %arg2, %arg1 : i32, i32
  }
  func.func @transform_2(%arg0: i32, %arg1: i32, %arg2: i32) -> (i32, i32) {
    %c0_i32 = arith.constant 0 : i32
    %c0_i32_0 = arith.constant 0 : i32
    return %c0_i32, %arg1 : i32, i32
  }
  func.func @transform_3(%arg0: i32, %arg1: i32, %arg2: i32) -> (i32, i32) {
    %c0_i32 = arith.constant 0 : i32
    return %arg0, %arg1 : i32, i32
  }
}

module attributes {stable_mosaic.version = 11 : i64} {
  func.func @_gemm_kernel_single(%arg0: i32, %arg1: i32, %arg2: i32, %arg3: memref<800x64xbf16, #tpu.memory_space<vmem>>, %arg4: memref<64x128xbf16, #tpu.memory_space<vmem>>, %arg5: memref<1x128xf32, #tpu.memory_space<vmem>>, %arg6: memref<800x128xf32, #tpu.memory_space<vmem>>) attributes {dimension_semantics = [#tpu.dimension_semantics<parallel>, #tpu.dimension_semantics<parallel>, #tpu.dimension_semantics<arbitrary>], iteration_bounds = array<i64: 1, 1, 1>, scalar_prefetch = 0 : i64, scratch_operands = 0 : i64, tpu.core_type = #tpu.core_type<tc>, window_params = [{transform_indices = @transform_0, window_bounds = array<i64: 800, 64>}, {transform_indices = @transform_1, window_bounds = array<i64: 64, 128>}, {transform_indices = @transform_2, window_bounds = array<i64: 1, 128>}, {transform_indices = @transform_3, window_bounds = array<i64: 800, 128>}]} {
    %c0 = arith.constant 0 : index
    %c0_0 = arith.constant 0 : index
    %0 = vector.load %arg3[%c0, %c0_0] : memref<800x64xbf16, #tpu.memory_space<vmem>>, vector<800x64xbf16>
    %c0_1 = arith.constant 0 : index
    %c0_2 = arith.constant 0 : index
    %1 = vector.load %arg4[%c0_1, %c0_2] : memref<64x128xbf16, #tpu.memory_space<vmem>>, vector<64x128xbf16>
    %cst = arith.constant dense<0.000000e+00> : vector<800x128xf32>
    %2 = tpu.matmul %0, %1, %cst {dimension_numbers = #tpu.dot_dimension_numbers<[1], [0], [0], [1], [0, 0, 1, 1], [], []>} : vector<800x64xbf16>, vector<64x128xbf16>, vector<800x128xf32> -> vector<800x128xf32>
    %c0_3 = arith.constant 0 : index
    %c0_4 = arith.constant 0 : index
    %3 = vector.load %arg5[%c0_3, %c0_4] : memref<1x128xf32, #tpu.memory_space<vmem>>, vector<1x128xf32>
    %4 = vector.broadcast %3 : vector<1x128xf32> to vector<800x128xf32>
    %5 = arith.addf %2, %4 : vector<800x128xf32>
    %6 = arith.negf %5 : vector<800x128xf32>
    %7 = math.exp %6 : vector<800x128xf32>
    %cst_5 = arith.constant 1.000000e+00 : f32
    %8 = vector.broadcast %cst_5 : f32 to vector<800x128xf32>
    %9 = arith.addf %8, %7 : vector<800x128xf32>
    %10 = arith.divf %8, %9 : vector<800x128xf32>
    %c0_6 = arith.constant 0 : index
    %c0_7 = arith.constant 0 : index
    %11 = vector.load %arg6[%c0_6, %c0_7] : memref<800x128xf32, #tpu.memory_space<vmem>>, vector<800x128xf32>
    tpu.vector_store %arg6[%c0_6, %c0_7], %10 {strides = array<i32>} : memref<800x128xf32, #tpu.memory_space<vmem>>, vector<800x128xf32>,
    return
  }
  func.func @transform_0(%arg0: i32, %arg1: i32, %arg2: i32) -> (i32, i32) {
    %c0_i32 = arith.constant 0 : i32
    return %arg0, %arg2 : i32, i32
  }
  func.func @transform_1(%arg0: i32, %arg1: i32, %arg2: i32) -> (i32, i32) {
    %c0_i32 = arith.constant 0 : i32
    return %arg2, %arg1 : i32, i32
  }
  func.func @transform_2(%arg0: i32, %arg1: i32, %arg2: i32) -> (i32, i32) {
    %c0_i32 = arith.constant 0 : i32
    %c0_i32_0 = arith.constant 0 : i32
    return %c0_i32, %arg1 : i32, i32
  }
  func.func @transform_3(%arg0: i32, %arg1: i32, %arg2: i32) -> (i32, i32) {
    %c0_i32 = arith.constant 0 : i32
    return %arg0, %arg1 : i32, i32
  }
}

</mosaic_0001>

<llo_original>
// kernel: forward.12
$region0: #{forward.12}
  #allocation0 [shape = 'u32[]', space=smem, size = 0x4, offset = 0x4, fixed_abs, tag = 'smem constant byte address 0x4 - core index']
  #allocation1 [shape = 'u32[72,128]{1,0:T(1,128)}', space=vmem, size = 0x9000, scoped, tag = 'internal scratch']
  %s0 = inlined_call_operand.vmem [shape: bf16[656,9], index: 0, kind: input, shape index: {}]
  %s1 = inlined_call_operand.vmem [shape: bf16[9,128], index: 1, kind: input, shape index: {}]
  %s2 = inlined_call_operand.vmem [shape: f32[1,128], index: 2, kind: input, shape index: {}]
  %s3 = inlined_call_operand.vmem [shape: bf16[656,128], index: 3, kind: output, shape index: {}]
  %s4 = sld [smem:[#allocation0]]
  $region22: #{forward.12} parent=0
    _
  %s6 = ssub.s32 1, %s4
  %s7 = scalar_select 0, %s6, %s4
  // Predicated region
  $region2: #{forward.12} parent=0 // pred_check
    _
  $region3: #{forward.12} parent=0 // pred_check_branch
    %9 = sbr.rel (0) target = $region5
  $region4: #{forward.12} parent=0 // pred_region
    _
  $region5: #{forward.12} parent=0 // pred_fallthru
    _
  // Predicated region
  $region6: #{forward.12} parent=0 // pred_check
    _
  $region7: #{forward.12} parent=0 // pred_check_branch
    %11 = sbr.rel (0) target = $region9
  $region8: #{forward.12} parent=0 // pred_region
    _
  $region9: #{forward.12} parent=0 // pred_fallthru
    _
  // Predicated region
  $region10: #{forward.12} parent=0 // pred_check
    _
  $region11: #{forward.12} parent=0 // pred_check_branch
    %13 = sbr.rel (0) target = $region13
  $region12: #{forward.12} parent=0 // pred_region
    _
  $region13: #{forward.12} parent=0 // pred_fallthru
    _
  %v15 = vld [vmem:[%s0] sm:$0xf]
  %v16 = vld [vmem:[%s0 + $0x4] sm:$0xf]
  %v17 = vld [vmem:[%s0 + $0x8] sm:$0xf]
  %v18 = vld [vmem:[%s0 + $0xc] sm:$0xf]
  %v19 = vld [vmem:[%s0 + $0x10] sm:$0xf]
  %v20 = vld [vmem:[%s0 + $0x14] sm:$0xf]
  %v21 = vld [vmem:[%s0 + $0x18] sm:$0xf]
  %v22 = vld [vmem:[%s0 + $0x1c] sm:$0xf]
  %v23 = vld [vmem:[%s0 + $0x20] sm:$0xf]
  %v24 = vld [vmem:[%s0 + $0x24] sm:$0xf]
  %v25 = vld [vmem:[%s0 + $0x28] sm:$0xf]
  %v26 = vld [vmem:[%s0 + $0x2c] sm:$0xf]
  %v27 = vld [vmem:[%s0 + $0x30] sm:$0xf]
  %v28 = vld [vmem:[%s0 + $0x34] sm:$0xf]
  %v29 = vld [vmem:[%s0 + $0x38] sm:$0xf]
  %v30 = vld [vmem:[%s0 + $0x3c] sm:$0xf]
  %v31 = vld [vmem:[%s0 + $0x40] sm:$0xf]
  %v32 = vld [vmem:[%s0 + $0x44] sm:$0xf]
  %v33 = vld [vmem:[%s0 + $0x48] sm:$0xf]
  %v34 = vld [vmem:[%s0 + $0x4c] sm:$0xf]
  %v35 = vld [vmem:[%s0 + $0x50] sm:$0xf]
  %v36 = vld [vmem:[%s0 + $0x54] sm:$0xf]
  %v37 = vld [vmem:[%s0 + $0x58] sm:$0xf]
  %v38 = vld [vmem:[%s0 + $0x5c] sm:$0xf]
  %v39 = vld [vmem:[%s0 + $0x60] sm:$0xf]
  %v40 = vld [vmem:[%s0 + $0x64] sm:$0xf]
  %v41 = vld [vmem:[%s0 + $0x68] sm:$0xf]
  %v42 = vld [vmem:[%s0 + $0x6c] sm:$0xf]
  %v43 = vld [vmem:[%s0 + $0x70] sm:$0xf]
  %v44 = vld [vmem:[%s0 + $0x74] sm:$0xf]
  %v45 = vld [vmem:[%s0 + $0x78] sm:$0xf]
  %v46 = vld [vmem:[%s0 + $0x7c] sm:$0xf]
  %v47 = vld [vmem:[%s0 + $0x80] sm:$0xf]
  %v48 = vld [vmem:[%s0 + $0x84] sm:$0xf]
  %v49 = vld [vmem:[%s0 + $0x88] sm:$0xf]
  %v50 = vld [vmem:[%s0 + $0x8c] sm:$0xf]
  %v51 = vld [vmem:[%s0 + $0x90] sm:$0xf]
  %v52 = vld [vmem:[%s0 + $0x94] sm:$0xf]
  %v53 = vld [vmem:[%s0 + $0x98] sm:$0xf]
  %v54 = vld [vmem:[%s0 + $0x9c] sm:$0xf]
  %v55 = vld [vmem:[%s0 + $0xa0] sm:$0xf]
  %v56 = vld [vmem:[%s0 + $0xa4] sm:$0xf]
  %v57 = vld [vmem:[%s0 + $0xa8] sm:$0xf]
  %v58 = vld [vmem:[%s0 + $0xac] sm:$0xf]
  %v59 = vld [vmem:[%s0 + $0xb0] sm:$0xf]
  %v60 = vld [vmem:[%s0 + $0xb4] sm:$0xf]
  %v61 = vld [vmem:[%s0 + $0xb8] sm:$0xf]
  %v62 = vld [vmem:[%s0 + $0xbc] sm:$0xf]
  %v63 = vld [vmem:[%s0 + $0xc0] sm:$0xf]
  %v64 = vld [vmem:[%s0 + $0xc4] sm:$0xf]
  %v65 = vld [vmem:[%s0 + $0xc8] sm:$0xf]
  %v66 = vld [vmem:[%s0 + $0xcc] sm:$0xf]
  %v67 = vld [vmem:[%s0 + $0xd0] sm:$0xf]
  %v68 = vld [vmem:[%s0 + $0xd4] sm:$0xf]
  %v69 = vld [vmem:[%s0 + $0xd8] sm:$0xf]
  %v70 = vld [vmem:[%s0 + $0xdc] sm:$0xf]
  %v71 = vld [vmem:[%s0 + $0xe0] sm:$0xf]
  %v72 = vld [vmem:[%s0 + $0xe4] sm:$0xf]
  %v73 = vld [vmem:[%s0 + $0xe8] sm:$0xf]
  %v74 = vld [vmem:[%s0 + $0xec] sm:$0xf]
  %v75 = vld [vmem:[%s0 + $0xf0] sm:$0xf]
  %v76 = vld [vmem:[%s0 + $0xf4] sm:$0xf]
  %v77 = vld [vmem:[%s0 + $0xf8] sm:$0xf]
  %v78 = vld [vmem:[%s0 + $0xfc] sm:$0xf]
  %v79 = vld [vmem:[%s0 + $0x100] sm:$0xf]
  %v80 = vld [vmem:[%s0 + $0x104] sm:$0xf]
  %v81 = vld [vmem:[%s0 + $0x108] sm:$0xf]
  %v82 = vld [vmem:[%s0 + $0x10c] sm:$0xf]
  %v83 = vld [vmem:[%s0 + $0x110] sm:$0xf]
  %v84 = vld [vmem:[%s0 + $0x114] sm:$0xf]
  %v85 = vld [vmem:[%s0 + $0x118] sm:$0xf]
  %v86 = vld [vmem:[%s0 + $0x11c] sm:$0xf]
  %v87 = vld [vmem:[%s0 + $0x120] sm:$0xf]
  %v88 = vld [vmem:[%s0 + $0x124] sm:$0xf]
  %v89 = vld [vmem:[%s0 + $0x128] sm:$0xf]
  %v90 = vld [vmem:[%s0 + $0x12c] sm:$0xf]
  %v91 = vld [vmem:[%s0 + $0x130] sm:$0xf]
  %v92 = vld [vmem:[%s0 + $0x134] sm:$0xf]
  %v93 = vld [vmem:[%s0 + $0x138] sm:$0xf]
  %v94 = vld [vmem:[%s0 + $0x13c] sm:$0xf]
  %v95 = vld [vmem:[%s0 + $0x140] sm:$0xf]
  %v96 = vld [vmem:[%s0 + $0x144] sm:$0xf]
  %v97 = vld [vmem:[%s1] sm:$0xf]
  %v98 = vld [vmem:[%s1 + $0x4] sm:$0x1]
  %v99 = vld [vmem:[%s2] sm:$0x1]
  %v101 = vperm.slane %v99, 0
  %v185 = vunpack.c.l.b16 %v15
  %v186 = vunpack.c.l.b16 %v16
  %v187 = vunpack.c.l.b16 %v17
  %v188 = vunpack.c.l.b16 %v18
  %v189 = vunpack.c.l.b16 %v19
  %v190 = vunpack.c.l.b16 %v20
  %v191 = vunpack.c.l.b16 %v21
  %v192 = vunpack.c.l.b16 %v22
  %v193 = vunpack.c.l.b16 %v23
  %v194 = vunpack.c.l.b16 %v24
  %v195 = vunpack.c.l.b16 %v25
  %v196 = vunpack.c.l.b16 %v26
  %v197 = vunpack.c.l.b16 %v27
  %v198 = vunpack.c.l.b16 %v28
  %v199 = vunpack.c.l.b16 %v29
  %v200 = vunpack.c.l.b16 %v30
  %v201 = vunpack.c.l.b16 %v31
  %v202 = vunpack.c.l.b16 %v32
  %v203 = vunpack.c.l.b16 %v33
  %v204 = vunpack.c.l.b16 %v34
  %v205 = vunpack.c.l.b16 %v35
  %v206 = vunpack.c.l.b16 %v36
  %v207 = vunpack.c.l.b16 %v37
  %v208 = vunpack.c.l.b16 %v38
  %v209 = vunpack.c.l.b16 %v39
  %v210 = vunpack.c.l.b16 %v40
  %v211 = vunpack.c.l.b16 %v41
  %v212 = vunpack.c.l.b16 %v42
  %v213 = vunpack.c.l.b16 %v43
  %v214 = vunpack.c.l.b16 %v44
  %v215 = vunpack.c.l.b16 %v45
  %v216 = vunpack.c.l.b16 %v46
  %v217 = vunpack.c.l.b16 %v47
  %v218 = vunpack.c.l.b16 %v48
  %v219 = vunpack.c.l.b16 %v49
  %v220 = vunpack.c.l.b16 %v50
  %v221 = vunpack.c.l.b16 %v51
  %v222 = vunpack.c.l.b16 %v52
  %v223 = vunpack.c.l.b16 %v53
  %v224 = vunpack.c.l.b16 %v54
  %v225 = vunpack.c.l.b16 %v55
  %v226 = vunpack.c.l.b16 %v56
  %v227 = vunpack.c.l.b16 %v57
  %v228 = vunpack.c.l.b16 %v58
  %v229 = vunpack.c.l.b16 %v59
  %v230 = vunpack.c.l.b16 %v60
  %v231 = vunpack.c.l.b16 %v61
  %v232 = vunpack.c.l.b16 %v62
  %v233 = vunpack.c.l.b16 %v63
  %v234 = vunpack.c.l.b16 %v64
  %v235 = vunpack.c.l.b16 %v65
  %v236 = vunpack.c.l.b16 %v66
  %v237 = vunpack.c.l.b16 %v67
  %v238 = vunpack.c.l.b16 %v68
  %v239 = vunpack.c.l.b16 %v69
  %v240 = vunpack.c.l.b16 %v70
  %v241 = vunpack.c.l.b16 %v71
  %v242 = vunpack.c.l.b16 %v72
  %v243 = vunpack.c.l.b16 %v73
  %v244 = vunpack.c.l.b16 %v74
  %v245 = vunpack.c.l.b16 %v75
  %v246 = vunpack.c.l.b16 %v76
  %v247 = vunpack.c.l.b16 %v77
  %v248 = vunpack.c.l.b16 %v78
  %v249 = vunpack.c.l.b16 %v79
  %v250 = vunpack.c.l.b16 %v80
  %v251 = vunpack.c.l.b16 %v81
  %v252 = vunpack.c.l.b16 %v82
  %v253 = vunpack.c.l.b16 %v83
  %v254 = vunpack.c.l.b16 %v84
  %v255 = vunpack.c.l.b16 %v85
  %v256 = vunpack.c.l.b16 %v86
  %v257 = vunpack.c.l.b16 %v87
  %v258 = vunpack.c.l.b16 %v88
  %v259 = vunpack.c.l.b16 %v89
  %v260 = vunpack.c.l.b16 %v90
  %v261 = vunpack.c.l.b16 %v91
  %v262 = vunpack.c.l.b16 %v92
  %v263 = vunpack.c.l.b16 %v93
  %v264 = vunpack.c.l.b16 %v94
  %v265 = vunpack.c.l.b16 %v95
  %v266 = vunpack.c.l.b16 %v96
  %v267 = vpack.c.b16 %v186, %v185
  %v268 = vpack.c.b16 %v188, %v187
  %v269 = vpack.c.b16 %v190, %v189
  %v270 = vpack.c.b16 %v192, %v191
  %v271 = vpack.c.b16 %v194, %v193
  %v272 = vpack.c.b16 %v196, %v195
  %v273 = vpack.c.b16 %v198, %v197
  %v274 = vpack.c.b16 %v200, %v199
  %v275 = vpack.c.b16 %v202, %v201
  %v276 = vpack.c.b16 %v204, %v203
  %v277 = vpack.c.b16 %v206, %v205
  %v278 = vpack.c.b16 %v208, %v207
  %v279 = vpack.c.b16 %v210, %v209
  %v280 = vpack.c.b16 %v212, %v211
  %v281 = vpack.c.b16 %v214, %v213
  %v282 = vpack.c.b16 %v216, %v215
  %v283 = vpack.c.b16 %v218, %v217
  %v284 = vpack.c.b16 %v220, %v219
  %v285 = vpack.c.b16 %v222, %v221
  %v286 = vpack.c.b16 %v224, %v223
  %v287 = vpack.c.b16 %v226, %v225
  %v288 = vpack.c.b16 %v228, %v227
  %v289 = vpack.c.b16 %v230, %v229
  %v290 = vpack.c.b16 %v232, %v231
  %v291 = vpack.c.b16 %v234, %v233
  %v292 = vpack.c.b16 %v236, %v235
  %v293 = vpack.c.b16 %v238, %v237
  %v294 = vpack.c.b16 %v240, %v239
  %v295 = vpack.c.b16 %v242, %v241
  %v296 = vpack.c.b16 %v244, %v243
  %v297 = vpack.c.b16 %v246, %v245
  %v298 = vpack.c.b16 %v248, %v247
  %v299 = vpack.c.b16 %v250, %v249
  %v300 = vpack.c.b16 %v252, %v251
  %v301 = vpack.c.b16 %v254, %v253
  %v302 = vpack.c.b16 %v256, %v255
  %v303 = vpack.c.b16 %v258, %v257
  %v304 = vpack.c.b16 %v260, %v259
  %v305 = vpack.c.b16 %v262, %v261
  %v306 = vpack.c.b16 %v264, %v263
  %v307 = vpack.c.b16 %v266, %v265
  %v310 = vunpack.c.l.b16 %v97
  %v311 = vunpack.c.l.b16 %v98
  %v312 = vpack.c.b16 %v311, %v310
  %vm313 = vcmask 72704
  %v315 = vsel %vm313, %v267, 0
  %v318 = vsel %vm313, %v268, 0
  %v321 = vsel %vm313, %v269, 0
  %v324 = vsel %vm313, %v270, 0
  %v327 = vsel %vm313, %v271, 0
  %v330 = vsel %vm313, %v272, 0
  %v333 = vsel %vm313, %v273, 0
  %v336 = vsel %vm313, %v274, 0
  %v339 = vsel %vm313, %v275, 0
  %v342 = vsel %vm313, %v276, 0
  %v345 = vsel %vm313, %v277, 0
  %v348 = vsel %vm313, %v278, 0
  %v351 = vsel %vm313, %v279, 0
  %v354 = vsel %vm313, %v280, 0
  %v357 = vsel %vm313, %v281, 0
  %v360 = vsel %vm313, %v282, 0
  %v363 = vsel %vm313, %v283, 0
  %v366 = vsel %vm313, %v284, 0
  %v369 = vsel %vm313, %v285, 0
  %v372 = vsel %vm313, %v286, 0
  %v375 = vsel %vm313, %v287, 0
  %v378 = vsel %vm313, %v288, 0
  %v381 = vsel %vm313, %v289, 0
  %v384 = vsel %vm313, %v290, 0
  %v387 = vsel %vm313, %v291, 0
  %v390 = vsel %vm313, %v292, 0
  %v393 = vsel %vm313, %v293, 0
  %v396 = vsel %vm313, %v294, 0
  %v399 = vsel %vm313, %v295, 0
  %v402 = vsel %vm313, %v296, 0
  %v405 = vsel %vm313, %v297, 0
  %v408 = vsel %vm313, %v298, 0
  %v411 = vsel %vm313, %v299, 0
  %v414 = vsel %vm313, %v300, 0
  %v417 = vsel %vm313, %v301, 0
  %v420 = vsel %vm313, %v302, 0
  %v423 = vsel %vm313, %v303, 0
  %v426 = vsel %vm313, %v304, 0
  %v429 = vsel %vm313, %v305, 0
  %v432 = vsel %vm313, %v306, 0
  %v435 = vsel %vm313, %v307, 0
  %vm437 = vcmask 1043456
  %vm438 = vcmask 1044480
  %v439 = vsel %vm437, 4294967295, 65535
  %v440 = vsel %vm438, %v439, 0
  %v442 = vand.u32 %v312, %v440
  %444 = vmatpush.bf16.msra.mxu0 0
  %445 = vmatpush.bf16.msra.mxu0 0
  %446 = vmatpush.bf16.msra.mxu0 0
  %447 = vmatpush.bf16.msra.mxu0 0
  %448 = vmatpush.bf16.msra.mxu0 0
  %449 = vmatpush.bf16.msra.mxu0 0
  %450 = vmatpush.bf16.msra.mxu0 0
  %451 = vmatpush.bf16.msra.mxu0 %v442
  %452 = vmatmul.bf16.gmra.mxu0 %v315
  %v453 = vpop.f32.mrf.mxu0
  %v454 = vadd.f32 %v101, %v453
  %v455 = vpop.f32.mrf.mxu0
  %v456 = vadd.f32 %v101, %v455
  %457 = vmatmul.bf16.gmra.mxu0 %v318
  %v458 = vpop.f32.mrf.mxu0
  %v459 = vadd.f32 %v101, %v458
  %v460 = vpop.f32.mrf.mxu0
  %v461 = vadd.f32 %v101, %v460
  %462 = vmatmul.bf16.gmra.mxu0 %v321
  %v463 = vpop.f32.mrf.mxu0
  %v464 = vadd.f32 %v101, %v463
  %v465 = vpop.f32.mrf.mxu0
  %v466 = vadd.f32 %v101, %v465
  %467 = vmatmul.bf16.gmra.mxu0 %v324
  %v468 = vpop.f32.mrf.mxu0
  %v469 = vadd.f32 %v101, %v468
  %v470 = vpop.f32.mrf.mxu0
  %v471 = vadd.f32 %v101, %v470
  %472 = vmatmul.bf16.gmra.mxu0 %v327
  %v473 = vpop.f32.mrf.mxu0
  %v474 = vadd.f32 %v101, %v473
  %v475 = vpop.f32.mrf.mxu0
  %v476 = vadd.f32 %v101, %v475
  %477 = vmatmul.bf16.gmra.mxu0 %v330
  %v478 = vpop.f32.mrf.mxu0
  %v479 = vadd.f32 %v101, %v478
  %v480 = vpop.f32.mrf.mxu0
  %v481 = vadd.f32 %v101, %v480
  %482 = vmatmul.bf16.gmra.mxu0 %v333
  %v483 = vpop.f32.mrf.mxu0
  %v484 = vadd.f32 %v101, %v483
  %v485 = vpop.f32.mrf.mxu0
  %v486 = vadd.f32 %v101, %v485
  %487 = vmatmul.bf16.gmra.mxu0 %v336
  %v488 = vpop.f32.mrf.mxu0
  %v489 = vadd.f32 %v101, %v488
  %v490 = vpop.f32.mrf.mxu0
  %v491 = vadd.f32 %v101, %v490
  %492 = vmatmul.bf16.gmra.mxu0 %v339
  %v493 = vpop.f32.mrf.mxu0
  %v494 = vadd.f32 %v101, %v493
  %v495 = vpop.f32.mrf.mxu0
  %v496 = vadd.f32 %v101, %v495
  %497 = vmatmul.bf16.gmra.mxu0 %v342
  %v498 = vpop.f32.mrf.mxu0
  %v499 = vadd.f32 %v101, %v498
  %v500 = vpop.f32.mrf.mxu0
  %v501 = vadd.f32 %v101, %v500
  %502 = vmatmul.bf16.gmra.mxu0 %v345
  %v503 = vpop.f32.mrf.mxu0
  %v504 = vadd.f32 %v101, %v503
  %v505 = vpop.f32.mrf.mxu0
  %v506 = vadd.f32 %v101, %v505
  %507 = vmatmul.bf16.gmra.mxu0 %v348
  %v508 = vpop.f32.mrf.mxu0
  %v509 = vadd.f32 %v101, %v508
  %v510 = vpop.f32.mrf.mxu0
  %v511 = vadd.f32 %v101, %v510
  %512 = vmatmul.bf16.gmra.mxu0 %v351
  %v513 = vpop.f32.mrf.mxu0
  %v514 = vadd.f32 %v101, %v513
  %v515 = vpop.f32.mrf.mxu0
  %v516 = vadd.f32 %v101, %v515
  %517 = vmatmul.bf16.gmra.mxu0 %v354
  %v518 = vpop.f32.mrf.mxu0
  %v519 = vadd.f32 %v101, %v518
  %v520 = vpop.f32.mrf.mxu0
  %v521 = vadd.f32 %v101, %v520
  %522 = vmatmul.bf16.gmra.mxu0 %v357
  %v523 = vpop.f32.mrf.mxu0
  %v524 = vadd.f32 %v101, %v523
  %v525 = vpop.f32.mrf.mxu0
  %v526 = vadd.f32 %v101, %v525
  %527 = vmatmul.bf16.gmra.mxu0 %v360
  %v528 = vpop.f32.mrf.mxu0
  %v529 = vadd.f32 %v101, %v528
  %v530 = vpop.f32.mrf.mxu0
  %v531 = vadd.f32 %v101, %v530
  %532 = vmatmul.bf16.gmra.mxu0 %v363
  %v533 = vpop.f32.mrf.mxu0
  %v534 = vadd.f32 %v101, %v533
  %v535 = vpop.f32.mrf.mxu0
  %v536 = vadd.f32 %v101, %v535
  %537 = vmatmul.bf16.gmra.mxu0 %v366
  %v538 = vpop.f32.mrf.mxu0
  %v539 = vadd.f32 %v101, %v538
  %v540 = vpop.f32.mrf.mxu0
  %v541 = vadd.f32 %v101, %v540
  %542 = vmatmul.bf16.gmra.mxu0 %v369
  %v543 = vpop.f32.mrf.mxu0
  %v544 = vadd.f32 %v101, %v543
  %v545 = vpop.f32.mrf.mxu0
  %v546 = vadd.f32 %v101, %v545
  %547 = vmatmul.bf16.gmra.mxu0 %v372
  %v548 = vpop.f32.mrf.mxu0
  %v549 = vadd.f32 %v101, %v548
  %v550 = vpop.f32.mrf.mxu0
  %v551 = vadd.f32 %v101, %v550
  %552 = vmatmul.bf16.gmra.mxu0 %v375
  %v553 = vpop.f32.mrf.mxu0
  %v554 = vadd.f32 %v101, %v553
  %v555 = vpop.f32.mrf.mxu0
  %v556 = vadd.f32 %v101, %v555
  %557 = vmatmul.bf16.gmra.mxu0 %v378
  %v558 = vpop.f32.mrf.mxu0
  %v559 = vadd.f32 %v101, %v558
  %v560 = vpop.f32.mrf.mxu0
  %v561 = vadd.f32 %v101, %v560
  %562 = vmatmul.bf16.gmra.mxu0 %v381
  %v563 = vpop.f32.mrf.mxu0
  %v564 = vadd.f32 %v101, %v563
  %v565 = vpop.f32.mrf.mxu0
  %v566 = vadd.f32 %v101, %v565
  %567 = vmatmul.bf16.gmra.mxu0 %v384
  %v568 = vpop.f32.mrf.mxu0
  %v569 = vadd.f32 %v101, %v568
  %v570 = vpop.f32.mrf.mxu0
  %v571 = vadd.f32 %v101, %v570
  %572 = vmatmul.bf16.gmra.mxu0 %v387
  %v573 = vpop.f32.mrf.mxu0
  %v574 = vadd.f32 %v101, %v573
  %v575 = vpop.f32.mrf.mxu0
  %v576 = vadd.f32 %v101, %v575
  %577 = vmatmul.bf16.gmra.mxu0 %v390
  %v578 = vpop.f32.mrf.mxu0
  %v579 = vadd.f32 %v101, %v578
  %v580 = vpop.f32.mrf.mxu0
  %v581 = vadd.f32 %v101, %v580
  %582 = vmatmul.bf16.gmra.mxu0 %v393
  %v583 = vpop.f32.mrf.mxu0
  %v584 = vadd.f32 %v101, %v583
  %v585 = vpop.f32.mrf.mxu0
  %v586 = vadd.f32 %v101, %v585
  %587 = vmatmul.bf16.gmra.mxu0 %v396
  %v588 = vpop.f32.mrf.mxu0
  %v589 = vadd.f32 %v101, %v588
  %v590 = vpop.f32.mrf.mxu0
  %v591 = vadd.f32 %v101, %v590
  %592 = vmatmul.bf16.gmra.mxu0 %v399
  %v593 = vpop.f32.mrf.mxu0
  %v594 = vadd.f32 %v101, %v593
  %v595 = vpop.f32.mrf.mxu0
  %v596 = vadd.f32 %v101, %v595
  %597 = vmatmul.bf16.gmra.mxu0 %v402
  %v598 = vpop.f32.mrf.mxu0
  %v599 = vadd.f32 %v101, %v598
  %v600 = vpop.f32.mrf.mxu0
  %v601 = vadd.f32 %v101, %v600
  %602 = vmatmul.bf16.gmra.mxu0 %v405
  %v603 = vpop.f32.mrf.mxu0
  %v604 = vadd.f32 %v101, %v603
  %v605 = vpop.f32.mrf.mxu0
  %v606 = vadd.f32 %v101, %v605
  %607 = vmatmul.bf16.gmra.mxu0 %v408
  %v608 = vpop.f32.mrf.mxu0
  %v609 = vadd.f32 %v101, %v608
  %v610 = vpop.f32.mrf.mxu0
  %v611 = vadd.f32 %v101, %v610
  %612 = vmatmul.bf16.gmra.mxu0 %v411
  %v613 = vpop.f32.mrf.mxu0
  %v614 = vadd.f32 %v101, %v613
  %v615 = vpop.f32.mrf.mxu0
  %v616 = vadd.f32 %v101, %v615
  %617 = vmatmul.bf16.gmra.mxu0 %v414
  %v618 = vpop.f32.mrf.mxu0
  %v619 = vadd.f32 %v101, %v618
  %v620 = vpop.f32.mrf.mxu0
  %v621 = vadd.f32 %v101, %v620
  %622 = vmatmul.bf16.gmra.mxu0 %v417
  %v623 = vpop.f32.mrf.mxu0
  %v624 = vadd.f32 %v101, %v623
  %v625 = vpop.f32.mrf.mxu0
  %v626 = vadd.f32 %v101, %v625
  %627 = vmatmul.bf16.gmra.mxu0 %v420
  %v628 = vpop.f32.mrf.mxu0
  %v629 = vadd.f32 %v101, %v628
  %v630 = vpop.f32.mrf.mxu0
  %v631 = vadd.f32 %v101, %v630
  %632 = vmatmul.bf16.gmra.mxu0 %v423
  %v633 = vpop.f32.mrf.mxu0
  %v634 = vadd.f32 %v101, %v633
  %v635 = vpop.f32.mrf.mxu0
  %v636 = vadd.f32 %v101, %v635
  %637 = vmatmul.bf16.gmra.mxu0 %v426
  %v638 = vpop.f32.mrf.mxu0
  %v639 = vadd.f32 %v101, %v638
  %v640 = vpop.f32.mrf.mxu0
  %v641 = vadd.f32 %v101, %v640
  %642 = vmatmul.bf16.gmra.mxu0 %v429
  %v643 = vpop.f32.mrf.mxu0
  %v644 = vadd.f32 %v101, %v643
  %v645 = vpop.f32.mrf.mxu0
  %v646 = vadd.f32 %v101, %v645
  %647 = vmatmul.bf16.gmra.mxu0 %v432
  %v648 = vpop.f32.mrf.mxu0
  %v649 = vadd.f32 %v101, %v648
  %v650 = vpop.f32.mrf.mxu0
  %v651 = vadd.f32 %v101, %v650
  %652 = vmatmul.bf16.gmra.mxu0 %v435
  %v653 = vpop.f32.mrf.mxu0
  %v654 = vadd.f32 %v101, %v653
  %v655 = vpop.f32.mrf.mxu0
  %v656 = vadd.f32 %v101, %v655
  %657 = vdwg.mxu0
  %v658 = vmax.f32 %v454, 0.0
  %v659 = vmax.f32 %v456, 0.0
  %v660 = vmax.f32 %v459, 0.0
  %v661 = vmax.f32 %v461, 0.0
  %v662 = vmax.f32 %v464, 0.0
  %v663 = vmax.f32 %v466, 0.0
  %v664 = vmax.f32 %v469, 0.0
  %v665 = vmax.f32 %v471, 0.0
  %v666 = vmax.f32 %v474, 0.0
  %v667 = vmax.f32 %v476, 0.0
  %v668 = vmax.f32 %v479, 0.0
  %v669 = vmax.f32 %v481, 0.0
  %v670 = vmax.f32 %v484, 0.0
  %v671 = vmax.f32 %v486, 0.0
  %v672 = vmax.f32 %v489, 0.0
  %v673 = vmax.f32 %v491, 0.0
  %v674 = vmax.f32 %v494, 0.0
  %v675 = vmax.f32 %v496, 0.0
  %v676 = vmax.f32 %v499, 0.0
  %v677 = vmax.f32 %v501, 0.0
  %v678 = vmax.f32 %v504, 0.0
  %v679 = vmax.f32 %v506, 0.0
  %v680 = vmax.f32 %v509, 0.0
  %v681 = vmax.f32 %v511, 0.0
  %v682 = vmax.f32 %v514, 0.0
  %v683 = vmax.f32 %v516, 0.0
  %v684 = vmax.f32 %v519, 0.0
  %v685 = vmax.f32 %v521, 0.0
  %v686 = vmax.f32 %v524, 0.0
  %v687 = vmax.f32 %v526, 0.0
  %v688 = vmax.f32 %v529, 0.0
  %v689 = vmax.f32 %v531, 0.0
  %v690 = vmax.f32 %v534, 0.0
  %v691 = vmax.f32 %v536, 0.0
  %v692 = vmax.f32 %v539, 0.0
  %v693 = vmax.f32 %v541, 0.0
  %v694 = vmax.f32 %v544, 0.0
  %v695 = vmax.f32 %v546, 0.0
  %v696 = vmax.f32 %v549, 0.0
  %v697 = vmax.f32 %v551, 0.0
  %v698 = vmax.f32 %v554, 0.0
  %v699 = vmax.f32 %v556, 0.0
  %v700 = vmax.f32 %v559, 0.0
  %v701 = vmax.f32 %v561, 0.0
  %v702 = vmax.f32 %v564, 0.0
  %v703 = vmax.f32 %v566, 0.0
  %v704 = vmax.f32 %v569, 0.0
  %v705 = vmax.f32 %v571, 0.0
  %v706 = vmax.f32 %v574, 0.0
  %v707 = vmax.f32 %v576, 0.0
  %v708 = vmax.f32 %v579, 0.0
  %v709 = vmax.f32 %v581, 0.0
  %v710 = vmax.f32 %v584, 0.0
  %v711 = vmax.f32 %v586, 0.0
  %v712 = vmax.f32 %v589, 0.0
  %v713 = vmax.f32 %v591, 0.0
  %v714 = vmax.f32 %v594, 0.0
  %v715 = vmax.f32 %v596, 0.0
  %v716 = vmax.f32 %v599, 0.0
  %v717 = vmax.f32 %v601, 0.0
  %v718 = vmax.f32 %v604, 0.0
  %v719 = vmax.f32 %v606, 0.0
  %v720 = vmax.f32 %v609, 0.0
  %v721 = vmax.f32 %v611, 0.0
  %v722 = vmax.f32 %v614, 0.0
  %v723 = vmax.f32 %v616, 0.0
  %v724 = vmax.f32 %v619, 0.0
  %v725 = vmax.f32 %v621, 0.0
  %v726 = vmax.f32 %v624, 0.0
  %v727 = vmax.f32 %v626, 0.0
  %v728 = vmax.f32 %v629, 0.0
  %v729 = vmax.f32 %v631, 0.0
  %v730 = vmax.f32 %v634, 0.0
  %v731 = vmax.f32 %v636, 0.0
  %v732 = vmax.f32 %v639, 0.0
  %v733 = vmax.f32 %v641, 0.0
  %v734 = vmax.f32 %v644, 0.0
  %v735 = vmax.f32 %v646, 0.0
  %v736 = vmax.f32 %v649, 0.0
  %v737 = vmax.f32 %v651, 0.0
  %v738 = vmax.f32 %v654, 0.0
  %v739 = vmax.f32 %v656, 0.0
  %v740 = vpack.c.bf16 %v658, %v658
  %v741 = vpack.c.bf16 %v659, %v659
  %v742 = vpack.c.bf16 %v660, %v660
  %v743 = vpack.c.bf16 %v661, %v661
  %v744 = vpack.c.bf16 %v662, %v662
  %v745 = vpack.c.bf16 %v663, %v663
  %v746 = vpack.c.bf16 %v664, %v664
  %v747 = vpack.c.bf16 %v665, %v665
  %v748 = vpack.c.bf16 %v666, %v666
  %v749 = vpack.c.bf16 %v667, %v667
  %v750 = vpack.c.bf16 %v668, %v668
  %v751 = vpack.c.bf16 %v669, %v669
  %v752 = vpack.c.bf16 %v670, %v670
  %v753 = vpack.c.bf16 %v671, %v671
  %v754 = vpack.c.bf16 %v672, %v672
  %v755 = vpack.c.bf16 %v673, %v673
  %v756 = vpack.c.bf16 %v674, %v674
  %v757 = vpack.c.bf16 %v675, %v675
  %v758 = vpack.c.bf16 %v676, %v676
  %v759 = vpack.c.bf16 %v677, %v677
  %v760 = vpack.c.bf16 %v678, %v678
  %v761 = vpack.c.bf16 %v679, %v679
  %v762 = vpack.c.bf16 %v680, %v680
  %v763 = vpack.c.bf16 %v681, %v681
  %v764 = vpack.c.bf16 %v682, %v682
  %v765 = vpack.c.bf16 %v683, %v683
  %v766 = vpack.c.bf16 %v684, %v684
  %v767 = vpack.c.bf16 %v685, %v685
  %v768 = vpack.c.bf16 %v686, %v686
  %v769 = vpack.c.bf16 %v687, %v687
  %v770 = vpack.c.bf16 %v688, %v688
  %v771 = vpack.c.bf16 %v689, %v689
  %v772 = vpack.c.bf16 %v690, %v690
  %v773 = vpack.c.bf16 %v691, %v691
  %v774 = vpack.c.bf16 %v692, %v692
  %v775 = vpack.c.bf16 %v693, %v693
  %v776 = vpack.c.bf16 %v694, %v694
  %v777 = vpack.c.bf16 %v695, %v695
  %v778 = vpack.c.bf16 %v696, %v696
  %v779 = vpack.c.bf16 %v697, %v697
  %v780 = vpack.c.bf16 %v698, %v698
  %v781 = vpack.c.bf16 %v699, %v699
  %v782 = vpack.c.bf16 %v700, %v700
  %v783 = vpack.c.bf16 %v701, %v701
  %v784 = vpack.c.bf16 %v702, %v702
  %v785 = vpack.c.bf16 %v703, %v703
  %v786 = vpack.c.bf16 %v704, %v704
  %v787 = vpack.c.bf16 %v705, %v705
  %v788 = vpack.c.bf16 %v706, %v706
  %v789 = vpack.c.bf16 %v707, %v707
  %v790 = vpack.c.bf16 %v708, %v708
  %v791 = vpack.c.bf16 %v709, %v709
  %v792 = vpack.c.bf16 %v710, %v710
  %v793 = vpack.c.bf16 %v711, %v711
  %v794 = vpack.c.bf16 %v712, %v712
  %v795 = vpack.c.bf16 %v713, %v713
  %v796 = vpack.c.bf16 %v714, %v714
  %v797 = vpack.c.bf16 %v715, %v715
  %v798 = vpack.c.bf16 %v716, %v716
  %v799 = vpack.c.bf16 %v717, %v717
  %v800 = vpack.c.bf16 %v718, %v718
  %v801 = vpack.c.bf16 %v719, %v719
  %v802 = vpack.c.bf16 %v720, %v720
  %v803 = vpack.c.bf16 %v721, %v721
  %v804 = vpack.c.bf16 %v722, %v722
  %v805 = vpack.c.bf16 %v723, %v723
  %v806 = vpack.c.bf16 %v724, %v724
  %v807 = vpack.c.bf16 %v725, %v725
  %v808 = vpack.c.bf16 %v726, %v726
  %v809 = vpack.c.bf16 %v727, %v727
  %v810 = vpack.c.bf16 %v728, %v728
  %v811 = vpack.c.bf16 %v729, %v729
  %v812 = vpack.c.bf16 %v730, %v730
  %v813 = vpack.c.bf16 %v731, %v731
  %v814 = vpack.c.bf16 %v732, %v732
  %v815 = vpack.c.bf16 %v733, %v733
  %v816 = vpack.c.bf16 %v734, %v734
  %v817 = vpack.c.bf16 %v735, %v735
  %v818 = vpack.c.bf16 %v736, %v736
  %v819 = vpack.c.bf16 %v737, %v737
  %v820 = vpack.c.bf16 %v738, %v738
  %v821 = vpack.c.bf16 %v739, %v739
  %822 = vst [vmem:[%s3] sm:$0xf] %v740
  %823 = vst [vmem:[%s3 + $0x4] sm:$0xf] %v741
  %824 = vst [vmem:[%s3 + $0x8] sm:$0xf] %v742
  %825 = vst [vmem:[%s3 + $0xc] sm:$0xf] %v743
  %826 = vst [vmem:[%s3 + $0x10] sm:$0xf] %v744
  %827 = vst [vmem:[%s3 + $0x14] sm:$0xf] %v745
  %828 = vst [vmem:[%s3 + $0x18] sm:$0xf] %v746
  %829 = vst [vmem:[%s3 + $0x1c] sm:$0xf] %v747
  %830 = vst [vmem:[%s3 + $0x20] sm:$0xf] %v748
  %831 = vst [vmem:[%s3 + $0x24] sm:$0xf] %v749
  %832 = vst [vmem:[%s3 + $0x28] sm:$0xf] %v750
  %833 = vst [vmem:[%s3 + $0x2c] sm:$0xf] %v751
  %834 = vst [vmem:[%s3 + $0x30] sm:$0xf] %v752
  %835 = vst [vmem:[%s3 + $0x34] sm:$0xf] %v753
  %836 = vst [vmem:[%s3 + $0x38] sm:$0xf] %v754
  %837 = vst [vmem:[%s3 + $0x3c] sm:$0xf] %v755
  %838 = vst [vmem:[%s3 + $0x40] sm:$0xf] %v756
  %839 = vst [vmem:[%s3 + $0x44] sm:$0xf] %v757
  %840 = vst [vmem:[%s3 + $0x48] sm:$0xf] %v758
  %841 = vst [vmem:[%s3 + $0x4c] sm:$0xf] %v759
  %842 = vst [vmem:[%s3 + $0x50] sm:$0xf] %v760
  %843 = vst [vmem:[%s3 + $0x54] sm:$0xf] %v761
  %844 = vst [vmem:[%s3 + $0x58] sm:$0xf] %v762
  %845 = vst [vmem:[%s3 + $0x5c] sm:$0xf] %v763
  %846 = vst [vmem:[%s3 + $0x60] sm:$0xf] %v764
  %847 = vst [vmem:[%s3 + $0x64] sm:$0xf] %v765
  %848 = vst [vmem:[%s3 + $0x68] sm:$0xf] %v766
  %849 = vst [vmem:[%s3 + $0x6c] sm:$0xf] %v767
  %850 = vst [vmem:[%s3 + $0x70] sm:$0xf] %v768
  %851 = vst [vmem:[%s3 + $0x74] sm:$0xf] %v769
  %852 = vst [vmem:[%s3 + $0x78] sm:$0xf] %v770
  %853 = vst [vmem:[%s3 + $0x7c] sm:$0xf] %v771
  %854 = vst [vmem:[%s3 + $0x80] sm:$0xf] %v772
  %855 = vst [vmem:[%s3 + $0x84] sm:$0xf] %v773
  %856 = vst [vmem:[%s3 + $0x88] sm:$0xf] %v774
  %857 = vst [vmem:[%s3 + $0x8c] sm:$0xf] %v775
  %858 = vst [vmem:[%s3 + $0x90] sm:$0xf] %v776
  %859 = vst [vmem:[%s3 + $0x94] sm:$0xf] %v777
  %860 = vst [vmem:[%s3 + $0x98] sm:$0xf] %v778
  %861 = vst [vmem:[%s3 + $0x9c] sm:$0xf] %v779
  %862 = vst [vmem:[%s3 + $0xa0] sm:$0xf] %v780
  %863 = vst [vmem:[%s3 + $0xa4] sm:$0xf] %v781
  %864 = vst [vmem:[%s3 + $0xa8] sm:$0xf] %v782
  %865 = vst [vmem:[%s3 + $0xac] sm:$0xf] %v783
  %866 = vst [vmem:[%s3 + $0xb0] sm:$0xf] %v784
  %867 = vst [vmem:[%s3 + $0xb4] sm:$0xf] %v785
  %868 = vst [vmem:[%s3 + $0xb8] sm:$0xf] %v786
  %869 = vst [vmem:[%s3 + $0xbc] sm:$0xf] %v787
  %870 = vst [vmem:[%s3 + $0xc0] sm:$0xf] %v788
  %871 = vst [vmem:[%s3 + $0xc4] sm:$0xf] %v789
  %872 = vst [vmem:[%s3 + $0xc8] sm:$0xf] %v790
  %873 = vst [vmem:[%s3 + $0xcc] sm:$0xf] %v791
  %874 = vst [vmem:[%s3 + $0xd0] sm:$0xf] %v792
  %875 = vst [vmem:[%s3 + $0xd4] sm:$0xf] %v793
  %876 = vst [vmem:[%s3 + $0xd8] sm:$0xf] %v794
  %877 = vst [vmem:[%s3 + $0xdc] sm:$0xf] %v795
  %878 = vst [vmem:[%s3 + $0xe0] sm:$0xf] %v796
  %879 = vst [vmem:[%s3 + $0xe4] sm:$0xf] %v797
  %880 = vst [vmem:[%s3 + $0xe8] sm:$0xf] %v798
  %881 = vst [vmem:[%s3 + $0xec] sm:$0xf] %v799
  %882 = vst [vmem:[%s3 + $0xf0] sm:$0xf] %v800
  %883 = vst [vmem:[%s3 + $0xf4] sm:$0xf] %v801
  %884 = vst [vmem:[%s3 + $0xf8] sm:$0xf] %v802
  %885 = vst [vmem:[%s3 + $0xfc] sm:$0xf] %v803
  %886 = vst [vmem:[%s3 + $0x100] sm:$0xf] %v804
  %887 = vst [vmem:[%s3 + $0x104] sm:$0xf] %v805
  %888 = vst [vmem:[%s3 + $0x108] sm:$0xf] %v806
  %889 = vst [vmem:[%s3 + $0x10c] sm:$0xf] %v807
  %890 = vst [vmem:[%s3 + $0x110] sm:$0xf] %v808
  %891 = vst [vmem:[%s3 + $0x114] sm:$0xf] %v809
  %892 = vst [vmem:[%s3 + $0x118] sm:$0xf] %v810
  %893 = vst [vmem:[%s3 + $0x11c] sm:$0xf] %v811
  %894 = vst [vmem:[%s3 + $0x120] sm:$0xf] %v812
  %895 = vst [vmem:[%s3 + $0x124] sm:$0xf] %v813
  %896 = vst [vmem:[%s3 + $0x128] sm:$0xf] %v814
  %897 = vst [vmem:[%s3 + $0x12c] sm:$0xf] %v815
  %898 = vst [vmem:[%s3 + $0x130] sm:$0xf] %v816
  %899 = vst [vmem:[%s3 + $0x134] sm:$0xf] %v817
  %900 = vst [vmem:[%s3 + $0x138] sm:$0xf] %v818
  %901 = vst [vmem:[%s3 + $0x13c] sm:$0xf] %v819
  %902 = vst [vmem:[%s3 + $0x140] sm:$0xf] %v820
  %903 = vst [vmem:[%s3 + $0x144] sm:$0xf] %v821
  // Predicated region
  $region14: #{forward.12} parent=0 // pred_check
    _
  $region15: #{forward.12} parent=0 // pred_check_branch
    %905 = sbr.rel (0) target = $region17
  $region16: #{forward.12} parent=0 // pred_region
    _
  $region17: #{forward.12} parent=0 // pred_fallthru
    _
  // Predicated region
  $region18: #{forward.12} parent=0 // pred_check
    _
  $region19: #{forward.12} parent=0 // pred_check_branch
    %907 = sbr.rel (0) target = $region21
  $region20: #{forward.12} parent=0 // pred_region
    _
  $region21: #{forward.12} parent=0 // pred_fallthru
    _

// kernel: forward.13
$region0: #{forward.13}
  #allocation0 [shape = 'u32[]', space=smem, size = 0x4, offset = 0x4, fixed_abs, tag = 'smem constant byte address 0x4 - core index']
  #allocation1 [shape = 'u32[72,128]{1,0:T(1,128)}', space=vmem, size = 0x9000, scoped, tag = 'internal scratch']
  %s0 = inlined_call_operand.vmem [shape: bf16[128,144], index: 0, kind: input, shape index: {}]
  %s1 = inlined_call_operand.vmem [shape: bf16[144,128], index: 1, kind: input, shape index: {}]
  %s2 = inlined_call_operand.vmem [shape: f32[1,128], index: 2, kind: input, shape index: {}]
  %s3 = inlined_call_operand.vmem [shape: bf16[128,128], index: 3, kind: output, shape index: {}]
  %s4 = sld [smem:[#allocation0]]
  $region22: #{forward.13} parent=0
    _
  %s6 = ssub.s32 1, %s4
  %s7 = scalar_select 0, %s6, %s4
  // Predicated region
  $region2: #{forward.13} parent=0 // pred_check
    _
  $region3: #{forward.13} parent=0 // pred_check_branch
    %9 = sbr.rel (0) target = $region5
  $region4: #{forward.13} parent=0 // pred_region
    _
  $region5: #{forward.13} parent=0 // pred_fallthru
    _
  // Predicated region
  $region6: #{forward.13} parent=0 // pred_check
    _
  $region7: #{forward.13} parent=0 // pred_check_branch
    %11 = sbr.rel (0) target = $region9
  $region8: #{forward.13} parent=0 // pred_region
    _
  $region9: #{forward.13} parent=0 // pred_fallthru
    _
  // Predicated region
  $region10: #{forward.13} parent=0 // pred_check
    _
  $region11: #{forward.13} parent=0 // pred_check_branch
    %13 = sbr.rel (0) target = $region13
  $region12: #{forward.13} parent=0 // pred_region
    _
  $region13: #{forward.13} parent=0 // pred_fallthru
    _
  %v15 = vld [vmem:[%s0] sm:$0xff]
  %v16 = vld [vmem:[%s0 + $0x8] sm:$0xff]
  %v17 = vld [vmem:[%s0 + $0x10] sm:$0xff]
  %v18 = vld [vmem:[%s0 + $0x18] sm:$0xff]
  %v19 = vld [vmem:[%s0 + $0x20] sm:$0xff]
  %v20 = vld [vmem:[%s0 + $0x28] sm:$0xff]
  %v21 = vld [vmem:[%s0 + $0x30] sm:$0xff]
  %v22 = vld [vmem:[%s0 + $0x38] sm:$0xff]
  %v23 = vld [vmem:[%s0 + $0x40] sm:$0xff]
  %v24 = vld [vmem:[%s0 + $0x48] sm:$0xff]
  %v25 = vld [vmem:[%s0 + $0x50] sm:$0xff]
  %v26 = vld [vmem:[%s0 + $0x58] sm:$0xff]
  %v27 = vld [vmem:[%s0 + $0x60] sm:$0xff]
  %v28 = vld [vmem:[%s0 + $0x68] sm:$0xff]
  %v29 = vld [vmem:[%s0 + $0x70] sm:$0xff]
  %v30 = vld [vmem:[%s0 + $0x78] sm:$0xff]
  %v31 = vld [vmem:[%s1] sm:$0xf]
  %v32 = vld [vmem:[%s1 + $0x4] sm:$0xf]
  %v33 = vld [vmem:[%s1 + $0x8] sm:$0xf]
  %v34 = vld [vmem:[%s1 + $0xc] sm:$0xf]
  %v35 = vld [vmem:[%s1 + $0x10] sm:$0xf]
  %v36 = vld [vmem:[%s1 + $0x14] sm:$0xf]
  %v37 = vld [vmem:[%s1 + $0x18] sm:$0xf]
  %v38 = vld [vmem:[%s1 + $0x1c] sm:$0xf]
  %v39 = vld [vmem:[%s1 + $0x20] sm:$0xf]
  %v40 = vld [vmem:[%s1 + $0x24] sm:$0xf]
  %v41 = vld [vmem:[%s1 + $0x28] sm:$0xf]
  %v42 = vld [vmem:[%s1 + $0x2c] sm:$0xf]
  %v43 = vld [vmem:[%s1 + $0x30] sm:$0xf]
  %v44 = vld [vmem:[%s1 + $0x34] sm:$0xf]
  %v45 = vld [vmem:[%s1 + $0x38] sm:$0xf]
  %v46 = vld [vmem:[%s1 + $0x3c] sm:$0xf]
  %v47 = vld [vmem:[%s1 + $0x40] sm:$0xf]
  %v48 = vld [vmem:[%s1 + $0x44] sm:$0xf]
  %v49 = vld [vmem:[%s2] sm:$0x1]
  %v51 = vperm.slane %v49, 0
  %v69 = vunpack.c.l.b16 %v15
  %v70 = vunpack.c.h.b16 %v15
  %v71 = vunpack.c.l.b16 %v16
  %v72 = vunpack.c.h.b16 %v16
  %v73 = vunpack.c.l.b16 %v17
  %v74 = vunpack.c.h.b16 %v17
  %v75 = vunpack.c.l.b16 %v18
  %v76 = vunpack.c.h.b16 %v18
  %v77 = vunpack.c.l.b16 %v19
  %v78 = vunpack.c.h.b16 %v19
  %v79 = vunpack.c.l.b16 %v20
  %v80 = vunpack.c.h.b16 %v20
  %v81 = vunpack.c.l.b16 %v21
  %v82 = vunpack.c.h.b16 %v21
  %v83 = vunpack.c.l.b16 %v22
  %v84 = vunpack.c.h.b16 %v22
  %v85 = vunpack.c.l.b16 %v23
  %v86 = vunpack.c.h.b16 %v23
  %v87 = vunpack.c.l.b16 %v24
  %v88 = vunpack.c.h.b16 %v24
  %v89 = vunpack.c.l.b16 %v25
  %v90 = vunpack.c.h.b16 %v25
  %v91 = vunpack.c.l.b16 %v26
  %v92 = vunpack.c.h.b16 %v26
  %v93 = vunpack.c.l.b16 %v27
  %v94 = vunpack.c.h.b16 %v27
  %v95 = vunpack.c.l.b16 %v28
  %v96 = vunpack.c.h.b16 %v28
  %v97 = vunpack.c.l.b16 %v29
  %v98 = vunpack.c.h.b16 %v29
  %v99 = vunpack.c.l.b16 %v30
  %v100 = vunpack.c.h.b16 %v30
  %v101 = vpack.c.b16 %v71, %v69
  %v102 = vpack.c.b16 %v72, %v70
  %v103 = vpack.c.b16 %v75, %v73
  %v104 = vpack.c.b16 %v76, %v74
  %v105 = vpack.c.b16 %v79, %v77
  %v106 = vpack.c.b16 %v80, %v78
  %v107 = vpack.c.b16 %v83, %v81
  %v108 = vpack.c.b16 %v84, %v82
  %v109 = vpack.c.b16 %v87, %v85
  %v110 = vpack.c.b16 %v88, %v86
  %v111 = vpack.c.b16 %v91, %v89
  %v112 = vpack.c.b16 %v92, %v90
  %v113 = vpack.c.b16 %v95, %v93
  %v114 = vpack.c.b16 %v96, %v94
  %v115 = vpack.c.b16 %v99, %v97
  %v116 = vpack.c.b16 %v100, %v98
  %v143 = vunpack.c.l.b16 %v31
  %v144 = vunpack.c.l.b16 %v32
  %v145 = vunpack.c.l.b16 %v33
  %v146 = vunpack.c.l.b16 %v34
  %v147 = vunpack.c.l.b16 %v35
  %v148 = vunpack.c.l.b16 %v36
  %v149 = vunpack.c.l.b16 %v37
  %v150 = vunpack.c.l.b16 %v38
  %v151 = vunpack.c.l.b16 %v39
  %v152 = vunpack.c.l.b16 %v40
  %v153 = vunpack.c.l.b16 %v41
  %v154 = vunpack.c.l.b16 %v42
  %v155 = vunpack.c.l.b16 %v43
  %v156 = vunpack.c.l.b16 %v44
  %v157 = vunpack.c.l.b16 %v45
  %v158 = vunpack.c.l.b16 %v46
  %v159 = vunpack.c.l.b16 %v47
  %v160 = vunpack.c.l.b16 %v48
  %v161 = vpack.c.b16 %v144, %v143
  %v162 = vpack.c.b16 %v146, %v145
  %v163 = vpack.c.b16 %v148, %v147
  %v164 = vpack.c.b16 %v150, %v149
  %v165 = vpack.c.b16 %v152, %v151
  %v166 = vpack.c.b16 %v154, %v153
  %v167 = vpack.c.b16 %v156, %v155
  %v168 = vpack.c.b16 %v158, %v157
  %v169 = vpack.c.b16 %v160, %v159
  %vm179 = vcmask 130048
  %v181 = vsel %vm179, %v102, 0
  %v184 = vsel %vm179, %v104, 0
  %v187 = vsel %vm179, %v106, 0
  %v190 = vsel %vm179, %v108, 0
  %v193 = vsel %vm179, %v110, 0
  %v196 = vsel %vm179, %v112, 0
  %v199 = vsel %vm179, %v114, 0
  %v202 = vsel %vm179, %v116, 0
  %204 = vmatpush.bf16.msra.mxu0 %v168
  %205 = vmatpush.bf16.msra.mxu0 %v167
  %206 = vmatpush.bf16.msra.mxu0 %v166
  %207 = vmatpush.bf16.msra.mxu0 %v165
  %208 = vmatpush.bf16.msra.mxu0 %v164
  %209 = vmatpush.bf16.msra.mxu0 %v163
  %210 = vmatpush.bf16.msra.mxu0 %v162
  %211 = vmatpush.bf16.msra.mxu0 %v161
  %212 = vmatmul.bf16.gmra.mxu0 %v101
  %v213 = vpop.f32.mrf.mxu0
  %v214 = vadd.f32 %v51, %v213
  %v215 = vpop.f32.mrf.mxu0
  %v216 = vadd.f32 %v51, %v215
  %217 = vmatmul.bf16.gmra.mxu0 %v103
  %v218 = vpop.f32.mrf.mxu0
  %v219 = vadd.f32 %v51, %v218
  %v220 = vpop.f32.mrf.mxu0
  %v221 = vadd.f32 %v51, %v220
  %222 = vmatmul.bf16.gmra.mxu0 %v105
  %v223 = vpop.f32.mrf.mxu0
  %v224 = vadd.f32 %v51, %v223
  %v225 = vpop.f32.mrf.mxu0
  %v226 = vadd.f32 %v51, %v225
  %227 = vmatmul.bf16.gmra.mxu0 %v107
  %v228 = vpop.f32.mrf.mxu0
  %v229 = vadd.f32 %v51, %v228
  %v230 = vpop.f32.mrf.mxu0
  %v231 = vadd.f32 %v51, %v230
  %232 = vmatmul.bf16.gmra.mxu0 %v109
  %v233 = vpop.f32.mrf.mxu0
  %v234 = vadd.f32 %v51, %v233
  %v235 = vpop.f32.mrf.mxu0
  %v236 = vadd.f32 %v51, %v235
  %237 = vmatmul.bf16.gmra.mxu0 %v111
  %v238 = vpop.f32.mrf.mxu0
  %v239 = vadd.f32 %v51, %v238
  %v240 = vpop.f32.mrf.mxu0
  %v241 = vadd.f32 %v51, %v240
  %242 = vmatmul.bf16.gmra.mxu0 %v113
  %v243 = vpop.f32.mrf.mxu0
  %v244 = vadd.f32 %v51, %v243
  %v245 = vpop.f32.mrf.mxu0
  %v246 = vadd.f32 %v51, %v245
  %247 = vmatmul.bf16.gmra.mxu0 %v115
  %v248 = vpop.f32.mrf.mxu0
  %v249 = vadd.f32 %v51, %v248
  %v250 = vpop.f32.mrf.mxu0
  %v251 = vadd.f32 %v51, %v250
  %252 = vdwg.mxu0
  %253 = vmatpush.bf16.msra.mxu0 0
  %254 = vmatpush.bf16.msra.mxu0 0
  %255 = vmatpush.bf16.msra.mxu0 0
  %256 = vmatpush.bf16.msra.mxu0 0
  %257 = vmatpush.bf16.msra.mxu0 0
  %258 = vmatpush.bf16.msra.mxu0 0
  %259 = vmatpush.bf16.msra.mxu0 0
  %260 = vmatpush.bf16.msra.mxu0 %v169
  %261 = vmatmul.bf16.gmra.mxu0 %v181
  %v262 = vpop.f32.mrf.mxu0
  %v263 = vadd.f32 %v214, %v262
  %v264 = vpop.f32.mrf.mxu0
  %v265 = vadd.f32 %v216, %v264
  %266 = vmatmul.bf16.gmra.mxu0 %v184
  %v267 = vpop.f32.mrf.mxu0
  %v268 = vadd.f32 %v219, %v267
  %v269 = vpop.f32.mrf.mxu0
  %v270 = vadd.f32 %v221, %v269
  %271 = vmatmul.bf16.gmra.mxu0 %v187
  %v272 = vpop.f32.mrf.mxu0
  %v273 = vadd.f32 %v224, %v272
  %v274 = vpop.f32.mrf.mxu0
  %v275 = vadd.f32 %v226, %v274
  %276 = vmatmul.bf16.gmra.mxu0 %v190
  %v277 = vpop.f32.mrf.mxu0
  %v278 = vadd.f32 %v229, %v277
  %v279 = vpop.f32.mrf.mxu0
  %v280 = vadd.f32 %v231, %v279
  %281 = vmatmul.bf16.gmra.mxu0 %v193
  %v282 = vpop.f32.mrf.mxu0
  %v283 = vadd.f32 %v234, %v282
  %v284 = vpop.f32.mrf.mxu0
  %v285 = vadd.f32 %v236, %v284
  %286 = vmatmul.bf16.gmra.mxu0 %v196
  %v287 = vpop.f32.mrf.mxu0
  %v288 = vadd.f32 %v239, %v287
  %v289 = vpop.f32.mrf.mxu0
  %v290 = vadd.f32 %v241, %v289
  %291 = vmatmul.bf16.gmra.mxu0 %v199
  %v292 = vpop.f32.mrf.mxu0
  %v293 = vadd.f32 %v244, %v292
  %v294 = vpop.f32.mrf.mxu0
  %v295 = vadd.f32 %v246, %v294
  %296 = vmatmul.bf16.gmra.mxu0 %v202
  %v297 = vpop.f32.mrf.mxu0
  %v298 = vadd.f32 %v249, %v297
  %v299 = vpop.f32.mrf.mxu0
  %v300 = vadd.f32 %v251, %v299
  %301 = vdwg.mxu0
  %v302 = vmax.f32 %v263, 0.0
  %v303 = vmax.f32 %v265, 0.0
  %v304 = vmax.f32 %v268, 0.0
  %v305 = vmax.f32 %v270, 0.0
  %v306 = vmax.f32 %v273, 0.0
  %v307 = vmax.f32 %v275, 0.0
  %v308 = vmax.f32 %v278, 0.0
  %v309 = vmax.f32 %v280, 0.0
  %v310 = vmax.f32 %v283, 0.0
  %v311 = vmax.f32 %v285, 0.0
  %v312 = vmax.f32 %v288, 0.0
  %v313 = vmax.f32 %v290, 0.0
  %v314 = vmax.f32 %v293, 0.0
  %v315 = vmax.f32 %v295, 0.0
  %v316 = vmax.f32 %v298, 0.0
  %v317 = vmax.f32 %v300, 0.0
  %v318 = vpack.c.bf16 %v302, %v302
  %v319 = vpack.c.bf16 %v303, %v303
  %v320 = vpack.c.bf16 %v304, %v304
  %v321 = vpack.c.bf16 %v305, %v305
  %v322 = vpack.c.bf16 %v306, %v306
  %v323 = vpack.c.bf16 %v307, %v307
  %v324 = vpack.c.bf16 %v308, %v308
  %v325 = vpack.c.bf16 %v309, %v309
  %v326 = vpack.c.bf16 %v310, %v310
  %v327 = vpack.c.bf16 %v311, %v311
  %v328 = vpack.c.bf16 %v312, %v312
  %v329 = vpack.c.bf16 %v313, %v313
  %v330 = vpack.c.bf16 %v314, %v314
  %v331 = vpack.c.bf16 %v315, %v315
  %v332 = vpack.c.bf16 %v316, %v316
  %v333 = vpack.c.bf16 %v317, %v317
  %334 = vst [vmem:[%s3] sm:$0xf] %v318
  %335 = vst [vmem:[%s3 + $0x4] sm:$0xf] %v319
  %336 = vst [vmem:[%s3 + $0x8] sm:$0xf] %v320
  %337 = vst [vmem:[%s3 + $0xc] sm:$0xf] %v321
  %338 = vst [vmem:[%s3 + $0x10] sm:$0xf] %v322
  %339 = vst [vmem:[%s3 + $0x14] sm:$0xf] %v323
  %340 = vst [vmem:[%s3 + $0x18] sm:$0xf] %v324
  %341 = vst [vmem:[%s3 + $0x1c] sm:$0xf] %v325
  %342 = vst [vmem:[%s3 + $0x20] sm:$0xf] %v326
  %343 = vst [vmem:[%s3 + $0x24] sm:$0xf] %v327
  %344 = vst [vmem:[%s3 + $0x28] sm:$0xf] %v328
  %345 = vst [vmem:[%s3 + $0x2c] sm:$0xf] %v329
  %346 = vst [vmem:[%s3 + $0x30] sm:$0xf] %v330
  %347 = vst [vmem:[%s3 + $0x34] sm:$0xf] %v331
  %348 = vst [vmem:[%s3 + $0x38] sm:$0xf] %v332
  %349 = vst [vmem:[%s3 + $0x3c] sm:$0xf] %v333
  // Predicated region
  $region14: #{forward.13} parent=0 // pred_check
    _
  $region15: #{forward.13} parent=0 // pred_check_branch
    %351 = sbr.rel (0) target = $region17
  $region16: #{forward.13} parent=0 // pred_region
    _
  $region17: #{forward.13} parent=0 // pred_fallthru
    _
  // Predicated region
  $region18: #{forward.13} parent=0 // pred_check
    _
  $region19: #{forward.13} parent=0 // pred_check_branch
    %353 = sbr.rel (0) target = $region21
  $region20: #{forward.13} parent=0 // pred_region
    _
  $region21: #{forward.13} parent=0 // pred_fallthru
    _

// kernel: forward.14
$region0: #{forward.14}
  #allocation0 [shape = 'u32[]', space=smem, size = 0x4, offset = 0x4, fixed_abs, tag = 'smem constant byte address 0x4 - core index']
  #allocation1 [shape = 'u32[72,128]{1,0:T(1,128)}', space=vmem, size = 0x9000, scoped, tag = 'internal scratch']
  %s0 = inlined_call_operand.vmem [shape: bf16[80,288], index: 0, kind: input, shape index: {}]
  %s1 = inlined_call_operand.vmem [shape: bf16[288,128], index: 1, kind: input, shape index: {}]
  %s2 = inlined_call_operand.vmem [shape: f32[1,128], index: 2, kind: input, shape index: {}]
  %s3 = inlined_call_operand.vmem [shape: bf16[80,128], index: 3, kind: output, shape index: {}]
  %s4 = sld [smem:[#allocation0]]
  $region22: #{forward.14} parent=0
    _
  %s6 = ssub.s32 1, %s4
  %s7 = scalar_select 0, %s6, %s4
  // Predicated region
  $region2: #{forward.14} parent=0 // pred_check
    _
  $region3: #{forward.14} parent=0 // pred_check_branch
    %9 = sbr.rel (0) target = $region5
  $region4: #{forward.14} parent=0 // pred_region
    _
  $region5: #{forward.14} parent=0 // pred_fallthru
    _
  // Predicated region
  $region6: #{forward.14} parent=0 // pred_check
    _
  $region7: #{forward.14} parent=0 // pred_check_branch
    %11 = sbr.rel (0) target = $region9
  $region8: #{forward.14} parent=0 // pred_region
    _
  $region9: #{forward.14} parent=0 // pred_fallthru
    _
  // Predicated region
  $region10: #{forward.14} parent=0 // pred_check
    _
  $region11: #{forward.14} parent=0 // pred_check_branch
    %13 = sbr.rel (0) target = $region13
  $region12: #{forward.14} parent=0 // pred_region
    _
  $region13: #{forward.14} parent=0 // pred_fallthru
    _
  %v15 = vld [vmem:[%s0] sm:$0xff]
  %v16 = vld [vmem:[%s0 + $0x8] sm:$0xf]
  %v17 = vld [vmem:[%s0 + $0xc] sm:$0xff]
  %v18 = vld [vmem:[%s0 + $0x14] sm:$0xf]
  %v19 = vld [vmem:[%s0 + $0x18] sm:$0xff]
  %v20 = vld [vmem:[%s0 + $0x20] sm:$0xf]
  %v21 = vld [vmem:[%s0 + $0x24] sm:$0xff]
  %v22 = vld [vmem:[%s0 + $0x2c] sm:$0xf]
  %v23 = vld [vmem:[%s0 + $0x30] sm:$0xff]
  %v24 = vld [vmem:[%s0 + $0x38] sm:$0xf]
  %v25 = vld [vmem:[%s0 + $0x3c] sm:$0xff]
  %v26 = vld [vmem:[%s0 + $0x44] sm:$0xf]
  %v27 = vld [vmem:[%s0 + $0x48] sm:$0xff]
  %v28 = vld [vmem:[%s0 + $0x50] sm:$0xf]
  %v29 = vld [vmem:[%s0 + $0x54] sm:$0xff]
  %v30 = vld [vmem:[%s0 + $0x5c] sm:$0xf]
  %v31 = vld [vmem:[%s0 + $0x60] sm:$0xff]
  %v32 = vld [vmem:[%s0 + $0x68] sm:$0xf]
  %v33 = vld [vmem:[%s0 + $0x6c] sm:$0xff]
  %v34 = vld [vmem:[%s0 + $0x74] sm:$0xf]
  %v35 = vld [vmem:[%s1] sm:$0xf]
  %v36 = vld [vmem:[%s1 + $0x4] sm:$0xf]
  %v37 = vld [vmem:[%s1 + $0x8] sm:$0xf]
  %v38 = vld [vmem:[%s1 + $0xc] sm:$0xf]
  %v39 = vld [vmem:[%s1 + $0x10] sm:$0xf]
  %v40 = vld [vmem:[%s1 + $0x14] sm:$0xf]
  %v41 = vld [vmem:[%s1 + $0x18] sm:$0xf]
  %v42 = vld [vmem:[%s1 + $0x1c] sm:$0xf]
  %v43 = vld [vmem:[%s1 + $0x20] sm:$0xf]
  %v44 = vld [vmem:[%s1 + $0x24] sm:$0xf]
  %v45 = vld [vmem:[%s1 + $0x28] sm:$0xf]
  %v46 = vld [vmem:[%s1 + $0x2c] sm:$0xf]
  %v47 = vld [vmem:[%s1 + $0x30] sm:$0xf]
  %v48 = vld [vmem:[%s1 + $0x34] sm:$0xf]
  %v49 = vld [vmem:[%s1 + $0x38] sm:$0xf]
  %v50 = vld [vmem:[%s1 + $0x3c] sm:$0xf]
  %v51 = vld [vmem:[%s1 + $0x40] sm:$0xf]
  %v52 = vld [vmem:[%s1 + $0x44] sm:$0xf]
  %v53 = vld [vmem:[%s1 + $0x48] sm:$0xf]
  %v54 = vld [vmem:[%s1 + $0x4c] sm:$0xf]
  %v55 = vld [vmem:[%s1 + $0x50] sm:$0xf]
  %v56 = vld [vmem:[%s1 + $0x54] sm:$0xf]
  %v57 = vld [vmem:[%s1 + $0x58] sm:$0xf]
  %v58 = vld [vmem:[%s1 + $0x5c] sm:$0xf]
  %v59 = vld [vmem:[%s1 + $0x60] sm:$0xf]
  %v60 = vld [vmem:[%s1 + $0x64] sm:$0xf]
  %v61 = vld [vmem:[%s1 + $0x68] sm:$0xf]
  %v62 = vld [vmem:[%s1 + $0x6c] sm:$0xf]
  %v63 = vld [vmem:[%s1 + $0x70] sm:$0xf]
  %v64 = vld [vmem:[%s1 + $0x74] sm:$0xf]
  %v65 = vld [vmem:[%s1 + $0x78] sm:$0xf]
  %v66 = vld [vmem:[%s1 + $0x7c] sm:$0xf]
  %v67 = vld [vmem:[%s1 + $0x80] sm:$0xf]
  %v68 = vld [vmem:[%s1 + $0x84] sm:$0xf]
  %v69 = vld [vmem:[%s1 + $0x88] sm:$0xf]
  %v70 = vld [vmem:[%s1 + $0x8c] sm:$0xf]
  %v71 = vld [vmem:[%s2] sm:$0x1]
  %v73 = vperm.slane %v71, 0
  %v95 = vunpack.c.l.b16 %v15
  %v96 = vunpack.c.h.b16 %v15
  %v97 = vunpack.c.l.b16 %v16
  %v98 = vunpack.c.l.b16 %v17
  %v99 = vunpack.c.h.b16 %v17
  %v100 = vunpack.c.l.b16 %v18
  %v101 = vunpack.c.l.b16 %v19
  %v102 = vunpack.c.h.b16 %v19
  %v103 = vunpack.c.l.b16 %v20
  %v104 = vunpack.c.l.b16 %v21
  %v105 = vunpack.c.h.b16 %v21
  %v106 = vunpack.c.l.b16 %v22
  %v107 = vunpack.c.l.b16 %v23
  %v108 = vunpack.c.h.b16 %v23
  %v109 = vunpack.c.l.b16 %v24
  %v110 = vunpack.c.l.b16 %v25
  %v111 = vunpack.c.h.b16 %v25
  %v112 = vunpack.c.l.b16 %v26
  %v113 = vunpack.c.l.b16 %v27
  %v114 = vunpack.c.h.b16 %v27
  %v115 = vunpack.c.l.b16 %v28
  %v116 = vunpack.c.l.b16 %v29
  %v117 = vunpack.c.h.b16 %v29
  %v118 = vunpack.c.l.b16 %v30
  %v119 = vunpack.c.l.b16 %v31
  %v120 = vunpack.c.h.b16 %v31
  %v121 = vunpack.c.l.b16 %v32
  %v122 = vunpack.c.l.b16 %v33
  %v123 = vunpack.c.h.b16 %v33
  %v124 = vunpack.c.l.b16 %v34
  %v125 = vpack.c.b16 %v98, %v95
  %v126 = vpack.c.b16 %v99, %v96
  %v127 = vpack.c.b16 %v100, %v97
  %v128 = vpack.c.b16 %v104, %v101
  %v129 = vpack.c.b16 %v105, %v102
  %v130 = vpack.c.b16 %v106, %v103
  %v131 = vpack.c.b16 %v110, %v107
  %v132 = vpack.c.b16 %v111, %v108
  %v133 = vpack.c.b16 %v112, %v109
  %v134 = vpack.c.b16 %v116, %v113
  %v135 = vpack.c.b16 %v117, %v114
  %v136 = vpack.c.b16 %v118, %v115
  %v137 = vpack.c.b16 %v122, %v119
  %v138 = vpack.c.b16 %v123, %v120
  %v139 = vpack.c.b16 %v124, %v121
  %v186 = vunpack.c.l.b16 %v35
  %v187 = vunpack.c.l.b16 %v36
  %v188 = vunpack.c.l.b16 %v37
  %v189 = vunpack.c.l.b16 %v38
  %v190 = vunpack.c.l.b16 %v39
  %v191 = vunpack.c.l.b16 %v40
  %v192 = vunpack.c.l.b16 %v41
  %v193 = vunpack.c.l.b16 %v42
  %v194 = vunpack.c.l.b16 %v43
  %v195 = vunpack.c.l.b16 %v44
  %v196 = vunpack.c.l.b16 %v45
  %v197 = vunpack.c.l.b16 %v46
  %v198 = vunpack.c.l.b16 %v47
  %v199 = vunpack.c.l.b16 %v48
  %v200 = vunpack.c.l.b16 %v49
  %v201 = vunpack.c.l.b16 %v50
  %v202 = vunpack.c.l.b16 %v51
  %v203 = vunpack.c.l.b16 %v52
  %v204 = vunpack.c.l.b16 %v53
  %v205 = vunpack.c.l.b16 %v54
  %v206 = vunpack.c.l.b16 %v55
  %v207 = vunpack.c.l.b16 %v56
  %v208 = vunpack.c.l.b16 %v57
  %v209 = vunpack.c.l.b16 %v58
  %v210 = vunpack.c.l.b16 %v59
  %v211 = vunpack.c.l.b16 %v60
  %v212 = vunpack.c.l.b16 %v61
  %v213 = vunpack.c.l.b16 %v62
  %v214 = vunpack.c.l.b16 %v63
  %v215 = vunpack.c.l.b16 %v64
  %v216 = vunpack.c.l.b16 %v65
  %v217 = vunpack.c.l.b16 %v66
  %v218 = vunpack.c.l.b16 %v67
  %v219 = vunpack.c.l.b16 %v68
  %v220 = vunpack.c.l.b16 %v69
  %v221 = vunpack.c.l.b16 %v70
  %v222 = vpack.c.b16 %v187, %v186
  %v223 = vpack.c.b16 %v189, %v188
  %v224 = vpack.c.b16 %v191, %v190
  %v225 = vpack.c.b16 %v193, %v192
  %v226 = vpack.c.b16 %v195, %v194
  %v227 = vpack.c.b16 %v197, %v196
  %v228 = vpack.c.b16 %v199, %v198
  %v229 = vpack.c.b16 %v201, %v200
  %v230 = vpack.c.b16 %v203, %v202
  %v231 = vpack.c.b16 %v205, %v204
  %v232 = vpack.c.b16 %v207, %v206
  %v233 = vpack.c.b16 %v209, %v208
  %v234 = vpack.c.b16 %v211, %v210
  %v235 = vpack.c.b16 %v213, %v212
  %v236 = vpack.c.b16 %v215, %v214
  %v237 = vpack.c.b16 %v217, %v216
  %v238 = vpack.c.b16 %v219, %v218
  %v239 = vpack.c.b16 %v221, %v220
  %vm258 = vcmask 261120
  %v260 = vsel %vm258, %v127, 0
  %v263 = vsel %vm258, %v130, 0
  %v266 = vsel %vm258, %v133, 0
  %v269 = vsel %vm258, %v136, 0
  %v272 = vsel %vm258, %v139, 0
  %274 = vmatpush.bf16.msra.mxu0 %v229
  %275 = vmatpush.bf16.msra.mxu0 %v228
  %276 = vmatpush.bf16.msra.mxu0 %v227
  %277 = vmatpush.bf16.msra.mxu0 %v226
  %278 = vmatpush.bf16.msra.mxu0 %v225
  %279 = vmatpush.bf16.msra.mxu0 %v224
  %280 = vmatpush.bf16.msra.mxu0 %v223
  %281 = vmatpush.bf16.msra.mxu0 %v222
  %282 = vmatmul.bf16.gmra.mxu0 %v125
  %v283 = vpop.f32.mrf.mxu0
  %v284 = vadd.f32 %v73, %v283
  %v285 = vpop.f32.mrf.mxu0
  %v286 = vadd.f32 %v73, %v285
  %287 = vmatmul.bf16.gmra.mxu0 %v128
  %v288 = vpop.f32.mrf.mxu0
  %v289 = vadd.f32 %v73, %v288
  %v290 = vpop.f32.mrf.mxu0
  %v291 = vadd.f32 %v73, %v290
  %292 = vmatmul.bf16.gmra.mxu0 %v131
  %v293 = vpop.f32.mrf.mxu0
  %v294 = vadd.f32 %v73, %v293
  %v295 = vpop.f32.mrf.mxu0
  %v296 = vadd.f32 %v73, %v295
  %297 = vmatmul.bf16.gmra.mxu0 %v134
  %v298 = vpop.f32.mrf.mxu0
  %v299 = vadd.f32 %v73, %v298
  %v300 = vpop.f32.mrf.mxu0
  %v301 = vadd.f32 %v73, %v300
  %302 = vmatmul.bf16.gmra.mxu0 %v137
  %v303 = vpop.f32.mrf.mxu0
  %v304 = vadd.f32 %v73, %v303
  %v305 = vpop.f32.mrf.mxu0
  %v306 = vadd.f32 %v73, %v305
  %307 = vdwg.mxu0
  %308 = vmatpush.bf16.msra.mxu0 %v237
  %309 = vmatpush.bf16.msra.mxu0 %v236
  %310 = vmatpush.bf16.msra.mxu0 %v235
  %311 = vmatpush.bf16.msra.mxu0 %v234
  %312 = vmatpush.bf16.msra.mxu0 %v233
  %313 = vmatpush.bf16.msra.mxu0 %v232
  %314 = vmatpush.bf16.msra.mxu0 %v231
  %315 = vmatpush.bf16.msra.mxu0 %v230
  %316 = vmatmul.bf16.gmra.mxu0 %v126
  %v317 = vpop.f32.mrf.mxu0
  %v318 = vadd.f32 %v284, %v317
  %v319 = vpop.f32.mrf.mxu0
  %v320 = vadd.f32 %v286, %v319
  %321 = vmatmul.bf16.gmra.mxu0 %v129
  %v322 = vpop.f32.mrf.mxu0
  %v323 = vadd.f32 %v289, %v322
  %v324 = vpop.f32.mrf.mxu0
  %v325 = vadd.f32 %v291, %v324
  %326 = vmatmul.bf16.gmra.mxu0 %v132
  %v327 = vpop.f32.mrf.mxu0
  %v328 = vadd.f32 %v294, %v327
  %v329 = vpop.f32.mrf.mxu0
  %v330 = vadd.f32 %v296, %v329
  %331 = vmatmul.bf16.gmra.mxu0 %v135
  %v332 = vpop.f32.mrf.mxu0
  %v333 = vadd.f32 %v299, %v332
  %v334 = vpop.f32.mrf.mxu0
  %v335 = vadd.f32 %v301, %v334
  %336 = vmatmul.bf16.gmra.mxu0 %v138
  %v337 = vpop.f32.mrf.mxu0
  %v338 = vadd.f32 %v304, %v337
  %v339 = vpop.f32.mrf.mxu0
  %v340 = vadd.f32 %v306, %v339
  %341 = vdwg.mxu0
  %342 = vmatpush.bf16.msra.mxu0 0
  %343 = vmatpush.bf16.msra.mxu0 0
  %344 = vmatpush.bf16.msra.mxu0 0
  %345 = vmatpush.bf16.msra.mxu0 0
  %346 = vmatpush.bf16.msra.mxu0 0
  %347 = vmatpush.bf16.msra.mxu0 0
  %348 = vmatpush.bf16.msra.mxu0 %v239
  %349 = vmatpush.bf16.msra.mxu0 %v238
  %350 = vmatmul.bf16.gmra.mxu0 %v260
  %v351 = vpop.f32.mrf.mxu0
  %v352 = vadd.f32 %v318, %v351
  %v353 = vpop.f32.mrf.mxu0
  %v354 = vadd.f32 %v320, %v353
  %355 = vmatmul.bf16.gmra.mxu0 %v263
  %v356 = vpop.f32.mrf.mxu0
  %v357 = vadd.f32 %v323, %v356
  %v358 = vpop.f32.mrf.mxu0
  %v359 = vadd.f32 %v325, %v358
  %360 = vmatmul.bf16.gmra.mxu0 %v266
  %v361 = vpop.f32.mrf.mxu0
  %v362 = vadd.f32 %v328, %v361
  %v363 = vpop.f32.mrf.mxu0
  %v364 = vadd.f32 %v330, %v363
  %365 = vmatmul.bf16.gmra.mxu0 %v269
  %v366 = vpop.f32.mrf.mxu0
  %v367 = vadd.f32 %v333, %v366
  %v368 = vpop.f32.mrf.mxu0
  %v369 = vadd.f32 %v335, %v368
  %370 = vmatmul.bf16.gmra.mxu0 %v272
  %v371 = vpop.f32.mrf.mxu0
  %v372 = vadd.f32 %v338, %v371
  %v373 = vpop.f32.mrf.mxu0
  %v374 = vadd.f32 %v340, %v373
  %375 = vdwg.mxu0
  %v376 = vmax.f32 %v352, 0.0
  %v377 = vmax.f32 %v354, 0.0
  %v378 = vmax.f32 %v357, 0.0
  %v379 = vmax.f32 %v359, 0.0
  %v380 = vmax.f32 %v362, 0.0
  %v381 = vmax.f32 %v364, 0.0
  %v382 = vmax.f32 %v367, 0.0
  %v383 = vmax.f32 %v369, 0.0
  %v384 = vmax.f32 %v372, 0.0
  %v385 = vmax.f32 %v374, 0.0
  %v386 = vpack.c.bf16 %v376, %v376
  %v387 = vpack.c.bf16 %v377, %v377
  %v388 = vpack.c.bf16 %v378, %v378
  %v389 = vpack.c.bf16 %v379, %v379
  %v390 = vpack.c.bf16 %v380, %v380
  %v391 = vpack.c.bf16 %v381, %v381
  %v392 = vpack.c.bf16 %v382, %v382
  %v393 = vpack.c.bf16 %v383, %v383
  %v394 = vpack.c.bf16 %v384, %v384
  %v395 = vpack.c.bf16 %v385, %v385
  %396 = vst [vmem:[%s3] sm:$0xf] %v386
  %397 = vst [vmem:[%s3 + $0x4] sm:$0xf] %v387
  %398 = vst [vmem:[%s3 + $0x8] sm:$0xf] %v388
  %399 = vst [vmem:[%s3 + $0xc] sm:$0xf] %v389
  %400 = vst [vmem:[%s3 + $0x10] sm:$0xf] %v390
  %401 = vst [vmem:[%s3 + $0x14] sm:$0xf] %v391
  %402 = vst [vmem:[%s3 + $0x18] sm:$0xf] %v392
  %403 = vst [vmem:[%s3 + $0x1c] sm:$0xf] %v393
  %404 = vst [vmem:[%s3 + $0x20] sm:$0xf] %v394
  %405 = vst [vmem:[%s3 + $0x24] sm:$0xf] %v395
  // Predicated region
  $region14: #{forward.14} parent=0 // pred_check
    _
  $region15: #{forward.14} parent=0 // pred_check_branch
    %407 = sbr.rel (0) target = $region17
  $region16: #{forward.14} parent=0 // pred_region
    _
  $region17: #{forward.14} parent=0 // pred_fallthru
    _
  // Predicated region
  $region18: #{forward.14} parent=0 // pred_check
    _
  $region19: #{forward.14} parent=0 // pred_check_branch
    %409 = sbr.rel (0) target = $region21
  $region20: #{forward.14} parent=0 // pred_region
    _
  $region21: #{forward.14} parent=0 // pred_fallthru
    _

// kernel: forward.17
$region0: #{forward.17}
  #allocation0 [shape = 'u32[]', space=smem, size = 0x4, offset = 0x4, fixed_abs, tag = 'smem constant byte address 0x4 - core index']
  #allocation1 [shape = 'u32[72,128]{1,0:T(1,128)}', space=vmem, size = 0x9000, scoped, tag = 'internal scratch']
  %s0 = inlined_call_operand.vmem [shape: bf16[2,256], index: 0, kind: input, shape index: {}]
  %s1 = inlined_call_operand.vmem [shape: bf16[2,256,8], index: 1, kind: input, shape index: {}]
  %s2 = inlined_call_operand.vmem [shape: f32[2,1,8], index: 2, kind: input, shape index: {}]
  %s3 = inlined_call_operand.vmem [shape: f32[2,8], index: 3, kind: input, shape index: {}]
  %s4 = inlined_call_operand.hbm [shape: f32[2,8], index: 4, kind: output, shape index: {0}]
  %s5 = inlined_call_operand.hbm [shape: f32[2,8], index: 5, kind: output, shape index: {1}]
  %s6 = inlined_call_operand.vmem [shape: f32[2,8], index: 6, kind: output, shape index: {2}]
  %7 = xla_tuple %s4, %s5, %s6
  %s8 = sld [smem:[#allocation0]]
  $region42: #{forward.17} parent=0
    _
  %s10 = ssub.s32 1, %s8
  %s11 = scalar_select 0, %s10, %s8
  $region1: #{forward.17} parent=0
    #allocation2 [shape = 'u8[1024]{0}', space=vmem, size = 0x400, scoped, tag = 'output window, operand 0, single buffered']
    #allocation3 [shape = 's32[1]{0}', space=sflag, size = 0x4, scoped, tag = 'scoped memory for forward.17']
    #allocation4 [shape = 'u8[1024]{0}', space=vmem, size = 0x400, scoped, tag = 'output window, operand 1, single buffered']
    #allocation5 [shape = 's32[1]{0}', space=sflag, size = 0x4, scoped, tag = 'scoped memory for forward.17']
    %12 = vsyncpa [#allocation3], 0
    %13 = vsyncpa [#allocation5], 0
    // Predicated region
    $region2: #{forward.17} parent=1 // pred_check
      _
    $region3: #{forward.17} parent=1 // pred_check_branch
      %15 = sbr.rel (0) target = $region5
    $region4: #{forward.17} parent=1 // pred_region
      _
    $region5: #{forward.17} parent=1 // pred_fallthru
      _
    // Predicated region
    $region6: #{forward.17} parent=1 // pred_check
      _
    $region7: #{forward.17} parent=1 // pred_check_branch
      %17 = sbr.rel (0) target = $region9
    $region8: #{forward.17} parent=1 // pred_region
      _
    $region9: #{forward.17} parent=1 // pred_fallthru
      _
    // Predicated region
    $region10: #{forward.17} parent=1 // pred_check
      _
    $region11: #{forward.17} parent=1 // pred_check_branch
      %19 = sbr.rel (0) target = $region13
    $region12: #{forward.17} parent=1 // pred_region
      _
    $region13: #{forward.17} parent=1 // pred_fallthru
      _
    // Predicated region
    $region14: #{forward.17} parent=1 // pred_check
      _
    $region15: #{forward.17} parent=1 // pred_check_branch
      %21 = sbr.rel (0) target = $region17
    $region16: #{forward.17} parent=1 // pred_region
      _
    $region17: #{forward.17} parent=1 // pred_fallthru
      _
    %v22 = vld [vmem:[%s0] sm:$0x3]
    %v23 = vld [vmem:[%s1] sm:$0xf]
    %v24 = vld [vmem:[%s1 + $0x4] sm:$0xf]
    %v25 = vld [vmem:[%s1 + $0x8] sm:$0xf]
    %v26 = vld [vmem:[%s1 + $0xc] sm:$0xf]
    %v27 = vld [vmem:[%s1 + $0x10] sm:$0xf]
    %v28 = vld [vmem:[%s1 + $0x14] sm:$0xf]
    %v29 = vld [vmem:[%s1 + $0x18] sm:$0xf]
    %v30 = vld [vmem:[%s1 + $0x1c] sm:$0xf]
    %v31 = vld [vmem:[%s1 + $0x20] sm:$0xf]
    %v32 = vld [vmem:[%s1 + $0x24] sm:$0xf]
    %v33 = vld [vmem:[%s1 + $0x28] sm:$0xf]
    %v34 = vld [vmem:[%s1 + $0x2c] sm:$0xf]
    %v35 = vld [vmem:[%s1 + $0x30] sm:$0xf]
    %v36 = vld [vmem:[%s1 + $0x34] sm:$0xf]
    %v37 = vld [vmem:[%s1 + $0x38] sm:$0xf]
    %v38 = vld [vmem:[%s1 + $0x3c] sm:$0xf]
    %v39 = vld [vmem:[%s1 + $0x40] sm:$0xf]
    %v40 = vld [vmem:[%s1 + $0x44] sm:$0xf]
    %v41 = vld [vmem:[%s1 + $0x48] sm:$0xf]
    %v42 = vld [vmem:[%s1 + $0x4c] sm:$0xf]
    %v43 = vld [vmem:[%s1 + $0x50] sm:$0xf]
    %v44 = vld [vmem:[%s1 + $0x54] sm:$0xf]
    %v45 = vld [vmem:[%s1 + $0x58] sm:$0xf]
    %v46 = vld [vmem:[%s1 + $0x5c] sm:$0xf]
    %v47 = vld [vmem:[%s1 + $0x60] sm:$0xf]
    %v48 = vld [vmem:[%s1 + $0x64] sm:$0xf]
    %v49 = vld [vmem:[%s1 + $0x68] sm:$0xf]
    %v50 = vld [vmem:[%s1 + $0x6c] sm:$0xf]
    %v51 = vld [vmem:[%s1 + $0x70] sm:$0xf]
    %v52 = vld [vmem:[%s1 + $0x74] sm:$0xf]
    %v53 = vld [vmem:[%s1 + $0x78] sm:$0xf]
    %v54 = vld [vmem:[%s1 + $0x7c] sm:$0xf]
    %v55 = vld [vmem:[%s2] sm:$0x1]
    %v57 = vperm.slane %v55, 0
    %60 = vst [vmem:[#allocation1] ss:$9 sm:$0xff] %v22
    %v61 = vld [vmem:[#allocation1] sm:$0xff]
    %v62 = vld [vmem:[#allocation1 + $0x9] sm:$0xff]
    %v97 = vunpack.c.l.b16 %v23
    %v98 = vunpack.c.l.b16 %v24
    %v99 = vunpack.c.l.b16 %v25
    %v100 = vunpack.c.l.b16 %v26
    %v101 = vunpack.c.l.b16 %v27
    %v102 = vunpack.c.l.b16 %v28
    %v103 = vunpack.c.l.b16 %v29
    %v104 = vunpack.c.l.b16 %v30
    %v105 = vunpack.c.l.b16 %v31
    %v106 = vunpack.c.l.b16 %v32
    %v107 = vunpack.c.l.b16 %v33
    %v108 = vunpack.c.l.b16 %v34
    %v109 = vunpack.c.l.b16 %v35
    %v110 = vunpack.c.l.b16 %v36
    %v111 = vunpack.c.l.b16 %v37
    %v112 = vunpack.c.l.b16 %v38
    %v113 = vunpack.c.l.b16 %v39
    %v114 = vunpack.c.l.b16 %v40
    %v115 = vunpack.c.l.b16 %v41
    %v116 = vunpack.c.l.b16 %v42
    %v117 = vunpack.c.l.b16 %v43
    %v118 = vunpack.c.l.b16 %v44
    %v119 = vunpack.c.l.b16 %v45
    %v120 = vunpack.c.l.b16 %v46
    %v121 = vunpack.c.l.b16 %v47
    %v122 = vunpack.c.l.b16 %v48
    %v123 = vunpack.c.l.b16 %v49
    %v124 = vunpack.c.l.b16 %v50
    %v125 = vunpack.c.l.b16 %v51
    %v126 = vunpack.c.l.b16 %v52
    %v127 = vunpack.c.l.b16 %v53
    %v128 = vunpack.c.l.b16 %v54
    %v129 = vpack.c.b16 %v98, %v97
    %v130 = vpack.c.b16 %v100, %v99
    %v131 = vpack.c.b16 %v102, %v101
    %v132 = vpack.c.b16 %v104, %v103
    %v133 = vpack.c.b16 %v106, %v105
    %v134 = vpack.c.b16 %v108, %v107
    %v135 = vpack.c.b16 %v110, %v109
    %v136 = vpack.c.b16 %v112, %v111
    %v137 = vpack.c.b16 %v114, %v113
    %v138 = vpack.c.b16 %v116, %v115
    %v139 = vpack.c.b16 %v118, %v117
    %v140 = vpack.c.b16 %v120, %v119
    %v141 = vpack.c.b16 %v122, %v121
    %v142 = vpack.c.b16 %v124, %v123
    %v143 = vpack.c.b16 %v126, %v125
    %v144 = vpack.c.b16 %v128, %v127
    %161 = vmatpush.bf16.msra.mxu0 %v136
    %162 = vmatpush.bf16.msra.mxu0 %v135
    %163 = vmatpush.bf16.msra.mxu0 %v134
    %164 = vmatpush.bf16.msra.mxu0 %v133
    %165 = vmatpush.bf16.msra.mxu0 %v132
    %166 = vmatpush.bf16.msra.mxu0 %v131
    %167 = vmatpush.bf16.msra.mxu0 %v130
    %168 = vmatpush.bf16.msra.mxu0 %v129
    %169 = vmatmul.bf16.gmra.mxu0 %v61
    %v170 = vpop.f32.mrf.mxu0
    %v171 = vadd.f32 %v57, %v170
    %v172 = vpop.f32.mrf.mxu0
    %173 = vdwg.mxu0
    %174 = vmatpush.bf16.msra.mxu0 %v144
    %175 = vmatpush.bf16.msra.mxu0 %v143
    %176 = vmatpush.bf16.msra.mxu0 %v142
    %177 = vmatpush.bf16.msra.mxu0 %v141
    %178 = vmatpush.bf16.msra.mxu0 %v140
    %179 = vmatpush.bf16.msra.mxu0 %v139
    %180 = vmatpush.bf16.msra.mxu0 %v138
    %181 = vmatpush.bf16.msra.mxu0 %v137
    %182 = vmatmul.bf16.gmra.mxu0 %v62
    %v183 = vpop.f32.mrf.mxu0
    %v184 = vadd.f32 %v171, %v183
    %v185 = vpop.f32.mrf.mxu0
    %186 = vdwg.mxu0
    %s187 = scalar_lea.vmem %s1, 128
    %v188 = vld [vmem:[%s187] sm:$0xf]
    %v189 = vld [vmem:[%s187 + $0x4] sm:$0xf]
    %v190 = vld [vmem:[%s187 + $0x8] sm:$0xf]
    %v191 = vld [vmem:[%s187 + $0xc] sm:$0xf]
    %v192 = vld [vmem:[%s187 + $0x10] sm:$0xf]
    %v193 = vld [vmem:[%s187 + $0x14] sm:$0xf]
    %v194 = vld [vmem:[%s187 + $0x18] sm:$0xf]
    %v195 = vld [vmem:[%s187 + $0x1c] sm:$0xf]
    %v196 = vld [vmem:[%s187 + $0x20] sm:$0xf]
    %v197 = vld [vmem:[%s187 + $0x24] sm:$0xf]
    %v198 = vld [vmem:[%s187 + $0x28] sm:$0xf]
    %v199 = vld [vmem:[%s187 + $0x2c] sm:$0xf]
    %v200 = vld [vmem:[%s187 + $0x30] sm:$0xf]
    %v201 = vld [vmem:[%s187 + $0x34] sm:$0xf]
    %v202 = vld [vmem:[%s187 + $0x38] sm:$0xf]
    %v203 = vld [vmem:[%s187 + $0x3c] sm:$0xf]
    %v204 = vld [vmem:[%s187 + $0x40] sm:$0xf]
    %v205 = vld [vmem:[%s187 + $0x44] sm:$0xf]
    %v206 = vld [vmem:[%s187 + $0x48] sm:$0xf]
    %v207 = vld [vmem:[%s187 + $0x4c] sm:$0xf]
    %v208 = vld [vmem:[%s187 + $0x50] sm:$0xf]
    %v209 = vld [vmem:[%s187 + $0x54] sm:$0xf]
    %v210 = vld [vmem:[%s187 + $0x58] sm:$0xf]
    %v211 = vld [vmem:[%s187 + $0x5c] sm:$0xf]
    %v212 = vld [vmem:[%s187 + $0x60] sm:$0xf]
    %v213 = vld [vmem:[%s187 + $0x64] sm:$0xf]
    %v214 = vld [vmem:[%s187 + $0x68] sm:$0xf]
    %v215 = vld [vmem:[%s187 + $0x6c] sm:$0xf]
    %v216 = vld [vmem:[%s187 + $0x70] sm:$0xf]
    %v217 = vld [vmem:[%s187 + $0x74] sm:$0xf]
    %v218 = vld [vmem:[%s187 + $0x78] sm:$0xf]
    %v219 = vld [vmem:[%s187 + $0x7c] sm:$0xf]
    %s220 = scalar_lea.vmem %s2, 1
    %v221 = vld [vmem:[%s220] sm:$0x1]
    %v223 = vperm.slane %v221, 0
    %225 = vst [vmem:[#allocation1] ss:$9 sm:$0xff] %v22
    %v226 = vld [vmem:[#allocation1] sm:$0xff]
    %v227 = vld [vmem:[#allocation1 + $0x9] sm:$0xff]
    %v262 = vunpack.c.l.b16 %v188
    %v263 = vunpack.c.l.b16 %v189
    %v264 = vunpack.c.l.b16 %v190
    %v265 = vunpack.c.l.b16 %v191
    %v266 = vunpack.c.l.b16 %v192
    %v267 = vunpack.c.l.b16 %v193
    %v268 = vunpack.c.l.b16 %v194
    %v269 = vunpack.c.l.b16 %v195
    %v270 = vunpack.c.l.b16 %v196
    %v271 = vunpack.c.l.b16 %v197
    %v272 = vunpack.c.l.b16 %v198
    %v273 = vunpack.c.l.b16 %v199
    %v274 = vunpack.c.l.b16 %v200
    %v275 = vunpack.c.l.b16 %v201
    %v276 = vunpack.c.l.b16 %v202
    %v277 = vunpack.c.l.b16 %v203
    %v278 = vunpack.c.l.b16 %v204
    %v279 = vunpack.c.l.b16 %v205
    %v280 = vunpack.c.l.b16 %v206
    %v281 = vunpack.c.l.b16 %v207
    %v282 = vunpack.c.l.b16 %v208
    %v283 = vunpack.c.l.b16 %v209
    %v284 = vunpack.c.l.b16 %v210
    %v285 = vunpack.c.l.b16 %v211
    %v286 = vunpack.c.l.b16 %v212
    %v287 = vunpack.c.l.b16 %v213
    %v288 = vunpack.c.l.b16 %v214
    %v289 = vunpack.c.l.b16 %v215
    %v290 = vunpack.c.l.b16 %v216
    %v291 = vunpack.c.l.b16 %v217
    %v292 = vunpack.c.l.b16 %v218
    %v293 = vunpack.c.l.b16 %v219
    %v294 = vpack.c.b16 %v263, %v262
    %v295 = vpack.c.b16 %v265, %v264
    %v296 = vpack.c.b16 %v267, %v266
    %v297 = vpack.c.b16 %v269, %v268
    %v298 = vpack.c.b16 %v271, %v270
    %v299 = vpack.c.b16 %v273, %v272
    %v300 = vpack.c.b16 %v275, %v274
    %v301 = vpack.c.b16 %v277, %v276
    %v302 = vpack.c.b16 %v279, %v278
    %v303 = vpack.c.b16 %v281, %v280
    %v304 = vpack.c.b16 %v283, %v282
    %v305 = vpack.c.b16 %v285, %v284
    %v306 = vpack.c.b16 %v287, %v286
    %v307 = vpack.c.b16 %v289, %v288
    %v308 = vpack.c.b16 %v291, %v290
    %v309 = vpack.c.b16 %v293, %v292
    %326 = vmatpush.bf16.msra.mxu0 %v301
    %327 = vmatpush.bf16.msra.mxu0 %v300
    %328 = vmatpush.bf16.msra.mxu0 %v299
    %329 = vmatpush.bf16.msra.mxu0 %v298
    %330 = vmatpush.bf16.msra.mxu0 %v297
    %331 = vmatpush.bf16.msra.mxu0 %v296
    %332 = vmatpush.bf16.msra.mxu0 %v295
    %333 = vmatpush.bf16.msra.mxu0 %v294
    %334 = vmatmul.bf16.gmra.mxu0 %v226
    %v335 = vpop.f32.mrf.mxu0
    %v336 = vadd.f32 %v223, %v335
    %v337 = vpop.f32.mrf.mxu0
    %338 = vdwg.mxu0
    %339 = vmatpush.bf16.msra.mxu0 %v309
    %340 = vmatpush.bf16.msra.mxu0 %v308
    %341 = vmatpush.bf16.msra.mxu0 %v307
    %342 = vmatpush.bf16.msra.mxu0 %v306
    %343 = vmatpush.bf16.msra.mxu0 %v305
    %344 = vmatpush.bf16.msra.mxu0 %v304
    %345 = vmatpush.bf16.msra.mxu0 %v303
    %346 = vmatpush.bf16.msra.mxu0 %v302
    %347 = vmatmul.bf16.gmra.mxu0 %v227
    %v348 = vpop.f32.mrf.mxu0
    %v349 = vadd.f32 %v336, %v348
    %v350 = vpop.f32.mrf.mxu0
    %351 = vdwg.mxu0
    %vm352 = vcmask 58368
    %353 = vst.msk [vmem:[#allocation2] sm:$0x3] %vm352, %v184
    %354 = vst.msk [vmem:[#allocation4] sm:$0x3] %vm352, %v349
    %v355 = vld [vmem:[%s3] sm:$0x3]
    %v356 = vmul.f32 %v349, 0.5
    %v357 = vmul.f32 %v356, 1.442695
    %v358 = vpow.pop %v357
    %v359 = vmul.f32 %v355, %v358
    %v360 = vadd.f32 %v184, %v359
    %361 = vst.msk [vmem:[%s6] sm:$0x3] %vm352, %v360
    // Predicated region
    $region18: #{forward.17} parent=1 // pred_check
      _
    $region19: #{forward.17} parent=1 // pred_check_branch
      %363 = sbr.rel (0) target = $region21
    $region20: #{forward.17} parent=1 // pred_region
      %365 = vsyncadd [#allocation3], 0
      %s367 = sshll.u32 [#allocation2], 4
      %s368 = int_to_ptr.vmem [resolvable:$true] %s367
      %s369 = sshll.u32 %s4, 4
      %s370 = int_to_ptr.hbm [resolvable:$true] %s369
      %372 = dma.vmem_to_hbm [thread:$0]  %s368, 32, %s370, [#allocation3]
    $region21: #{forward.17} parent=1 // pred_fallthru
      _
    // Predicated region
    $region22: #{forward.17} parent=1 // pred_check
      _
    $region23: #{forward.17} parent=1 // pred_check_branch
      %374 = sbr.rel (0) target = $region25
    $region24: #{forward.17} parent=1 // pred_region
      %376 = vsyncadd [#allocation5], 0
      %s378 = sshll.u32 [#allocation4], 4
      %s379 = int_to_ptr.vmem [resolvable:$true] %s378
      %s380 = sshll.u32 %s5, 4
      %s381 = int_to_ptr.hbm [resolvable:$true] %s380
      %383 = dma.vmem_to_hbm [thread:$0]  %s379, 32, %s381, [#allocation5]
    $region25: #{forward.17} parent=1 // pred_fallthru
      _
    // Predicated region
    $region26: #{forward.17} parent=1 // pred_check
      _
    $region27: #{forward.17} parent=1 // pred_check_branch
      %385 = sbr.rel (0) target = $region29
    $region28: #{forward.17} parent=1 // pred_region
      _
    $region29: #{forward.17} parent=1 // pred_fallthru
      _
    // Predicated region
    $region30: #{forward.17} parent=1 // pred_check
      _
    $region31: #{forward.17} parent=1 // pred_check_branch
      %387 = sbr.rel (0) target = $region33
    $region32: #{forward.17} parent=1 // pred_region
      %389 = dma.done [#allocation3], 32
    $region33: #{forward.17} parent=1 // pred_fallthru
      _
    // Predicated region
    $region34: #{forward.17} parent=1 // pred_check
      _
    $region35: #{forward.17} parent=1 // pred_check_branch
      %391 = sbr.rel (0) target = $region37
    $region36: #{forward.17} parent=1 // pred_region
      %393 = dma.done [#allocation5], 32
    $region37: #{forward.17} parent=1 // pred_fallthru
      _
    // Predicated region
    $region38: #{forward.17} parent=1 // pred_check
      _
    $region39: #{forward.17} parent=1 // pred_check_branch
      %395 = sbr.rel (0) target = $region41
    $region40: #{forward.17} parent=1 // pred_region
      _
    $region41: #{forward.17} parent=1 // pred_fallthru
      _
    %396 = vsyncpa [#allocation3], 1
    %397 = vsyncpa [#allocation5], 1

// kernel: forward.15
$region0: #{forward.15}
  #allocation0 [shape = 'u32[]', space=smem, size = 0x4, offset = 0x4, fixed_abs, tag = 'smem constant byte address 0x4 - core index']
  #allocation1 [shape = 'u32[72,128]{1,0:T(1,128)}', space=vmem, size = 0x9000, scoped, tag = 'internal scratch']
  %s0 = inlined_call_operand.vmem [shape: bf16[16,640], index: 0, kind: input, shape index: {}]
  %s1 = inlined_call_operand.vmem [shape: bf16[640,128], index: 1, kind: input, shape index: {}]
  %s2 = inlined_call_operand.vmem [shape: f32[1,128], index: 2, kind: input, shape index: {}]
  %s3 = inlined_call_operand.vmem [shape: bf16[16,128], index: 3, kind: output, shape index: {}]
  %s4 = sld [smem:[#allocation0]]
  $region22: #{forward.15} parent=0
    _
  %s6 = ssub.s32 1, %s4
  %s7 = scalar_select 0, %s6, %s4
  // Predicated region
  $region2: #{forward.15} parent=0 // pred_check
    _
  $region3: #{forward.15} parent=0 // pred_check_branch
    %9 = sbr.rel (0) target = $region5
  $region4: #{forward.15} parent=0 // pred_region
    _
  $region5: #{forward.15} parent=0 // pred_fallthru
    _
  // Predicated region
  $region6: #{forward.15} parent=0 // pred_check
    _
  $region7: #{forward.15} parent=0 // pred_check_branch
    %11 = sbr.rel (0) target = $region9
  $region8: #{forward.15} parent=0 // pred_region
    _
  $region9: #{forward.15} parent=0 // pred_fallthru
    _
  // Predicated region
  $region10: #{forward.15} parent=0 // pred_check
    _
  $region11: #{forward.15} parent=0 // pred_check_branch
    %13 = sbr.rel (0) target = $region13
  $region12: #{forward.15} parent=0 // pred_region
    _
  $region13: #{forward.15} parent=0 // pred_fallthru
    _
  %v14 = vld [vmem:[%s0] sm:$0xff]
  %v15 = vld [vmem:[%s0 + $0x8] sm:$0xff]
  %v16 = vld [vmem:[%s0 + $0x10] sm:$0xf]
  %v17 = vld [vmem:[%s0 + $0x14] sm:$0xff]
  %v18 = vld [vmem:[%s0 + $0x1c] sm:$0xff]
  %v19 = vld [vmem:[%s0 + $0x24] sm:$0xf]
  %v20 = vld [vmem:[%s1] sm:$0xf]
  %v21 = vld [vmem:[%s1 + $0x4] sm:$0xf]
  %v22 = vld [vmem:[%s1 + $0x8] sm:$0xf]
  %v23 = vld [vmem:[%s1 + $0xc] sm:$0xf]
  %v24 = vld [vmem:[%s1 + $0x10] sm:$0xf]
  %v25 = vld [vmem:[%s1 + $0x14] sm:$0xf]
  %v26 = vld [vmem:[%s1 + $0x18] sm:$0xf]
  %v27 = vld [vmem:[%s1 + $0x1c] sm:$0xf]
  %v28 = vld [vmem:[%s1 + $0x20] sm:$0xf]
  %v29 = vld [vmem:[%s1 + $0x24] sm:$0xf]
  %v30 = vld [vmem:[%s1 + $0x28] sm:$0xf]
  %v31 = vld [vmem:[%s1 + $0x2c] sm:$0xf]
  %v32 = vld [vmem:[%s1 + $0x30] sm:$0xf]
  %v33 = vld [vmem:[%s1 + $0x34] sm:$0xf]
  %v34 = vld [vmem:[%s1 + $0x38] sm:$0xf]
  %v35 = vld [vmem:[%s1 + $0x3c] sm:$0xf]
  %v36 = vld [vmem:[%s1 + $0x40] sm:$0xf]
  %v37 = vld [vmem:[%s1 + $0x44] sm:$0xf]
  %v38 = vld [vmem:[%s1 + $0x48] sm:$0xf]
  %v39 = vld [vmem:[%s1 + $0x4c] sm:$0xf]
  %v40 = vld [vmem:[%s1 + $0x50] sm:$0xf]
  %v41 = vld [vmem:[%s1 + $0x54] sm:$0xf]
  %v42 = vld [vmem:[%s1 + $0x58] sm:$0xf]
  %v43 = vld [vmem:[%s1 + $0x5c] sm:$0xf]
  %v44 = vld [vmem:[%s1 + $0x60] sm:$0xf]
  %v45 = vld [vmem:[%s1 + $0x64] sm:$0xf]
  %v46 = vld [vmem:[%s1 + $0x68] sm:$0xf]
  %v47 = vld [vmem:[%s1 + $0x6c] sm:$0xf]
  %v48 = vld [vmem:[%s1 + $0x70] sm:$0xf]
  %v49 = vld [vmem:[%s1 + $0x74] sm:$0xf]
  %v50 = vld [vmem:[%s1 + $0x78] sm:$0xf]
  %v51 = vld [vmem:[%s1 + $0x7c] sm:$0xf]
  %v52 = vld [vmem:[%s1 + $0x80] sm:$0xf]
  %v53 = vld [vmem:[%s1 + $0x84] sm:$0xf]
  %v54 = vld [vmem:[%s1 + $0x88] sm:$0xf]
  %v55 = vld [vmem:[%s1 + $0x8c] sm:$0xf]
  %v56 = vld [vmem:[%s1 + $0x90] sm:$0xf]
  %v57 = vld [vmem:[%s1 + $0x94] sm:$0xf]
  %v58 = vld [vmem:[%s1 + $0x98] sm:$0xf]
  %v59 = vld [vmem:[%s1 + $0x9c] sm:$0xf]
  %v60 = vld [vmem:[%s1 + $0xa0] sm:$0xf]
  %v61 = vld [vmem:[%s1 + $0xa4] sm:$0xf]
  %v62 = vld [vmem:[%s1 + $0xa8] sm:$0xf]
  %v63 = vld [vmem:[%s1 + $0xac] sm:$0xf]
  %v64 = vld [vmem:[%s1 + $0xb0] sm:$0xf]
  %v65 = vld [vmem:[%s1 + $0xb4] sm:$0xf]
  %v66 = vld [vmem:[%s1 + $0xb8] sm:$0xf]
  %v67 = vld [vmem:[%s1 + $0xbc] sm:$0xf]
  %v68 = vld [vmem:[%s1 + $0xc0] sm:$0xf]
  %v69 = vld [vmem:[%s1 + $0xc4] sm:$0xf]
  %v70 = vld [vmem:[%s1 + $0xc8] sm:$0xf]
  %v71 = vld [vmem:[%s1 + $0xcc] sm:$0xf]
  %v72 = vld [vmem:[%s1 + $0xd0] sm:$0xf]
  %v73 = vld [vmem:[%s1 + $0xd4] sm:$0xf]
  %v74 = vld [vmem:[%s1 + $0xd8] sm:$0xf]
  %v75 = vld [vmem:[%s1 + $0xdc] sm:$0xf]
  %v76 = vld [vmem:[%s1 + $0xe0] sm:$0xf]
  %v77 = vld [vmem:[%s1 + $0xe4] sm:$0xf]
  %v78 = vld [vmem:[%s1 + $0xe8] sm:$0xf]
  %v79 = vld [vmem:[%s1 + $0xec] sm:$0xf]
  %v80 = vld [vmem:[%s1 + $0xf0] sm:$0xf]
  %v81 = vld [vmem:[%s1 + $0xf4] sm:$0xf]
  %v82 = vld [vmem:[%s1 + $0xf8] sm:$0xf]
  %v83 = vld [vmem:[%s1 + $0xfc] sm:$0xf]
  %v84 = vld [vmem:[%s1 + $0x100] sm:$0xf]
  %v85 = vld [vmem:[%s1 + $0x104] sm:$0xf]
  %v86 = vld [vmem:[%s1 + $0x108] sm:$0xf]
  %v87 = vld [vmem:[%s1 + $0x10c] sm:$0xf]
  %v88 = vld [vmem:[%s1 + $0x110] sm:$0xf]
  %v89 = vld [vmem:[%s1 + $0x114] sm:$0xf]
  %v90 = vld [vmem:[%s1 + $0x118] sm:$0xf]
  %v91 = vld [vmem:[%s1 + $0x11c] sm:$0xf]
  %v92 = vld [vmem:[%s1 + $0x120] sm:$0xf]
  %v93 = vld [vmem:[%s1 + $0x124] sm:$0xf]
  %v94 = vld [vmem:[%s1 + $0x128] sm:$0xf]
  %v95 = vld [vmem:[%s1 + $0x12c] sm:$0xf]
  %v96 = vld [vmem:[%s1 + $0x130] sm:$0xf]
  %v97 = vld [vmem:[%s1 + $0x134] sm:$0xf]
  %v98 = vld [vmem:[%s1 + $0x138] sm:$0xf]
  %v99 = vld [vmem:[%s1 + $0x13c] sm:$0xf]
  %v100 = vld [vmem:[%s2] sm:$0x1]
  %v102 = vperm.slane %v100, 0
  %v110 = vunpack.c.l.b16 %v14
  %v111 = vunpack.c.h.b16 %v14
  %v112 = vunpack.c.l.b16 %v15
  %v113 = vunpack.c.h.b16 %v15
  %v114 = vunpack.c.l.b16 %v16
  %v115 = vunpack.c.l.b16 %v17
  %v116 = vunpack.c.h.b16 %v17
  %v117 = vunpack.c.l.b16 %v18
  %v118 = vunpack.c.h.b16 %v18
  %v119 = vunpack.c.l.b16 %v19
  %v120 = vpack.c.b16 %v115, %v110
  %v121 = vpack.c.b16 %v116, %v111
  %v122 = vpack.c.b16 %v117, %v112
  %v123 = vpack.c.b16 %v118, %v113
  %v124 = vpack.c.b16 %v119, %v114
  %v210 = vunpack.c.l.b16 %v20
  %v211 = vunpack.c.l.b16 %v21
  %v212 = vunpack.c.l.b16 %v22
  %v213 = vunpack.c.l.b16 %v23
  %v214 = vunpack.c.l.b16 %v24
  %v215 = vunpack.c.l.b16 %v25
  %v216 = vunpack.c.l.b16 %v26
  %v217 = vunpack.c.l.b16 %v27
  %v218 = vunpack.c.l.b16 %v28
  %v219 = vunpack.c.l.b16 %v29
  %v220 = vunpack.c.l.b16 %v30
  %v221 = vunpack.c.l.b16 %v31
  %v222 = vunpack.c.l.b16 %v32
  %v223 = vunpack.c.l.b16 %v33
  %v224 = vunpack.c.l.b16 %v34
  %v225 = vunpack.c.l.b16 %v35
  %v226 = vunpack.c.l.b16 %v36
  %v227 = vunpack.c.l.b16 %v37
  %v228 = vunpack.c.l.b16 %v38
  %v229 = vunpack.c.l.b16 %v39
  %v230 = vunpack.c.l.b16 %v40
  %v231 = vunpack.c.l.b16 %v41
  %v232 = vunpack.c.l.b16 %v42
  %v233 = vunpack.c.l.b16 %v43
  %v234 = vunpack.c.l.b16 %v44
  %v235 = vunpack.c.l.b16 %v45
  %v236 = vunpack.c.l.b16 %v46
  %v237 = vunpack.c.l.b16 %v47
  %v238 = vunpack.c.l.b16 %v48
  %v239 = vunpack.c.l.b16 %v49
  %v240 = vunpack.c.l.b16 %v50
  %v241 = vunpack.c.l.b16 %v51
  %v242 = vunpack.c.l.b16 %v52
  %v243 = vunpack.c.l.b16 %v53
  %v244 = vunpack.c.l.b16 %v54
  %v245 = vunpack.c.l.b16 %v55
  %v246 = vunpack.c.l.b16 %v56
  %v247 = vunpack.c.l.b16 %v57
  %v248 = vunpack.c.l.b16 %v58
  %v249 = vunpack.c.l.b16 %v59
  %v250 = vunpack.c.l.b16 %v60
  %v251 = vunpack.c.l.b16 %v61
  %v252 = vunpack.c.l.b16 %v62
  %v253 = vunpack.c.l.b16 %v63
  %v254 = vunpack.c.l.b16 %v64
  %v255 = vunpack.c.l.b16 %v65
  %v256 = vunpack.c.l.b16 %v66
  %v257 = vunpack.c.l.b16 %v67
  %v258 = vunpack.c.l.b16 %v68
  %v259 = vunpack.c.l.b16 %v69
  %v260 = vunpack.c.l.b16 %v70
  %v261 = vunpack.c.l.b16 %v71
  %v262 = vunpack.c.l.b16 %v72
  %v263 = vunpack.c.l.b16 %v73
  %v264 = vunpack.c.l.b16 %v74
  %v265 = vunpack.c.l.b16 %v75
  %v266 = vunpack.c.l.b16 %v76
  %v267 = vunpack.c.l.b16 %v77
  %v268 = vunpack.c.l.b16 %v78
  %v269 = vunpack.c.l.b16 %v79
  %v270 = vunpack.c.l.b16 %v80
  %v271 = vunpack.c.l.b16 %v81
  %v272 = vunpack.c.l.b16 %v82
  %v273 = vunpack.c.l.b16 %v83
  %v274 = vunpack.c.l.b16 %v84
  %v275 = vunpack.c.l.b16 %v85
  %v276 = vunpack.c.l.b16 %v86
  %v277 = vunpack.c.l.b16 %v87
  %v278 = vunpack.c.l.b16 %v88
  %v279 = vunpack.c.l.b16 %v89
  %v280 = vunpack.c.l.b16 %v90
  %v281 = vunpack.c.l.b16 %v91
  %v282 = vunpack.c.l.b16 %v92
  %v283 = vunpack.c.l.b16 %v93
  %v284 = vunpack.c.l.b16 %v94
  %v285 = vunpack.c.l.b16 %v95
  %v286 = vunpack.c.l.b16 %v96
  %v287 = vunpack.c.l.b16 %v97
  %v288 = vunpack.c.l.b16 %v98
  %v289 = vunpack.c.l.b16 %v99
  %v290 = vpack.c.b16 %v211, %v210
  %v291 = vpack.c.b16 %v213, %v212
  %v292 = vpack.c.b16 %v215, %v214
  %v293 = vpack.c.b16 %v217, %v216
  %v294 = vpack.c.b16 %v219, %v218
  %v295 = vpack.c.b16 %v221, %v220
  %v296 = vpack.c.b16 %v223, %v222
  %v297 = vpack.c.b16 %v225, %v224
  %v298 = vpack.c.b16 %v227, %v226
  %v299 = vpack.c.b16 %v229, %v228
  %v300 = vpack.c.b16 %v231, %v230
  %v301 = vpack.c.b16 %v233, %v232
  %v302 = vpack.c.b16 %v235, %v234
  %v303 = vpack.c.b16 %v237, %v236
  %v304 = vpack.c.b16 %v239, %v238
  %v305 = vpack.c.b16 %v241, %v240
  %v306 = vpack.c.b16 %v243, %v242
  %v307 = vpack.c.b16 %v245, %v244
  %v308 = vpack.c.b16 %v247, %v246
  %v309 = vpack.c.b16 %v249, %v248
  %v310 = vpack.c.b16 %v251, %v250
  %v311 = vpack.c.b16 %v253, %v252
  %v312 = vpack.c.b16 %v255, %v254
  %v313 = vpack.c.b16 %v257, %v256
  %v314 = vpack.c.b16 %v259, %v258
  %v315 = vpack.c.b16 %v261, %v260
  %v316 = vpack.c.b16 %v263, %v262
  %v317 = vpack.c.b16 %v265, %v264
  %v318 = vpack.c.b16 %v267, %v266
  %v319 = vpack.c.b16 %v269, %v268
  %v320 = vpack.c.b16 %v271, %v270
  %v321 = vpack.c.b16 %v273, %v272
  %v322 = vpack.c.b16 %v275, %v274
  %v323 = vpack.c.b16 %v277, %v276
  %v324 = vpack.c.b16 %v279, %v278
  %v325 = vpack.c.b16 %v281, %v280
  %v326 = vpack.c.b16 %v283, %v282
  %v327 = vpack.c.b16 %v285, %v284
  %v328 = vpack.c.b16 %v287, %v286
  %v329 = vpack.c.b16 %v289, %v288
  %370 = vmatpush.bf16.msra.mxu0 %v297
  %371 = vmatpush.bf16.msra.mxu0 %v296
  %372 = vmatpush.bf16.msra.mxu0 %v295
  %373 = vmatpush.bf16.msra.mxu0 %v294
  %374 = vmatpush.bf16.msra.mxu0 %v293
  %375 = vmatpush.bf16.msra.mxu0 %v292
  %376 = vmatpush.bf16.msra.mxu0 %v291
  %377 = vmatpush.bf16.msra.mxu0 %v290
  %378 = vmatmul.bf16.gmra.mxu0 %v120
  %v379 = vpop.f32.mrf.mxu0
  %v380 = vadd.f32 %v102, %v379
  %v381 = vpop.f32.mrf.mxu0
  %v382 = vadd.f32 %v102, %v381
  %383 = vdwg.mxu0
  %384 = vmatpush.bf16.msra.mxu0 %v305
  %385 = vmatpush.bf16.msra.mxu0 %v304
  %386 = vmatpush.bf16.msra.mxu0 %v303
  %387 = vmatpush.bf16.msra.mxu0 %v302
  %388 = vmatpush.bf16.msra.mxu0 %v301
  %389 = vmatpush.bf16.msra.mxu0 %v300
  %390 = vmatpush.bf16.msra.mxu0 %v299
  %391 = vmatpush.bf16.msra.mxu0 %v298
  %392 = vmatmul.bf16.gmra.mxu0 %v121
  %v393 = vpop.f32.mrf.mxu0
  %v394 = vadd.f32 %v380, %v393
  %v395 = vpop.f32.mrf.mxu0
  %v396 = vadd.f32 %v382, %v395
  %397 = vdwg.mxu0
  %398 = vmatpush.bf16.msra.mxu0 %v313
  %399 = vmatpush.bf16.msra.mxu0 %v312
  %400 = vmatpush.bf16.msra.mxu0 %v311
  %401 = vmatpush.bf16.msra.mxu0 %v310
  %402 = vmatpush.bf16.msra.mxu0 %v309
  %403 = vmatpush.bf16.msra.mxu0 %v308
  %404 = vmatpush.bf16.msra.mxu0 %v307
  %405 = vmatpush.bf16.msra.mxu0 %v306
  %406 = vmatmul.bf16.gmra.mxu0 %v122
  %v407 = vpop.f32.mrf.mxu0
  %v408 = vadd.f32 %v394, %v407
  %v409 = vpop.f32.mrf.mxu0
  %v410 = vadd.f32 %v396, %v409
  %411 = vdwg.mxu0
  %412 = vmatpush.bf16.msra.mxu0 %v321
  %413 = vmatpush.bf16.msra.mxu0 %v320
  %414 = vmatpush.bf16.msra.mxu0 %v319
  %415 = vmatpush.bf16.msra.mxu0 %v318
  %416 = vmatpush.bf16.msra.mxu0 %v317
  %417 = vmatpush.bf16.msra.mxu0 %v316
  %418 = vmatpush.bf16.msra.mxu0 %v315
  %419 = vmatpush.bf16.msra.mxu0 %v314
  %420 = vmatmul.bf16.gmra.mxu0 %v123
  %v421 = vpop.f32.mrf.mxu0
  %v422 = vadd.f32 %v408, %v421
  %v423 = vpop.f32.mrf.mxu0
  %v424 = vadd.f32 %v410, %v423
  %425 = vdwg.mxu0
  %426 = vmatpush.bf16.msra.mxu0 %v329
  %427 = vmatpush.bf16.msra.mxu0 %v328
  %428 = vmatpush.bf16.msra.mxu0 %v327
  %429 = vmatpush.bf16.msra.mxu0 %v326
  %430 = vmatpush.bf16.msra.mxu0 %v325
  %431 = vmatpush.bf16.msra.mxu0 %v324
  %432 = vmatpush.bf16.msra.mxu0 %v323
  %433 = vmatpush.bf16.msra.mxu0 %v322
  %434 = vmatmul.bf16.gmra.mxu0 %v124
  %v435 = vpop.f32.mrf.mxu0
  %v436 = vadd.f32 %v422, %v435
  %v437 = vpop.f32.mrf.mxu0
  %v438 = vadd.f32 %v424, %v437
  %439 = vdwg.mxu0
  %v440 = vmax.f32 %v436, 0.0
  %v441 = vmax.f32 %v438, 0.0
  %v442 = vpack.c.bf16 %v440, %v440
  %v443 = vpack.c.bf16 %v441, %v441
  %444 = vst [vmem:[%s3] sm:$0xf] %v442
  %445 = vst [vmem:[%s3 + $0x4] sm:$0xf] %v443
  // Predicated region
  $region14: #{forward.15} parent=0 // pred_check
    _
  $region15: #{forward.15} parent=0 // pred_check_branch
    %447 = sbr.rel (0) target = $region17
  $region16: #{forward.15} parent=0 // pred_region
    _
  $region17: #{forward.15} parent=0 // pred_fallthru
    _
  // Predicated region
  $region18: #{forward.15} parent=0 // pred_check
    _
  $region19: #{forward.15} parent=0 // pred_check_branch
    %449 = sbr.rel (0) target = $region21
  $region20: #{forward.15} parent=0 // pred_region
    _
  $region21: #{forward.15} parent=0 // pred_fallthru
    _

// kernel: forward.16
$region0: #{forward.16}
  #allocation0 [shape = 'u32[]', space=smem, size = 0x4, offset = 0x4, fixed_abs, tag = 'smem constant byte address 0x4 - core index']
  #allocation1 [shape = 'u32[72,128]{1,0:T(1,128)}', space=vmem, size = 0x9000, scoped, tag = 'internal scratch']
  %s0 = inlined_call_operand.vmem [shape: bf16[16,512], index: 0, kind: input, shape index: {}]
  %s1 = inlined_call_operand.vmem [shape: bf16[512,256], index: 1, kind: input, shape index: {}]
  %s2 = inlined_call_operand.vmem [shape: f32[1,256], index: 2, kind: input, shape index: {}]
  %s3 = inlined_call_operand.vmem [shape: bf16[16,256], index: 3, kind: output, shape index: {}]
  %s4 = sld [smem:[#allocation0]]
  $region22: #{forward.16} parent=0
    _
  %s6 = ssub.s32 1, %s4
  %s7 = scalar_select 0, %s6, %s4
  // Predicated region
  $region2: #{forward.16} parent=0 // pred_check
    _
  $region3: #{forward.16} parent=0 // pred_check_branch
    %9 = sbr.rel (0) target = $region5
  $region4: #{forward.16} parent=0 // pred_region
    _
  $region5: #{forward.16} parent=0 // pred_fallthru
    _
  // Predicated region
  $region6: #{forward.16} parent=0 // pred_check
    _
  $region7: #{forward.16} parent=0 // pred_check_branch
    %11 = sbr.rel (0) target = $region9
  $region8: #{forward.16} parent=0 // pred_region
    _
  $region9: #{forward.16} parent=0 // pred_fallthru
    _
  // Predicated region
  $region10: #{forward.16} parent=0 // pred_check
    _
  $region11: #{forward.16} parent=0 // pred_check_branch
    %13 = sbr.rel (0) target = $region13
  $region12: #{forward.16} parent=0 // pred_region
    _
  $region13: #{forward.16} parent=0 // pred_fallthru
    _
  %v14 = vld [vmem:[%s0] sm:$0xff]
  %v15 = vld [vmem:[%s0 + $0x8] sm:$0xff]
  %v16 = vld [vmem:[%s0 + $0x10] sm:$0xff]
  %v17 = vld [vmem:[%s0 + $0x18] sm:$0xff]
  %v18 = vld [vmem:[%s1] sm:$0xff]
  %v19 = vld [vmem:[%s1 + $0x8] sm:$0xff]
  %v20 = vld [vmem:[%s1 + $0x10] sm:$0xff]
  %v21 = vld [vmem:[%s1 + $0x18] sm:$0xff]
  %v22 = vld [vmem:[%s1 + $0x20] sm:$0xff]
  %v23 = vld [vmem:[%s1 + $0x28] sm:$0xff]
  %v24 = vld [vmem:[%s1 + $0x30] sm:$0xff]
  %v25 = vld [vmem:[%s1 + $0x38] sm:$0xff]
  %v26 = vld [vmem:[%s1 + $0x40] sm:$0xff]
  %v27 = vld [vmem:[%s1 + $0x48] sm:$0xff]
  %v28 = vld [vmem:[%s1 + $0x50] sm:$0xff]
  %v29 = vld [vmem:[%s1 + $0x58] sm:$0xff]
  %v30 = vld [vmem:[%s1 + $0x60] sm:$0xff]
  %v31 = vld [vmem:[%s1 + $0x68] sm:$0xff]
  %v32 = vld [vmem:[%s1 + $0x70] sm:$0xff]
  %v33 = vld [vmem:[%s1 + $0x78] sm:$0xff]
  %v34 = vld [vmem:[%s1 + $0x80] sm:$0xff]
  %v35 = vld [vmem:[%s1 + $0x88] sm:$0xff]
  %v36 = vld [vmem:[%s1 + $0x90] sm:$0xff]
  %v37 = vld [vmem:[%s1 + $0x98] sm:$0xff]
  %v38 = vld [vmem:[%s1 + $0xa0] sm:$0xff]
  %v39 = vld [vmem:[%s1 + $0xa8] sm:$0xff]
  %v40 = vld [vmem:[%s1 + $0xb0] sm:$0xff]
  %v41 = vld [vmem:[%s1 + $0xb8] sm:$0xff]
  %v42 = vld [vmem:[%s1 + $0xc0] sm:$0xff]
  %v43 = vld [vmem:[%s1 + $0xc8] sm:$0xff]
  %v44 = vld [vmem:[%s1 + $0xd0] sm:$0xff]
  %v45 = vld [vmem:[%s1 + $0xd8] sm:$0xff]
  %v46 = vld [vmem:[%s1 + $0xe0] sm:$0xff]
  %v47 = vld [vmem:[%s1 + $0xe8] sm:$0xff]
  %v48 = vld [vmem:[%s1 + $0xf0] sm:$0xff]
  %v49 = vld [vmem:[%s1 + $0xf8] sm:$0xff]
  %v50 = vld [vmem:[%s1 + $0x100] sm:$0xff]
  %v51 = vld [vmem:[%s1 + $0x108] sm:$0xff]
  %v52 = vld [vmem:[%s1 + $0x110] sm:$0xff]
  %v53 = vld [vmem:[%s1 + $0x118] sm:$0xff]
  %v54 = vld [vmem:[%s1 + $0x120] sm:$0xff]
  %v55 = vld [vmem:[%s1 + $0x128] sm:$0xff]
  %v56 = vld [vmem:[%s1 + $0x130] sm:$0xff]
  %v57 = vld [vmem:[%s1 + $0x138] sm:$0xff]
  %v58 = vld [vmem:[%s1 + $0x140] sm:$0xff]
  %v59 = vld [vmem:[%s1 + $0x148] sm:$0xff]
  %v60 = vld [vmem:[%s1 + $0x150] sm:$0xff]
  %v61 = vld [vmem:[%s1 + $0x158] sm:$0xff]
  %v62 = vld [vmem:[%s1 + $0x160] sm:$0xff]
  %v63 = vld [vmem:[%s1 + $0x168] sm:$0xff]
  %v64 = vld [vmem:[%s1 + $0x170] sm:$0xff]
  %v65 = vld [vmem:[%s1 + $0x178] sm:$0xff]
  %v66 = vld [vmem:[%s1 + $0x180] sm:$0xff]
  %v67 = vld [vmem:[%s1 + $0x188] sm:$0xff]
  %v68 = vld [vmem:[%s1 + $0x190] sm:$0xff]
  %v69 = vld [vmem:[%s1 + $0x198] sm:$0xff]
  %v70 = vld [vmem:[%s1 + $0x1a0] sm:$0xff]
  %v71 = vld [vmem:[%s1 + $0x1a8] sm:$0xff]
  %v72 = vld [vmem:[%s1 + $0x1b0] sm:$0xff]
  %v73 = vld [vmem:[%s1 + $0x1b8] sm:$0xff]
  %v74 = vld [vmem:[%s1 + $0x1c0] sm:$0xff]
  %v75 = vld [vmem:[%s1 + $0x1c8] sm:$0xff]
  %v76 = vld [vmem:[%s1 + $0x1d0] sm:$0xff]
  %v77 = vld [vmem:[%s1 + $0x1d8] sm:$0xff]
  %v78 = vld [vmem:[%s1 + $0x1e0] sm:$0xff]
  %v79 = vld [vmem:[%s1 + $0x1e8] sm:$0xff]
  %v80 = vld [vmem:[%s1 + $0x1f0] sm:$0xff]
  %v81 = vld [vmem:[%s1 + $0x1f8] sm:$0xff]
  %v82 = vld [vmem:[%s2] sm:$0x3]
  %v84 = vperm.slane %v82, 0
  %v85 = vperm.slane %v82, 1
  %v92 = vunpack.c.l.b16 %v14
  %v93 = vunpack.c.h.b16 %v14
  %v94 = vunpack.c.l.b16 %v15
  %v95 = vunpack.c.h.b16 %v15
  %v96 = vunpack.c.l.b16 %v16
  %v97 = vunpack.c.h.b16 %v16
  %v98 = vunpack.c.l.b16 %v17
  %v99 = vunpack.c.h.b16 %v17
  %v100 = vpack.c.b16 %v96, %v92
  %v101 = vpack.c.b16 %v97, %v93
  %v102 = vpack.c.b16 %v98, %v94
  %v103 = vpack.c.b16 %v99, %v95
  %v172 = vunpack.c.l.b16 %v18
  %v173 = vunpack.c.h.b16 %v18
  %v174 = vunpack.c.l.b16 %v19
  %v175 = vunpack.c.h.b16 %v19
  %v176 = vunpack.c.l.b16 %v20
  %v177 = vunpack.c.h.b16 %v20
  %v178 = vunpack.c.l.b16 %v21
  %v179 = vunpack.c.h.b16 %v21
  %v180 = vunpack.c.l.b16 %v22
  %v181 = vunpack.c.h.b16 %v22
  %v182 = vunpack.c.l.b16 %v23
  %v183 = vunpack.c.h.b16 %v23
  %v184 = vunpack.c.l.b16 %v24
  %v185 = vunpack.c.h.b16 %v24
  %v186 = vunpack.c.l.b16 %v25
  %v187 = vunpack.c.h.b16 %v25
  %v188 = vunpack.c.l.b16 %v26
  %v189 = vunpack.c.h.b16 %v26
  %v190 = vunpack.c.l.b16 %v27
  %v191 = vunpack.c.h.b16 %v27
  %v192 = vunpack.c.l.b16 %v28
  %v193 = vunpack.c.h.b16 %v28
  %v194 = vunpack.c.l.b16 %v29
  %v195 = vunpack.c.h.b16 %v29
  %v196 = vunpack.c.l.b16 %v30
  %v197 = vunpack.c.h.b16 %v30
  %v198 = vunpack.c.l.b16 %v31
  %v199 = vunpack.c.h.b16 %v31
  %v200 = vunpack.c.l.b16 %v32
  %v201 = vunpack.c.h.b16 %v32
  %v202 = vunpack.c.l.b16 %v33
  %v203 = vunpack.c.h.b16 %v33
  %v204 = vunpack.c.l.b16 %v34
  %v205 = vunpack.c.h.b16 %v34
  %v206 = vunpack.c.l.b16 %v35
  %v207 = vunpack.c.h.b16 %v35
  %v208 = vunpack.c.l.b16 %v36
  %v209 = vunpack.c.h.b16 %v36
  %v210 = vunpack.c.l.b16 %v37
  %v211 = vunpack.c.h.b16 %v37
  %v212 = vunpack.c.l.b16 %v38
  %v213 = vunpack.c.h.b16 %v38
  %v214 = vunpack.c.l.b16 %v39
  %v215 = vunpack.c.h.b16 %v39
  %v216 = vunpack.c.l.b16 %v40
  %v217 = vunpack.c.h.b16 %v40
  %v218 = vunpack.c.l.b16 %v41
  %v219 = vunpack.c.h.b16 %v41
  %v220 = vunpack.c.l.b16 %v42
  %v221 = vunpack.c.h.b16 %v42
  %v222 = vunpack.c.l.b16 %v43
  %v223 = vunpack.c.h.b16 %v43
  %v224 = vunpack.c.l.b16 %v44
  %v225 = vunpack.c.h.b16 %v44
  %v226 = vunpack.c.l.b16 %v45
  %v227 = vunpack.c.h.b16 %v45
  %v228 = vunpack.c.l.b16 %v46
  %v229 = vunpack.c.h.b16 %v46
  %v230 = vunpack.c.l.b16 %v47
  %v231 = vunpack.c.h.b16 %v47
  %v232 = vunpack.c.l.b16 %v48
  %v233 = vunpack.c.h.b16 %v48
  %v234 = vunpack.c.l.b16 %v49
  %v235 = vunpack.c.h.b16 %v49
  %v236 = vunpack.c.l.b16 %v50
  %v237 = vunpack.c.h.b16 %v50
  %v238 = vunpack.c.l.b16 %v51
  %v239 = vunpack.c.h.b16 %v51
  %v240 = vunpack.c.l.b16 %v52
  %v241 = vunpack.c.h.b16 %v52
  %v242 = vunpack.c.l.b16 %v53
  %v243 = vunpack.c.h.b16 %v53
  %v244 = vunpack.c.l.b16 %v54
  %v245 = vunpack.c.h.b16 %v54
  %v246 = vunpack.c.l.b16 %v55
  %v247 = vunpack.c.h.b16 %v55
  %v248 = vunpack.c.l.b16 %v56
  %v249 = vunpack.c.h.b16 %v56
  %v250 = vunpack.c.l.b16 %v57
  %v251 = vunpack.c.h.b16 %v57
  %v252 = vunpack.c.l.b16 %v58
  %v253 = vunpack.c.h.b16 %v58
  %v254 = vunpack.c.l.b16 %v59
  %v255 = vunpack.c.h.b16 %v59
  %v256 = vunpack.c.l.b16 %v60
  %v257 = vunpack.c.h.b16 %v60
  %v258 = vunpack.c.l.b16 %v61
  %v259 = vunpack.c.h.b16 %v61
  %v260 = vunpack.c.l.b16 %v62
  %v261 = vunpack.c.h.b16 %v62
  %v262 = vunpack.c.l.b16 %v63
  %v263 = vunpack.c.h.b16 %v63
  %v264 = vunpack.c.l.b16 %v64
  %v265 = vunpack.c.h.b16 %v64
  %v266 = vunpack.c.l.b16 %v65
  %v267 = vunpack.c.h.b16 %v65
  %v268 = vunpack.c.l.b16 %v66
  %v269 = vunpack.c.h.b16 %v66
  %v270 = vunpack.c.l.b16 %v67
  %v271 = vunpack.c.h.b16 %v67
  %v272 = vunpack.c.l.b16 %v68
  %v273 = vunpack.c.h.b16 %v68
  %v274 = vunpack.c.l.b16 %v69
  %v275 = vunpack.c.h.b16 %v69
  %v276 = vunpack.c.l.b16 %v70
  %v277 = vunpack.c.h.b16 %v70
  %v278 = vunpack.c.l.b16 %v71
  %v279 = vunpack.c.h.b16 %v71
  %v280 = vunpack.c.l.b16 %v72
  %v281 = vunpack.c.h.b16 %v72
  %v282 = vunpack.c.l.b16 %v73
  %v283 = vunpack.c.h.b16 %v73
  %v284 = vunpack.c.l.b16 %v74
  %v285 = vunpack.c.h.b16 %v74
  %v286 = vunpack.c.l.b16 %v75
  %v287 = vunpack.c.h.b16 %v75
  %v288 = vunpack.c.l.b16 %v76
  %v289 = vunpack.c.h.b16 %v76
  %v290 = vunpack.c.l.b16 %v77
  %v291 = vunpack.c.h.b16 %v77
  %v292 = vunpack.c.l.b16 %v78
  %v293 = vunpack.c.h.b16 %v78
  %v294 = vunpack.c.l.b16 %v79
  %v295 = vunpack.c.h.b16 %v79
  %v296 = vunpack.c.l.b16 %v80
  %v297 = vunpack.c.h.b16 %v80
  %v298 = vunpack.c.l.b16 %v81
  %v299 = vunpack.c.h.b16 %v81
  %v300 = vpack.c.b16 %v174, %v172
  %v301 = vpack.c.b16 %v175, %v173
  %v302 = vpack.c.b16 %v178, %v176
  %v303 = vpack.c.b16 %v179, %v177
  %v304 = vpack.c.b16 %v182, %v180
  %v305 = vpack.c.b16 %v183, %v181
  %v306 = vpack.c.b16 %v186, %v184
  %v307 = vpack.c.b16 %v187, %v185
  %v308 = vpack.c.b16 %v190, %v188
  %v309 = vpack.c.b16 %v191, %v189
  %v310 = vpack.c.b16 %v194, %v192
  %v311 = vpack.c.b16 %v195, %v193
  %v312 = vpack.c.b16 %v198, %v196
  %v313 = vpack.c.b16 %v199, %v197
  %v314 = vpack.c.b16 %v202, %v200
  %v315 = vpack.c.b16 %v203, %v201
  %v316 = vpack.c.b16 %v206, %v204
  %v317 = vpack.c.b16 %v207, %v205
  %v318 = vpack.c.b16 %v210, %v208
  %v319 = vpack.c.b16 %v211, %v209
  %v320 = vpack.c.b16 %v214, %v212
  %v321 = vpack.c.b16 %v215, %v213
  %v322 = vpack.c.b16 %v218, %v216
  %v323 = vpack.c.b16 %v219, %v217
  %v324 = vpack.c.b16 %v222, %v220
  %v325 = vpack.c.b16 %v223, %v221
  %v326 = vpack.c.b16 %v226, %v224
  %v327 = vpack.c.b16 %v227, %v225
  %v328 = vpack.c.b16 %v230, %v228
  %v329 = vpack.c.b16 %v231, %v229
  %v330 = vpack.c.b16 %v234, %v232
  %v331 = vpack.c.b16 %v235, %v233
  %v332 = vpack.c.b16 %v238, %v236
  %v333 = vpack.c.b16 %v239, %v237
  %v334 = vpack.c.b16 %v242, %v240
  %v335 = vpack.c.b16 %v243, %v241
  %v336 = vpack.c.b16 %v246, %v244
  %v337 = vpack.c.b16 %v247, %v245
  %v338 = vpack.c.b16 %v250, %v248
  %v339 = vpack.c.b16 %v251, %v249
  %v340 = vpack.c.b16 %v254, %v252
  %v341 = vpack.c.b16 %v255, %v253
  %v342 = vpack.c.b16 %v258, %v256
  %v343 = vpack.c.b16 %v259, %v257
  %v344 = vpack.c.b16 %v262, %v260
  %v345 = vpack.c.b16 %v263, %v261
  %v346 = vpack.c.b16 %v266, %v264
  %v347 = vpack.c.b16 %v267, %v265
  %v348 = vpack.c.b16 %v270, %v268
  %v349 = vpack.c.b16 %v271, %v269
  %v350 = vpack.c.b16 %v274, %v272
  %v351 = vpack.c.b16 %v275, %v273
  %v352 = vpack.c.b16 %v278, %v276
  %v353 = vpack.c.b16 %v279, %v277
  %v354 = vpack.c.b16 %v282, %v280
  %v355 = vpack.c.b16 %v283, %v281
  %v356 = vpack.c.b16 %v286, %v284
  %v357 = vpack.c.b16 %v287, %v285
  %v358 = vpack.c.b16 %v290, %v288
  %v359 = vpack.c.b16 %v291, %v289
  %v360 = vpack.c.b16 %v294, %v292
  %v361 = vpack.c.b16 %v295, %v293
  %v362 = vpack.c.b16 %v298, %v296
  %v363 = vpack.c.b16 %v299, %v297
  %428 = vmatpush.bf16.msra.mxu0 %v314
  %429 = vmatpush.bf16.msra.mxu0 %v312
  %430 = vmatpush.bf16.msra.mxu0 %v310
  %431 = vmatpush.bf16.msra.mxu0 %v308
  %432 = vmatpush.bf16.msra.mxu0 %v306
  %433 = vmatpush.bf16.msra.mxu0 %v304
  %434 = vmatpush.bf16.msra.mxu0 %v302
  %435 = vmatpush.bf16.msra.mxu0 %v300
  %436 = vmatmul.bf16.gmra.mxu0 %v100
  %v437 = vpop.f32.mrf.mxu0
  %v438 = vadd.f32 %v84, %v437
  %v439 = vpop.f32.mrf.mxu0
  %v440 = vadd.f32 %v84, %v439
  %441 = vdwg.mxu0
  %442 = vmatpush.bf16.msra.mxu0 %v330
  %443 = vmatpush.bf16.msra.mxu0 %v328
  %444 = vmatpush.bf16.msra.mxu0 %v326
  %445 = vmatpush.bf16.msra.mxu0 %v324
  %446 = vmatpush.bf16.msra.mxu0 %v322
  %447 = vmatpush.bf16.msra.mxu0 %v320
  %448 = vmatpush.bf16.msra.mxu0 %v318
  %449 = vmatpush.bf16.msra.mxu0 %v316
  %450 = vmatmul.bf16.gmra.mxu0 %v101
  %v451 = vpop.f32.mrf.mxu0
  %v452 = vadd.f32 %v438, %v451
  %v453 = vpop.f32.mrf.mxu0
  %v454 = vadd.f32 %v440, %v453
  %455 = vdwg.mxu0
  %456 = vmatpush.bf16.msra.mxu0 %v346
  %457 = vmatpush.bf16.msra.mxu0 %v344
  %458 = vmatpush.bf16.msra.mxu0 %v342
  %459 = vmatpush.bf16.msra.mxu0 %v340
  %460 = vmatpush.bf16.msra.mxu0 %v338
  %461 = vmatpush.bf16.msra.mxu0 %v336
  %462 = vmatpush.bf16.msra.mxu0 %v334
  %463 = vmatpush.bf16.msra.mxu0 %v332
  %464 = vmatmul.bf16.gmra.mxu0 %v102
  %v465 = vpop.f32.mrf.mxu0
  %v466 = vadd.f32 %v452, %v465
  %v467 = vpop.f32.mrf.mxu0
  %v468 = vadd.f32 %v454, %v467
  %469 = vdwg.mxu0
  %470 = vmatpush.bf16.msra.mxu0 %v362
  %471 = vmatpush.bf16.msra.mxu0 %v360
  %472 = vmatpush.bf16.msra.mxu0 %v358
  %473 = vmatpush.bf16.msra.mxu0 %v356
  %474 = vmatpush.bf16.msra.mxu0 %v354
  %475 = vmatpush.bf16.msra.mxu0 %v352
  %476 = vmatpush.bf16.msra.mxu0 %v350
  %477 = vmatpush.bf16.msra.mxu0 %v348
  %478 = vmatmul.bf16.gmra.mxu0 %v103
  %v479 = vpop.f32.mrf.mxu0
  %v480 = vadd.f32 %v466, %v479
  %v481 = vpop.f32.mrf.mxu0
  %v482 = vadd.f32 %v468, %v481
  %483 = vdwg.mxu0
  %484 = vmatpush.bf16.msra.mxu0 %v315
  %485 = vmatpush.bf16.msra.mxu0 %v313
  %486 = vmatpush.bf16.msra.mxu0 %v311
  %487 = vmatpush.bf16.msra.mxu0 %v309
  %488 = vmatpush.bf16.msra.mxu0 %v307
  %489 = vmatpush.bf16.msra.mxu0 %v305
  %490 = vmatpush.bf16.msra.mxu0 %v303
  %491 = vmatpush.bf16.msra.mxu0 %v301
  %492 = vmatmul.bf16.gmra.mxu0 %v100
  %v493 = vpop.f32.mrf.mxu0
  %v494 = vadd.f32 %v85, %v493
  %v495 = vpop.f32.mrf.mxu0
  %v496 = vadd.f32 %v85, %v495
  %497 = vdwg.mxu0
  %498 = vmatpush.bf16.msra.mxu0 %v331
  %499 = vmatpush.bf16.msra.mxu0 %v329
  %500 = vmatpush.bf16.msra.mxu0 %v327
  %501 = vmatpush.bf16.msra.mxu0 %v325
  %502 = vmatpush.bf16.msra.mxu0 %v323
  %503 = vmatpush.bf16.msra.mxu0 %v321
  %504 = vmatpush.bf16.msra.mxu0 %v319
  %505 = vmatpush.bf16.msra.mxu0 %v317
  %506 = vmatmul.bf16.gmra.mxu0 %v101
  %v507 = vpop.f32.mrf.mxu0
  %v508 = vadd.f32 %v494, %v507
  %v509 = vpop.f32.mrf.mxu0
  %v510 = vadd.f32 %v496, %v509
  %511 = vdwg.mxu0
  %512 = vmatpush.bf16.msra.mxu0 %v347
  %513 = vmatpush.bf16.msra.mxu0 %v345
  %514 = vmatpush.bf16.msra.mxu0 %v343
  %515 = vmatpush.bf16.msra.mxu0 %v341
  %516 = vmatpush.bf16.msra.mxu0 %v339
  %517 = vmatpush.bf16.msra.mxu0 %v337
  %518 = vmatpush.bf16.msra.mxu0 %v335
  %519 = vmatpush.bf16.msra.mxu0 %v333
  %520 = vmatmul.bf16.gmra.mxu0 %v102
  %v521 = vpop.f32.mrf.mxu0
  %v522 = vadd.f32 %v508, %v521
  %v523 = vpop.f32.mrf.mxu0
  %v524 = vadd.f32 %v510, %v523
  %525 = vdwg.mxu0
  %526 = vmatpush.bf16.msra.mxu0 %v363
  %527 = vmatpush.bf16.msra.mxu0 %v361
  %528 = vmatpush.bf16.msra.mxu0 %v359
  %529 = vmatpush.bf16.msra.mxu0 %v357
  %530 = vmatpush.bf16.msra.mxu0 %v355
  %531 = vmatpush.bf16.msra.mxu0 %v353
  %532 = vmatpush.bf16.msra.mxu0 %v351
  %533 = vmatpush.bf16.msra.mxu0 %v349
  %534 = vmatmul.bf16.gmra.mxu0 %v103
  %v535 = vpop.f32.mrf.mxu0
  %v536 = vadd.f32 %v522, %v535
  %v537 = vpop.f32.mrf.mxu0
  %v538 = vadd.f32 %v524, %v537
  %539 = vdwg.mxu0
  %v540 = vmax.f32 %v480, 0.0
  %v541 = vmax.f32 %v536, 0.0
  %v542 = vmax.f32 %v482, 0.0
  %v543 = vmax.f32 %v538, 0.0
  %v544 = vpack.c.bf16 %v541, %v540
  %v545 = vpack.c.bf16 %v543, %v542
  %546 = vst [vmem:[%s3] sm:$0xff] %v544
  %547 = vst [vmem:[%s3 + $0x8] sm:$0xff] %v545
  // Predicated region
  $region14: #{forward.16} parent=0 // pred_check
    _
  $region15: #{forward.16} parent=0 // pred_check_branch
    %549 = sbr.rel (0) target = $region17
  $region16: #{forward.16} parent=0 // pred_region
    _
  $region17: #{forward.16} parent=0 // pred_fallthru
    _
  // Predicated region
  $region18: #{forward.16} parent=0 // pred_check
    _
  $region19: #{forward.16} parent=0 // pred_check_branch
    %551 = sbr.rel (0) target = $region21
  $region20: #{forward.16} parent=0 // pred_region
    _
  $region21: #{forward.16} parent=0 // pred_fallthru
    _

// kernel: forward.18
$region0: #{forward.18}
  #allocation0 [shape = 'u32[]', space=smem, size = 0x4, offset = 0x4, fixed_abs, tag = 'smem constant byte address 0x4 - core index']
  #allocation1 [shape = 'u32[72,128]{1,0:T(1,128)}', space=vmem, size = 0x9000, scoped, tag = 'internal scratch']
  %s0 = inlined_call_operand.vmem [shape: bf16[16,128], index: 0, kind: input, shape index: {}]
  %s1 = inlined_call_operand.vmem [shape: bf16[128,256], index: 1, kind: input, shape index: {}]
  %s2 = inlined_call_operand.vmem [shape: f32[1,256], index: 2, kind: input, shape index: {}]
  %s3 = inlined_call_operand.vmem [shape: bf16[16,256], index: 3, kind: output, shape index: {}]
  %s4 = sld [smem:[#allocation0]]
  $region22: #{forward.18} parent=0
    _
  %s6 = ssub.s32 1, %s4
  %s7 = scalar_select 0, %s6, %s4
  // Predicated region
  $region2: #{forward.18} parent=0 // pred_check
    _
  $region3: #{forward.18} parent=0 // pred_check_branch
    %9 = sbr.rel (0) target = $region5
  $region4: #{forward.18} parent=0 // pred_region
    _
  $region5: #{forward.18} parent=0 // pred_fallthru
    _
  // Predicated region
  $region6: #{forward.18} parent=0 // pred_check
    _
  $region7: #{forward.18} parent=0 // pred_check_branch
    %11 = sbr.rel (0) target = $region9
  $region8: #{forward.18} parent=0 // pred_region
    _
  $region9: #{forward.18} parent=0 // pred_fallthru
    _
  // Predicated region
  $region10: #{forward.18} parent=0 // pred_check
    _
  $region11: #{forward.18} parent=0 // pred_check_branch
    %13 = sbr.rel (0) target = $region13
  $region12: #{forward.18} parent=0 // pred_region
    _
  $region13: #{forward.18} parent=0 // pred_fallthru
    _
  %v14 = vld [vmem:[%s0] sm:$0xf]
  %v15 = vld [vmem:[%s0 + $0x4] sm:$0xf]
  %v16 = vld [vmem:[%s1] sm:$0xff]
  %v17 = vld [vmem:[%s1 + $0x8] sm:$0xff]
  %v18 = vld [vmem:[%s1 + $0x10] sm:$0xff]
  %v19 = vld [vmem:[%s1 + $0x18] sm:$0xff]
  %v20 = vld [vmem:[%s1 + $0x20] sm:$0xff]
  %v21 = vld [vmem:[%s1 + $0x28] sm:$0xff]
  %v22 = vld [vmem:[%s1 + $0x30] sm:$0xff]
  %v23 = vld [vmem:[%s1 + $0x38] sm:$0xff]
  %v24 = vld [vmem:[%s1 + $0x40] sm:$0xff]
  %v25 = vld [vmem:[%s1 + $0x48] sm:$0xff]
  %v26 = vld [vmem:[%s1 + $0x50] sm:$0xff]
  %v27 = vld [vmem:[%s1 + $0x58] sm:$0xff]
  %v28 = vld [vmem:[%s1 + $0x60] sm:$0xff]
  %v29 = vld [vmem:[%s1 + $0x68] sm:$0xff]
  %v30 = vld [vmem:[%s1 + $0x70] sm:$0xff]
  %v31 = vld [vmem:[%s1 + $0x78] sm:$0xff]
  %v32 = vld [vmem:[%s2] sm:$0x3]
  %v34 = vperm.slane %v32, 0
  %v35 = vperm.slane %v32, 1
  %v40 = vunpack.c.l.b16 %v14
  %v41 = vunpack.c.l.b16 %v15
  %v42 = vpack.c.b16 %v41, %v40
  %v60 = vunpack.c.l.b16 %v16
  %v61 = vunpack.c.h.b16 %v16
  %v62 = vunpack.c.l.b16 %v17
  %v63 = vunpack.c.h.b16 %v17
  %v64 = vunpack.c.l.b16 %v18
  %v65 = vunpack.c.h.b16 %v18
  %v66 = vunpack.c.l.b16 %v19
  %v67 = vunpack.c.h.b16 %v19
  %v68 = vunpack.c.l.b16 %v20
  %v69 = vunpack.c.h.b16 %v20
  %v70 = vunpack.c.l.b16 %v21
  %v71 = vunpack.c.h.b16 %v21
  %v72 = vunpack.c.l.b16 %v22
  %v73 = vunpack.c.h.b16 %v22
  %v74 = vunpack.c.l.b16 %v23
  %v75 = vunpack.c.h.b16 %v23
  %v76 = vunpack.c.l.b16 %v24
  %v77 = vunpack.c.h.b16 %v24
  %v78 = vunpack.c.l.b16 %v25
  %v79 = vunpack.c.h.b16 %v25
  %v80 = vunpack.c.l.b16 %v26
  %v81 = vunpack.c.h.b16 %v26
  %v82 = vunpack.c.l.b16 %v27
  %v83 = vunpack.c.h.b16 %v27
  %v84 = vunpack.c.l.b16 %v28
  %v85 = vunpack.c.h.b16 %v28
  %v86 = vunpack.c.l.b16 %v29
  %v87 = vunpack.c.h.b16 %v29
  %v88 = vunpack.c.l.b16 %v30
  %v89 = vunpack.c.h.b16 %v30
  %v90 = vunpack.c.l.b16 %v31
  %v91 = vunpack.c.h.b16 %v31
  %v92 = vpack.c.b16 %v62, %v60
  %v93 = vpack.c.b16 %v63, %v61
  %v94 = vpack.c.b16 %v66, %v64
  %v95 = vpack.c.b16 %v67, %v65
  %v96 = vpack.c.b16 %v70, %v68
  %v97 = vpack.c.b16 %v71, %v69
  %v98 = vpack.c.b16 %v74, %v72
  %v99 = vpack.c.b16 %v75, %v73
  %v100 = vpack.c.b16 %v78, %v76
  %v101 = vpack.c.b16 %v79, %v77
  %v102 = vpack.c.b16 %v82, %v80
  %v103 = vpack.c.b16 %v83, %v81
  %v104 = vpack.c.b16 %v86, %v84
  %v105 = vpack.c.b16 %v87, %v85
  %v106 = vpack.c.b16 %v90, %v88
  %v107 = vpack.c.b16 %v91, %v89
  %124 = vmatpush.bf16.msra.mxu0 %v106
  %125 = vmatpush.bf16.msra.mxu0 %v104
  %126 = vmatpush.bf16.msra.mxu0 %v102
  %127 = vmatpush.bf16.msra.mxu0 %v100
  %128 = vmatpush.bf16.msra.mxu0 %v98
  %129 = vmatpush.bf16.msra.mxu0 %v96
  %130 = vmatpush.bf16.msra.mxu0 %v94
  %131 = vmatpush.bf16.msra.mxu0 %v92
  %132 = vmatmul.bf16.gmra.mxu0 %v42
  %v133 = vpop.f32.mrf.mxu0
  %v134 = vadd.f32 %v34, %v133
  %v135 = vpop.f32.mrf.mxu0
  %v136 = vadd.f32 %v34, %v135
  %137 = vdwg.mxu0
  %138 = vmatpush.bf16.msra.mxu0 %v107
  %139 = vmatpush.bf16.msra.mxu0 %v105
  %140 = vmatpush.bf16.msra.mxu0 %v103
  %141 = vmatpush.bf16.msra.mxu0 %v101
  %142 = vmatpush.bf16.msra.mxu0 %v99
  %143 = vmatpush.bf16.msra.mxu0 %v97
  %144 = vmatpush.bf16.msra.mxu0 %v95
  %145 = vmatpush.bf16.msra.mxu0 %v93
  %146 = vmatmul.bf16.gmra.mxu0 %v42
  %v147 = vpop.f32.mrf.mxu0
  %v148 = vadd.f32 %v35, %v147
  %v149 = vpop.f32.mrf.mxu0
  %v150 = vadd.f32 %v35, %v149
  %151 = vdwg.mxu0
  %v152 = vmax.f32 %v134, 0.0
  %v153 = vmax.f32 %v148, 0.0
  %v154 = vmax.f32 %v136, 0.0
  %v155 = vmax.f32 %v150, 0.0
  %v156 = vpack.c.bf16 %v153, %v152
  %v157 = vpack.c.bf16 %v155, %v154
  %158 = vst [vmem:[%s3] sm:$0xff] %v156
  %159 = vst [vmem:[%s3 + $0x8] sm:$0xff] %v157
  // Predicated region
  $region14: #{forward.18} parent=0 // pred_check
    _
  $region15: #{forward.18} parent=0 // pred_check_branch
    %161 = sbr.rel (0) target = $region17
  $region16: #{forward.18} parent=0 // pred_region
    _
  $region17: #{forward.18} parent=0 // pred_fallthru
    _
  // Predicated region
  $region18: #{forward.18} parent=0 // pred_check
    _
  $region19: #{forward.18} parent=0 // pred_check_branch
    %163 = sbr.rel (0) target = $region21
  $region20: #{forward.18} parent=0 // pred_region
    _
  $region21: #{forward.18} parent=0 // pred_fallthru
    _

// kernel: forward.19
$region0: #{forward.19}
  #allocation0 [shape = 'u32[]', space=smem, size = 0x4, offset = 0x4, fixed_abs, tag = 'smem constant byte address 0x4 - core index']
  #allocation1 [shape = 'u32[72,128]{1,0:T(1,128)}', space=vmem, size = 0x9000, scoped, tag = 'internal scratch']
  %s0 = inlined_call_operand.vmem [shape: bf16[16,256], index: 0, kind: input, shape index: {}]
  %s1 = inlined_call_operand.vmem [shape: bf16[256,512], index: 1, kind: input, shape index: {}]
  %s2 = inlined_call_operand.vmem [shape: f32[1,512], index: 2, kind: input, shape index: {}]
  %s3 = inlined_call_operand.vmem [shape: bf16[16,512], index: 3, kind: output, shape index: {}]
  %s4 = sld [smem:[#allocation0]]
  $region22: #{forward.19} parent=0
    _
  %s6 = ssub.s32 1, %s4
  %s7 = scalar_select 0, %s6, %s4
  // Predicated region
  $region2: #{forward.19} parent=0 // pred_check
    _
  $region3: #{forward.19} parent=0 // pred_check_branch
    %9 = sbr.rel (0) target = $region5
  $region4: #{forward.19} parent=0 // pred_region
    _
  $region5: #{forward.19} parent=0 // pred_fallthru
    _
  // Predicated region
  $region6: #{forward.19} parent=0 // pred_check
    _
  $region7: #{forward.19} parent=0 // pred_check_branch
    %11 = sbr.rel (0) target = $region9
  $region8: #{forward.19} parent=0 // pred_region
    _
  $region9: #{forward.19} parent=0 // pred_fallthru
    _
  // Predicated region
  $region10: #{forward.19} parent=0 // pred_check
    _
  $region11: #{forward.19} parent=0 // pred_check_branch
    %13 = sbr.rel (0) target = $region13
  $region12: #{forward.19} parent=0 // pred_region
    _
  $region13: #{forward.19} parent=0 // pred_fallthru
    _
  %v14 = vld [vmem:[%s0] sm:$0xff]
  %v15 = vld [vmem:[%s0 + $0x8] sm:$0xff]
  %v16 = vld [vmem:[%s1] sm:$0xff]
  %v17 = vld [vmem:[%s1 + $0x8] sm:$0xff]
  %v18 = vld [vmem:[%s1 + $0x10] sm:$0xff]
  %v19 = vld [vmem:[%s1 + $0x18] sm:$0xff]
  %v20 = vld [vmem:[%s1 + $0x20] sm:$0xff]
  %v21 = vld [vmem:[%s1 + $0x28] sm:$0xff]
  %v22 = vld [vmem:[%s1 + $0x30] sm:$0xff]
  %v23 = vld [vmem:[%s1 + $0x38] sm:$0xff]
  %v24 = vld [vmem:[%s1 + $0x40] sm:$0xff]
  %v25 = vld [vmem:[%s1 + $0x48] sm:$0xff]
  %v26 = vld [vmem:[%s1 + $0x50] sm:$0xff]
  %v27 = vld [vmem:[%s1 + $0x58] sm:$0xff]
  %v28 = vld [vmem:[%s1 + $0x60] sm:$0xff]
  %v29 = vld [vmem:[%s1 + $0x68] sm:$0xff]
  %v30 = vld [vmem:[%s1 + $0x70] sm:$0xff]
  %v31 = vld [vmem:[%s1 + $0x78] sm:$0xff]
  %v32 = vld [vmem:[%s1 + $0x80] sm:$0xff]
  %v33 = vld [vmem:[%s1 + $0x88] sm:$0xff]
  %v34 = vld [vmem:[%s1 + $0x90] sm:$0xff]
  %v35 = vld [vmem:[%s1 + $0x98] sm:$0xff]
  %v36 = vld [vmem:[%s1 + $0xa0] sm:$0xff]
  %v37 = vld [vmem:[%s1 + $0xa8] sm:$0xff]
  %v38 = vld [vmem:[%s1 + $0xb0] sm:$0xff]
  %v39 = vld [vmem:[%s1 + $0xb8] sm:$0xff]
  %v40 = vld [vmem:[%s1 + $0xc0] sm:$0xff]
  %v41 = vld [vmem:[%s1 + $0xc8] sm:$0xff]
  %v42 = vld [vmem:[%s1 + $0xd0] sm:$0xff]
  %v43 = vld [vmem:[%s1 + $0xd8] sm:$0xff]
  %v44 = vld [vmem:[%s1 + $0xe0] sm:$0xff]
  %v45 = vld [vmem:[%s1 + $0xe8] sm:$0xff]
  %v46 = vld [vmem:[%s1 + $0xf0] sm:$0xff]
  %v47 = vld [vmem:[%s1 + $0xf8] sm:$0xff]
  %v48 = vld [vmem:[%s1 + $0x100] sm:$0xff]
  %v49 = vld [vmem:[%s1 + $0x108] sm:$0xff]
  %v50 = vld [vmem:[%s1 + $0x110] sm:$0xff]
  %v51 = vld [vmem:[%s1 + $0x118] sm:$0xff]
  %v52 = vld [vmem:[%s1 + $0x120] sm:$0xff]
  %v53 = vld [vmem:[%s1 + $0x128] sm:$0xff]
  %v54 = vld [vmem:[%s1 + $0x130] sm:$0xff]
  %v55 = vld [vmem:[%s1 + $0x138] sm:$0xff]
  %v56 = vld [vmem:[%s1 + $0x140] sm:$0xff]
  %v57 = vld [vmem:[%s1 + $0x148] sm:$0xff]
  %v58 = vld [vmem:[%s1 + $0x150] sm:$0xff]
  %v59 = vld [vmem:[%s1 + $0x158] sm:$0xff]
  %v60 = vld [vmem:[%s1 + $0x160] sm:$0xff]
  %v61 = vld [vmem:[%s1 + $0x168] sm:$0xff]
  %v62 = vld [vmem:[%s1 + $0x170] sm:$0xff]
  %v63 = vld [vmem:[%s1 + $0x178] sm:$0xff]
  %v64 = vld [vmem:[%s1 + $0x180] sm:$0xff]
  %v65 = vld [vmem:[%s1 + $0x188] sm:$0xff]
  %v66 = vld [vmem:[%s1 + $0x190] sm:$0xff]
  %v67 = vld [vmem:[%s1 + $0x198] sm:$0xff]
  %v68 = vld [vmem:[%s1 + $0x1a0] sm:$0xff]
  %v69 = vld [vmem:[%s1 + $0x1a8] sm:$0xff]
  %v70 = vld [vmem:[%s1 + $0x1b0] sm:$0xff]
  %v71 = vld [vmem:[%s1 + $0x1b8] sm:$0xff]
  %v72 = vld [vmem:[%s1 + $0x1c0] sm:$0xff]
  %v73 = vld [vmem:[%s1 + $0x1c8] sm:$0xff]
  %v74 = vld [vmem:[%s1 + $0x1d0] sm:$0xff]
  %v75 = vld [vmem:[%s1 + $0x1d8] sm:$0xff]
  %v76 = vld [vmem:[%s1 + $0x1e0] sm:$0xff]
  %v77 = vld [vmem:[%s1 + $0x1e8] sm:$0xff]
  %v78 = vld [vmem:[%s1 + $0x1f0] sm:$0xff]
  %v79 = vld [vmem:[%s1 + $0x1f8] sm:$0xff]
  %v80 = vld [vmem:[%s2] sm:$0xf]
  %v82 = vperm.slane %v80, 0
  %v83 = vperm.slane %v80, 1
  %v84 = vperm.slane %v80, 2
  %v85 = vperm.slane %v80, 3
  %v92 = vunpack.c.l.b16 %v14
  %v93 = vunpack.c.h.b16 %v14
  %v94 = vunpack.c.l.b16 %v15
  %v95 = vunpack.c.h.b16 %v15
  %v96 = vpack.c.b16 %v94, %v92
  %v97 = vpack.c.b16 %v95, %v93
  %v164 = vunpack.c.l.b16 %v16
  %v165 = vunpack.c.h.b16 %v16
  %v166 = vunpack.c.l.b16 %v17
  %v167 = vunpack.c.h.b16 %v17
  %v168 = vunpack.c.l.b16 %v18
  %v169 = vunpack.c.h.b16 %v18
  %v170 = vunpack.c.l.b16 %v19
  %v171 = vunpack.c.h.b16 %v19
  %v172 = vunpack.c.l.b16 %v20
  %v173 = vunpack.c.h.b16 %v20
  %v174 = vunpack.c.l.b16 %v21
  %v175 = vunpack.c.h.b16 %v21
  %v176 = vunpack.c.l.b16 %v22
  %v177 = vunpack.c.h.b16 %v22
  %v178 = vunpack.c.l.b16 %v23
  %v179 = vunpack.c.h.b16 %v23
  %v180 = vunpack.c.l.b16 %v24
  %v181 = vunpack.c.h.b16 %v24
  %v182 = vunpack.c.l.b16 %v25
  %v183 = vunpack.c.h.b16 %v25
  %v184 = vunpack.c.l.b16 %v26
  %v185 = vunpack.c.h.b16 %v26
  %v186 = vunpack.c.l.b16 %v27
  %v187 = vunpack.c.h.b16 %v27
  %v188 = vunpack.c.l.b16 %v28
  %v189 = vunpack.c.h.b16 %v28
  %v190 = vunpack.c.l.b16 %v29
  %v191 = vunpack.c.h.b16 %v29
  %v192 = vunpack.c.l.b16 %v30
  %v193 = vunpack.c.h.b16 %v30
  %v194 = vunpack.c.l.b16 %v31
  %v195 = vunpack.c.h.b16 %v31
  %v196 = vunpack.c.l.b16 %v32
  %v197 = vunpack.c.h.b16 %v32
  %v198 = vunpack.c.l.b16 %v33
  %v199 = vunpack.c.h.b16 %v33
  %v200 = vunpack.c.l.b16 %v34
  %v201 = vunpack.c.h.b16 %v34
  %v202 = vunpack.c.l.b16 %v35
  %v203 = vunpack.c.h.b16 %v35
  %v204 = vunpack.c.l.b16 %v36
  %v205 = vunpack.c.h.b16 %v36
  %v206 = vunpack.c.l.b16 %v37
  %v207 = vunpack.c.h.b16 %v37
  %v208 = vunpack.c.l.b16 %v38
  %v209 = vunpack.c.h.b16 %v38
  %v210 = vunpack.c.l.b16 %v39
  %v211 = vunpack.c.h.b16 %v39
  %v212 = vunpack.c.l.b16 %v40
  %v213 = vunpack.c.h.b16 %v40
  %v214 = vunpack.c.l.b16 %v41
  %v215 = vunpack.c.h.b16 %v41
  %v216 = vunpack.c.l.b16 %v42
  %v217 = vunpack.c.h.b16 %v42
  %v218 = vunpack.c.l.b16 %v43
  %v219 = vunpack.c.h.b16 %v43
  %v220 = vunpack.c.l.b16 %v44
  %v221 = vunpack.c.h.b16 %v44
  %v222 = vunpack.c.l.b16 %v45
  %v223 = vunpack.c.h.b16 %v45
  %v224 = vunpack.c.l.b16 %v46
  %v225 = vunpack.c.h.b16 %v46
  %v226 = vunpack.c.l.b16 %v47
  %v227 = vunpack.c.h.b16 %v47
  %v228 = vunpack.c.l.b16 %v48
  %v229 = vunpack.c.h.b16 %v48
  %v230 = vunpack.c.l.b16 %v49
  %v231 = vunpack.c.h.b16 %v49
  %v232 = vunpack.c.l.b16 %v50
  %v233 = vunpack.c.h.b16 %v50
  %v234 = vunpack.c.l.b16 %v51
  %v235 = vunpack.c.h.b16 %v51
  %v236 = vunpack.c.l.b16 %v52
  %v237 = vunpack.c.h.b16 %v52
  %v238 = vunpack.c.l.b16 %v53
  %v239 = vunpack.c.h.b16 %v53
  %v240 = vunpack.c.l.b16 %v54
  %v241 = vunpack.c.h.b16 %v54
  %v242 = vunpack.c.l.b16 %v55
  %v243 = vunpack.c.h.b16 %v55
  %v244 = vunpack.c.l.b16 %v56
  %v245 = vunpack.c.h.b16 %v56
  %v246 = vunpack.c.l.b16 %v57
  %v247 = vunpack.c.h.b16 %v57
  %v248 = vunpack.c.l.b16 %v58
  %v249 = vunpack.c.h.b16 %v58
  %v250 = vunpack.c.l.b16 %v59
  %v251 = vunpack.c.h.b16 %v59
  %v252 = vunpack.c.l.b16 %v60
  %v253 = vunpack.c.h.b16 %v60
  %v254 = vunpack.c.l.b16 %v61
  %v255 = vunpack.c.h.b16 %v61
  %v256 = vunpack.c.l.b16 %v62
  %v257 = vunpack.c.h.b16 %v62
  %v258 = vunpack.c.l.b16 %v63
  %v259 = vunpack.c.h.b16 %v63
  %v260 = vunpack.c.l.b16 %v64
  %v261 = vunpack.c.h.b16 %v64
  %v262 = vunpack.c.l.b16 %v65
  %v263 = vunpack.c.h.b16 %v65
  %v264 = vunpack.c.l.b16 %v66
  %v265 = vunpack.c.h.b16 %v66
  %v266 = vunpack.c.l.b16 %v67
  %v267 = vunpack.c.h.b16 %v67
  %v268 = vunpack.c.l.b16 %v68
  %v269 = vunpack.c.h.b16 %v68
  %v270 = vunpack.c.l.b16 %v69
  %v271 = vunpack.c.h.b16 %v69
  %v272 = vunpack.c.l.b16 %v70
  %v273 = vunpack.c.h.b16 %v70
  %v274 = vunpack.c.l.b16 %v71
  %v275 = vunpack.c.h.b16 %v71
  %v276 = vunpack.c.l.b16 %v72
  %v277 = vunpack.c.h.b16 %v72
  %v278 = vunpack.c.l.b16 %v73
  %v279 = vunpack.c.h.b16 %v73
  %v280 = vunpack.c.l.b16 %v74
  %v281 = vunpack.c.h.b16 %v74
  %v282 = vunpack.c.l.b16 %v75
  %v283 = vunpack.c.h.b16 %v75
  %v284 = vunpack.c.l.b16 %v76
  %v285 = vunpack.c.h.b16 %v76
  %v286 = vunpack.c.l.b16 %v77
  %v287 = vunpack.c.h.b16 %v77
  %v288 = vunpack.c.l.b16 %v78
  %v289 = vunpack.c.h.b16 %v78
  %v290 = vunpack.c.l.b16 %v79
  %v291 = vunpack.c.h.b16 %v79
  %v292 = vpack.c.b16 %v168, %v164
  %v293 = vpack.c.b16 %v169, %v165
  %v294 = vpack.c.b16 %v170, %v166
  %v295 = vpack.c.b16 %v171, %v167
  %v296 = vpack.c.b16 %v176, %v172
  %v297 = vpack.c.b16 %v177, %v173
  %v298 = vpack.c.b16 %v178, %v174
  %v299 = vpack.c.b16 %v179, %v175
  %v300 = vpack.c.b16 %v184, %v180
  %v301 = vpack.c.b16 %v185, %v181
  %v302 = vpack.c.b16 %v186, %v182
  %v303 = vpack.c.b16 %v187, %v183
  %v304 = vpack.c.b16 %v192, %v188
  %v305 = vpack.c.b16 %v193, %v189
  %v306 = vpack.c.b16 %v194, %v190
  %v307 = vpack.c.b16 %v195, %v191
  %v308 = vpack.c.b16 %v200, %v196
  %v309 = vpack.c.b16 %v201, %v197
  %v310 = vpack.c.b16 %v202, %v198
  %v311 = vpack.c.b16 %v203, %v199
  %v312 = vpack.c.b16 %v208, %v204
  %v313 = vpack.c.b16 %v209, %v205
  %v314 = vpack.c.b16 %v210, %v206
  %v315 = vpack.c.b16 %v211, %v207
  %v316 = vpack.c.b16 %v216, %v212
  %v317 = vpack.c.b16 %v217, %v213
  %v318 = vpack.c.b16 %v218, %v214
  %v319 = vpack.c.b16 %v219, %v215
  %v320 = vpack.c.b16 %v224, %v220
  %v321 = vpack.c.b16 %v225, %v221
  %v322 = vpack.c.b16 %v226, %v222
  %v323 = vpack.c.b16 %v227, %v223
  %v324 = vpack.c.b16 %v232, %v228
  %v325 = vpack.c.b16 %v233, %v229
  %v326 = vpack.c.b16 %v234, %v230
  %v327 = vpack.c.b16 %v235, %v231
  %v328 = vpack.c.b16 %v240, %v236
  %v329 = vpack.c.b16 %v241, %v237
  %v330 = vpack.c.b16 %v242, %v238
  %v331 = vpack.c.b16 %v243, %v239
  %v332 = vpack.c.b16 %v248, %v244
  %v333 = vpack.c.b16 %v249, %v245
  %v334 = vpack.c.b16 %v250, %v246
  %v335 = vpack.c.b16 %v251, %v247
  %v336 = vpack.c.b16 %v256, %v252
  %v337 = vpack.c.b16 %v257, %v253
  %v338 = vpack.c.b16 %v258, %v254
  %v339 = vpack.c.b16 %v259, %v255
  %v340 = vpack.c.b16 %v264, %v260
  %v341 = vpack.c.b16 %v265, %v261
  %v342 = vpack.c.b16 %v266, %v262
  %v343 = vpack.c.b16 %v267, %v263
  %v344 = vpack.c.b16 %v272, %v268
  %v345 = vpack.c.b16 %v273, %v269
  %v346 = vpack.c.b16 %v274, %v270
  %v347 = vpack.c.b16 %v275, %v271
  %v348 = vpack.c.b16 %v280, %v276
  %v349 = vpack.c.b16 %v281, %v277
  %v350 = vpack.c.b16 %v282, %v278
  %v351 = vpack.c.b16 %v283, %v279
  %v352 = vpack.c.b16 %v288, %v284
  %v353 = vpack.c.b16 %v289, %v285
  %v354 = vpack.c.b16 %v290, %v286
  %v355 = vpack.c.b16 %v291, %v287
  %420 = vmatpush.bf16.msra.mxu0 %v320
  %421 = vmatpush.bf16.msra.mxu0 %v316
  %422 = vmatpush.bf16.msra.mxu0 %v312
  %423 = vmatpush.bf16.msra.mxu0 %v308
  %424 = vmatpush.bf16.msra.mxu0 %v304
  %425 = vmatpush.bf16.msra.mxu0 %v300
  %426 = vmatpush.bf16.msra.mxu0 %v296
  %427 = vmatpush.bf16.msra.mxu0 %v292
  %428 = vmatmul.bf16.gmra.mxu0 %v96
  %v429 = vpop.f32.mrf.mxu0
  %v430 = vadd.f32 %v82, %v429
  %v431 = vpop.f32.mrf.mxu0
  %v432 = vadd.f32 %v82, %v431
  %433 = vdwg.mxu0
  %434 = vmatpush.bf16.msra.mxu0 %v352
  %435 = vmatpush.bf16.msra.mxu0 %v348
  %436 = vmatpush.bf16.msra.mxu0 %v344
  %437 = vmatpush.bf16.msra.mxu0 %v340
  %438 = vmatpush.bf16.msra.mxu0 %v336
  %439 = vmatpush.bf16.msra.mxu0 %v332
  %440 = vmatpush.bf16.msra.mxu0 %v328
  %441 = vmatpush.bf16.msra.mxu0 %v324
  %442 = vmatmul.bf16.gmra.mxu0 %v97
  %v443 = vpop.f32.mrf.mxu0
  %v444 = vadd.f32 %v430, %v443
  %v445 = vpop.f32.mrf.mxu0
  %v446 = vadd.f32 %v432, %v445
  %447 = vdwg.mxu0
  %448 = vmatpush.bf16.msra.mxu0 %v321
  %449 = vmatpush.bf16.msra.mxu0 %v317
  %450 = vmatpush.bf16.msra.mxu0 %v313
  %451 = vmatpush.bf16.msra.mxu0 %v309
  %452 = vmatpush.bf16.msra.mxu0 %v305
  %453 = vmatpush.bf16.msra.mxu0 %v301
  %454 = vmatpush.bf16.msra.mxu0 %v297
  %455 = vmatpush.bf16.msra.mxu0 %v293
  %456 = vmatmul.bf16.gmra.mxu0 %v96
  %v457 = vpop.f32.mrf.mxu0
  %v458 = vadd.f32 %v83, %v457
  %v459 = vpop.f32.mrf.mxu0
  %v460 = vadd.f32 %v83, %v459
  %461 = vdwg.mxu0
  %462 = vmatpush.bf16.msra.mxu0 %v353
  %463 = vmatpush.bf16.msra.mxu0 %v349
  %464 = vmatpush.bf16.msra.mxu0 %v345
  %465 = vmatpush.bf16.msra.mxu0 %v341
  %466 = vmatpush.bf16.msra.mxu0 %v337
  %467 = vmatpush.bf16.msra.mxu0 %v333
  %468 = vmatpush.bf16.msra.mxu0 %v329
  %469 = vmatpush.bf16.msra.mxu0 %v325
  %470 = vmatmul.bf16.gmra.mxu0 %v97
  %v471 = vpop.f32.mrf.mxu0
  %v472 = vadd.f32 %v458, %v471
  %v473 = vpop.f32.mrf.mxu0
  %v474 = vadd.f32 %v460, %v473
  %475 = vdwg.mxu0
  %476 = vmatpush.bf16.msra.mxu0 %v322
  %477 = vmatpush.bf16.msra.mxu0 %v318
  %478 = vmatpush.bf16.msra.mxu0 %v314
  %479 = vmatpush.bf16.msra.mxu0 %v310
  %480 = vmatpush.bf16.msra.mxu0 %v306
  %481 = vmatpush.bf16.msra.mxu0 %v302
  %482 = vmatpush.bf16.msra.mxu0 %v298
  %483 = vmatpush.bf16.msra.mxu0 %v294
  %484 = vmatmul.bf16.gmra.mxu0 %v96
  %v485 = vpop.f32.mrf.mxu0
  %v486 = vadd.f32 %v84, %v485
  %v487 = vpop.f32.mrf.mxu0
  %v488 = vadd.f32 %v84, %v487
  %489 = vdwg.mxu0
  %490 = vmatpush.bf16.msra.mxu0 %v354
  %491 = vmatpush.bf16.msra.mxu0 %v350
  %492 = vmatpush.bf16.msra.mxu0 %v346
  %493 = vmatpush.bf16.msra.mxu0 %v342
  %494 = vmatpush.bf16.msra.mxu0 %v338
  %495 = vmatpush.bf16.msra.mxu0 %v334
  %496 = vmatpush.bf16.msra.mxu0 %v330
  %497 = vmatpush.bf16.msra.mxu0 %v326
  %498 = vmatmul.bf16.gmra.mxu0 %v97
  %v499 = vpop.f32.mrf.mxu0
  %v500 = vadd.f32 %v486, %v499
  %v501 = vpop.f32.mrf.mxu0
  %v502 = vadd.f32 %v488, %v501
  %503 = vdwg.mxu0
  %504 = vmatpush.bf16.msra.mxu0 %v323
  %505 = vmatpush.bf16.msra.mxu0 %v319
  %506 = vmatpush.bf16.msra.mxu0 %v315
  %507 = vmatpush.bf16.msra.mxu0 %v311
  %508 = vmatpush.bf16.msra.mxu0 %v307
  %509 = vmatpush.bf16.msra.mxu0 %v303
  %510 = vmatpush.bf16.msra.mxu0 %v299
  %511 = vmatpush.bf16.msra.mxu0 %v295
  %512 = vmatmul.bf16.gmra.mxu0 %v96
  %v513 = vpop.f32.mrf.mxu0
  %v514 = vadd.f32 %v85, %v513
  %v515 = vpop.f32.mrf.mxu0
  %v516 = vadd.f32 %v85, %v515
  %517 = vdwg.mxu0
  %518 = vmatpush.bf16.msra.mxu0 %v355
  %519 = vmatpush.bf16.msra.mxu0 %v351
  %520 = vmatpush.bf16.msra.mxu0 %v347
  %521 = vmatpush.bf16.msra.mxu0 %v343
  %522 = vmatpush.bf16.msra.mxu0 %v339
  %523 = vmatpush.bf16.msra.mxu0 %v335
  %524 = vmatpush.bf16.msra.mxu0 %v331
  %525 = vmatpush.bf16.msra.mxu0 %v327
  %526 = vmatmul.bf16.gmra.mxu0 %v97
  %v527 = vpop.f32.mrf.mxu0
  %v528 = vadd.f32 %v514, %v527
  %v529 = vpop.f32.mrf.mxu0
  %v530 = vadd.f32 %v516, %v529
  %531 = vdwg.mxu0
  %v532 = vmax.f32 %v444, 0.0
  %v533 = vmax.f32 %v472, 0.0
  %v534 = vmax.f32 %v500, 0.0
  %v535 = vmax.f32 %v528, 0.0
  %v536 = vmax.f32 %v446, 0.0
  %v537 = vmax.f32 %v474, 0.0
  %v538 = vmax.f32 %v502, 0.0
  %v539 = vmax.f32 %v530, 0.0
  %v540 = vpack.c.bf16 %v533, %v532
  %v541 = vpack.c.bf16 %v535, %v534
  %v542 = vpack.c.bf16 %v537, %v536
  %v543 = vpack.c.bf16 %v539, %v538
  %544 = vst [vmem:[%s3] sm:$0xff] %v540
  %545 = vst [vmem:[%s3 + $0x8] sm:$0xff] %v541
  %546 = vst [vmem:[%s3 + $0x10] sm:$0xff] %v542
  %547 = vst [vmem:[%s3 + $0x18] sm:$0xff] %v543
  // Predicated region
  $region14: #{forward.19} parent=0 // pred_check
    _
  $region15: #{forward.19} parent=0 // pred_check_branch
    %549 = sbr.rel (0) target = $region17
  $region16: #{forward.19} parent=0 // pred_region
    _
  $region17: #{forward.19} parent=0 // pred_fallthru
    _
  // Predicated region
  $region18: #{forward.19} parent=0 // pred_check
    _
  $region19: #{forward.19} parent=0 // pred_check_branch
    %551 = sbr.rel (0) target = $region21
  $region20: #{forward.19} parent=0 // pred_region
    _
  $region21: #{forward.19} parent=0 // pred_fallthru
    _

// kernel: forward.20
$region0: #{forward.20}
  #allocation0 [shape = 'u32[]', space=smem, size = 0x4, offset = 0x4, fixed_abs, tag = 'smem constant byte address 0x4 - core index']
  #allocation1 [shape = 'u32[72,128]{1,0:T(1,128)}', space=vmem, size = 0x9000, scoped, tag = 'internal scratch']
  %s0 = inlined_call_operand.vmem [shape: bf16[32,1152], index: 0, kind: input, shape index: {}]
  %s1 = inlined_call_operand.vmem [shape: bf16[1152,256], index: 1, kind: input, shape index: {}]
  %s2 = inlined_call_operand.vmem [shape: f32[1,256], index: 2, kind: input, shape index: {}]
  %s3 = inlined_call_operand.vmem [shape: bf16[32,256], index: 3, kind: output, shape index: {}]
  %s4 = sld [smem:[#allocation0]]
  $region22: #{forward.20} parent=0
    _
  %s6 = ssub.s32 1, %s4
  %s7 = scalar_select 0, %s6, %s4
  // Predicated region
  $region2: #{forward.20} parent=0 // pred_check
    _
  $region3: #{forward.20} parent=0 // pred_check_branch
    %9 = sbr.rel (0) target = $region5
  $region4: #{forward.20} parent=0 // pred_region
    _
  $region5: #{forward.20} parent=0 // pred_fallthru
    _
  // Predicated region
  $region6: #{forward.20} parent=0 // pred_check
    _
  $region7: #{forward.20} parent=0 // pred_check_branch
    %11 = sbr.rel (0) target = $region9
  $region8: #{forward.20} parent=0 // pred_region
    _
  $region9: #{forward.20} parent=0 // pred_fallthru
    _
  // Predicated region
  $region10: #{forward.20} parent=0 // pred_check
    _
  $region11: #{forward.20} parent=0 // pred_check_branch
    %13 = sbr.rel (0) target = $region13
  $region12: #{forward.20} parent=0 // pred_region
    _
  $region13: #{forward.20} parent=0 // pred_fallthru
    _
  %v14 = vld [vmem:[%s0] sm:$0xff]
  %v15 = vld [vmem:[%s0 + $0x8] sm:$0xff]
  %v16 = vld [vmem:[%s0 + $0x10] sm:$0xff]
  %v17 = vld [vmem:[%s0 + $0x18] sm:$0xff]
  %v18 = vld [vmem:[%s0 + $0x20] sm:$0xf]
  %v19 = vld [vmem:[%s0 + $0x24] sm:$0xff]
  %v20 = vld [vmem:[%s0 + $0x2c] sm:$0xff]
  %v21 = vld [vmem:[%s0 + $0x34] sm:$0xff]
  %v22 = vld [vmem:[%s0 + $0x3c] sm:$0xff]
  %v23 = vld [vmem:[%s0 + $0x44] sm:$0xf]
  %v24 = vld [vmem:[%s0 + $0x48] sm:$0xff]
  %v25 = vld [vmem:[%s0 + $0x50] sm:$0xff]
  %v26 = vld [vmem:[%s0 + $0x58] sm:$0xff]
  %v27 = vld [vmem:[%s0 + $0x60] sm:$0xff]
  %v28 = vld [vmem:[%s0 + $0x68] sm:$0xf]
  %v29 = vld [vmem:[%s0 + $0x6c] sm:$0xff]
  %v30 = vld [vmem:[%s0 + $0x74] sm:$0xff]
  %v31 = vld [vmem:[%s0 + $0x7c] sm:$0xff]
  %v32 = vld [vmem:[%s0 + $0x84] sm:$0xff]
  %v33 = vld [vmem:[%s0 + $0x8c] sm:$0xf]
  %v34 = vld [vmem:[%s1] sm:$0xff]
  %v35 = vld [vmem:[%s1 + $0x8] sm:$0xff]
  %v36 = vld [vmem:[%s1 + $0x10] sm:$0xff]
  %v37 = vld [vmem:[%s1 + $0x18] sm:$0xff]
  %v38 = vld [vmem:[%s1 + $0x20] sm:$0xff]
  %v39 = vld [vmem:[%s1 + $0x28] sm:$0xff]
  %v40 = vld [vmem:[%s1 + $0x30] sm:$0xff]
  %v41 = vld [vmem:[%s1 + $0x38] sm:$0xff]
  %v42 = vld [vmem:[%s1 + $0x40] sm:$0xff]
  %v43 = vld [vmem:[%s1 + $0x48] sm:$0xff]
  %v44 = vld [vmem:[%s1 + $0x50] sm:$0xff]
  %v45 = vld [vmem:[%s1 + $0x58] sm:$0xff]
  %v46 = vld [vmem:[%s1 + $0x60] sm:$0xff]
  %v47 = vld [vmem:[%s1 + $0x68] sm:$0xff]
  %v48 = vld [vmem:[%s1 + $0x70] sm:$0xff]
  %v49 = vld [vmem:[%s1 + $0x78] sm:$0xff]
  %v50 = vld [vmem:[%s1 + $0x80] sm:$0xff]
  %v51 = vld [vmem:[%s1 + $0x88] sm:$0xff]
  %v52 = vld [vmem:[%s1 + $0x90] sm:$0xff]
  %v53 = vld [vmem:[%s1 + $0x98] sm:$0xff]
  %v54 = vld [vmem:[%s1 + $0xa0] sm:$0xff]
  %v55 = vld [vmem:[%s1 + $0xa8] sm:$0xff]
  %v56 = vld [vmem:[%s1 + $0xb0] sm:$0xff]
  %v57 = vld [vmem:[%s1 + $0xb8] sm:$0xff]
  %v58 = vld [vmem:[%s1 + $0xc0] sm:$0xff]
  %v59 = vld [vmem:[%s1 + $0xc8] sm:$0xff]
  %v60 = vld [vmem:[%s1 + $0xd0] sm:$0xff]
  %v61 = vld [vmem:[%s1 + $0xd8] sm:$0xff]
  %v62 = vld [vmem:[%s1 + $0xe0] sm:$0xff]
  %v63 = vld [vmem:[%s1 + $0xe8] sm:$0xff]
  %v64 = vld [vmem:[%s1 + $0xf0] sm:$0xff]
  %v65 = vld [vmem:[%s1 + $0xf8] sm:$0xff]
  %v66 = vld [vmem:[%s1 + $0x100] sm:$0xff]
  %v67 = vld [vmem:[%s1 + $0x108] sm:$0xff]
  %v68 = vld [vmem:[%s1 + $0x110] sm:$0xff]
  %v69 = vld [vmem:[%s1 + $0x118] sm:$0xff]
  %v70 = vld [vmem:[%s1 + $0x120] sm:$0xff]
  %v71 = vld [vmem:[%s1 + $0x128] sm:$0xff]
  %v72 = vld [vmem:[%s1 + $0x130] sm:$0xff]
  %v73 = vld [vmem:[%s1 + $0x138] sm:$0xff]
  %v74 = vld [vmem:[%s1 + $0x140] sm:$0xff]
  %v75 = vld [vmem:[%s1 + $0x148] sm:$0xff]
  %v76 = vld [vmem:[%s1 + $0x150] sm:$0xff]
  %v77 = vld [vmem:[%s1 + $0x158] sm:$0xff]
  %v78 = vld [vmem:[%s1 + $0x160] sm:$0xff]
  %v79 = vld [vmem:[%s1 + $0x168] sm:$0xff]
  %v80 = vld [vmem:[%s1 + $0x170] sm:$0xff]
  %v81 = vld [vmem:[%s1 + $0x178] sm:$0xff]
  %v82 = vld [vmem:[%s1 + $0x180] sm:$0xff]
  %v83 = vld [vmem:[%s1 + $0x188] sm:$0xff]
  %v84 = vld [vmem:[%s1 + $0x190] sm:$0xff]
  %v85 = vld [vmem:[%s1 + $0x198] sm:$0xff]
  %v86 = vld [vmem:[%s1 + $0x1a0] sm:$0xff]
  %v87 = vld [vmem:[%s1 + $0x1a8] sm:$0xff]
  %v88 = vld [vmem:[%s1 + $0x1b0] sm:$0xff]
  %v89 = vld [vmem:[%s1 + $0x1b8] sm:$0xff]
  %v90 = vld [vmem:[%s1 + $0x1c0] sm:$0xff]
  %v91 = vld [vmem:[%s1 + $0x1c8] sm:$0xff]
  %v92 = vld [vmem:[%s1 + $0x1d0] sm:$0xff]
  %v93 = vld [vmem:[%s1 + $0x1d8] sm:$0xff]
  %v94 = vld [vmem:[%s1 + $0x1e0] sm:$0xff]
  %v95 = vld [vmem:[%s1 + $0x1e8] sm:$0xff]
  %v96 = vld [vmem:[%s1 + $0x1f0] sm:$0xff]
  %v97 = vld [vmem:[%s1 + $0x1f8] sm:$0xff]
  %v98 = vld [vmem:[%s1 + $0x200] sm:$0xff]
  %v99 = vld [vmem:[%s1 + $0x208] sm:$0xff]
  %v100 = vld [vmem:[%s1 + $0x210] sm:$0xff]
  %v101 = vld [vmem:[%s1 + $0x218] sm:$0xff]
  %v102 = vld [vmem:[%s1 + $0x220] sm:$0xff]
  %v103 = vld [vmem:[%s1 + $0x228] sm:$0xff]
  %v104 = vld [vmem:[%s1 + $0x230] sm:$0xff]
  %v105 = vld [vmem:[%s1 + $0x238] sm:$0xff]
  %v106 = vld [vmem:[%s1 + $0x240] sm:$0xff]
  %v107 = vld [vmem:[%s1 + $0x248] sm:$0xff]
  %v108 = vld [vmem:[%s1 + $0x250] sm:$0xff]
  %v109 = vld [vmem:[%s1 + $0x258] sm:$0xff]
  %v110 = vld [vmem:[%s1 + $0x260] sm:$0xff]
  %v111 = vld [vmem:[%s1 + $0x268] sm:$0xff]
  %v112 = vld [vmem:[%s1 + $0x270] sm:$0xff]
  %v113 = vld [vmem:[%s1 + $0x278] sm:$0xff]
  %v114 = vld [vmem:[%s1 + $0x280] sm:$0xff]
  %v115 = vld [vmem:[%s1 + $0x288] sm:$0xff]
  %v116 = vld [vmem:[%s1 + $0x290] sm:$0xff]
  %v117 = vld [vmem:[%s1 + $0x298] sm:$0xff]
  %v118 = vld [vmem:[%s1 + $0x2a0] sm:$0xff]
  %v119 = vld [vmem:[%s1 + $0x2a8] sm:$0xff]
  %v120 = vld [vmem:[%s1 + $0x2b0] sm:$0xff]
  %v121 = vld [vmem:[%s1 + $0x2b8] sm:$0xff]
  %v122 = vld [vmem:[%s1 + $0x2c0] sm:$0xff]
  %v123 = vld [vmem:[%s1 + $0x2c8] sm:$0xff]
  %v124 = vld [vmem:[%s1 + $0x2d0] sm:$0xff]
  %v125 = vld [vmem:[%s1 + $0x2d8] sm:$0xff]
  %v126 = vld [vmem:[%s1 + $0x2e0] sm:$0xff]
  %v127 = vld [vmem:[%s1 + $0x2e8] sm:$0xff]
  %v128 = vld [vmem:[%s1 + $0x2f0] sm:$0xff]
  %v129 = vld [vmem:[%s1 + $0x2f8] sm:$0xff]
  %v130 = vld [vmem:[%s1 + $0x300] sm:$0xff]
  %v131 = vld [vmem:[%s1 + $0x308] sm:$0xff]
  %v132 = vld [vmem:[%s1 + $0x310] sm:$0xff]
  %v133 = vld [vmem:[%s1 + $0x318] sm:$0xff]
  %v134 = vld [vmem:[%s1 + $0x320] sm:$0xff]
  %v135 = vld [vmem:[%s1 + $0x328] sm:$0xff]
  %v136 = vld [vmem:[%s1 + $0x330] sm:$0xff]
  %v137 = vld [vmem:[%s1 + $0x338] sm:$0xff]
  %v138 = vld [vmem:[%s1 + $0x340] sm:$0xff]
  %v139 = vld [vmem:[%s1 + $0x348] sm:$0xff]
  %v140 = vld [vmem:[%s1 + $0x350] sm:$0xff]
  %v141 = vld [vmem:[%s1 + $0x358] sm:$0xff]
  %v142 = vld [vmem:[%s1 + $0x360] sm:$0xff]
  %v143 = vld [vmem:[%s1 + $0x368] sm:$0xff]
  %v144 = vld [vmem:[%s1 + $0x370] sm:$0xff]
  %v145 = vld [vmem:[%s1 + $0x378] sm:$0xff]
  %v146 = vld [vmem:[%s1 + $0x380] sm:$0xff]
  %v147 = vld [vmem:[%s1 + $0x388] sm:$0xff]
  %v148 = vld [vmem:[%s1 + $0x390] sm:$0xff]
  %v149 = vld [vmem:[%s1 + $0x398] sm:$0xff]
  %v150 = vld [vmem:[%s1 + $0x3a0] sm:$0xff]
  %v151 = vld [vmem:[%s1 + $0x3a8] sm:$0xff]
  %v152 = vld [vmem:[%s1 + $0x3b0] sm:$0xff]
  %v153 = vld [vmem:[%s1 + $0x3b8] sm:$0xff]
  %v154 = vld [vmem:[%s1 + $0x3c0] sm:$0xff]
  %v155 = vld [vmem:[%s1 + $0x3c8] sm:$0xff]
  %v156 = vld [vmem:[%s1 + $0x3d0] sm:$0xff]
  %v157 = vld [vmem:[%s1 + $0x3d8] sm:$0xff]
  %v158 = vld [vmem:[%s1 + $0x3e0] sm:$0xff]
  %v159 = vld [vmem:[%s1 + $0x3e8] sm:$0xff]
  %v160 = vld [vmem:[%s1 + $0x3f0] sm:$0xff]
  %v161 = vld [vmem:[%s1 + $0x3f8] sm:$0xff]
  %v162 = vld [vmem:[%s1 + $0x400] sm:$0xff]
  %v163 = vld [vmem:[%s1 + $0x408] sm:$0xff]
  %v164 = vld [vmem:[%s1 + $0x410] sm:$0xff]
  %v165 = vld [vmem:[%s1 + $0x418] sm:$0xff]
  %v166 = vld [vmem:[%s1 + $0x420] sm:$0xff]
  %v167 = vld [vmem:[%s1 + $0x428] sm:$0xff]
  %v168 = vld [vmem:[%s1 + $0x430] sm:$0xff]
  %v169 = vld [vmem:[%s1 + $0x438] sm:$0xff]
  %v170 = vld [vmem:[%s1 + $0x440] sm:$0xff]
  %v171 = vld [vmem:[%s1 + $0x448] sm:$0xff]
  %v172 = vld [vmem:[%s1 + $0x450] sm:$0xff]
  %v173 = vld [vmem:[%s1 + $0x458] sm:$0xff]
  %v174 = vld [vmem:[%s1 + $0x460] sm:$0xff]
  %v175 = vld [vmem:[%s1 + $0x468] sm:$0xff]
  %v176 = vld [vmem:[%s1 + $0x470] sm:$0xff]
  %v177 = vld [vmem:[%s1 + $0x478] sm:$0xff]
  %v178 = vld [vmem:[%s2] sm:$0x3]
  %v180 = vperm.slane %v178, 0
  %v181 = vperm.slane %v178, 1
  %v204 = vunpack.c.l.b16 %v14
  %v205 = vunpack.c.h.b16 %v14
  %v206 = vunpack.c.l.b16 %v15
  %v207 = vunpack.c.h.b16 %v15
  %v208 = vunpack.c.l.b16 %v16
  %v209 = vunpack.c.h.b16 %v16
  %v210 = vunpack.c.l.b16 %v17
  %v211 = vunpack.c.h.b16 %v17
  %v212 = vunpack.c.l.b16 %v18
  %v213 = vunpack.c.l.b16 %v19
  %v214 = vunpack.c.h.b16 %v19
  %v215 = vunpack.c.l.b16 %v20
  %v216 = vunpack.c.h.b16 %v20
  %v217 = vunpack.c.l.b16 %v21
  %v218 = vunpack.c.h.b16 %v21
  %v219 = vunpack.c.l.b16 %v22
  %v220 = vunpack.c.h.b16 %v22
  %v221 = vunpack.c.l.b16 %v23
  %v222 = vunpack.c.l.b16 %v24
  %v223 = vunpack.c.h.b16 %v24
  %v224 = vunpack.c.l.b16 %v25
  %v225 = vunpack.c.h.b16 %v25
  %v226 = vunpack.c.l.b16 %v26
  %v227 = vunpack.c.h.b16 %v26
  %v228 = vunpack.c.l.b16 %v27
  %v229 = vunpack.c.h.b16 %v27
  %v230 = vunpack.c.l.b16 %v28
  %v231 = vunpack.c.l.b16 %v29
  %v232 = vunpack.c.h.b16 %v29
  %v233 = vunpack.c.l.b16 %v30
  %v234 = vunpack.c.h.b16 %v30
  %v235 = vunpack.c.l.b16 %v31
  %v236 = vunpack.c.h.b16 %v31
  %v237 = vunpack.c.l.b16 %v32
  %v238 = vunpack.c.h.b16 %v32
  %v239 = vunpack.c.l.b16 %v33
  %v240 = vpack.c.b16 %v213, %v204
  %v241 = vpack.c.b16 %v214, %v205
  %v242 = vpack.c.b16 %v215, %v206
  %v243 = vpack.c.b16 %v216, %v207
  %v244 = vpack.c.b16 %v217, %v208
  %v245 = vpack.c.b16 %v218, %v209
  %v246 = vpack.c.b16 %v219, %v210
  %v247 = vpack.c.b16 %v220, %v211
  %v248 = vpack.c.b16 %v221, %v212
  %v249 = vpack.c.b16 %v231, %v222
  %v250 = vpack.c.b16 %v232, %v223
  %v251 = vpack.c.b16 %v233, %v224
  %v252 = vpack.c.b16 %v234, %v225
  %v253 = vpack.c.b16 %v235, %v226
  %v254 = vpack.c.b16 %v236, %v227
  %v255 = vpack.c.b16 %v237, %v228
  %v256 = vpack.c.b16 %v238, %v229
  %v257 = vpack.c.b16 %v239, %v230
  %v420 = vunpack.c.l.b16 %v34
  %v421 = vunpack.c.h.b16 %v34
  %v422 = vunpack.c.l.b16 %v35
  %v423 = vunpack.c.h.b16 %v35
  %v424 = vunpack.c.l.b16 %v36
  %v425 = vunpack.c.h.b16 %v36
  %v426 = vunpack.c.l.b16 %v37
  %v427 = vunpack.c.h.b16 %v37
  %v428 = vunpack.c.l.b16 %v38
  %v429 = vunpack.c.h.b16 %v38
  %v430 = vunpack.c.l.b16 %v39
  %v431 = vunpack.c.h.b16 %v39
  %v432 = vunpack.c.l.b16 %v40
  %v433 = vunpack.c.h.b16 %v40
  %v434 = vunpack.c.l.b16 %v41
  %v435 = vunpack.c.h.b16 %v41
  %v436 = vunpack.c.l.b16 %v42
  %v437 = vunpack.c.h.b16 %v42
  %v438 = vunpack.c.l.b16 %v43
  %v439 = vunpack.c.h.b16 %v43
  %v440 = vunpack.c.l.b16 %v44
  %v441 = vunpack.c.h.b16 %v44
  %v442 = vunpack.c.l.b16 %v45
  %v443 = vunpack.c.h.b16 %v45
  %v444 = vunpack.c.l.b16 %v46
  %v445 = vunpack.c.h.b16 %v46
  %v446 = vunpack.c.l.b16 %v47
  %v447 = vunpack.c.h.b16 %v47
  %v448 = vunpack.c.l.b16 %v48
  %v449 = vunpack.c.h.b16 %v48
  %v450 = vunpack.c.l.b16 %v49
  %v451 = vunpack.c.h.b16 %v49
  %v452 = vunpack.c.l.b16 %v50
  %v453 = vunpack.c.h.b16 %v50
  %v454 = vunpack.c.l.b16 %v51
  %v455 = vunpack.c.h.b16 %v51
  %v456 = vunpack.c.l.b16 %v52
  %v457 = vunpack.c.h.b16 %v52
  %v458 = vunpack.c.l.b16 %v53
  %v459 = vunpack.c.h.b16 %v53
  %v460 = vunpack.c.l.b16 %v54
  %v461 = vunpack.c.h.b16 %v54
  %v462 = vunpack.c.l.b16 %v55
  %v463 = vunpack.c.h.b16 %v55
  %v464 = vunpack.c.l.b16 %v56
  %v465 = vunpack.c.h.b16 %v56
  %v466 = vunpack.c.l.b16 %v57
  %v467 = vunpack.c.h.b16 %v57
  %v468 = vunpack.c.l.b16 %v58
  %v469 = vunpack.c.h.b16 %v58
  %v470 = vunpack.c.l.b16 %v59
  %v471 = vunpack.c.h.b16 %v59
  %v472 = vunpack.c.l.b16 %v60
  %v473 = vunpack.c.h.b16 %v60
  %v474 = vunpack.c.l.b16 %v61
  %v475 = vunpack.c.h.b16 %v61
  %v476 = vunpack.c.l.b16 %v62
  %v477 = vunpack.c.h.b16 %v62
  %v478 = vunpack.c.l.b16 %v63
  %v479 = vunpack.c.h.b16 %v63
  %v480 = vunpack.c.l.b16 %v64
  %v481 = vunpack.c.h.b16 %v64
  %v482 = vunpack.c.l.b16 %v65
  %v483 = vunpack.c.h.b16 %v65
  %v484 = vunpack.c.l.b16 %v66
  %v485 = vunpack.c.h.b16 %v66
  %v486 = vunpack.c.l.b16 %v67
  %v487 = vunpack.c.h.b16 %v67
  %v488 = vunpack.c.l.b16 %v68
  %v489 = vunpack.c.h.b16 %v68
  %v490 = vunpack.c.l.b16 %v69
  %v491 = vunpack.c.h.b16 %v69
  %v492 = vunpack.c.l.b16 %v70
  %v493 = vunpack.c.h.b16 %v70
  %v494 = vunpack.c.l.b16 %v71
  %v495 = vunpack.c.h.b16 %v71
  %v496 = vunpack.c.l.b16 %v72
  %v497 = vunpack.c.h.b16 %v72
  %v498 = vunpack.c.l.b16 %v73
  %v499 = vunpack.c.h.b16 %v73
  %v500 = vunpack.c.l.b16 %v74
  %v501 = vunpack.c.h.b16 %v74
  %v502 = vunpack.c.l.b16 %v75
  %v503 = vunpack.c.h.b16 %v75
  %v504 = vunpack.c.l.b16 %v76
  %v505 = vunpack.c.h.b16 %v76
  %v506 = vunpack.c.l.b16 %v77
  %v507 = vunpack.c.h.b16 %v77
  %v508 = vunpack.c.l.b16 %v78
  %v509 = vunpack.c.h.b16 %v78
  %v510 = vunpack.c.l.b16 %v79
  %v511 = vunpack.c.h.b16 %v79
  %v512 = vunpack.c.l.b16 %v80
  %v513 = vunpack.c.h.b16 %v80
  %v514 = vunpack.c.l.b16 %v81
  %v515 = vunpack.c.h.b16 %v81
  %v516 = vunpack.c.l.b16 %v82
  %v517 = vunpack.c.h.b16 %v82
  %v518 = vunpack.c.l.b16 %v83
  %v519 = vunpack.c.h.b16 %v83
  %v520 = vunpack.c.l.b16 %v84
  %v521 = vunpack.c.h.b16 %v84
  %v522 = vunpack.c.l.b16 %v85
  %v523 = vunpack.c.h.b16 %v85
  %v524 = vunpack.c.l.b16 %v86
  %v525 = vunpack.c.h.b16 %v86
  %v526 = vunpack.c.l.b16 %v87
  %v527 = vunpack.c.h.b16 %v87
  %v528 = vunpack.c.l.b16 %v88
  %v529 = vunpack.c.h.b16 %v88
  %v530 = vunpack.c.l.b16 %v89
  %v531 = vunpack.c.h.b16 %v89
  %v532 = vunpack.c.l.b16 %v90
  %v533 = vunpack.c.h.b16 %v90
  %v534 = vunpack.c.l.b16 %v91
  %v535 = vunpack.c.h.b16 %v91
  %v536 = vunpack.c.l.b16 %v92
  %v537 = vunpack.c.h.b16 %v92
  %v538 = vunpack.c.l.b16 %v93
  %v539 = vunpack.c.h.b16 %v93
  %v540 = vunpack.c.l.b16 %v94
  %v541 = vunpack.c.h.b16 %v94
  %v542 = vunpack.c.l.b16 %v95
  %v543 = vunpack.c.h.b16 %v95
  %v544 = vunpack.c.l.b16 %v96
  %v545 = vunpack.c.h.b16 %v96
  %v546 = vunpack.c.l.b16 %v97
  %v547 = vunpack.c.h.b16 %v97
  %v548 = vunpack.c.l.b16 %v98
  %v549 = vunpack.c.h.b16 %v98
  %v550 = vunpack.c.l.b16 %v99
  %v551 = vunpack.c.h.b16 %v99
  %v552 = vunpack.c.l.b16 %v100
  %v553 = vunpack.c.h.b16 %v100
  %v554 = vunpack.c.l.b16 %v101
  %v555 = vunpack.c.h.b16 %v101
  %v556 = vunpack.c.l.b16 %v102
  %v557 = vunpack.c.h.b16 %v102
  %v558 = vunpack.c.l.b16 %v103
  %v559 = vunpack.c.h.b16 %v103
  %v560 = vunpack.c.l.b16 %v104
  %v561 = vunpack.c.h.b16 %v104
  %v562 = vunpack.c.l.b16 %v105
  %v563 = vunpack.c.h.b16 %v105
  %v564 = vunpack.c.l.b16 %v106
  %v565 = vunpack.c.h.b16 %v106
  %v566 = vunpack.c.l.b16 %v107
  %v567 = vunpack.c.h.b16 %v107
  %v568 = vunpack.c.l.b16 %v108
  %v569 = vunpack.c.h.b16 %v108
  %v570 = vunpack.c.l.b16 %v109
  %v571 = vunpack.c.h.b16 %v109
  %v572 = vunpack.c.l.b16 %v110
  %v573 = vunpack.c.h.b16 %v110
  %v574 = vunpack.c.l.b16 %v111
  %v575 = vunpack.c.h.b16 %v111
  %v576 = vunpack.c.l.b16 %v112
  %v577 = vunpack.c.h.b16 %v112
  %v578 = vunpack.c.l.b16 %v113
  %v579 = vunpack.c.h.b16 %v113
  %v580 = vunpack.c.l.b16 %v114
  %v581 = vunpack.c.h.b16 %v114
  %v582 = vunpack.c.l.b16 %v115
  %v583 = vunpack.c.h.b16 %v115
  %v584 = vunpack.c.l.b16 %v116
  %v585 = vunpack.c.h.b16 %v116
  %v586 = vunpack.c.l.b16 %v117
  %v587 = vunpack.c.h.b16 %v117
  %v588 = vunpack.c.l.b16 %v118
  %v589 = vunpack.c.h.b16 %v118
  %v590 = vunpack.c.l.b16 %v119
  %v591 = vunpack.c.h.b16 %v119
  %v592 = vunpack.c.l.b16 %v120
  %v593 = vunpack.c.h.b16 %v120
  %v594 = vunpack.c.l.b16 %v121
  %v595 = vunpack.c.h.b16 %v121
  %v596 = vunpack.c.l.b16 %v122
  %v597 = vunpack.c.h.b16 %v122
  %v598 = vunpack.c.l.b16 %v123
  %v599 = vunpack.c.h.b16 %v123
  %v600 = vunpack.c.l.b16 %v124
  %v601 = vunpack.c.h.b16 %v124
  %v602 = vunpack.c.l.b16 %v125
  %v603 = vunpack.c.h.b16 %v125
  %v604 = vunpack.c.l.b16 %v126
  %v605 = vunpack.c.h.b16 %v126
  %v606 = vunpack.c.l.b16 %v127
  %v607 = vunpack.c.h.b16 %v127
  %v608 = vunpack.c.l.b16 %v128
  %v609 = vunpack.c.h.b16 %v128
  %v610 = vunpack.c.l.b16 %v129
  %v611 = vunpack.c.h.b16 %v129
  %v612 = vunpack.c.l.b16 %v130
  %v613 = vunpack.c.h.b16 %v130
  %v614 = vunpack.c.l.b16 %v131
  %v615 = vunpack.c.h.b16 %v131
  %v616 = vunpack.c.l.b16 %v132
  %v617 = vunpack.c.h.b16 %v132
  %v618 = vunpack.c.l.b16 %v133
  %v619 = vunpack.c.h.b16 %v133
  %v620 = vunpack.c.l.b16 %v134
  %v621 = vunpack.c.h.b16 %v134
  %v622 = vunpack.c.l.b16 %v135
  %v623 = vunpack.c.h.b16 %v135
  %v624 = vunpack.c.l.b16 %v136
  %v625 = vunpack.c.h.b16 %v136
  %v626 = vunpack.c.l.b16 %v137
  %v627 = vunpack.c.h.b16 %v137
  %v628 = vunpack.c.l.b16 %v138
  %v629 = vunpack.c.h.b16 %v138
  %v630 = vunpack.c.l.b16 %v139
  %v631 = vunpack.c.h.b16 %v139
  %v632 = vunpack.c.l.b16 %v140
  %v633 = vunpack.c.h.b16 %v140
  %v634 = vunpack.c.l.b16 %v141
  %v635 = vunpack.c.h.b16 %v141
  %v636 = vunpack.c.l.b16 %v142
  %v637 = vunpack.c.h.b16 %v142
  %v638 = vunpack.c.l.b16 %v143
  %v639 = vunpack.c.h.b16 %v143
  %v640 = vunpack.c.l.b16 %v144
  %v641 = vunpack.c.h.b16 %v144
  %v642 = vunpack.c.l.b16 %v145
  %v643 = vunpack.c.h.b16 %v145
  %v644 = vunpack.c.l.b16 %v146
  %v645 = vunpack.c.h.b16 %v146
  %v646 = vunpack.c.l.b16 %v147
  %v647 = vunpack.c.h.b16 %v147
  %v648 = vunpack.c.l.b16 %v148
  %v649 = vunpack.c.h.b16 %v148
  %v650 = vunpack.c.l.b16 %v149
  %v651 = vunpack.c.h.b16 %v149
  %v652 = vunpack.c.l.b16 %v150
  %v653 = vunpack.c.h.b16 %v150
  %v654 = vunpack.c.l.b16 %v151
  %v655 = vunpack.c.h.b16 %v151
  %v656 = vunpack.c.l.b16 %v152
  %v657 = vunpack.c.h.b16 %v152
  %v658 = vunpack.c.l.b16 %v153
  %v659 = vunpack.c.h.b16 %v153
  %v660 = vunpack.c.l.b16 %v154
  %v661 = vunpack.c.h.b16 %v154
  %v662 = vunpack.c.l.b16 %v155
  %v663 = vunpack.c.h.b16 %v155
  %v664 = vunpack.c.l.b16 %v156
  %v665 = vunpack.c.h.b16 %v156
  %v666 = vunpack.c.l.b16 %v157
  %v667 = vunpack.c.h.b16 %v157
  %v668 = vunpack.c.l.b16 %v158
  %v669 = vunpack.c.h.b16 %v158
  %v670 = vunpack.c.l.b16 %v159
  %v671 = vunpack.c.h.b16 %v159
  %v672 = vunpack.c.l.b16 %v160
  %v673 = vunpack.c.h.b16 %v160
  %v674 = vunpack.c.l.b16 %v161
  %v675 = vunpack.c.h.b16 %v161
  %v676 = vunpack.c.l.b16 %v162
  %v677 = vunpack.c.h.b16 %v162
  %v678 = vunpack.c.l.b16 %v163
  %v679 = vunpack.c.h.b16 %v163
  %v680 = vunpack.c.l.b16 %v164
  %v681 = vunpack.c.h.b16 %v164
  %v682 = vunpack.c.l.b16 %v165
  %v683 = vunpack.c.h.b16 %v165
  %v684 = vunpack.c.l.b16 %v166
  %v685 = vunpack.c.h.b16 %v166
  %v686 = vunpack.c.l.b16 %v167
  %v687 = vunpack.c.h.b16 %v167
  %v688 = vunpack.c.l.b16 %v168
  %v689 = vunpack.c.h.b16 %v168
  %v690 = vunpack.c.l.b16 %v169
  %v691 = vunpack.c.h.b16 %v169
  %v692 = vunpack.c.l.b16 %v170
  %v693 = vunpack.c.h.b16 %v170
  %v694 = vunpack.c.l.b16 %v171
  %v695 = vunpack.c.h.b16 %v171
  %v696 = vunpack.c.l.b16 %v172
  %v697 = vunpack.c.h.b16 %v172
  %v698 = vunpack.c.l.b16 %v173
  %v699 = vunpack.c.h.b16 %v173
  %v700 = vunpack.c.l.b16 %v174
  %v701 = vunpack.c.h.b16 %v174
  %v702 = vunpack.c.l.b16 %v175
  %v703 = vunpack.c.h.b16 %v175
  %v704 = vunpack.c.l.b16 %v176
  %v705 = vunpack.c.h.b16 %v176
  %v706 = vunpack.c.l.b16 %v177
  %v707 = vunpack.c.h.b16 %v177
  %v708 = vpack.c.b16 %v422, %v420
  %v709 = vpack.c.b16 %v423, %v421
  %v710 = vpack.c.b16 %v426, %v424
  %v711 = vpack.c.b16 %v427, %v425
  %v712 = vpack.c.b16 %v430, %v428
  %v713 = vpack.c.b16 %v431, %v429
  %v714 = vpack.c.b16 %v434, %v432
  %v715 = vpack.c.b16 %v435, %v433
  %v716 = vpack.c.b16 %v438, %v436
  %v717 = vpack.c.b16 %v439, %v437
  %v718 = vpack.c.b16 %v442, %v440
  %v719 = vpack.c.b16 %v443, %v441
  %v720 = vpack.c.b16 %v446, %v444
  %v721 = vpack.c.b16 %v447, %v445
  %v722 = vpack.c.b16 %v450, %v448
  %v723 = vpack.c.b16 %v451, %v449
  %v724 = vpack.c.b16 %v454, %v452
  %v725 = vpack.c.b16 %v455, %v453
  %v726 = vpack.c.b16 %v458, %v456
  %v727 = vpack.c.b16 %v459, %v457
  %v728 = vpack.c.b16 %v462, %v460
  %v729 = vpack.c.b16 %v463, %v461
  %v730 = vpack.c.b16 %v466, %v464
  %v731 = vpack.c.b16 %v467, %v465
  %v732 = vpack.c.b16 %v470, %v468
  %v733 = vpack.c.b16 %v471, %v469
  %v734 = vpack.c.b16 %v474, %v472
  %v735 = vpack.c.b16 %v475, %v473
  %v736 = vpack.c.b16 %v478, %v476
  %v737 = vpack.c.b16 %v479, %v477
  %v738 = vpack.c.b16 %v482, %v480
  %v739 = vpack.c.b16 %v483, %v481
  %v740 = vpack.c.b16 %v486, %v484
  %v741 = vpack.c.b16 %v487, %v485
  %v742 = vpack.c.b16 %v490, %v488
  %v743 = vpack.c.b16 %v491, %v489
  %v744 = vpack.c.b16 %v494, %v492
  %v745 = vpack.c.b16 %v495, %v493
  %v746 = vpack.c.b16 %v498, %v496
  %v747 = vpack.c.b16 %v499, %v497
  %v748 = vpack.c.b16 %v502, %v500
  %v749 = vpack.c.b16 %v503, %v501
  %v750 = vpack.c.b16 %v506, %v504
  %v751 = vpack.c.b16 %v507, %v505
  %v752 = vpack.c.b16 %v510, %v508
  %v753 = vpack.c.b16 %v511, %v509
  %v754 = vpack.c.b16 %v514, %v512
  %v755 = vpack.c.b16 %v515, %v513
  %v756 = vpack.c.b16 %v518, %v516
  %v757 = vpack.c.b16 %v519, %v517
  %v758 = vpack.c.b16 %v522, %v520
  %v759 = vpack.c.b16 %v523, %v521
  %v760 = vpack.c.b16 %v526, %v524
  %v761 = vpack.c.b16 %v527, %v525
  %v762 = vpack.c.b16 %v530, %v528
  %v763 = vpack.c.b16 %v531, %v529
  %v764 = vpack.c.b16 %v534, %v532
  %v765 = vpack.c.b16 %v535, %v533
  %v766 = vpack.c.b16 %v538, %v536
  %v767 = vpack.c.b16 %v539, %v537
  %v768 = vpack.c.b16 %v542, %v540
  %v769 = vpack.c.b16 %v543, %v541
  %v770 = vpack.c.b16 %v546, %v544
  %v771 = vpack.c.b16 %v547, %v545
  %v772 = vpack.c.b16 %v550, %v548
  %v773 = vpack.c.b16 %v551, %v549
  %v774 = vpack.c.b16 %v554, %v552
  %v775 = vpack.c.b16 %v555, %v553
  %v776 = vpack.c.b16 %v558, %v556
  %v777 = vpack.c.b16 %v559, %v557
  %v778 = vpack.c.b16 %v562, %v560
  %v779 = vpack.c.b16 %v563, %v561
  %v780 = vpack.c.b16 %v566, %v564
  %v781 = vpack.c.b16 %v567, %v565
  %v782 = vpack.c.b16 %v570, %v568
  %v783 = vpack.c.b16 %v571, %v569
  %v784 = vpack.c.b16 %v574, %v572
  %v785 = vpack.c.b16 %v575, %v573
  %v786 = vpack.c.b16 %v578, %v576
  %v787 = vpack.c.b16 %v579, %v577
  %v788 = vpack.c.b16 %v582, %v580
  %v789 = vpack.c.b16 %v583, %v581
  %v790 = vpack.c.b16 %v586, %v584
  %v791 = vpack.c.b16 %v587, %v585
  %v792 = vpack.c.b16 %v590, %v588
  %v793 = vpack.c.b16 %v591, %v589
  %v794 = vpack.c.b16 %v594, %v592
  %v795 = vpack.c.b16 %v595, %v593
  %v796 = vpack.c.b16 %v598, %v596
  %v797 = vpack.c.b16 %v599, %v597
  %v798 = vpack.c.b16 %v602, %v600
  %v799 = vpack.c.b16 %v603, %v601
  %v800 = vpack.c.b16 %v606, %v604
  %v801 = vpack.c.b16 %v607, %v605
  %v802 = vpack.c.b16 %v610, %v608
  %v803 = vpack.c.b16 %v611, %v609
  %v804 = vpack.c.b16 %v614, %v612
  %v805 = vpack.c.b16 %v615, %v613
  %v806 = vpack.c.b16 %v618, %v616
  %v807 = vpack.c.b16 %v619, %v617
  %v808 = vpack.c.b16 %v622, %v620
  %v809 = vpack.c.b16 %v623, %v621
  %v810 = vpack.c.b16 %v626, %v624
  %v811 = vpack.c.b16 %v627, %v625
  %v812 = vpack.c.b16 %v630, %v628
  %v813 = vpack.c.b16 %v631, %v629
  %v814 = vpack.c.b16 %v634, %v632
  %v815 = vpack.c.b16 %v635, %v633
  %v816 = vpack.c.b16 %v638, %v636
  %v817 = vpack.c.b16 %v639, %v637
  %v818 = vpack.c.b16 %v642, %v640
  %v819 = vpack.c.b16 %v643, %v641
  %v820 = vpack.c.b16 %v646, %v644
  %v821 = vpack.c.b16 %v647, %v645
  %v822 = vpack.c.b16 %v650, %v648
  %v823 = vpack.c.b16 %v651, %v649
  %v824 = vpack.c.b16 %v654, %v652
  %v825 = vpack.c.b16 %v655, %v653
  %v826 = vpack.c.b16 %v658, %v656
  %v827 = vpack.c.b16 %v659, %v657
  %v828 = vpack.c.b16 %v662, %v660
  %v829 = vpack.c.b16 %v663, %v661
  %v830 = vpack.c.b16 %v666, %v664
  %v831 = vpack.c.b16 %v667, %v665
  %v832 = vpack.c.b16 %v670, %v668
  %v833 = vpack.c.b16 %v671, %v669
  %v834 = vpack.c.b16 %v674, %v672
  %v835 = vpack.c.b16 %v675, %v673
  %v836 = vpack.c.b16 %v678, %v676
  %v837 = vpack.c.b16 %v679, %v677
  %v838 = vpack.c.b16 %v682, %v680
  %v839 = vpack.c.b16 %v683, %v681
  %v840 = vpack.c.b16 %v686, %v684
  %v841 = vpack.c.b16 %v687, %v685
  %v842 = vpack.c.b16 %v690, %v688
  %v843 = vpack.c.b16 %v691, %v689
  %v844 = vpack.c.b16 %v694, %v692
  %v845 = vpack.c.b16 %v695, %v693
  %v846 = vpack.c.b16 %v698, %v696
  %v847 = vpack.c.b16 %v699, %v697
  %v848 = vpack.c.b16 %v702, %v700
  %v849 = vpack.c.b16 %v703, %v701
  %v850 = vpack.c.b16 %v706, %v704
  %v851 = vpack.c.b16 %v707, %v705
  %996 = vmatpush.bf16.msra.mxu0 %v722
  %997 = vmatpush.bf16.msra.mxu0 %v720
  %998 = vmatpush.bf16.msra.mxu0 %v718
  %999 = vmatpush.bf16.msra.mxu0 %v716
  %1000 = vmatpush.bf16.msra.mxu0 %v714
  %1001 = vmatpush.bf16.msra.mxu0 %v712
  %1002 = vmatpush.bf16.msra.mxu0 %v710
  %1003 = vmatpush.bf16.msra.mxu0 %v708
  %1004 = vmatmul.bf16.gmra.mxu0 %v240
  %v1005 = vpop.f32.mrf.mxu0
  %v1006 = vadd.f32 %v180, %v1005
  %v1007 = vpop.f32.mrf.mxu0
  %v1008 = vadd.f32 %v180, %v1007
  %1009 = vmatmul.bf16.gmra.mxu0 %v249
  %v1010 = vpop.f32.mrf.mxu0
  %v1011 = vadd.f32 %v180, %v1010
  %v1012 = vpop.f32.mrf.mxu0
  %v1013 = vadd.f32 %v180, %v1012
  %1014 = vdwg.mxu0
  %1015 = vmatpush.bf16.msra.mxu0 %v738
  %1016 = vmatpush.bf16.msra.mxu0 %v736
  %1017 = vmatpush.bf16.msra.mxu0 %v734
  %1018 = vmatpush.bf16.msra.mxu0 %v732
  %1019 = vmatpush.bf16.msra.mxu0 %v730
  %1020 = vmatpush.bf16.msra.mxu0 %v728
  %1021 = vmatpush.bf16.msra.mxu0 %v726
  %1022 = vmatpush.bf16.msra.mxu0 %v724
  %1023 = vmatmul.bf16.gmra.mxu0 %v241
  %v1024 = vpop.f32.mrf.mxu0
  %v1025 = vadd.f32 %v1006, %v1024
  %v1026 = vpop.f32.mrf.mxu0
  %v1027 = vadd.f32 %v1008, %v1026
  %1028 = vmatmul.bf16.gmra.mxu0 %v250
  %v1029 = vpop.f32.mrf.mxu0
  %v1030 = vadd.f32 %v1011, %v1029
  %v1031 = vpop.f32.mrf.mxu0
  %v1032 = vadd.f32 %v1013, %v1031
  %1033 = vdwg.mxu0
  %1034 = vmatpush.bf16.msra.mxu0 %v754
  %1035 = vmatpush.bf16.msra.mxu0 %v752
  %1036 = vmatpush.bf16.msra.mxu0 %v750
  %1037 = vmatpush.bf16.msra.mxu0 %v748
  %1038 = vmatpush.bf16.msra.mxu0 %v746
  %1039 = vmatpush.bf16.msra.mxu0 %v744
  %1040 = vmatpush.bf16.msra.mxu0 %v742
  %1041 = vmatpush.bf16.msra.mxu0 %v740
  %1042 = vmatmul.bf16.gmra.mxu0 %v242
  %v1043 = vpop.f32.mrf.mxu0
  %v1044 = vadd.f32 %v1025, %v1043
  %v1045 = vpop.f32.mrf.mxu0
  %v1046 = vadd.f32 %v1027, %v1045
  %1047 = vmatmul.bf16.gmra.mxu0 %v251
  %v1048 = vpop.f32.mrf.mxu0
  %v1049 = vadd.f32 %v1030, %v1048
  %v1050 = vpop.f32.mrf.mxu0
  %v1051 = vadd.f32 %v1032, %v1050
  %1052 = vdwg.mxu0
  %1053 = vmatpush.bf16.msra.mxu0 %v770
  %1054 = vmatpush.bf16.msra.mxu0 %v768
  %1055 = vmatpush.bf16.msra.mxu0 %v766
  %1056 = vmatpush.bf16.msra.mxu0 %v764
  %1057 = vmatpush.bf16.msra.mxu0 %v762
  %1058 = vmatpush.bf16.msra.mxu0 %v760
  %1059 = vmatpush.bf16.msra.mxu0 %v758
  %1060 = vmatpush.bf16.msra.mxu0 %v756
  %1061 = vmatmul.bf16.gmra.mxu0 %v243
  %v1062 = vpop.f32.mrf.mxu0
  %v1063 = vadd.f32 %v1044, %v1062
  %v1064 = vpop.f32.mrf.mxu0
  %v1065 = vadd.f32 %v1046, %v1064
  %1066 = vmatmul.bf16.gmra.mxu0 %v252
  %v1067 = vpop.f32.mrf.mxu0
  %v1068 = vadd.f32 %v1049, %v1067
  %v1069 = vpop.f32.mrf.mxu0
  %v1070 = vadd.f32 %v1051, %v1069
  %1071 = vdwg.mxu0
  %1072 = vmatpush.bf16.msra.mxu0 %v786
  %1073 = vmatpush.bf16.msra.mxu0 %v784
  %1074 = vmatpush.bf16.msra.mxu0 %v782
  %1075 = vmatpush.bf16.msra.mxu0 %v780
  %1076 = vmatpush.bf16.msra.mxu0 %v778
  %1077 = vmatpush.bf16.msra.mxu0 %v776
  %1078 = vmatpush.bf16.msra.mxu0 %v774
  %1079 = vmatpush.bf16.msra.mxu0 %v772
  %1080 = vmatmul.bf16.gmra.mxu0 %v244
  %v1081 = vpop.f32.mrf.mxu0
  %v1082 = vadd.f32 %v1063, %v1081
  %v1083 = vpop.f32.mrf.mxu0
  %v1084 = vadd.f32 %v1065, %v1083
  %1085 = vmatmul.bf16.gmra.mxu0 %v253
  %v1086 = vpop.f32.mrf.mxu0
  %v1087 = vadd.f32 %v1068, %v1086
  %v1088 = vpop.f32.mrf.mxu0
  %v1089 = vadd.f32 %v1070, %v1088
  %1090 = vdwg.mxu0
  %1091 = vmatpush.bf16.msra.mxu0 %v802
  %1092 = vmatpush.bf16.msra.mxu0 %v800
  %1093 = vmatpush.bf16.msra.mxu0 %v798
  %1094 = vmatpush.bf16.msra.mxu0 %v796
  %1095 = vmatpush.bf16.msra.mxu0 %v794
  %1096 = vmatpush.bf16.msra.mxu0 %v792
  %1097 = vmatpush.bf16.msra.mxu0 %v790
  %1098 = vmatpush.bf16.msra.mxu0 %v788
  %1099 = vmatmul.bf16.gmra.mxu0 %v245
  %v1100 = vpop.f32.mrf.mxu0
  %v1101 = vadd.f32 %v1082, %v1100
  %v1102 = vpop.f32.mrf.mxu0
  %v1103 = vadd.f32 %v1084, %v1102
  %1104 = vmatmul.bf16.gmra.mxu0 %v254
  %v1105 = vpop.f32.mrf.mxu0
  %v1106 = vadd.f32 %v1087, %v1105
  %v1107 = vpop.f32.mrf.mxu0
  %v1108 = vadd.f32 %v1089, %v1107
  %1109 = vdwg.mxu0
  %1110 = vmatpush.bf16.msra.mxu0 %v818
  %1111 = vmatpush.bf16.msra.mxu0 %v816
  %1112 = vmatpush.bf16.msra.mxu0 %v814
  %1113 = vmatpush.bf16.msra.mxu0 %v812
  %1114 = vmatpush.bf16.msra.mxu0 %v810
  %1115 = vmatpush.bf16.msra.mxu0 %v808
  %1116 = vmatpush.bf16.msra.mxu0 %v806
  %1117 = vmatpush.bf16.msra.mxu0 %v804
  %1118 = vmatmul.bf16.gmra.mxu0 %v246
  %v1119 = vpop.f32.mrf.mxu0
  %v1120 = vadd.f32 %v1101, %v1119
  %v1121 = vpop.f32.mrf.mxu0
  %v1122 = vadd.f32 %v1103, %v1121
  %1123 = vmatmul.bf16.gmra.mxu0 %v255
  %v1124 = vpop.f32.mrf.mxu0
  %v1125 = vadd.f32 %v1106, %v1124
  %v1126 = vpop.f32.mrf.mxu0
  %v1127 = vadd.f32 %v1108, %v1126
  %1128 = vdwg.mxu0
  %1129 = vmatpush.bf16.msra.mxu0 %v834
  %1130 = vmatpush.bf16.msra.mxu0 %v832
  %1131 = vmatpush.bf16.msra.mxu0 %v830
  %1132 = vmatpush.bf16.msra.mxu0 %v828
  %1133 = vmatpush.bf16.msra.mxu0 %v826
  %1134 = vmatpush.bf16.msra.mxu0 %v824
  %1135 = vmatpush.bf16.msra.mxu0 %v822
  %1136 = vmatpush.bf16.msra.mxu0 %v820
  %1137 = vmatmul.bf16.gmra.mxu0 %v247
  %v1138 = vpop.f32.mrf.mxu0
  %v1139 = vadd.f32 %v1120, %v1138
  %v1140 = vpop.f32.mrf.mxu0
  %v1141 = vadd.f32 %v1122, %v1140
  %1142 = vmatmul.bf16.gmra.mxu0 %v256
  %v1143 = vpop.f32.mrf.mxu0
  %v1144 = vadd.f32 %v1125, %v1143
  %v1145 = vpop.f32.mrf.mxu0
  %v1146 = vadd.f32 %v1127, %v1145
  %1147 = vdwg.mxu0
  %1148 = vmatpush.bf16.msra.mxu0 %v850
  %1149 = vmatpush.bf16.msra.mxu0 %v848
  %1150 = vmatpush.bf16.msra.mxu0 %v846
  %1151 = vmatpush.bf16.msra.mxu0 %v844
  %1152 = vmatpush.bf16.msra.mxu0 %v842
  %1153 = vmatpush.bf16.msra.mxu0 %v840
  %1154 = vmatpush.bf16.msra.mxu0 %v838
  %1155 = vmatpush.bf16.msra.mxu0 %v836
  %1156 = vmatmul.bf16.gmra.mxu0 %v248
  %v1157 = vpop.f32.mrf.mxu0
  %v1158 = vadd.f32 %v1139, %v1157
  %v1159 = vpop.f32.mrf.mxu0
  %v1160 = vadd.f32 %v1141, %v1159
  %1161 = vmatmul.bf16.gmra.mxu0 %v257
  %v1162 = vpop.f32.mrf.mxu0
  %v1163 = vadd.f32 %v1144, %v1162
  %v1164 = vpop.f32.mrf.mxu0
  %v1165 = vadd.f32 %v1146, %v1164
  %1166 = vdwg.mxu0
  %1167 = vmatpush.bf16.msra.mxu0 %v723
  %1168 = vmatpush.bf16.msra.mxu0 %v721
  %1169 = vmatpush.bf16.msra.mxu0 %v719
  %1170 = vmatpush.bf16.msra.mxu0 %v717
  %1171 = vmatpush.bf16.msra.mxu0 %v715
  %1172 = vmatpush.bf16.msra.mxu0 %v713
  %1173 = vmatpush.bf16.msra.mxu0 %v711
  %1174 = vmatpush.bf16.msra.mxu0 %v709
  %1175 = vmatmul.bf16.gmra.mxu0 %v240
  %v1176 = vpop.f32.mrf.mxu0
  %v1177 = vadd.f32 %v181, %v1176
  %v1178 = vpop.f32.mrf.mxu0
  %v1179 = vadd.f32 %v181, %v1178
  %1180 = vmatmul.bf16.gmra.mxu0 %v249
  %v1181 = vpop.f32.mrf.mxu0
  %v1182 = vadd.f32 %v181, %v1181
  %v1183 = vpop.f32.mrf.mxu0
  %v1184 = vadd.f32 %v181, %v1183
  %1185 = vdwg.mxu0
  %1186 = vmatpush.bf16.msra.mxu0 %v739
  %1187 = vmatpush.bf16.msra.mxu0 %v737
  %1188 = vmatpush.bf16.msra.mxu0 %v735
  %1189 = vmatpush.bf16.msra.mxu0 %v733
  %1190 = vmatpush.bf16.msra.mxu0 %v731
  %1191 = vmatpush.bf16.msra.mxu0 %v729
  %1192 = vmatpush.bf16.msra.mxu0 %v727
  %1193 = vmatpush.bf16.msra.mxu0 %v725
  %1194 = vmatmul.bf16.gmra.mxu0 %v241
  %v1195 = vpop.f32.mrf.mxu0
  %v1196 = vadd.f32 %v1177, %v1195
  %v1197 = vpop.f32.mrf.mxu0
  %v1198 = vadd.f32 %v1179, %v1197
  %1199 = vmatmul.bf16.gmra.mxu0 %v250
  %v1200 = vpop.f32.mrf.mxu0
  %v1201 = vadd.f32 %v1182, %v1200
  %v1202 = vpop.f32.mrf.mxu0
  %v1203 = vadd.f32 %v1184, %v1202
  %1204 = vdwg.mxu0
  %1205 = vmatpush.bf16.msra.mxu0 %v755
  %1206 = vmatpush.bf16.msra.mxu0 %v753
  %1207 = vmatpush.bf16.msra.mxu0 %v751
  %1208 = vmatpush.bf16.msra.mxu0 %v749
  %1209 = vmatpush.bf16.msra.mxu0 %v747
  %1210 = vmatpush.bf16.msra.mxu0 %v745
  %1211 = vmatpush.bf16.msra.mxu0 %v743
  %1212 = vmatpush.bf16.msra.mxu0 %v741
  %1213 = vmatmul.bf16.gmra.mxu0 %v242
  %v1214 = vpop.f32.mrf.mxu0
  %v1215 = vadd.f32 %v1196, %v1214
  %v1216 = vpop.f32.mrf.mxu0
  %v1217 = vadd.f32 %v1198, %v1216
  %1218 = vmatmul.bf16.gmra.mxu0 %v251
  %v1219 = vpop.f32.mrf.mxu0
  %v1220 = vadd.f32 %v1201, %v1219
  %v1221 = vpop.f32.mrf.mxu0
  %v1222 = vadd.f32 %v1203, %v1221
  %1223 = vdwg.mxu0
  %1224 = vmatpush.bf16.msra.mxu0 %v771
  %1225 = vmatpush.bf16.msra.mxu0 %v769
  %1226 = vmatpush.bf16.msra.mxu0 %v767
  %1227 = vmatpush.bf16.msra.mxu0 %v765
  %1228 = vmatpush.bf16.msra.mxu0 %v763
  %1229 = vmatpush.bf16.msra.mxu0 %v761
  %1230 = vmatpush.bf16.msra.mxu0 %v759
  %1231 = vmatpush.bf16.msra.mxu0 %v757
  %1232 = vmatmul.bf16.gmra.mxu0 %v243
  %v1233 = vpop.f32.mrf.mxu0
  %v1234 = vadd.f32 %v1215, %v1233
  %v1235 = vpop.f32.mrf.mxu0
  %v1236 = vadd.f32 %v1217, %v1235
  %1237 = vmatmul.bf16.gmra.mxu0 %v252
  %v1238 = vpop.f32.mrf.mxu0
  %v1239 = vadd.f32 %v1220, %v1238
  %v1240 = vpop.f32.mrf.mxu0
  %v1241 = vadd.f32 %v1222, %v1240
  %1242 = vdwg.mxu0
  %1243 = vmatpush.bf16.msra.mxu0 %v787
  %1244 = vmatpush.bf16.msra.mxu0 %v785
  %1245 = vmatpush.bf16.msra.mxu0 %v783
  %1246 = vmatpush.bf16.msra.mxu0 %v781
  %1247 = vmatpush.bf16.msra.mxu0 %v779
  %1248 = vmatpush.bf16.msra.mxu0 %v777
  %1249 = vmatpush.bf16.msra.mxu0 %v775
  %1250 = vmatpush.bf16.msra.mxu0 %v773
  %1251 = vmatmul.bf16.gmra.mxu0 %v244
  %v1252 = vpop.f32.mrf.mxu0
  %v1253 = vadd.f32 %v1234, %v1252
  %v1254 = vpop.f32.mrf.mxu0
  %v1255 = vadd.f32 %v1236, %v1254
  %1256 = vmatmul.bf16.gmra.mxu0 %v253
  %v1257 = vpop.f32.mrf.mxu0
  %v1258 = vadd.f32 %v1239, %v1257
  %v1259 = vpop.f32.mrf.mxu0
  %v1260 = vadd.f32 %v1241, %v1259
  %1261 = vdwg.mxu0
  %1262 = vmatpush.bf16.msra.mxu0 %v803
  %1263 = vmatpush.bf16.msra.mxu0 %v801
  %1264 = vmatpush.bf16.msra.mxu0 %v799
  %1265 = vmatpush.bf16.msra.mxu0 %v797
  %1266 = vmatpush.bf16.msra.mxu0 %v795
  %1267 = vmatpush.bf16.msra.mxu0 %v793
  %1268 = vmatpush.bf16.msra.mxu0 %v791
  %1269 = vmatpush.bf16.msra.mxu0 %v789
  %1270 = vmatmul.bf16.gmra.mxu0 %v245
  %v1271 = vpop.f32.mrf.mxu0
  %v1272 = vadd.f32 %v1253, %v1271
  %v1273 = vpop.f32.mrf.mxu0
  %v1274 = vadd.f32 %v1255, %v1273
  %1275 = vmatmul.bf16.gmra.mxu0 %v254
  %v1276 = vpop.f32.mrf.mxu0
  %v1277 = vadd.f32 %v1258, %v1276
  %v1278 = vpop.f32.mrf.mxu0
  %v1279 = vadd.f32 %v1260, %v1278
  %1280 = vdwg.mxu0
  %1281 = vmatpush.bf16.msra.mxu0 %v819
  %1282 = vmatpush.bf16.msra.mxu0 %v817
  %1283 = vmatpush.bf16.msra.mxu0 %v815
  %1284 = vmatpush.bf16.msra.mxu0 %v813
  %1285 = vmatpush.bf16.msra.mxu0 %v811
  %1286 = vmatpush.bf16.msra.mxu0 %v809
  %1287 = vmatpush.bf16.msra.mxu0 %v807
  %1288 = vmatpush.bf16.msra.mxu0 %v805
  %1289 = vmatmul.bf16.gmra.mxu0 %v246
  %v1290 = vpop.f32.mrf.mxu0
  %v1291 = vadd.f32 %v1272, %v1290
  %v1292 = vpop.f32.mrf.mxu0
  %v1293 = vadd.f32 %v1274, %v1292
  %1294 = vmatmul.bf16.gmra.mxu0 %v255
  %v1295 = vpop.f32.mrf.mxu0
  %v1296 = vadd.f32 %v1277, %v1295
  %v1297 = vpop.f32.mrf.mxu0
  %v1298 = vadd.f32 %v1279, %v1297
  %1299 = vdwg.mxu0
  %1300 = vmatpush.bf16.msra.mxu0 %v835
  %1301 = vmatpush.bf16.msra.mxu0 %v833
  %1302 = vmatpush.bf16.msra.mxu0 %v831
  %1303 = vmatpush.bf16.msra.mxu0 %v829
  %1304 = vmatpush.bf16.msra.mxu0 %v827
  %1305 = vmatpush.bf16.msra.mxu0 %v825
  %1306 = vmatpush.bf16.msra.mxu0 %v823
  %1307 = vmatpush.bf16.msra.mxu0 %v821
  %1308 = vmatmul.bf16.gmra.mxu0 %v247
  %v1309 = vpop.f32.mrf.mxu0
  %v1310 = vadd.f32 %v1291, %v1309
  %v1311 = vpop.f32.mrf.mxu0
  %v1312 = vadd.f32 %v1293, %v1311
  %1313 = vmatmul.bf16.gmra.mxu0 %v256
  %v1314 = vpop.f32.mrf.mxu0
  %v1315 = vadd.f32 %v1296, %v1314
  %v1316 = vpop.f32.mrf.mxu0
  %v1317 = vadd.f32 %v1298, %v1316
  %1318 = vdwg.mxu0
  %1319 = vmatpush.bf16.msra.mxu0 %v851
  %1320 = vmatpush.bf16.msra.mxu0 %v849
  %1321 = vmatpush.bf16.msra.mxu0 %v847
  %1322 = vmatpush.bf16.msra.mxu0 %v845
  %1323 = vmatpush.bf16.msra.mxu0 %v843
  %1324 = vmatpush.bf16.msra.mxu0 %v841
  %1325 = vmatpush.bf16.msra.mxu0 %v839
  %1326 = vmatpush.bf16.msra.mxu0 %v837
  %1327 = vmatmul.bf16.gmra.mxu0 %v248
  %v1328 = vpop.f32.mrf.mxu0
  %v1329 = vadd.f32 %v1310, %v1328
  %v1330 = vpop.f32.mrf.mxu0
  %v1331 = vadd.f32 %v1312, %v1330
  %1332 = vmatmul.bf16.gmra.mxu0 %v257
  %v1333 = vpop.f32.mrf.mxu0
  %v1334 = vadd.f32 %v1315, %v1333
  %v1335 = vpop.f32.mrf.mxu0
  %v1336 = vadd.f32 %v1317, %v1335
  %1337 = vdwg.mxu0
  %v1338 = vmax.f32 %v1158, 0.0
  %v1339 = vmax.f32 %v1329, 0.0
  %v1340 = vmax.f32 %v1160, 0.0
  %v1341 = vmax.f32 %v1331, 0.0
  %v1342 = vmax.f32 %v1163, 0.0
  %v1343 = vmax.f32 %v1334, 0.0
  %v1344 = vmax.f32 %v1165, 0.0
  %v1345 = vmax.f32 %v1336, 0.0
  %v1346 = vpack.c.bf16 %v1339, %v1338
  %v1347 = vpack.c.bf16 %v1341, %v1340
  %v1348 = vpack.c.bf16 %v1343, %v1342
  %v1349 = vpack.c.bf16 %v1345, %v1344
  %1350 = vst [vmem:[%s3] sm:$0xff] %v1346
  %1351 = vst [vmem:[%s3 + $0x8] sm:$0xff] %v1347
  %1352 = vst [vmem:[%s3 + $0x10] sm:$0xff] %v1348
  %1353 = vst [vmem:[%s3 + $0x18] sm:$0xff] %v1349
  // Predicated region
  $region14: #{forward.20} parent=0 // pred_check
    _
  $region15: #{forward.20} parent=0 // pred_check_branch
    %1355 = sbr.rel (0) target = $region17
  $region16: #{forward.20} parent=0 // pred_region
    _
  $region17: #{forward.20} parent=0 // pred_fallthru
    _
  // Predicated region
  $region18: #{forward.20} parent=0 // pred_check
    _
  $region19: #{forward.20} parent=0 // pred_check_branch
    %1357 = sbr.rel (0) target = $region21
  $region20: #{forward.20} parent=0 // pred_region
    _
  $region21: #{forward.20} parent=0 // pred_fallthru
    _

// kernel: forward.21
$region0: #{forward.21}
  #allocation0 [shape = 'u32[]', space=smem, size = 0x4, offset = 0x4, fixed_abs, tag = 'smem constant byte address 0x4 - core index']
  #allocation1 [shape = 'u32[72,128]{1,0:T(1,128)}', space=vmem, size = 0x9000, scoped, tag = 'internal scratch']
  %s0 = inlined_call_operand.vmem [shape: bf16[128,256], index: 0, kind: input, shape index: {}]
  %s1 = inlined_call_operand.vmem [shape: bf16[256,128], index: 1, kind: input, shape index: {}]
  %s2 = inlined_call_operand.vmem [shape: f32[1,128], index: 2, kind: input, shape index: {}]
  %s3 = inlined_call_operand.vmem [shape: bf16[128,128], index: 3, kind: output, shape index: {}]
  %s4 = sld [smem:[#allocation0]]
  $region22: #{forward.21} parent=0
    _
  %s6 = ssub.s32 1, %s4
  %s7 = scalar_select 0, %s6, %s4
  // Predicated region
  $region2: #{forward.21} parent=0 // pred_check
    _
  $region3: #{forward.21} parent=0 // pred_check_branch
    %9 = sbr.rel (0) target = $region5
  $region4: #{forward.21} parent=0 // pred_region
    _
  $region5: #{forward.21} parent=0 // pred_fallthru
    _
  // Predicated region
  $region6: #{forward.21} parent=0 // pred_check
    _
  $region7: #{forward.21} parent=0 // pred_check_branch
    %11 = sbr.rel (0) target = $region9
  $region8: #{forward.21} parent=0 // pred_region
    _
  $region9: #{forward.21} parent=0 // pred_fallthru
    _
  // Predicated region
  $region10: #{forward.21} parent=0 // pred_check
    _
  $region11: #{forward.21} parent=0 // pred_check_branch
    %13 = sbr.rel (0) target = $region13
  $region12: #{forward.21} parent=0 // pred_region
    _
  $region13: #{forward.21} parent=0 // pred_fallthru
    _
  %v14 = vld [vmem:[%s0] sm:$0xff]
  %v15 = vld [vmem:[%s0 + $0x8] sm:$0xff]
  %v16 = vld [vmem:[%s0 + $0x10] sm:$0xff]
  %v17 = vld [vmem:[%s0 + $0x18] sm:$0xff]
  %v18 = vld [vmem:[%s0 + $0x20] sm:$0xff]
  %v19 = vld [vmem:[%s0 + $0x28] sm:$0xff]
  %v20 = vld [vmem:[%s0 + $0x30] sm:$0xff]
  %v21 = vld [vmem:[%s0 + $0x38] sm:$0xff]
  %v22 = vld [vmem:[%s0 + $0x40] sm:$0xff]
  %v23 = vld [vmem:[%s0 + $0x48] sm:$0xff]
  %v24 = vld [vmem:[%s0 + $0x50] sm:$0xff]
  %v25 = vld [vmem:[%s0 + $0x58] sm:$0xff]
  %v26 = vld [vmem:[%s0 + $0x60] sm:$0xff]
  %v27 = vld [vmem:[%s0 + $0x68] sm:$0xff]
  %v28 = vld [vmem:[%s0 + $0x70] sm:$0xff]
  %v29 = vld [vmem:[%s0 + $0x78] sm:$0xff]
  %v30 = vld [vmem:[%s1] sm:$0xf]
  %v31 = vld [vmem:[%s1 + $0x4] sm:$0xf]
  %v32 = vld [vmem:[%s1 + $0x8] sm:$0xf]
  %v33 = vld [vmem:[%s1 + $0xc] sm:$0xf]
  %v34 = vld [vmem:[%s1 + $0x10] sm:$0xf]
  %v35 = vld [vmem:[%s1 + $0x14] sm:$0xf]
  %v36 = vld [vmem:[%s1 + $0x18] sm:$0xf]
  %v37 = vld [vmem:[%s1 + $0x1c] sm:$0xf]
  %v38 = vld [vmem:[%s1 + $0x20] sm:$0xf]
  %v39 = vld [vmem:[%s1 + $0x24] sm:$0xf]
  %v40 = vld [vmem:[%s1 + $0x28] sm:$0xf]
  %v41 = vld [vmem:[%s1 + $0x2c] sm:$0xf]
  %v42 = vld [vmem:[%s1 + $0x30] sm:$0xf]
  %v43 = vld [vmem:[%s1 + $0x34] sm:$0xf]
  %v44 = vld [vmem:[%s1 + $0x38] sm:$0xf]
  %v45 = vld [vmem:[%s1 + $0x3c] sm:$0xf]
  %v46 = vld [vmem:[%s1 + $0x40] sm:$0xf]
  %v47 = vld [vmem:[%s1 + $0x44] sm:$0xf]
  %v48 = vld [vmem:[%s1 + $0x48] sm:$0xf]
  %v49 = vld [vmem:[%s1 + $0x4c] sm:$0xf]
  %v50 = vld [vmem:[%s1 + $0x50] sm:$0xf]
  %v51 = vld [vmem:[%s1 + $0x54] sm:$0xf]
  %v52 = vld [vmem:[%s1 + $0x58] sm:$0xf]
  %v53 = vld [vmem:[%s1 + $0x5c] sm:$0xf]
  %v54 = vld [vmem:[%s1 + $0x60] sm:$0xf]
  %v55 = vld [vmem:[%s1 + $0x64] sm:$0xf]
  %v56 = vld [vmem:[%s1 + $0x68] sm:$0xf]
  %v57 = vld [vmem:[%s1 + $0x6c] sm:$0xf]
  %v58 = vld [vmem:[%s1 + $0x70] sm:$0xf]
  %v59 = vld [vmem:[%s1 + $0x74] sm:$0xf]
  %v60 = vld [vmem:[%s1 + $0x78] sm:$0xf]
  %v61 = vld [vmem:[%s1 + $0x7c] sm:$0xf]
  %v62 = vld [vmem:[%s2] sm:$0x1]
  %v64 = vperm.slane %v62, 0
  %v82 = vunpack.c.l.b16 %v14
  %v83 = vunpack.c.h.b16 %v14
  %v84 = vunpack.c.l.b16 %v15
  %v85 = vunpack.c.h.b16 %v15
  %v86 = vunpack.c.l.b16 %v16
  %v87 = vunpack.c.h.b16 %v16
  %v88 = vunpack.c.l.b16 %v17
  %v89 = vunpack.c.h.b16 %v17
  %v90 = vunpack.c.l.b16 %v18
  %v91 = vunpack.c.h.b16 %v18
  %v92 = vunpack.c.l.b16 %v19
  %v93 = vunpack.c.h.b16 %v19
  %v94 = vunpack.c.l.b16 %v20
  %v95 = vunpack.c.h.b16 %v20
  %v96 = vunpack.c.l.b16 %v21
  %v97 = vunpack.c.h.b16 %v21
  %v98 = vunpack.c.l.b16 %v22
  %v99 = vunpack.c.h.b16 %v22
  %v100 = vunpack.c.l.b16 %v23
  %v101 = vunpack.c.h.b16 %v23
  %v102 = vunpack.c.l.b16 %v24
  %v103 = vunpack.c.h.b16 %v24
  %v104 = vunpack.c.l.b16 %v25
  %v105 = vunpack.c.h.b16 %v25
  %v106 = vunpack.c.l.b16 %v26
  %v107 = vunpack.c.h.b16 %v26
  %v108 = vunpack.c.l.b16 %v27
  %v109 = vunpack.c.h.b16 %v27
  %v110 = vunpack.c.l.b16 %v28
  %v111 = vunpack.c.h.b16 %v28
  %v112 = vunpack.c.l.b16 %v29
  %v113 = vunpack.c.h.b16 %v29
  %v114 = vpack.c.b16 %v84, %v82
  %v115 = vpack.c.b16 %v85, %v83
  %v116 = vpack.c.b16 %v88, %v86
  %v117 = vpack.c.b16 %v89, %v87
  %v118 = vpack.c.b16 %v92, %v90
  %v119 = vpack.c.b16 %v93, %v91
  %v120 = vpack.c.b16 %v96, %v94
  %v121 = vpack.c.b16 %v97, %v95
  %v122 = vpack.c.b16 %v100, %v98
  %v123 = vpack.c.b16 %v101, %v99
  %v124 = vpack.c.b16 %v104, %v102
  %v125 = vpack.c.b16 %v105, %v103
  %v126 = vpack.c.b16 %v108, %v106
  %v127 = vpack.c.b16 %v109, %v107
  %v128 = vpack.c.b16 %v112, %v110
  %v129 = vpack.c.b16 %v113, %v111
  %v178 = vunpack.c.l.b16 %v30
  %v179 = vunpack.c.l.b16 %v31
  %v180 = vunpack.c.l.b16 %v32
  %v181 = vunpack.c.l.b16 %v33
  %v182 = vunpack.c.l.b16 %v34
  %v183 = vunpack.c.l.b16 %v35
  %v184 = vunpack.c.l.b16 %v36
  %v185 = vunpack.c.l.b16 %v37
  %v186 = vunpack.c.l.b16 %v38
  %v187 = vunpack.c.l.b16 %v39
  %v188 = vunpack.c.l.b16 %v40
  %v189 = vunpack.c.l.b16 %v41
  %v190 = vunpack.c.l.b16 %v42
  %v191 = vunpack.c.l.b16 %v43
  %v192 = vunpack.c.l.b16 %v44
  %v193 = vunpack.c.l.b16 %v45
  %v194 = vunpack.c.l.b16 %v46
  %v195 = vunpack.c.l.b16 %v47
  %v196 = vunpack.c.l.b16 %v48
  %v197 = vunpack.c.l.b16 %v49
  %v198 = vunpack.c.l.b16 %v50
  %v199 = vunpack.c.l.b16 %v51
  %v200 = vunpack.c.l.b16 %v52
  %v201 = vunpack.c.l.b16 %v53
  %v202 = vunpack.c.l.b16 %v54
  %v203 = vunpack.c.l.b16 %v55
  %v204 = vunpack.c.l.b16 %v56
  %v205 = vunpack.c.l.b16 %v57
  %v206 = vunpack.c.l.b16 %v58
  %v207 = vunpack.c.l.b16 %v59
  %v208 = vunpack.c.l.b16 %v60
  %v209 = vunpack.c.l.b16 %v61
  %v210 = vpack.c.b16 %v179, %v178
  %v211 = vpack.c.b16 %v181, %v180
  %v212 = vpack.c.b16 %v183, %v182
  %v213 = vpack.c.b16 %v185, %v184
  %v214 = vpack.c.b16 %v187, %v186
  %v215 = vpack.c.b16 %v189, %v188
  %v216 = vpack.c.b16 %v191, %v190
  %v217 = vpack.c.b16 %v193, %v192
  %v218 = vpack.c.b16 %v195, %v194
  %v219 = vpack.c.b16 %v197, %v196
  %v220 = vpack.c.b16 %v199, %v198
  %v221 = vpack.c.b16 %v201, %v200
  %v222 = vpack.c.b16 %v203, %v202
  %v223 = vpack.c.b16 %v205, %v204
  %v224 = vpack.c.b16 %v207, %v206
  %v225 = vpack.c.b16 %v209, %v208
  %242 = vmatpush.bf16.msra.mxu0 %v217
  %243 = vmatpush.bf16.msra.mxu0 %v216
  %244 = vmatpush.bf16.msra.mxu0 %v215
  %245 = vmatpush.bf16.msra.mxu0 %v214
  %246 = vmatpush.bf16.msra.mxu0 %v213
  %247 = vmatpush.bf16.msra.mxu0 %v212
  %248 = vmatpush.bf16.msra.mxu0 %v211
  %249 = vmatpush.bf16.msra.mxu0 %v210
  %250 = vmatmul.bf16.gmra.mxu0 %v114
  %v251 = vpop.f32.mrf.mxu0
  %v252 = vadd.f32 %v64, %v251
  %v253 = vpop.f32.mrf.mxu0
  %v254 = vadd.f32 %v64, %v253
  %255 = vmatmul.bf16.gmra.mxu0 %v116
  %v256 = vpop.f32.mrf.mxu0
  %v257 = vadd.f32 %v64, %v256
  %v258 = vpop.f32.mrf.mxu0
  %v259 = vadd.f32 %v64, %v258
  %260 = vmatmul.bf16.gmra.mxu0 %v118
  %v261 = vpop.f32.mrf.mxu0
  %v262 = vadd.f32 %v64, %v261
  %v263 = vpop.f32.mrf.mxu0
  %v264 = vadd.f32 %v64, %v263
  %265 = vmatmul.bf16.gmra.mxu0 %v120
  %v266 = vpop.f32.mrf.mxu0
  %v267 = vadd.f32 %v64, %v266
  %v268 = vpop.f32.mrf.mxu0
  %v269 = vadd.f32 %v64, %v268
  %270 = vmatmul.bf16.gmra.mxu0 %v122
  %v271 = vpop.f32.mrf.mxu0
  %v272 = vadd.f32 %v64, %v271
  %v273 = vpop.f32.mrf.mxu0
  %v274 = vadd.f32 %v64, %v273
  %275 = vmatmul.bf16.gmra.mxu0 %v124
  %v276 = vpop.f32.mrf.mxu0
  %v277 = vadd.f32 %v64, %v276
  %v278 = vpop.f32.mrf.mxu0
  %v279 = vadd.f32 %v64, %v278
  %280 = vmatmul.bf16.gmra.mxu0 %v126
  %v281 = vpop.f32.mrf.mxu0
  %v282 = vadd.f32 %v64, %v281
  %v283 = vpop.f32.mrf.mxu0
  %v284 = vadd.f32 %v64, %v283
  %285 = vmatmul.bf16.gmra.mxu0 %v128
  %v286 = vpop.f32.mrf.mxu0
  %v287 = vadd.f32 %v64, %v286
  %v288 = vpop.f32.mrf.mxu0
  %v289 = vadd.f32 %v64, %v288
  %290 = vdwg.mxu0
  %291 = vmatpush.bf16.msra.mxu0 %v225
  %292 = vmatpush.bf16.msra.mxu0 %v224
  %293 = vmatpush.bf16.msra.mxu0 %v223
  %294 = vmatpush.bf16.msra.mxu0 %v222
  %295 = vmatpush.bf16.msra.mxu0 %v221
  %296 = vmatpush.bf16.msra.mxu0 %v220
  %297 = vmatpush.bf16.msra.mxu0 %v219
  %298 = vmatpush.bf16.msra.mxu0 %v218
  %299 = vmatmul.bf16.gmra.mxu0 %v115
  %v300 = vpop.f32.mrf.mxu0
  %v301 = vadd.f32 %v252, %v300
  %v302 = vpop.f32.mrf.mxu0
  %v303 = vadd.f32 %v254, %v302
  %304 = vmatmul.bf16.gmra.mxu0 %v117
  %v305 = vpop.f32.mrf.mxu0
  %v306 = vadd.f32 %v257, %v305
  %v307 = vpop.f32.mrf.mxu0
  %v308 = vadd.f32 %v259, %v307
  %309 = vmatmul.bf16.gmra.mxu0 %v119
  %v310 = vpop.f32.mrf.mxu0
  %v311 = vadd.f32 %v262, %v310
  %v312 = vpop.f32.mrf.mxu0
  %v313 = vadd.f32 %v264, %v312
  %314 = vmatmul.bf16.gmra.mxu0 %v121
  %v315 = vpop.f32.mrf.mxu0
  %v316 = vadd.f32 %v267, %v315
  %v317 = vpop.f32.mrf.mxu0
  %v318 = vadd.f32 %v269, %v317
  %319 = vmatmul.bf16.gmra.mxu0 %v123
  %v320 = vpop.f32.mrf.mxu0
  %v321 = vadd.f32 %v272, %v320
  %v322 = vpop.f32.mrf.mxu0
  %v323 = vadd.f32 %v274, %v322
  %324 = vmatmul.bf16.gmra.mxu0 %v125
  %v325 = vpop.f32.mrf.mxu0
  %v326 = vadd.f32 %v277, %v325
  %v327 = vpop.f32.mrf.mxu0
  %v328 = vadd.f32 %v279, %v327
  %329 = vmatmul.bf16.gmra.mxu0 %v127
  %v330 = vpop.f32.mrf.mxu0
  %v331 = vadd.f32 %v282, %v330
  %v332 = vpop.f32.mrf.mxu0
  %v333 = vadd.f32 %v284, %v332
  %334 = vmatmul.bf16.gmra.mxu0 %v129
  %v335 = vpop.f32.mrf.mxu0
  %v336 = vadd.f32 %v287, %v335
  %v337 = vpop.f32.mrf.mxu0
  %v338 = vadd.f32 %v289, %v337
  %339 = vdwg.mxu0
  %v340 = vmax.f32 %v301, 0.0
  %v341 = vmax.f32 %v303, 0.0
  %v342 = vmax.f32 %v306, 0.0
  %v343 = vmax.f32 %v308, 0.0
  %v344 = vmax.f32 %v311, 0.0
  %v345 = vmax.f32 %v313, 0.0
  %v346 = vmax.f32 %v316, 0.0
  %v347 = vmax.f32 %v318, 0.0
  %v348 = vmax.f32 %v321, 0.0
  %v349 = vmax.f32 %v323, 0.0
  %v350 = vmax.f32 %v326, 0.0
  %v351 = vmax.f32 %v328, 0.0
  %v352 = vmax.f32 %v331, 0.0
  %v353 = vmax.f32 %v333, 0.0
  %v354 = vmax.f32 %v336, 0.0
  %v355 = vmax.f32 %v338, 0.0
  %v356 = vpack.c.bf16 %v340, %v340
  %v357 = vpack.c.bf16 %v341, %v341
  %v358 = vpack.c.bf16 %v342, %v342
  %v359 = vpack.c.bf16 %v343, %v343
  %v360 = vpack.c.bf16 %v344, %v344
  %v361 = vpack.c.bf16 %v345, %v345
  %v362 = vpack.c.bf16 %v346, %v346
  %v363 = vpack.c.bf16 %v347, %v347
  %v364 = vpack.c.bf16 %v348, %v348
  %v365 = vpack.c.bf16 %v349, %v349
  %v366 = vpack.c.bf16 %v350, %v350
  %v367 = vpack.c.bf16 %v351, %v351
  %v368 = vpack.c.bf16 %v352, %v352
  %v369 = vpack.c.bf16 %v353, %v353
  %v370 = vpack.c.bf16 %v354, %v354
  %v371 = vpack.c.bf16 %v355, %v355
  %372 = vst [vmem:[%s3] sm:$0xf] %v356
  %373 = vst [vmem:[%s3 + $0x4] sm:$0xf] %v357
  %374 = vst [vmem:[%s3 + $0x8] sm:$0xf] %v358
  %375 = vst [vmem:[%s3 + $0xc] sm:$0xf] %v359
  %376 = vst [vmem:[%s3 + $0x10] sm:$0xf] %v360
  %377 = vst [vmem:[%s3 + $0x14] sm:$0xf] %v361
  %378 = vst [vmem:[%s3 + $0x18] sm:$0xf] %v362
  %379 = vst [vmem:[%s3 + $0x1c] sm:$0xf] %v363
  %380 = vst [vmem:[%s3 + $0x20] sm:$0xf] %v364
  %381 = vst [vmem:[%s3 + $0x24] sm:$0xf] %v365
  %382 = vst [vmem:[%s3 + $0x28] sm:$0xf] %v366
  %383 = vst [vmem:[%s3 + $0x2c] sm:$0xf] %v367
  %384 = vst [vmem:[%s3 + $0x30] sm:$0xf] %v368
  %385 = vst [vmem:[%s3 + $0x34] sm:$0xf] %v369
  %386 = vst [vmem:[%s3 + $0x38] sm:$0xf] %v370
  %387 = vst [vmem:[%s3 + $0x3c] sm:$0xf] %v371
  // Predicated region
  $region14: #{forward.21} parent=0 // pred_check
    _
  $region15: #{forward.21} parent=0 // pred_check_branch
    %389 = sbr.rel (0) target = $region17
  $region16: #{forward.21} parent=0 // pred_region
    _
  $region17: #{forward.21} parent=0 // pred_fallthru
    _
  // Predicated region
  $region18: #{forward.21} parent=0 // pred_check
    _
  $region19: #{forward.21} parent=0 // pred_check_branch
    %391 = sbr.rel (0) target = $region21
  $region20: #{forward.21} parent=0 // pred_region
    _
  $region21: #{forward.21} parent=0 // pred_fallthru
    _

// kernel: forward.22
$region0: #{forward.22}
  #allocation0 [shape = 'u32[]', space=smem, size = 0x4, offset = 0x4, fixed_abs, tag = 'smem constant byte address 0x4 - core index']
  #allocation1 [shape = 'u32[72,128]{1,0:T(1,128)}', space=vmem, size = 0x9000, scoped, tag = 'internal scratch']
  %s0 = inlined_call_operand.vmem [shape: bf16[736,512], index: 0, kind: input, shape index: {}]
  %s1 = inlined_call_operand.vmem [shape: bf16[512,128], index: 1, kind: input, shape index: {}]
  %s2 = inlined_call_operand.vmem [shape: f32[1,128], index: 2, kind: input, shape index: {}]
  %s3 = inlined_call_operand.vmem [shape: bf16[736,128], index: 3, kind: output, shape index: {}]
  %s4 = sld [smem:[#allocation0]]
  $region22: #{forward.22} parent=0
    _
  %s6 = ssub.s32 1, %s4
  %s7 = scalar_select 0, %s6, %s4
  // Predicated region
  $region2: #{forward.22} parent=0 // pred_check
    _
  $region3: #{forward.22} parent=0 // pred_check_branch
    %9 = sbr.rel (0) target = $region5
  $region4: #{forward.22} parent=0 // pred_region
    _
  $region5: #{forward.22} parent=0 // pred_fallthru
    _
  // Predicated region
  $region6: #{forward.22} parent=0 // pred_check
    _
  $region7: #{forward.22} parent=0 // pred_check_branch
    %11 = sbr.rel (0) target = $region9
  $region8: #{forward.22} parent=0 // pred_region
    _
  $region9: #{forward.22} parent=0 // pred_fallthru
    _
  // Predicated region
  $region10: #{forward.22} parent=0 // pred_check
    _
  $region11: #{forward.22} parent=0 // pred_check_branch
    %13 = sbr.rel (0) target = $region13
  $region12: #{forward.22} parent=0 // pred_region
    _
  $region13: #{forward.22} parent=0 // pred_fallthru
    _
  %v14 = vld [vmem:[%s0] sm:$0xff]
  %v15 = vld [vmem:[%s0 + $0x8] sm:$0xff]
  %v16 = vld [vmem:[%s0 + $0x10] sm:$0xff]
  %v17 = vld [vmem:[%s0 + $0x18] sm:$0xff]
  %v18 = vld [vmem:[%s0 + $0x20] sm:$0xff]
  %v19 = vld [vmem:[%s0 + $0x28] sm:$0xff]
  %v20 = vld [vmem:[%s0 + $0x30] sm:$0xff]
  %v21 = vld [vmem:[%s0 + $0x38] sm:$0xff]
  %v22 = vld [vmem:[%s0 + $0x40] sm:$0xff]
  %v23 = vld [vmem:[%s0 + $0x48] sm:$0xff]
  %v24 = vld [vmem:[%s0 + $0x50] sm:$0xff]
  %v25 = vld [vmem:[%s0 + $0x58] sm:$0xff]
  %v26 = vld [vmem:[%s0 + $0x60] sm:$0xff]
  %v27 = vld [vmem:[%s0 + $0x68] sm:$0xff]
  %v28 = vld [vmem:[%s0 + $0x70] sm:$0xff]
  %v29 = vld [vmem:[%s0 + $0x78] sm:$0xff]
  %v30 = vld [vmem:[%s0 + $0x80] sm:$0xff]
  %v31 = vld [vmem:[%s0 + $0x88] sm:$0xff]
  %v32 = vld [vmem:[%s0 + $0x90] sm:$0xff]
  %v33 = vld [vmem:[%s0 + $0x98] sm:$0xff]
  %v34 = vld [vmem:[%s0 + $0xa0] sm:$0xff]
  %v35 = vld [vmem:[%s0 + $0xa8] sm:$0xff]
  %v36 = vld [vmem:[%s0 + $0xb0] sm:$0xff]
  %v37 = vld [vmem:[%s0 + $0xb8] sm:$0xff]
  %v38 = vld [vmem:[%s0 + $0xc0] sm:$0xff]
  %v39 = vld [vmem:[%s0 + $0xc8] sm:$0xff]
  %v40 = vld [vmem:[%s0 + $0xd0] sm:$0xff]
  %v41 = vld [vmem:[%s0 + $0xd8] sm:$0xff]
  %v42 = vld [vmem:[%s0 + $0xe0] sm:$0xff]
  %v43 = vld [vmem:[%s0 + $0xe8] sm:$0xff]
  %v44 = vld [vmem:[%s0 + $0xf0] sm:$0xff]
  %v45 = vld [vmem:[%s0 + $0xf8] sm:$0xff]
  %v46 = vld [vmem:[%s0 + $0x100] sm:$0xff]
  %v47 = vld [vmem:[%s0 + $0x108] sm:$0xff]
  %v48 = vld [vmem:[%s0 + $0x110] sm:$0xff]
  %v49 = vld [vmem:[%s0 + $0x118] sm:$0xff]
  %v50 = vld [vmem:[%s0 + $0x120] sm:$0xff]
  %v51 = vld [vmem:[%s0 + $0x128] sm:$0xff]
  %v52 = vld [vmem:[%s0 + $0x130] sm:$0xff]
  %v53 = vld [vmem:[%s0 + $0x138] sm:$0xff]
  %v54 = vld [vmem:[%s0 + $0x140] sm:$0xff]
  %v55 = vld [vmem:[%s0 + $0x148] sm:$0xff]
  %v56 = vld [vmem:[%s0 + $0x150] sm:$0xff]
  %v57 = vld [vmem:[%s0 + $0x158] sm:$0xff]
  %v58 = vld [vmem:[%s0 + $0x160] sm:$0xff]
  %v59 = vld [vmem:[%s0 + $0x168] sm:$0xff]
  %v60 = vld [vmem:[%s0 + $0x170] sm:$0xff]
  %v61 = vld [vmem:[%s0 + $0x178] sm:$0xff]
  %v62 = vld [vmem:[%s0 + $0x180] sm:$0xff]
  %v63 = vld [vmem:[%s0 + $0x188] sm:$0xff]
  %v64 = vld [vmem:[%s0 + $0x190] sm:$0xff]
  %v65 = vld [vmem:[%s0 + $0x198] sm:$0xff]
  %v66 = vld [vmem:[%s0 + $0x1a0] sm:$0xff]
  %v67 = vld [vmem:[%s0 + $0x1a8] sm:$0xff]
  %v68 = vld [vmem:[%s0 + $0x1b0] sm:$0xff]
  %v69 = vld [vmem:[%s0 + $0x1b8] sm:$0xff]
  %v70 = vld [vmem:[%s0 + $0x1c0] sm:$0xff]
  %v71 = vld [vmem:[%s0 + $0x1c8] sm:$0xff]
  %v72 = vld [vmem:[%s0 + $0x1d0] sm:$0xff]
  %v73 = vld [vmem:[%s0 + $0x1d8] sm:$0xff]
  %v74 = vld [vmem:[%s0 + $0x1e0] sm:$0xff]
  %v75 = vld [vmem:[%s0 + $0x1e8] sm:$0xff]
  %v76 = vld [vmem:[%s0 + $0x1f0] sm:$0xff]
  %v77 = vld [vmem:[%s0 + $0x1f8] sm:$0xff]
  %v78 = vld [vmem:[%s0 + $0x200] sm:$0xff]
  %v79 = vld [vmem:[%s0 + $0x208] sm:$0xff]
  %v80 = vld [vmem:[%s0 + $0x210] sm:$0xff]
  %v81 = vld [vmem:[%s0 + $0x218] sm:$0xff]
  %v82 = vld [vmem:[%s0 + $0x220] sm:$0xff]
  %v83 = vld [vmem:[%s0 + $0x228] sm:$0xff]
  %v84 = vld [vmem:[%s0 + $0x230] sm:$0xff]
  %v85 = vld [vmem:[%s0 + $0x238] sm:$0xff]
  %v86 = vld [vmem:[%s0 + $0x240] sm:$0xff]
  %v87 = vld [vmem:[%s0 + $0x248] sm:$0xff]
  %v88 = vld [vmem:[%s0 + $0x250] sm:$0xff]
  %v89 = vld [vmem:[%s0 + $0x258] sm:$0xff]
  %v90 = vld [vmem:[%s0 + $0x260] sm:$0xff]
  %v91 = vld [vmem:[%s0 + $0x268] sm:$0xff]
  %v92 = vld [vmem:[%s0 + $0x270] sm:$0xff]
  %v93 = vld [vmem:[%s0 + $0x278] sm:$0xff]
  %v94 = vld [vmem:[%s0 + $0x280] sm:$0xff]
  %v95 = vld [vmem:[%s0 + $0x288] sm:$0xff]
  %v96 = vld [vmem:[%s0 + $0x290] sm:$0xff]
  %v97 = vld [vmem:[%s0 + $0x298] sm:$0xff]
  %v98 = vld [vmem:[%s0 + $0x2a0] sm:$0xff]
  %v99 = vld [vmem:[%s0 + $0x2a8] sm:$0xff]
  %v100 = vld [vmem:[%s0 + $0x2b0] sm:$0xff]
  %v101 = vld [vmem:[%s0 + $0x2b8] sm:$0xff]
  %v102 = vld [vmem:[%s0 + $0x2c0] sm:$0xff]
  %v103 = vld [vmem:[%s0 + $0x2c8] sm:$0xff]
  %v104 = vld [vmem:[%s0 + $0x2d0] sm:$0xff]
  %v105 = vld [vmem:[%s0 + $0x2d8] sm:$0xff]
  %v106 = vld [vmem:[%s0 + $0x2e0] sm:$0xff]
  %v107 = vld [vmem:[%s0 + $0x2e8] sm:$0xff]
  %v108 = vld [vmem:[%s0 + $0x2f0] sm:$0xff]
  %v109 = vld [vmem:[%s0 + $0x2f8] sm:$0xff]
  %v110 = vld [vmem:[%s0 + $0x300] sm:$0xff]
  %v111 = vld [vmem:[%s0 + $0x308] sm:$0xff]
  %v112 = vld [vmem:[%s0 + $0x310] sm:$0xff]
  %v113 = vld [vmem:[%s0 + $0x318] sm:$0xff]
  %v114 = vld [vmem:[%s0 + $0x320] sm:$0xff]
  %v115 = vld [vmem:[%s0 + $0x328] sm:$0xff]
  %v116 = vld [vmem:[%s0 + $0x330] sm:$0xff]
  %v117 = vld [vmem:[%s0 + $0x338] sm:$0xff]
  %v118 = vld [vmem:[%s0 + $0x340] sm:$0xff]
  %v119 = vld [vmem:[%s0 + $0x348] sm:$0xff]
  %v120 = vld [vmem:[%s0 + $0x350] sm:$0xff]
  %v121 = vld [vmem:[%s0 + $0x358] sm:$0xff]
  %v122 = vld [vmem:[%s0 + $0x360] sm:$0xff]
  %v123 = vld [vmem:[%s0 + $0x368] sm:$0xff]
  %v124 = vld [vmem:[%s0 + $0x370] sm:$0xff]
  %v125 = vld [vmem:[%s0 + $0x378] sm:$0xff]
  %v126 = vld [vmem:[%s0 + $0x380] sm:$0xff]
  %v127 = vld [vmem:[%s0 + $0x388] sm:$0xff]
  %v128 = vld [vmem:[%s0 + $0x390] sm:$0xff]
  %v129 = vld [vmem:[%s0 + $0x398] sm:$0xff]
  %v130 = vld [vmem:[%s0 + $0x3a0] sm:$0xff]
  %v131 = vld [vmem:[%s0 + $0x3a8] sm:$0xff]
  %v132 = vld [vmem:[%s0 + $0x3b0] sm:$0xff]
  %v133 = vld [vmem:[%s0 + $0x3b8] sm:$0xff]
  %v134 = vld [vmem:[%s0 + $0x3c0] sm:$0xff]
  %v135 = vld [vmem:[%s0 + $0x3c8] sm:$0xff]
  %v136 = vld [vmem:[%s0 + $0x3d0] sm:$0xff]
  %v137 = vld [vmem:[%s0 + $0x3d8] sm:$0xff]
  %v138 = vld [vmem:[%s0 + $0x3e0] sm:$0xff]
  %v139 = vld [vmem:[%s0 + $0x3e8] sm:$0xff]
  %v140 = vld [vmem:[%s0 + $0x3f0] sm:$0xff]
  %v141 = vld [vmem:[%s0 + $0x3f8] sm:$0xff]
  %v142 = vld [vmem:[%s0 + $0x400] sm:$0xff]
  %v143 = vld [vmem:[%s0 + $0x408] sm:$0xff]
  %v144 = vld [vmem:[%s0 + $0x410] sm:$0xff]
  %v145 = vld [vmem:[%s0 + $0x418] sm:$0xff]
  %v146 = vld [vmem:[%s0 + $0x420] sm:$0xff]
  %v147 = vld [vmem:[%s0 + $0x428] sm:$0xff]
  %v148 = vld [vmem:[%s0 + $0x430] sm:$0xff]
  %v149 = vld [vmem:[%s0 + $0x438] sm:$0xff]
  %v150 = vld [vmem:[%s0 + $0x440] sm:$0xff]
  %v151 = vld [vmem:[%s0 + $0x448] sm:$0xff]
  %v152 = vld [vmem:[%s0 + $0x450] sm:$0xff]
  %v153 = vld [vmem:[%s0 + $0x458] sm:$0xff]
  %v154 = vld [vmem:[%s0 + $0x460] sm:$0xff]
  %v155 = vld [vmem:[%s0 + $0x468] sm:$0xff]
  %v156 = vld [vmem:[%s0 + $0x470] sm:$0xff]
  %v157 = vld [vmem:[%s0 + $0x478] sm:$0xff]
  %v158 = vld [vmem:[%s0 + $0x480] sm:$0xff]
  %v159 = vld [vmem:[%s0 + $0x488] sm:$0xff]
  %v160 = vld [vmem:[%s0 + $0x490] sm:$0xff]
  %v161 = vld [vmem:[%s0 + $0x498] sm:$0xff]
  %v162 = vld [vmem:[%s0 + $0x4a0] sm:$0xff]
  %v163 = vld [vmem:[%s0 + $0x4a8] sm:$0xff]
  %v164 = vld [vmem:[%s0 + $0x4b0] sm:$0xff]
  %v165 = vld [vmem:[%s0 + $0x4b8] sm:$0xff]
  %v166 = vld [vmem:[%s0 + $0x4c0] sm:$0xff]
  %v167 = vld [vmem:[%s0 + $0x4c8] sm:$0xff]
  %v168 = vld [vmem:[%s0 + $0x4d0] sm:$0xff]
  %v169 = vld [vmem:[%s0 + $0x4d8] sm:$0xff]
  %v170 = vld [vmem:[%s0 + $0x4e0] sm:$0xff]
  %v171 = vld [vmem:[%s0 + $0x4e8] sm:$0xff]
  %v172 = vld [vmem:[%s0 + $0x4f0] sm:$0xff]
  %v173 = vld [vmem:[%s0 + $0x4f8] sm:$0xff]
  %v174 = vld [vmem:[%s0 + $0x500] sm:$0xff]
  %v175 = vld [vmem:[%s0 + $0x508] sm:$0xff]
  %v176 = vld [vmem:[%s0 + $0x510] sm:$0xff]
  %v177 = vld [vmem:[%s0 + $0x518] sm:$0xff]
  %v178 = vld [vmem:[%s0 + $0x520] sm:$0xff]
  %v179 = vld [vmem:[%s0 + $0x528] sm:$0xff]
  %v180 = vld [vmem:[%s0 + $0x530] sm:$0xff]
  %v181 = vld [vmem:[%s0 + $0x538] sm:$0xff]
  %v182 = vld [vmem:[%s0 + $0x540] sm:$0xff]
  %v183 = vld [vmem:[%s0 + $0x548] sm:$0xff]
  %v184 = vld [vmem:[%s0 + $0x550] sm:$0xff]
  %v185 = vld [vmem:[%s0 + $0x558] sm:$0xff]
  %v186 = vld [vmem:[%s0 + $0x560] sm:$0xff]
  %v187 = vld [vmem:[%s0 + $0x568] sm:$0xff]
  %v188 = vld [vmem:[%s0 + $0x570] sm:$0xff]
  %v189 = vld [vmem:[%s0 + $0x578] sm:$0xff]
  %v190 = vld [vmem:[%s0 + $0x580] sm:$0xff]
  %v191 = vld [vmem:[%s0 + $0x588] sm:$0xff]
  %v192 = vld [vmem:[%s0 + $0x590] sm:$0xff]
  %v193 = vld [vmem:[%s0 + $0x598] sm:$0xff]
  %v194 = vld [vmem:[%s0 + $0x5a0] sm:$0xff]
  %v195 = vld [vmem:[%s0 + $0x5a8] sm:$0xff]
  %v196 = vld [vmem:[%s0 + $0x5b0] sm:$0xff]
  %v197 = vld [vmem:[%s0 + $0x5b8] sm:$0xff]
  %v198 = vld [vmem:[%s1] sm:$0xf]
  %v199 = vld [vmem:[%s1 + $0x4] sm:$0xf]
  %v200 = vld [vmem:[%s1 + $0x8] sm:$0xf]
  %v201 = vld [vmem:[%s1 + $0xc] sm:$0xf]
  %v202 = vld [vmem:[%s1 + $0x10] sm:$0xf]
  %v203 = vld [vmem:[%s1 + $0x14] sm:$0xf]
  %v204 = vld [vmem:[%s1 + $0x18] sm:$0xf]
  %v205 = vld [vmem:[%s1 + $0x1c] sm:$0xf]
  %v206 = vld [vmem:[%s1 + $0x20] sm:$0xf]
  %v207 = vld [vmem:[%s1 + $0x24] sm:$0xf]
  %v208 = vld [vmem:[%s1 + $0x28] sm:$0xf]
  %v209 = vld [vmem:[%s1 + $0x2c] sm:$0xf]
  %v210 = vld [vmem:[%s1 + $0x30] sm:$0xf]
  %v211 = vld [vmem:[%s1 + $0x34] sm:$0xf]
  %v212 = vld [vmem:[%s1 + $0x38] sm:$0xf]
  %v213 = vld [vmem:[%s1 + $0x3c] sm:$0xf]
  %v214 = vld [vmem:[%s1 + $0x40] sm:$0xf]
  %v215 = vld [vmem:[%s1 + $0x44] sm:$0xf]
  %v216 = vld [vmem:[%s1 + $0x48] sm:$0xf]
  %v217 = vld [vmem:[%s1 + $0x4c] sm:$0xf]
  %v218 = vld [vmem:[%s1 + $0x50] sm:$0xf]
  %v219 = vld [vmem:[%s1 + $0x54] sm:$0xf]
  %v220 = vld [vmem:[%s1 + $0x58] sm:$0xf]
  %v221 = vld [vmem:[%s1 + $0x5c] sm:$0xf]
  %v222 = vld [vmem:[%s1 + $0x60] sm:$0xf]
  %v223 = vld [vmem:[%s1 + $0x64] sm:$0xf]
  %v224 = vld [vmem:[%s1 + $0x68] sm:$0xf]
  %v225 = vld [vmem:[%s1 + $0x6c] sm:$0xf]
  %v226 = vld [vmem:[%s1 + $0x70] sm:$0xf]
  %v227 = vld [vmem:[%s1 + $0x74] sm:$0xf]
  %v228 = vld [vmem:[%s1 + $0x78] sm:$0xf]
  %v229 = vld [vmem:[%s1 + $0x7c] sm:$0xf]
  %v230 = vld [vmem:[%s1 + $0x80] sm:$0xf]
  %v231 = vld [vmem:[%s1 + $0x84] sm:$0xf]
  %v232 = vld [vmem:[%s1 + $0x88] sm:$0xf]
  %v233 = vld [vmem:[%s1 + $0x8c] sm:$0xf]
  %v234 = vld [vmem:[%s1 + $0x90] sm:$0xf]
  %v235 = vld [vmem:[%s1 + $0x94] sm:$0xf]
  %v236 = vld [vmem:[%s1 + $0x98] sm:$0xf]
  %v237 = vld [vmem:[%s1 + $0x9c] sm:$0xf]
  %v238 = vld [vmem:[%s1 + $0xa0] sm:$0xf]
  %v239 = vld [vmem:[%s1 + $0xa4] sm:$0xf]
  %v240 = vld [vmem:[%s1 + $0xa8] sm:$0xf]
  %v241 = vld [vmem:[%s1 + $0xac] sm:$0xf]
  %v242 = vld [vmem:[%s1 + $0xb0] sm:$0xf]
  %v243 = vld [vmem:[%s1 + $0xb4] sm:$0xf]
  %v244 = vld [vmem:[%s1 + $0xb8] sm:$0xf]
  %v245 = vld [vmem:[%s1 + $0xbc] sm:$0xf]
  %v246 = vld [vmem:[%s1 + $0xc0] sm:$0xf]
  %v247 = vld [vmem:[%s1 + $0xc4] sm:$0xf]
  %v248 = vld [vmem:[%s1 + $0xc8] sm:$0xf]
  %v249 = vld [vmem:[%s1 + $0xcc] sm:$0xf]
  %v250 = vld [vmem:[%s1 + $0xd0] sm:$0xf]
  %v251 = vld [vmem:[%s1 + $0xd4] sm:$0xf]
  %v252 = vld [vmem:[%s1 + $0xd8] sm:$0xf]
  %v253 = vld [vmem:[%s1 + $0xdc] sm:$0xf]
  %v254 = vld [vmem:[%s1 + $0xe0] sm:$0xf]
  %v255 = vld [vmem:[%s1 + $0xe4] sm:$0xf]
  %v256 = vld [vmem:[%s1 + $0xe8] sm:$0xf]
  %v257 = vld [vmem:[%s1 + $0xec] sm:$0xf]
  %v258 = vld [vmem:[%s1 + $0xf0] sm:$0xf]
  %v259 = vld [vmem:[%s1 + $0xf4] sm:$0xf]
  %v260 = vld [vmem:[%s1 + $0xf8] sm:$0xf]
  %v261 = vld [vmem:[%s1 + $0xfc] sm:$0xf]
  %v262 = vld [vmem:[%s2] sm:$0x1]
  %v264 = vperm.slane %v262, 0
  %v450 = vunpack.c.l.b16 %v14
  %v451 = vunpack.c.h.b16 %v14
  %v452 = vunpack.c.l.b16 %v15
  %v453 = vunpack.c.h.b16 %v15
  %v454 = vunpack.c.l.b16 %v16
  %v455 = vunpack.c.h.b16 %v16
  %v456 = vunpack.c.l.b16 %v17
  %v457 = vunpack.c.h.b16 %v17
  %v458 = vunpack.c.l.b16 %v18
  %v459 = vunpack.c.h.b16 %v18
  %v460 = vunpack.c.l.b16 %v19
  %v461 = vunpack.c.h.b16 %v19
  %v462 = vunpack.c.l.b16 %v20
  %v463 = vunpack.c.h.b16 %v20
  %v464 = vunpack.c.l.b16 %v21
  %v465 = vunpack.c.h.b16 %v21
  %v466 = vunpack.c.l.b16 %v22
  %v467 = vunpack.c.h.b16 %v22
  %v468 = vunpack.c.l.b16 %v23
  %v469 = vunpack.c.h.b16 %v23
  %v470 = vunpack.c.l.b16 %v24
  %v471 = vunpack.c.h.b16 %v24
  %v472 = vunpack.c.l.b16 %v25
  %v473 = vunpack.c.h.b16 %v25
  %v474 = vunpack.c.l.b16 %v26
  %v475 = vunpack.c.h.b16 %v26
  %v476 = vunpack.c.l.b16 %v27
  %v477 = vunpack.c.h.b16 %v27
  %v478 = vunpack.c.l.b16 %v28
  %v479 = vunpack.c.h.b16 %v28
  %v480 = vunpack.c.l.b16 %v29
  %v481 = vunpack.c.h.b16 %v29
  %v482 = vunpack.c.l.b16 %v30
  %v483 = vunpack.c.h.b16 %v30
  %v484 = vunpack.c.l.b16 %v31
  %v485 = vunpack.c.h.b16 %v31
  %v486 = vunpack.c.l.b16 %v32
  %v487 = vunpack.c.h.b16 %v32
  %v488 = vunpack.c.l.b16 %v33
  %v489 = vunpack.c.h.b16 %v33
  %v490 = vunpack.c.l.b16 %v34
  %v491 = vunpack.c.h.b16 %v34
  %v492 = vunpack.c.l.b16 %v35
  %v493 = vunpack.c.h.b16 %v35
  %v494 = vunpack.c.l.b16 %v36
  %v495 = vunpack.c.h.b16 %v36
  %v496 = vunpack.c.l.b16 %v37
  %v497 = vunpack.c.h.b16 %v37
  %v498 = vunpack.c.l.b16 %v38
  %v499 = vunpack.c.h.b16 %v38
  %v500 = vunpack.c.l.b16 %v39
  %v501 = vunpack.c.h.b16 %v39
  %v502 = vunpack.c.l.b16 %v40
  %v503 = vunpack.c.h.b16 %v40
  %v504 = vunpack.c.l.b16 %v41
  %v505 = vunpack.c.h.b16 %v41
  %v506 = vunpack.c.l.b16 %v42
  %v507 = vunpack.c.h.b16 %v42
  %v508 = vunpack.c.l.b16 %v43
  %v509 = vunpack.c.h.b16 %v43
  %v510 = vunpack.c.l.b16 %v44
  %v511 = vunpack.c.h.b16 %v44
  %v512 = vunpack.c.l.b16 %v45
  %v513 = vunpack.c.h.b16 %v45
  %v514 = vunpack.c.l.b16 %v46
  %v515 = vunpack.c.h.b16 %v46
  %v516 = vunpack.c.l.b16 %v47
  %v517 = vunpack.c.h.b16 %v47
  %v518 = vunpack.c.l.b16 %v48
  %v519 = vunpack.c.h.b16 %v48
  %v520 = vunpack.c.l.b16 %v49
  %v521 = vunpack.c.h.b16 %v49
  %v522 = vunpack.c.l.b16 %v50
  %v523 = vunpack.c.h.b16 %v50
  %v524 = vunpack.c.l.b16 %v51
  %v525 = vunpack.c.h.b16 %v51
  %v526 = vunpack.c.l.b16 %v52
  %v527 = vunpack.c.h.b16 %v52
  %v528 = vunpack.c.l.b16 %v53
  %v529 = vunpack.c.h.b16 %v53
  %v530 = vunpack.c.l.b16 %v54
  %v531 = vunpack.c.h.b16 %v54
  %v532 = vunpack.c.l.b16 %v55
  %v533 = vunpack.c.h.b16 %v55
  %v534 = vunpack.c.l.b16 %v56
  %v535 = vunpack.c.h.b16 %v56
  %v536 = vunpack.c.l.b16 %v57
  %v537 = vunpack.c.h.b16 %v57
  %v538 = vunpack.c.l.b16 %v58
  %v539 = vunpack.c.h.b16 %v58
  %v540 = vunpack.c.l.b16 %v59
  %v541 = vunpack.c.h.b16 %v59
  %v542 = vunpack.c.l.b16 %v60
  %v543 = vunpack.c.h.b16 %v60
  %v544 = vunpack.c.l.b16 %v61
  %v545 = vunpack.c.h.b16 %v61
  %v546 = vunpack.c.l.b16 %v62
  %v547 = vunpack.c.h.b16 %v62
  %v548 = vunpack.c.l.b16 %v63
  %v549 = vunpack.c.h.b16 %v63
  %v550 = vunpack.c.l.b16 %v64
  %v551 = vunpack.c.h.b16 %v64
  %v552 = vunpack.c.l.b16 %v65
  %v553 = vunpack.c.h.b16 %v65
  %v554 = vunpack.c.l.b16 %v66
  %v555 = vunpack.c.h.b16 %v66
  %v556 = vunpack.c.l.b16 %v67
  %v557 = vunpack.c.h.b16 %v67
  %v558 = vunpack.c.l.b16 %v68
  %v559 = vunpack.c.h.b16 %v68
  %v560 = vunpack.c.l.b16 %v69
  %v561 = vunpack.c.h.b16 %v69
  %v562 = vunpack.c.l.b16 %v70
  %v563 = vunpack.c.h.b16 %v70
  %v564 = vunpack.c.l.b16 %v71
  %v565 = vunpack.c.h.b16 %v71
  %v566 = vunpack.c.l.b16 %v72
  %v567 = vunpack.c.h.b16 %v72
  %v568 = vunpack.c.l.b16 %v73
  %v569 = vunpack.c.h.b16 %v73
  %v570 = vunpack.c.l.b16 %v74
  %v571 = vunpack.c.h.b16 %v74
  %v572 = vunpack.c.l.b16 %v75
  %v573 = vunpack.c.h.b16 %v75
  %v574 = vunpack.c.l.b16 %v76
  %v575 = vunpack.c.h.b16 %v76
  %v576 = vunpack.c.l.b16 %v77
  %v577 = vunpack.c.h.b16 %v77
  %v578 = vunpack.c.l.b16 %v78
  %v579 = vunpack.c.h.b16 %v78
  %v580 = vunpack.c.l.b16 %v79
  %v581 = vunpack.c.h.b16 %v79
  %v582 = vunpack.c.l.b16 %v80
  %v583 = vunpack.c.h.b16 %v80
  %v584 = vunpack.c.l.b16 %v81
  %v585 = vunpack.c.h.b16 %v81
  %v586 = vunpack.c.l.b16 %v82
  %v587 = vunpack.c.h.b16 %v82
  %v588 = vunpack.c.l.b16 %v83
  %v589 = vunpack.c.h.b16 %v83
  %v590 = vunpack.c.l.b16 %v84
  %v591 = vunpack.c.h.b16 %v84
  %v592 = vunpack.c.l.b16 %v85
  %v593 = vunpack.c.h.b16 %v85
  %v594 = vunpack.c.l.b16 %v86
  %v595 = vunpack.c.h.b16 %v86
  %v596 = vunpack.c.l.b16 %v87
  %v597 = vunpack.c.h.b16 %v87
  %v598 = vunpack.c.l.b16 %v88
  %v599 = vunpack.c.h.b16 %v88
  %v600 = vunpack.c.l.b16 %v89
  %v601 = vunpack.c.h.b16 %v89
  %v602 = vunpack.c.l.b16 %v90
  %v603 = vunpack.c.h.b16 %v90
  %v604 = vunpack.c.l.b16 %v91
  %v605 = vunpack.c.h.b16 %v91
  %v606 = vunpack.c.l.b16 %v92
  %v607 = vunpack.c.h.b16 %v92
  %v608 = vunpack.c.l.b16 %v93
  %v609 = vunpack.c.h.b16 %v93
  %v610 = vunpack.c.l.b16 %v94
  %v611 = vunpack.c.h.b16 %v94
  %v612 = vunpack.c.l.b16 %v95
  %v613 = vunpack.c.h.b16 %v95
  %v614 = vunpack.c.l.b16 %v96
  %v615 = vunpack.c.h.b16 %v96
  %v616 = vunpack.c.l.b16 %v97
  %v617 = vunpack.c.h.b16 %v97
  %v618 = vunpack.c.l.b16 %v98
  %v619 = vunpack.c.h.b16 %v98
  %v620 = vunpack.c.l.b16 %v99
  %v621 = vunpack.c.h.b16 %v99
  %v622 = vunpack.c.l.b16 %v100
  %v623 = vunpack.c.h.b16 %v100
  %v624 = vunpack.c.l.b16 %v101
  %v625 = vunpack.c.h.b16 %v101
  %v626 = vunpack.c.l.b16 %v102
  %v627 = vunpack.c.h.b16 %v102
  %v628 = vunpack.c.l.b16 %v103
  %v629 = vunpack.c.h.b16 %v103
  %v630 = vunpack.c.l.b16 %v104
  %v631 = vunpack.c.h.b16 %v104
  %v632 = vunpack.c.l.b16 %v105
  %v633 = vunpack.c.h.b16 %v105
  %v634 = vunpack.c.l.b16 %v106
  %v635 = vunpack.c.h.b16 %v106
  %v636 = vunpack.c.l.b16 %v107
  %v637 = vunpack.c.h.b16 %v107
  %v638 = vunpack.c.l.b16 %v108
  %v639 = vunpack.c.h.b16 %v108
  %v640 = vunpack.c.l.b16 %v109
  %v641 = vunpack.c.h.b16 %v109
  %v642 = vunpack.c.l.b16 %v110
  %v643 = vunpack.c.h.b16 %v110
  %v644 = vunpack.c.l.b16 %v111
  %v645 = vunpack.c.h.b16 %v111
  %v646 = vunpack.c.l.b16 %v112
  %v647 = vunpack.c.h.b16 %v112
  %v648 = vunpack.c.l.b16 %v113
  %v649 = vunpack.c.h.b16 %v113
  %v650 = vunpack.c.l.b16 %v114
  %v651 = vunpack.c.h.b16 %v114
  %v652 = vunpack.c.l.b16 %v115
  %v653 = vunpack.c.h.b16 %v115
  %v654 = vunpack.c.l.b16 %v116
  %v655 = vunpack.c.h.b16 %v116
  %v656 = vunpack.c.l.b16 %v117
  %v657 = vunpack.c.h.b16 %v117
  %v658 = vunpack.c.l.b16 %v118
  %v659 = vunpack.c.h.b16 %v118
  %v660 = vunpack.c.l.b16 %v119
  %v661 = vunpack.c.h.b16 %v119
  %v662 = vunpack.c.l.b16 %v120
  %v663 = vunpack.c.h.b16 %v120
  %v664 = vunpack.c.l.b16 %v121
  %v665 = vunpack.c.h.b16 %v121
  %v666 = vunpack.c.l.b16 %v122
  %v667 = vunpack.c.h.b16 %v122
  %v668 = vunpack.c.l.b16 %v123
  %v669 = vunpack.c.h.b16 %v123
  %v670 = vunpack.c.l.b16 %v124
  %v671 = vunpack.c.h.b16 %v124
  %v672 = vunpack.c.l.b16 %v125
  %v673 = vunpack.c.h.b16 %v125
  %v674 = vunpack.c.l.b16 %v126
  %v675 = vunpack.c.h.b16 %v126
  %v676 = vunpack.c.l.b16 %v127
  %v677 = vunpack.c.h.b16 %v127
  %v678 = vunpack.c.l.b16 %v128
  %v679 = vunpack.c.h.b16 %v128
  %v680 = vunpack.c.l.b16 %v129
  %v681 = vunpack.c.h.b16 %v129
  %v682 = vunpack.c.l.b16 %v130
  %v683 = vunpack.c.h.b16 %v130
  %v684 = vunpack.c.l.b16 %v131
  %v685 = vunpack.c.h.b16 %v131
  %v686 = vunpack.c.l.b16 %v132
  %v687 = vunpack.c.h.b16 %v132
  %v688 = vunpack.c.l.b16 %v133
  %v689 = vunpack.c.h.b16 %v133
  %v690 = vunpack.c.l.b16 %v134
  %v691 = vunpack.c.h.b16 %v134
  %v692 = vunpack.c.l.b16 %v135
  %v693 = vunpack.c.h.b16 %v135
  %v694 = vunpack.c.l.b16 %v136
  %v695 = vunpack.c.h.b16 %v136
  %v696 = vunpack.c.l.b16 %v137
  %v697 = vunpack.c.h.b16 %v137
  %v698 = vunpack.c.l.b16 %v138
  %v699 = vunpack.c.h.b16 %v138
  %v700 = vunpack.c.l.b16 %v139
  %v701 = vunpack.c.h.b16 %v139
  %v702 = vunpack.c.l.b16 %v140
  %v703 = vunpack.c.h.b16 %v140
  %v704 = vunpack.c.l.b16 %v141
  %v705 = vunpack.c.h.b16 %v141
  %v706 = vunpack.c.l.b16 %v142
  %v707 = vunpack.c.h.b16 %v142
  %v708 = vunpack.c.l.b16 %v143
  %v709 = vunpack.c.h.b16 %v143
  %v710 = vunpack.c.l.b16 %v144
  %v711 = vunpack.c.h.b16 %v144
  %v712 = vunpack.c.l.b16 %v145
  %v713 = vunpack.c.h.b16 %v145
  %v714 = vunpack.c.l.b16 %v146
  %v715 = vunpack.c.h.b16 %v146
  %v716 = vunpack.c.l.b16 %v147
  %v717 = vunpack.c.h.b16 %v147
  %v718 = vunpack.c.l.b16 %v148
  %v719 = vunpack.c.h.b16 %v148
  %v720 = vunpack.c.l.b16 %v149
  %v721 = vunpack.c.h.b16 %v149
  %v722 = vunpack.c.l.b16 %v150
  %v723 = vunpack.c.h.b16 %v150
  %v724 = vunpack.c.l.b16 %v151
  %v725 = vunpack.c.h.b16 %v151
  %v726 = vunpack.c.l.b16 %v152
  %v727 = vunpack.c.h.b16 %v152
  %v728 = vunpack.c.l.b16 %v153
  %v729 = vunpack.c.h.b16 %v153
  %v730 = vunpack.c.l.b16 %v154
  %v731 = vunpack.c.h.b16 %v154
  %v732 = vunpack.c.l.b16 %v155
  %v733 = vunpack.c.h.b16 %v155
  %v734 = vunpack.c.l.b16 %v156
  %v735 = vunpack.c.h.b16 %v156
  %v736 = vunpack.c.l.b16 %v157
  %v737 = vunpack.c.h.b16 %v157
  %v738 = vunpack.c.l.b16 %v158
  %v739 = vunpack.c.h.b16 %v158
  %v740 = vunpack.c.l.b16 %v159
  %v741 = vunpack.c.h.b16 %v159
  %v742 = vunpack.c.l.b16 %v160
  %v743 = vunpack.c.h.b16 %v160
  %v744 = vunpack.c.l.b16 %v161
  %v745 = vunpack.c.h.b16 %v161
  %v746 = vunpack.c.l.b16 %v162
  %v747 = vunpack.c.h.b16 %v162
  %v748 = vunpack.c.l.b16 %v163
  %v749 = vunpack.c.h.b16 %v163
  %v750 = vunpack.c.l.b16 %v164
  %v751 = vunpack.c.h.b16 %v164
  %v752 = vunpack.c.l.b16 %v165
  %v753 = vunpack.c.h.b16 %v165
  %v754 = vunpack.c.l.b16 %v166
  %v755 = vunpack.c.h.b16 %v166
  %v756 = vunpack.c.l.b16 %v167
  %v757 = vunpack.c.h.b16 %v167
  %v758 = vunpack.c.l.b16 %v168
  %v759 = vunpack.c.h.b16 %v168
  %v760 = vunpack.c.l.b16 %v169
  %v761 = vunpack.c.h.b16 %v169
  %v762 = vunpack.c.l.b16 %v170
  %v763 = vunpack.c.h.b16 %v170
  %v764 = vunpack.c.l.b16 %v171
  %v765 = vunpack.c.h.b16 %v171
  %v766 = vunpack.c.l.b16 %v172
  %v767 = vunpack.c.h.b16 %v172
  %v768 = vunpack.c.l.b16 %v173
  %v769 = vunpack.c.h.b16 %v173
  %v770 = vunpack.c.l.b16 %v174
  %v771 = vunpack.c.h.b16 %v174
  %v772 = vunpack.c.l.b16 %v175
  %v773 = vunpack.c.h.b16 %v175
  %v774 = vunpack.c.l.b16 %v176
  %v775 = vunpack.c.h.b16 %v176
  %v776 = vunpack.c.l.b16 %v177
  %v777 = vunpack.c.h.b16 %v177
  %v778 = vunpack.c.l.b16 %v178
  %v779 = vunpack.c.h.b16 %v178
  %v780 = vunpack.c.l.b16 %v179
  %v781 = vunpack.c.h.b16 %v179
  %v782 = vunpack.c.l.b16 %v180
  %v783 = vunpack.c.h.b16 %v180
  %v784 = vunpack.c.l.b16 %v181
  %v785 = vunpack.c.h.b16 %v181
  %v786 = vunpack.c.l.b16 %v182
  %v787 = vunpack.c.h.b16 %v182
  %v788 = vunpack.c.l.b16 %v183
  %v789 = vunpack.c.h.b16 %v183
  %v790 = vunpack.c.l.b16 %v184
  %v791 = vunpack.c.h.b16 %v184
  %v792 = vunpack.c.l.b16 %v185
  %v793 = vunpack.c.h.b16 %v185
  %v794 = vunpack.c.l.b16 %v186
  %v795 = vunpack.c.h.b16 %v186
  %v796 = vunpack.c.l.b16 %v187
  %v797 = vunpack.c.h.b16 %v187
  %v798 = vunpack.c.l.b16 %v188
  %v799 = vunpack.c.h.b16 %v188
  %v800 = vunpack.c.l.b16 %v189
  %v801 = vunpack.c.h.b16 %v189
  %v802 = vunpack.c.l.b16 %v190
  %v803 = vunpack.c.h.b16 %v190
  %v804 = vunpack.c.l.b16 %v191
  %v805 = vunpack.c.h.b16 %v191
  %v806 = vunpack.c.l.b16 %v192
  %v807 = vunpack.c.h.b16 %v192
  %v808 = vunpack.c.l.b16 %v193
  %v809 = vunpack.c.h.b16 %v193
  %v810 = vunpack.c.l.b16 %v194
  %v811 = vunpack.c.h.b16 %v194
  %v812 = vunpack.c.l.b16 %v195
  %v813 = vunpack.c.h.b16 %v195
  %v814 = vunpack.c.l.b16 %v196
  %v815 = vunpack.c.h.b16 %v196
  %v816 = vunpack.c.l.b16 %v197
  %v817 = vunpack.c.h.b16 %v197
  %v818 = vpack.c.b16 %v454, %v450
  %v819 = vpack.c.b16 %v455, %v451
  %v820 = vpack.c.b16 %v456, %v452
  %v821 = vpack.c.b16 %v457, %v453
  %v822 = vpack.c.b16 %v462, %v458
  %v823 = vpack.c.b16 %v463, %v459
  %v824 = vpack.c.b16 %v464, %v460
  %v825 = vpack.c.b16 %v465, %v461
  %v826 = vpack.c.b16 %v470, %v466
  %v827 = vpack.c.b16 %v471, %v467
  %v828 = vpack.c.b16 %v472, %v468
  %v829 = vpack.c.b16 %v473, %v469
  %v830 = vpack.c.b16 %v478, %v474
  %v831 = vpack.c.b16 %v479, %v475
  %v832 = vpack.c.b16 %v480, %v476
  %v833 = vpack.c.b16 %v481, %v477
  %v834 = vpack.c.b16 %v486, %v482
  %v835 = vpack.c.b16 %v487, %v483
  %v836 = vpack.c.b16 %v488, %v484
  %v837 = vpack.c.b16 %v489, %v485
  %v838 = vpack.c.b16 %v494, %v490
  %v839 = vpack.c.b16 %v495, %v491
  %v840 = vpack.c.b16 %v496, %v492
  %v841 = vpack.c.b16 %v497, %v493
  %v842 = vpack.c.b16 %v502, %v498
  %v843 = vpack.c.b16 %v503, %v499
  %v844 = vpack.c.b16 %v504, %v500
  %v845 = vpack.c.b16 %v505, %v501
  %v846 = vpack.c.b16 %v510, %v506
  %v847 = vpack.c.b16 %v511, %v507
  %v848 = vpack.c.b16 %v512, %v508
  %v849 = vpack.c.b16 %v513, %v509
  %v850 = vpack.c.b16 %v518, %v514
  %v851 = vpack.c.b16 %v519, %v515
  %v852 = vpack.c.b16 %v520, %v516
  %v853 = vpack.c.b16 %v521, %v517
  %v854 = vpack.c.b16 %v526, %v522
  %v855 = vpack.c.b16 %v527, %v523
  %v856 = vpack.c.b16 %v528, %v524
  %v857 = vpack.c.b16 %v529, %v525
  %v858 = vpack.c.b16 %v534, %v530
  %v859 = vpack.c.b16 %v535, %v531
  %v860 = vpack.c.b16 %v536, %v532
  %v861 = vpack.c.b16 %v537, %v533
  %v862 = vpack.c.b16 %v542, %v538
  %v863 = vpack.c.b16 %v543, %v539
  %v864 = vpack.c.b16 %v544, %v540
  %v865 = vpack.c.b16 %v545, %v541
  %v866 = vpack.c.b16 %v550, %v546
  %v867 = vpack.c.b16 %v551, %v547
  %v868 = vpack.c.b16 %v552, %v548
  %v869 = vpack.c.b16 %v553, %v549
  %v870 = vpack.c.b16 %v558, %v554
  %v871 = vpack.c.b16 %v559, %v555
  %v872 = vpack.c.b16 %v560, %v556
  %v873 = vpack.c.b16 %v561, %v557
  %v874 = vpack.c.b16 %v566, %v562
  %v875 = vpack.c.b16 %v567, %v563
  %v876 = vpack.c.b16 %v568, %v564
  %v877 = vpack.c.b16 %v569, %v565
  %v878 = vpack.c.b16 %v574, %v570
  %v879 = vpack.c.b16 %v575, %v571
  %v880 = vpack.c.b16 %v576, %v572
  %v881 = vpack.c.b16 %v577, %v573
  %v882 = vpack.c.b16 %v582, %v578
  %v883 = vpack.c.b16 %v583, %v579
  %v884 = vpack.c.b16 %v584, %v580
  %v885 = vpack.c.b16 %v585, %v581
  %v886 = vpack.c.b16 %v590, %v586
  %v887 = vpack.c.b16 %v591, %v587
  %v888 = vpack.c.b16 %v592, %v588
  %v889 = vpack.c.b16 %v593, %v589
  %v890 = vpack.c.b16 %v598, %v594
  %v891 = vpack.c.b16 %v599, %v595
  %v892 = vpack.c.b16 %v600, %v596
  %v893 = vpack.c.b16 %v601, %v597
  %v894 = vpack.c.b16 %v606, %v602
  %v895 = vpack.c.b16 %v607, %v603
  %v896 = vpack.c.b16 %v608, %v604
  %v897 = vpack.c.b16 %v609, %v605
  %v898 = vpack.c.b16 %v614, %v610
  %v899 = vpack.c.b16 %v615, %v611
  %v900 = vpack.c.b16 %v616, %v612
  %v901 = vpack.c.b16 %v617, %v613
  %v902 = vpack.c.b16 %v622, %v618
  %v903 = vpack.c.b16 %v623, %v619
  %v904 = vpack.c.b16 %v624, %v620
  %v905 = vpack.c.b16 %v625, %v621
  %v906 = vpack.c.b16 %v630, %v626
  %v907 = vpack.c.b16 %v631, %v627
  %v908 = vpack.c.b16 %v632, %v628
  %v909 = vpack.c.b16 %v633, %v629
  %v910 = vpack.c.b16 %v638, %v634
  %v911 = vpack.c.b16 %v639, %v635
  %v912 = vpack.c.b16 %v640, %v636
  %v913 = vpack.c.b16 %v641, %v637
  %v914 = vpack.c.b16 %v646, %v642
  %v915 = vpack.c.b16 %v647, %v643
  %v916 = vpack.c.b16 %v648, %v644
  %v917 = vpack.c.b16 %v649, %v645
  %v918 = vpack.c.b16 %v654, %v650
  %v919 = vpack.c.b16 %v655, %v651
  %v920 = vpack.c.b16 %v656, %v652
  %v921 = vpack.c.b16 %v657, %v653
  %v922 = vpack.c.b16 %v662, %v658
  %v923 = vpack.c.b16 %v663, %v659
  %v924 = vpack.c.b16 %v664, %v660
  %v925 = vpack.c.b16 %v665, %v661
  %v926 = vpack.c.b16 %v670, %v666
  %v927 = vpack.c.b16 %v671, %v667
  %v928 = vpack.c.b16 %v672, %v668
  %v929 = vpack.c.b16 %v673, %v669
  %v930 = vpack.c.b16 %v678, %v674
  %v931 = vpack.c.b16 %v679, %v675
  %v932 = vpack.c.b16 %v680, %v676
  %v933 = vpack.c.b16 %v681, %v677
  %v934 = vpack.c.b16 %v686, %v682
  %v935 = vpack.c.b16 %v687, %v683
  %v936 = vpack.c.b16 %v688, %v684
  %v937 = vpack.c.b16 %v689, %v685
  %v938 = vpack.c.b16 %v694, %v690
  %v939 = vpack.c.b16 %v695, %v691
  %v940 = vpack.c.b16 %v696, %v692
  %v941 = vpack.c.b16 %v697, %v693
  %v942 = vpack.c.b16 %v702, %v698
  %v943 = vpack.c.b16 %v703, %v699
  %v944 = vpack.c.b16 %v704, %v700
  %v945 = vpack.c.b16 %v705, %v701
  %v946 = vpack.c.b16 %v710, %v706
  %v947 = vpack.c.b16 %v711, %v707
  %v948 = vpack.c.b16 %v712, %v708
  %v949 = vpack.c.b16 %v713, %v709
  %v950 = vpack.c.b16 %v718, %v714
  %v951 = vpack.c.b16 %v719, %v715
  %v952 = vpack.c.b16 %v720, %v716
  %v953 = vpack.c.b16 %v721, %v717
  %v954 = vpack.c.b16 %v726, %v722
  %v955 = vpack.c.b16 %v727, %v723
  %v956 = vpack.c.b16 %v728, %v724
  %v957 = vpack.c.b16 %v729, %v725
  %v958 = vpack.c.b16 %v734, %v730
  %v959 = vpack.c.b16 %v735, %v731
  %v960 = vpack.c.b16 %v736, %v732
  %v961 = vpack.c.b16 %v737, %v733
  %v962 = vpack.c.b16 %v742, %v738
  %v963 = vpack.c.b16 %v743, %v739
  %v964 = vpack.c.b16 %v744, %v740
  %v965 = vpack.c.b16 %v745, %v741
  %v966 = vpack.c.b16 %v750, %v746
  %v967 = vpack.c.b16 %v751, %v747
  %v968 = vpack.c.b16 %v752, %v748
  %v969 = vpack.c.b16 %v753, %v749
  %v970 = vpack.c.b16 %v758, %v754
  %v971 = vpack.c.b16 %v759, %v755
  %v972 = vpack.c.b16 %v760, %v756
  %v973 = vpack.c.b16 %v761, %v757
  %v974 = vpack.c.b16 %v766, %v762
  %v975 = vpack.c.b16 %v767, %v763
  %v976 = vpack.c.b16 %v768, %v764
  %v977 = vpack.c.b16 %v769, %v765
  %v978 = vpack.c.b16 %v774, %v770
  %v979 = vpack.c.b16 %v775, %v771
  %v980 = vpack.c.b16 %v776, %v772
  %v981 = vpack.c.b16 %v777, %v773
  %v982 = vpack.c.b16 %v782, %v778
  %v983 = vpack.c.b16 %v783, %v779
  %v984 = vpack.c.b16 %v784, %v780
  %v985 = vpack.c.b16 %v785, %v781
  %v986 = vpack.c.b16 %v790, %v786
  %v987 = vpack.c.b16 %v791, %v787
  %v988 = vpack.c.b16 %v792, %v788
  %v989 = vpack.c.b16 %v793, %v789
  %v990 = vpack.c.b16 %v798, %v794
  %v991 = vpack.c.b16 %v799, %v795
  %v992 = vpack.c.b16 %v800, %v796
  %v993 = vpack.c.b16 %v801, %v797
  %v994 = vpack.c.b16 %v806, %v802
  %v995 = vpack.c.b16 %v807, %v803
  %v996 = vpack.c.b16 %v808, %v804
  %v997 = vpack.c.b16 %v809, %v805
  %v998 = vpack.c.b16 %v814, %v810
  %v999 = vpack.c.b16 %v815, %v811
  %v1000 = vpack.c.b16 %v816, %v812
  %v1001 = vpack.c.b16 %v817, %v813
  %v1250 = vunpack.c.l.b16 %v198
  %v1251 = vunpack.c.l.b16 %v199
  %v1252 = vunpack.c.l.b16 %v200
  %v1253 = vunpack.c.l.b16 %v201
  %v1254 = vunpack.c.l.b16 %v202
  %v1255 = vunpack.c.l.b16 %v203
  %v1256 = vunpack.c.l.b16 %v204
  %v1257 = vunpack.c.l.b16 %v205
  %v1258 = vunpack.c.l.b16 %v206
  %v1259 = vunpack.c.l.b16 %v207
  %v1260 = vunpack.c.l.b16 %v208
  %v1261 = vunpack.c.l.b16 %v209
  %v1262 = vunpack.c.l.b16 %v210
  %v1263 = vunpack.c.l.b16 %v211
  %v1264 = vunpack.c.l.b16 %v212
  %v1265 = vunpack.c.l.b16 %v213
  %v1266 = vunpack.c.l.b16 %v214
  %v1267 = vunpack.c.l.b16 %v215
  %v1268 = vunpack.c.l.b16 %v216
  %v1269 = vunpack.c.l.b16 %v217
  %v1270 = vunpack.c.l.b16 %v218
  %v1271 = vunpack.c.l.b16 %v219
  %v1272 = vunpack.c.l.b16 %v220
  %v1273 = vunpack.c.l.b16 %v221
  %v1274 = vunpack.c.l.b16 %v222
  %v1275 = vunpack.c.l.b16 %v223
  %v1276 = vunpack.c.l.b16 %v224
  %v1277 = vunpack.c.l.b16 %v225
  %v1278 = vunpack.c.l.b16 %v226
  %v1279 = vunpack.c.l.b16 %v227
  %v1280 = vunpack.c.l.b16 %v228
  %v1281 = vunpack.c.l.b16 %v229
  %v1282 = vunpack.c.l.b16 %v230
  %v1283 = vunpack.c.l.b16 %v231
  %v1284 = vunpack.c.l.b16 %v232
  %v1285 = vunpack.c.l.b16 %v233
  %v1286 = vunpack.c.l.b16 %v234
  %v1287 = vunpack.c.l.b16 %v235
  %v1288 = vunpack.c.l.b16 %v236
  %v1289 = vunpack.c.l.b16 %v237
  %v1290 = vunpack.c.l.b16 %v238
  %v1291 = vunpack.c.l.b16 %v239
  %v1292 = vunpack.c.l.b16 %v240
  %v1293 = vunpack.c.l.b16 %v241
  %v1294 = vunpack.c.l.b16 %v242
  %v1295 = vunpack.c.l.b16 %v243
  %v1296 = vunpack.c.l.b16 %v244
  %v1297 = vunpack.c.l.b16 %v245
  %v1298 = vunpack.c.l.b16 %v246
  %v1299 = vunpack.c.l.b16 %v247
  %v1300 = vunpack.c.l.b16 %v248
  %v1301 = vunpack.c.l.b16 %v249
  %v1302 = vunpack.c.l.b16 %v250
  %v1303 = vunpack.c.l.b16 %v251
  %v1304 = vunpack.c.l.b16 %v252
  %v1305 = vunpack.c.l.b16 %v253
  %v1306 = vunpack.c.l.b16 %v254
  %v1307 = vunpack.c.l.b16 %v255
  %v1308 = vunpack.c.l.b16 %v256
  %v1309 = vunpack.c.l.b16 %v257
  %v1310 = vunpack.c.l.b16 %v258
  %v1311 = vunpack.c.l.b16 %v259
  %v1312 = vunpack.c.l.b16 %v260
  %v1313 = vunpack.c.l.b16 %v261
  %v1314 = vpack.c.b16 %v1251, %v1250
  %v1315 = vpack.c.b16 %v1253, %v1252
  %v1316 = vpack.c.b16 %v1255, %v1254
  %v1317 = vpack.c.b16 %v1257, %v1256
  %v1318 = vpack.c.b16 %v1259, %v1258
  %v1319 = vpack.c.b16 %v1261, %v1260
  %v1320 = vpack.c.b16 %v1263, %v1262
  %v1321 = vpack.c.b16 %v1265, %v1264
  %v1322 = vpack.c.b16 %v1267, %v1266
  %v1323 = vpack.c.b16 %v1269, %v1268
  %v1324 = vpack.c.b16 %v1271, %v1270
  %v1325 = vpack.c.b16 %v1273, %v1272
  %v1326 = vpack.c.b16 %v1275, %v1274
  %v1327 = vpack.c.b16 %v1277, %v1276
  %v1328 = vpack.c.b16 %v1279, %v1278
  %v1329 = vpack.c.b16 %v1281, %v1280
  %v1330 = vpack.c.b16 %v1283, %v1282
  %v1331 = vpack.c.b16 %v1285, %v1284
  %v1332 = vpack.c.b16 %v1287, %v1286
  %v1333 = vpack.c.b16 %v1289, %v1288
  %v1334 = vpack.c.b16 %v1291, %v1290
  %v1335 = vpack.c.b16 %v1293, %v1292
  %v1336 = vpack.c.b16 %v1295, %v1294
  %v1337 = vpack.c.b16 %v1297, %v1296
  %v1338 = vpack.c.b16 %v1299, %v1298
  %v1339 = vpack.c.b16 %v1301, %v1300
  %v1340 = vpack.c.b16 %v1303, %v1302
  %v1341 = vpack.c.b16 %v1305, %v1304
  %v1342 = vpack.c.b16 %v1307, %v1306
  %v1343 = vpack.c.b16 %v1309, %v1308
  %v1344 = vpack.c.b16 %v1311, %v1310
  %v1345 = vpack.c.b16 %v1313, %v1312
  %1378 = vmatpush.bf16.msra.mxu0 %v1321
  %1379 = vmatpush.bf16.msra.mxu0 %v1320
  %1380 = vmatpush.bf16.msra.mxu0 %v1319
  %1381 = vmatpush.bf16.msra.mxu0 %v1318
  %1382 = vmatpush.bf16.msra.mxu0 %v1317
  %1383 = vmatpush.bf16.msra.mxu0 %v1316
  %1384 = vmatpush.bf16.msra.mxu0 %v1315
  %1385 = vmatpush.bf16.msra.mxu0 %v1314
  %1386 = vmatmul.bf16.gmra.mxu0 %v818
  %v1387 = vpop.f32.mrf.mxu0
  %v1388 = vadd.f32 %v264, %v1387
  %v1389 = vpop.f32.mrf.mxu0
  %v1390 = vadd.f32 %v264, %v1389
  %1391 = vmatmul.bf16.gmra.mxu0 %v822
  %v1392 = vpop.f32.mrf.mxu0
  %v1393 = vadd.f32 %v264, %v1392
  %v1394 = vpop.f32.mrf.mxu0
  %v1395 = vadd.f32 %v264, %v1394
  %1396 = vmatmul.bf16.gmra.mxu0 %v826
  %v1397 = vpop.f32.mrf.mxu0
  %v1398 = vadd.f32 %v264, %v1397
  %v1399 = vpop.f32.mrf.mxu0
  %v1400 = vadd.f32 %v264, %v1399
  %1401 = vmatmul.bf16.gmra.mxu0 %v830
  %v1402 = vpop.f32.mrf.mxu0
  %v1403 = vadd.f32 %v264, %v1402
  %v1404 = vpop.f32.mrf.mxu0
  %v1405 = vadd.f32 %v264, %v1404
  %1406 = vmatmul.bf16.gmra.mxu0 %v834
  %v1407 = vpop.f32.mrf.mxu0
  %v1408 = vadd.f32 %v264, %v1407
  %v1409 = vpop.f32.mrf.mxu0
  %v1410 = vadd.f32 %v264, %v1409
  %1411 = vmatmul.bf16.gmra.mxu0 %v838
  %v1412 = vpop.f32.mrf.mxu0
  %v1413 = vadd.f32 %v264, %v1412
  %v1414 = vpop.f32.mrf.mxu0
  %v1415 = vadd.f32 %v264, %v1414
  %1416 = vmatmul.bf16.gmra.mxu0 %v842
  %v1417 = vpop.f32.mrf.mxu0
  %v1418 = vadd.f32 %v264, %v1417
  %v1419 = vpop.f32.mrf.mxu0
  %v1420 = vadd.f32 %v264, %v1419
  %1421 = vmatmul.bf16.gmra.mxu0 %v846
  %v1422 = vpop.f32.mrf.mxu0
  %v1423 = vadd.f32 %v264, %v1422
  %v1424 = vpop.f32.mrf.mxu0
  %v1425 = vadd.f32 %v264, %v1424
  %1426 = vmatmul.bf16.gmra.mxu0 %v850
  %v1427 = vpop.f32.mrf.mxu0
  %v1428 = vadd.f32 %v264, %v1427
  %v1429 = vpop.f32.mrf.mxu0
  %v1430 = vadd.f32 %v264, %v1429
  %1431 = vmatmul.bf16.gmra.mxu0 %v854
  %v1432 = vpop.f32.mrf.mxu0
  %v1433 = vadd.f32 %v264, %v1432
  %v1434 = vpop.f32.mrf.mxu0
  %v1435 = vadd.f32 %v264, %v1434
  %1436 = vmatmul.bf16.gmra.mxu0 %v858
  %v1437 = vpop.f32.mrf.mxu0
  %v1438 = vadd.f32 %v264, %v1437
  %v1439 = vpop.f32.mrf.mxu0
  %v1440 = vadd.f32 %v264, %v1439
  %1441 = vmatmul.bf16.gmra.mxu0 %v862
  %v1442 = vpop.f32.mrf.mxu0
  %v1443 = vadd.f32 %v264, %v1442
  %v1444 = vpop.f32.mrf.mxu0
  %v1445 = vadd.f32 %v264, %v1444
  %1446 = vmatmul.bf16.gmra.mxu0 %v866
  %v1447 = vpop.f32.mrf.mxu0
  %v1448 = vadd.f32 %v264, %v1447
  %v1449 = vpop.f32.mrf.mxu0
  %v1450 = vadd.f32 %v264, %v1449
  %1451 = vmatmul.bf16.gmra.mxu0 %v870
  %v1452 = vpop.f32.mrf.mxu0
  %v1453 = vadd.f32 %v264, %v1452
  %v1454 = vpop.f32.mrf.mxu0
  %v1455 = vadd.f32 %v264, %v1454
  %1456 = vmatmul.bf16.gmra.mxu0 %v874
  %v1457 = vpop.f32.mrf.mxu0
  %v1458 = vadd.f32 %v264, %v1457
  %v1459 = vpop.f32.mrf.mxu0
  %v1460 = vadd.f32 %v264, %v1459
  %1461 = vmatmul.bf16.gmra.mxu0 %v878
  %v1462 = vpop.f32.mrf.mxu0
  %v1463 = vadd.f32 %v264, %v1462
  %v1464 = vpop.f32.mrf.mxu0
  %v1465 = vadd.f32 %v264, %v1464
  %1466 = vmatmul.bf16.gmra.mxu0 %v882
  %v1467 = vpop.f32.mrf.mxu0
  %v1468 = vadd.f32 %v264, %v1467
  %v1469 = vpop.f32.mrf.mxu0
  %v1470 = vadd.f32 %v264, %v1469
  %1471 = vmatmul.bf16.gmra.mxu0 %v886
  %v1472 = vpop.f32.mrf.mxu0
  %v1473 = vadd.f32 %v264, %v1472
  %v1474 = vpop.f32.mrf.mxu0
  %v1475 = vadd.f32 %v264, %v1474
  %1476 = vmatmul.bf16.gmra.mxu0 %v890
  %v1477 = vpop.f32.mrf.mxu0
  %v1478 = vadd.f32 %v264, %v1477
  %v1479 = vpop.f32.mrf.mxu0
  %v1480 = vadd.f32 %v264, %v1479
  %1481 = vmatmul.bf16.gmra.mxu0 %v894
  %v1482 = vpop.f32.mrf.mxu0
  %v1483 = vadd.f32 %v264, %v1482
  %v1484 = vpop.f32.mrf.mxu0
  %v1485 = vadd.f32 %v264, %v1484
  %1486 = vmatmul.bf16.gmra.mxu0 %v898
  %v1487 = vpop.f32.mrf.mxu0
  %v1488 = vadd.f32 %v264, %v1487
  %v1489 = vpop.f32.mrf.mxu0
  %v1490 = vadd.f32 %v264, %v1489
  %1491 = vmatmul.bf16.gmra.mxu0 %v902
  %v1492 = vpop.f32.mrf.mxu0
  %v1493 = vadd.f32 %v264, %v1492
  %v1494 = vpop.f32.mrf.mxu0
  %v1495 = vadd.f32 %v264, %v1494
  %1496 = vmatmul.bf16.gmra.mxu0 %v906
  %v1497 = vpop.f32.mrf.mxu0
  %v1498 = vadd.f32 %v264, %v1497
  %v1499 = vpop.f32.mrf.mxu0
  %v1500 = vadd.f32 %v264, %v1499
  %1501 = vmatmul.bf16.gmra.mxu0 %v910
  %v1502 = vpop.f32.mrf.mxu0
  %v1503 = vadd.f32 %v264, %v1502
  %v1504 = vpop.f32.mrf.mxu0
  %v1505 = vadd.f32 %v264, %v1504
  %1506 = vmatmul.bf16.gmra.mxu0 %v914
  %v1507 = vpop.f32.mrf.mxu0
  %v1508 = vadd.f32 %v264, %v1507
  %v1509 = vpop.f32.mrf.mxu0
  %v1510 = vadd.f32 %v264, %v1509
  %1511 = vmatmul.bf16.gmra.mxu0 %v918
  %v1512 = vpop.f32.mrf.mxu0
  %v1513 = vadd.f32 %v264, %v1512
  %v1514 = vpop.f32.mrf.mxu0
  %v1515 = vadd.f32 %v264, %v1514
  %1516 = vmatmul.bf16.gmra.mxu0 %v922
  %v1517 = vpop.f32.mrf.mxu0
  %v1518 = vadd.f32 %v264, %v1517
  %v1519 = vpop.f32.mrf.mxu0
  %v1520 = vadd.f32 %v264, %v1519
  %1521 = vmatmul.bf16.gmra.mxu0 %v926
  %v1522 = vpop.f32.mrf.mxu0
  %v1523 = vadd.f32 %v264, %v1522
  %v1524 = vpop.f32.mrf.mxu0
  %v1525 = vadd.f32 %v264, %v1524
  %1526 = vmatmul.bf16.gmra.mxu0 %v930
  %v1527 = vpop.f32.mrf.mxu0
  %v1528 = vadd.f32 %v264, %v1527
  %v1529 = vpop.f32.mrf.mxu0
  %v1530 = vadd.f32 %v264, %v1529
  %1531 = vmatmul.bf16.gmra.mxu0 %v934
  %v1532 = vpop.f32.mrf.mxu0
  %v1533 = vadd.f32 %v264, %v1532
  %v1534 = vpop.f32.mrf.mxu0
  %v1535 = vadd.f32 %v264, %v1534
  %1536 = vmatmul.bf16.gmra.mxu0 %v938
  %v1537 = vpop.f32.mrf.mxu0
  %v1538 = vadd.f32 %v264, %v1537
  %v1539 = vpop.f32.mrf.mxu0
  %v1540 = vadd.f32 %v264, %v1539
  %1541 = vmatmul.bf16.gmra.mxu0 %v942
  %v1542 = vpop.f32.mrf.mxu0
  %v1543 = vadd.f32 %v264, %v1542
  %v1544 = vpop.f32.mrf.mxu0
  %v1545 = vadd.f32 %v264, %v1544
  %1546 = vmatmul.bf16.gmra.mxu0 %v946
  %v1547 = vpop.f32.mrf.mxu0
  %v1548 = vadd.f32 %v264, %v1547
  %v1549 = vpop.f32.mrf.mxu0
  %v1550 = vadd.f32 %v264, %v1549
  %1551 = vmatmul.bf16.gmra.mxu0 %v950
  %v1552 = vpop.f32.mrf.mxu0
  %v1553 = vadd.f32 %v264, %v1552
  %v1554 = vpop.f32.mrf.mxu0
  %v1555 = vadd.f32 %v264, %v1554
  %1556 = vmatmul.bf16.gmra.mxu0 %v954
  %v1557 = vpop.f32.mrf.mxu0
  %v1558 = vadd.f32 %v264, %v1557
  %v1559 = vpop.f32.mrf.mxu0
  %v1560 = vadd.f32 %v264, %v1559
  %1561 = vmatmul.bf16.gmra.mxu0 %v958
  %v1562 = vpop.f32.mrf.mxu0
  %v1563 = vadd.f32 %v264, %v1562
  %v1564 = vpop.f32.mrf.mxu0
  %v1565 = vadd.f32 %v264, %v1564
  %1566 = vmatmul.bf16.gmra.mxu0 %v962
  %v1567 = vpop.f32.mrf.mxu0
  %v1568 = vadd.f32 %v264, %v1567
  %v1569 = vpop.f32.mrf.mxu0
  %v1570 = vadd.f32 %v264, %v1569
  %1571 = vmatmul.bf16.gmra.mxu0 %v966
  %v1572 = vpop.f32.mrf.mxu0
  %v1573 = vadd.f32 %v264, %v1572
  %v1574 = vpop.f32.mrf.mxu0
  %v1575 = vadd.f32 %v264, %v1574
  %1576 = vmatmul.bf16.gmra.mxu0 %v970
  %v1577 = vpop.f32.mrf.mxu0
  %v1578 = vadd.f32 %v264, %v1577
  %v1579 = vpop.f32.mrf.mxu0
  %v1580 = vadd.f32 %v264, %v1579
  %1581 = vmatmul.bf16.gmra.mxu0 %v974
  %v1582 = vpop.f32.mrf.mxu0
  %v1583 = vadd.f32 %v264, %v1582
  %v1584 = vpop.f32.mrf.mxu0
  %v1585 = vadd.f32 %v264, %v1584
  %1586 = vmatmul.bf16.gmra.mxu0 %v978
  %v1587 = vpop.f32.mrf.mxu0
  %v1588 = vadd.f32 %v264, %v1587
  %v1589 = vpop.f32.mrf.mxu0
  %v1590 = vadd.f32 %v264, %v1589
  %1591 = vmatmul.bf16.gmra.mxu0 %v982
  %v1592 = vpop.f32.mrf.mxu0
  %v1593 = vadd.f32 %v264, %v1592
  %v1594 = vpop.f32.mrf.mxu0
  %v1595 = vadd.f32 %v264, %v1594
  %1596 = vmatmul.bf16.gmra.mxu0 %v986
  %v1597 = vpop.f32.mrf.mxu0
  %v1598 = vadd.f32 %v264, %v1597
  %v1599 = vpop.f32.mrf.mxu0
  %v1600 = vadd.f32 %v264, %v1599
  %1601 = vmatmul.bf16.gmra.mxu0 %v990
  %v1602 = vpop.f32.mrf.mxu0
  %v1603 = vadd.f32 %v264, %v1602
  %v1604 = vpop.f32.mrf.mxu0
  %v1605 = vadd.f32 %v264, %v1604
  %1606 = vmatmul.bf16.gmra.mxu0 %v994
  %v1607 = vpop.f32.mrf.mxu0
  %v1608 = vadd.f32 %v264, %v1607
  %v1609 = vpop.f32.mrf.mxu0
  %v1610 = vadd.f32 %v264, %v1609
  %1611 = vmatmul.bf16.gmra.mxu0 %v998
  %v1612 = vpop.f32.mrf.mxu0
  %v1613 = vadd.f32 %v264, %v1612
  %v1614 = vpop.f32.mrf.mxu0
  %v1615 = vadd.f32 %v264, %v1614
  %1616 = vdwg.mxu0
  %1617 = vmatpush.bf16.msra.mxu0 %v1329
  %1618 = vmatpush.bf16.msra.mxu0 %v1328
  %1619 = vmatpush.bf16.msra.mxu0 %v1327
  %1620 = vmatpush.bf16.msra.mxu0 %v1326
  %1621 = vmatpush.bf16.msra.mxu0 %v1325
  %1622 = vmatpush.bf16.msra.mxu0 %v1324
  %1623 = vmatpush.bf16.msra.mxu0 %v1323
  %1624 = vmatpush.bf16.msra.mxu0 %v1322
  %1625 = vmatmul.bf16.gmra.mxu0 %v819
  %v1626 = vpop.f32.mrf.mxu0
  %v1627 = vadd.f32 %v1388, %v1626
  %v1628 = vpop.f32.mrf.mxu0
  %v1629 = vadd.f32 %v1390, %v1628
  %1630 = vmatmul.bf16.gmra.mxu0 %v823
  %v1631 = vpop.f32.mrf.mxu0
  %v1632 = vadd.f32 %v1393, %v1631
  %v1633 = vpop.f32.mrf.mxu0
  %v1634 = vadd.f32 %v1395, %v1633
  %1635 = vmatmul.bf16.gmra.mxu0 %v827
  %v1636 = vpop.f32.mrf.mxu0
  %v1637 = vadd.f32 %v1398, %v1636
  %v1638 = vpop.f32.mrf.mxu0
  %v1639 = vadd.f32 %v1400, %v1638
  %1640 = vmatmul.bf16.gmra.mxu0 %v831
  %v1641 = vpop.f32.mrf.mxu0
  %v1642 = vadd.f32 %v1403, %v1641
  %v1643 = vpop.f32.mrf.mxu0
  %v1644 = vadd.f32 %v1405, %v1643
  %1645 = vmatmul.bf16.gmra.mxu0 %v835
  %v1646 = vpop.f32.mrf.mxu0
  %v1647 = vadd.f32 %v1408, %v1646
  %v1648 = vpop.f32.mrf.mxu0
  %v1649 = vadd.f32 %v1410, %v1648
  %1650 = vmatmul.bf16.gmra.mxu0 %v839
  %v1651 = vpop.f32.mrf.mxu0
  %v1652 = vadd.f32 %v1413, %v1651
  %v1653 = vpop.f32.mrf.mxu0
  %v1654 = vadd.f32 %v1415, %v1653
  %1655 = vmatmul.bf16.gmra.mxu0 %v843
  %v1656 = vpop.f32.mrf.mxu0
  %v1657 = vadd.f32 %v1418, %v1656
  %v1658 = vpop.f32.mrf.mxu0
  %v1659 = vadd.f32 %v1420, %v1658
  %1660 = vmatmul.bf16.gmra.mxu0 %v847
  %v1661 = vpop.f32.mrf.mxu0
  %v1662 = vadd.f32 %v1423, %v1661
  %v1663 = vpop.f32.mrf.mxu0
  %v1664 = vadd.f32 %v1425, %v1663
  %1665 = vmatmul.bf16.gmra.mxu0 %v851
  %v1666 = vpop.f32.mrf.mxu0
  %v1667 = vadd.f32 %v1428, %v1666
  %v1668 = vpop.f32.mrf.mxu0
  %v1669 = vadd.f32 %v1430, %v1668
  %1670 = vmatmul.bf16.gmra.mxu0 %v855
  %v1671 = vpop.f32.mrf.mxu0
  %v1672 = vadd.f32 %v1433, %v1671
  %v1673 = vpop.f32.mrf.mxu0
  %v1674 = vadd.f32 %v1435, %v1673
  %1675 = vmatmul.bf16.gmra.mxu0 %v859
  %v1676 = vpop.f32.mrf.mxu0
  %v1677 = vadd.f32 %v1438, %v1676
  %v1678 = vpop.f32.mrf.mxu0
  %v1679 = vadd.f32 %v1440, %v1678
  %1680 = vmatmul.bf16.gmra.mxu0 %v863
  %v1681 = vpop.f32.mrf.mxu0
  %v1682 = vadd.f32 %v1443, %v1681
  %v1683 = vpop.f32.mrf.mxu0
  %v1684 = vadd.f32 %v1445, %v1683
  %1685 = vmatmul.bf16.gmra.mxu0 %v867
  %v1686 = vpop.f32.mrf.mxu0
  %v1687 = vadd.f32 %v1448, %v1686
  %v1688 = vpop.f32.mrf.mxu0
  %v1689 = vadd.f32 %v1450, %v1688
  %1690 = vmatmul.bf16.gmra.mxu0 %v871
  %v1691 = vpop.f32.mrf.mxu0
  %v1692 = vadd.f32 %v1453, %v1691
  %v1693 = vpop.f32.mrf.mxu0
  %v1694 = vadd.f32 %v1455, %v1693
  %1695 = vmatmul.bf16.gmra.mxu0 %v875
  %v1696 = vpop.f32.mrf.mxu0
  %v1697 = vadd.f32 %v1458, %v1696
  %v1698 = vpop.f32.mrf.mxu0
  %v1699 = vadd.f32 %v1460, %v1698
  %1700 = vmatmul.bf16.gmra.mxu0 %v879
  %v1701 = vpop.f32.mrf.mxu0
  %v1702 = vadd.f32 %v1463, %v1701
  %v1703 = vpop.f32.mrf.mxu0
  %v1704 = vadd.f32 %v1465, %v1703
  %1705 = vmatmul.bf16.gmra.mxu0 %v883
  %v1706 = vpop.f32.mrf.mxu0
  %v1707 = vadd.f32 %v1468, %v1706
  %v1708 = vpop.f32.mrf.mxu0
  %v1709 = vadd.f32 %v1470, %v1708
  %1710 = vmatmul.bf16.gmra.mxu0 %v887
  %v1711 = vpop.f32.mrf.mxu0
  %v1712 = vadd.f32 %v1473, %v1711
  %v1713 = vpop.f32.mrf.mxu0
  %v1714 = vadd.f32 %v1475, %v1713
  %1715 = vmatmul.bf16.gmra.mxu0 %v891
  %v1716 = vpop.f32.mrf.mxu0
  %v1717 = vadd.f32 %v1478, %v1716
  %v1718 = vpop.f32.mrf.mxu0
  %v1719 = vadd.f32 %v1480, %v1718
  %1720 = vmatmul.bf16.gmra.mxu0 %v895
  %v1721 = vpop.f32.mrf.mxu0
  %v1722 = vadd.f32 %v1483, %v1721
  %v1723 = vpop.f32.mrf.mxu0
  %v1724 = vadd.f32 %v1485, %v1723
  %1725 = vmatmul.bf16.gmra.mxu0 %v899
  %v1726 = vpop.f32.mrf.mxu0
  %v1727 = vadd.f32 %v1488, %v1726
  %v1728 = vpop.f32.mrf.mxu0
  %v1729 = vadd.f32 %v1490, %v1728
  %1730 = vmatmul.bf16.gmra.mxu0 %v903
  %v1731 = vpop.f32.mrf.mxu0
  %v1732 = vadd.f32 %v1493, %v1731
  %v1733 = vpop.f32.mrf.mxu0
  %v1734 = vadd.f32 %v1495, %v1733
  %1735 = vmatmul.bf16.gmra.mxu0 %v907
  %v1736 = vpop.f32.mrf.mxu0
  %v1737 = vadd.f32 %v1498, %v1736
  %v1738 = vpop.f32.mrf.mxu0
  %v1739 = vadd.f32 %v1500, %v1738
  %1740 = vmatmul.bf16.gmra.mxu0 %v911
  %v1741 = vpop.f32.mrf.mxu0
  %v1742 = vadd.f32 %v1503, %v1741
  %v1743 = vpop.f32.mrf.mxu0
  %v1744 = vadd.f32 %v1505, %v1743
  %1745 = vmatmul.bf16.gmra.mxu0 %v915
  %v1746 = vpop.f32.mrf.mxu0
  %v1747 = vadd.f32 %v1508, %v1746
  %v1748 = vpop.f32.mrf.mxu0
  %v1749 = vadd.f32 %v1510, %v1748
  %1750 = vmatmul.bf16.gmra.mxu0 %v919
  %v1751 = vpop.f32.mrf.mxu0
  %v1752 = vadd.f32 %v1513, %v1751
  %v1753 = vpop.f32.mrf.mxu0
  %v1754 = vadd.f32 %v1515, %v1753
  %1755 = vmatmul.bf16.gmra.mxu0 %v923
  %v1756 = vpop.f32.mrf.mxu0
  %v1757 = vadd.f32 %v1518, %v1756
  %v1758 = vpop.f32.mrf.mxu0
  %v1759 = vadd.f32 %v1520, %v1758
  %1760 = vmatmul.bf16.gmra.mxu0 %v927
  %v1761 = vpop.f32.mrf.mxu0
  %v1762 = vadd.f32 %v1523, %v1761
  %v1763 = vpop.f32.mrf.mxu0
  %v1764 = vadd.f32 %v1525, %v1763
  %1765 = vmatmul.bf16.gmra.mxu0 %v931
  %v1766 = vpop.f32.mrf.mxu0
  %v1767 = vadd.f32 %v1528, %v1766
  %v1768 = vpop.f32.mrf.mxu0
  %v1769 = vadd.f32 %v1530, %v1768
  %1770 = vmatmul.bf16.gmra.mxu0 %v935
  %v1771 = vpop.f32.mrf.mxu0
  %v1772 = vadd.f32 %v1533, %v1771
  %v1773 = vpop.f32.mrf.mxu0
  %v1774 = vadd.f32 %v1535, %v1773
  %1775 = vmatmul.bf16.gmra.mxu0 %v939
  %v1776 = vpop.f32.mrf.mxu0
  %v1777 = vadd.f32 %v1538, %v1776
  %v1778 = vpop.f32.mrf.mxu0
  %v1779 = vadd.f32 %v1540, %v1778
  %1780 = vmatmul.bf16.gmra.mxu0 %v943
  %v1781 = vpop.f32.mrf.mxu0
  %v1782 = vadd.f32 %v1543, %v1781
  %v1783 = vpop.f32.mrf.mxu0
  %v1784 = vadd.f32 %v1545, %v1783
  %1785 = vmatmul.bf16.gmra.mxu0 %v947
  %v1786 = vpop.f32.mrf.mxu0
  %v1787 = vadd.f32 %v1548, %v1786
  %v1788 = vpop.f32.mrf.mxu0
  %v1789 = vadd.f32 %v1550, %v1788
  %1790 = vmatmul.bf16.gmra.mxu0 %v951
  %v1791 = vpop.f32.mrf.mxu0
  %v1792 = vadd.f32 %v1553, %v1791
  %v1793 = vpop.f32.mrf.mxu0
  %v1794 = vadd.f32 %v1555, %v1793
  %1795 = vmatmul.bf16.gmra.mxu0 %v955
  %v1796 = vpop.f32.mrf.mxu0
  %v1797 = vadd.f32 %v1558, %v1796
  %v1798 = vpop.f32.mrf.mxu0
  %v1799 = vadd.f32 %v1560, %v1798
  %1800 = vmatmul.bf16.gmra.mxu0 %v959
  %v1801 = vpop.f32.mrf.mxu0
  %v1802 = vadd.f32 %v1563, %v1801
  %v1803 = vpop.f32.mrf.mxu0
  %v1804 = vadd.f32 %v1565, %v1803
  %1805 = vmatmul.bf16.gmra.mxu0 %v963
  %v1806 = vpop.f32.mrf.mxu0
  %v1807 = vadd.f32 %v1568, %v1806
  %v1808 = vpop.f32.mrf.mxu0
  %v1809 = vadd.f32 %v1570, %v1808
  %1810 = vmatmul.bf16.gmra.mxu0 %v967
  %v1811 = vpop.f32.mrf.mxu0
  %v1812 = vadd.f32 %v1573, %v1811
  %v1813 = vpop.f32.mrf.mxu0
  %v1814 = vadd.f32 %v1575, %v1813
  %1815 = vmatmul.bf16.gmra.mxu0 %v971
  %v1816 = vpop.f32.mrf.mxu0
  %v1817 = vadd.f32 %v1578, %v1816
  %v1818 = vpop.f32.mrf.mxu0
  %v1819 = vadd.f32 %v1580, %v1818
  %1820 = vmatmul.bf16.gmra.mxu0 %v975
  %v1821 = vpop.f32.mrf.mxu0
  %v1822 = vadd.f32 %v1583, %v1821
  %v1823 = vpop.f32.mrf.mxu0
  %v1824 = vadd.f32 %v1585, %v1823
  %1825 = vmatmul.bf16.gmra.mxu0 %v979
  %v1826 = vpop.f32.mrf.mxu0
  %v1827 = vadd.f32 %v1588, %v1826
  %v1828 = vpop.f32.mrf.mxu0
  %v1829 = vadd.f32 %v1590, %v1828
  %1830 = vmatmul.bf16.gmra.mxu0 %v983
  %v1831 = vpop.f32.mrf.mxu0
  %v1832 = vadd.f32 %v1593, %v1831
  %v1833 = vpop.f32.mrf.mxu0
  %v1834 = vadd.f32 %v1595, %v1833
  %1835 = vmatmul.bf16.gmra.mxu0 %v987
  %v1836 = vpop.f32.mrf.mxu0
  %v1837 = vadd.f32 %v1598, %v1836
  %v1838 = vpop.f32.mrf.mxu0
  %v1839 = vadd.f32 %v1600, %v1838
  %1840 = vmatmul.bf16.gmra.mxu0 %v991
  %v1841 = vpop.f32.mrf.mxu0
  %v1842 = vadd.f32 %v1603, %v1841
  %v1843 = vpop.f32.mrf.mxu0
  %v1844 = vadd.f32 %v1605, %v1843
  %1845 = vmatmul.bf16.gmra.mxu0 %v995
  %v1846 = vpop.f32.mrf.mxu0
  %v1847 = vadd.f32 %v1608, %v1846
  %v1848 = vpop.f32.mrf.mxu0
  %v1849 = vadd.f32 %v1610, %v1848
  %1850 = vmatmul.bf16.gmra.mxu0 %v999
  %v1851 = vpop.f32.mrf.mxu0
  %v1852 = vadd.f32 %v1613, %v1851
  %v1853 = vpop.f32.mrf.mxu0
  %v1854 = vadd.f32 %v1615, %v1853
  %1855 = vdwg.mxu0
  %1856 = vmatpush.bf16.msra.mxu0 %v1337
  %1857 = vmatpush.bf16.msra.mxu0 %v1336
  %1858 = vmatpush.bf16.msra.mxu0 %v1335
  %1859 = vmatpush.bf16.msra.mxu0 %v1334
  %1860 = vmatpush.bf16.msra.mxu0 %v1333
  %1861 = vmatpush.bf16.msra.mxu0 %v1332
  %1862 = vmatpush.bf16.msra.mxu0 %v1331
  %1863 = vmatpush.bf16.msra.mxu0 %v1330
  %1864 = vmatmul.bf16.gmra.mxu0 %v820
  %v1865 = vpop.f32.mrf.mxu0
  %v1866 = vadd.f32 %v1627, %v1865
  %v1867 = vpop.f32.mrf.mxu0
  %v1868 = vadd.f32 %v1629, %v1867
  %1869 = vmatmul.bf16.gmra.mxu0 %v824
  %v1870 = vpop.f32.mrf.mxu0
  %v1871 = vadd.f32 %v1632, %v1870
  %v1872 = vpop.f32.mrf.mxu0
  %v1873 = vadd.f32 %v1634, %v1872
  %1874 = vmatmul.bf16.gmra.mxu0 %v828
  %v1875 = vpop.f32.mrf.mxu0
  %v1876 = vadd.f32 %v1637, %v1875
  %v1877 = vpop.f32.mrf.mxu0
  %v1878 = vadd.f32 %v1639, %v1877
  %1879 = vmatmul.bf16.gmra.mxu0 %v832
  %v1880 = vpop.f32.mrf.mxu0
  %v1881 = vadd.f32 %v1642, %v1880
  %v1882 = vpop.f32.mrf.mxu0
  %v1883 = vadd.f32 %v1644, %v1882
  %1884 = vmatmul.bf16.gmra.mxu0 %v836
  %v1885 = vpop.f32.mrf.mxu0
  %v1886 = vadd.f32 %v1647, %v1885
  %v1887 = vpop.f32.mrf.mxu0
  %v1888 = vadd.f32 %v1649, %v1887
  %1889 = vmatmul.bf16.gmra.mxu0 %v840
  %v1890 = vpop.f32.mrf.mxu0
  %v1891 = vadd.f32 %v1652, %v1890
  %v1892 = vpop.f32.mrf.mxu0
  %v1893 = vadd.f32 %v1654, %v1892
  %1894 = vmatmul.bf16.gmra.mxu0 %v844
  %v1895 = vpop.f32.mrf.mxu0
  %v1896 = vadd.f32 %v1657, %v1895
  %v1897 = vpop.f32.mrf.mxu0
  %v1898 = vadd.f32 %v1659, %v1897
  %1899 = vmatmul.bf16.gmra.mxu0 %v848
  %v1900 = vpop.f32.mrf.mxu0
  %v1901 = vadd.f32 %v1662, %v1900
  %v1902 = vpop.f32.mrf.mxu0
  %v1903 = vadd.f32 %v1664, %v1902
  %1904 = vmatmul.bf16.gmra.mxu0 %v852
  %v1905 = vpop.f32.mrf.mxu0
  %v1906 = vadd.f32 %v1667, %v1905
  %v1907 = vpop.f32.mrf.mxu0
  %v1908 = vadd.f32 %v1669, %v1907
  %1909 = vmatmul.bf16.gmra.mxu0 %v856
  %v1910 = vpop.f32.mrf.mxu0
  %v1911 = vadd.f32 %v1672, %v1910
  %v1912 = vpop.f32.mrf.mxu0
  %v1913 = vadd.f32 %v1674, %v1912
  %1914 = vmatmul.bf16.gmra.mxu0 %v860
  %v1915 = vpop.f32.mrf.mxu0
  %v1916 = vadd.f32 %v1677, %v1915
  %v1917 = vpop.f32.mrf.mxu0
  %v1918 = vadd.f32 %v1679, %v1917
  %1919 = vmatmul.bf16.gmra.mxu0 %v864
  %v1920 = vpop.f32.mrf.mxu0
  %v1921 = vadd.f32 %v1682, %v1920
  %v1922 = vpop.f32.mrf.mxu0
  %v1923 = vadd.f32 %v1684, %v1922
  %1924 = vmatmul.bf16.gmra.mxu0 %v868
  %v1925 = vpop.f32.mrf.mxu0
  %v1926 = vadd.f32 %v1687, %v1925
  %v1927 = vpop.f32.mrf.mxu0
  %v1928 = vadd.f32 %v1689, %v1927
  %1929 = vmatmul.bf16.gmra.mxu0 %v872
  %v1930 = vpop.f32.mrf.mxu0
  %v1931 = vadd.f32 %v1692, %v1930
  %v1932 = vpop.f32.mrf.mxu0
  %v1933 = vadd.f32 %v1694, %v1932
  %1934 = vmatmul.bf16.gmra.mxu0 %v876
  %v1935 = vpop.f32.mrf.mxu0
  %v1936 = vadd.f32 %v1697, %v1935
  %v1937 = vpop.f32.mrf.mxu0
  %v1938 = vadd.f32 %v1699, %v1937
  %1939 = vmatmul.bf16.gmra.mxu0 %v880
  %v1940 = vpop.f32.mrf.mxu0
  %v1941 = vadd.f32 %v1702, %v1940
  %v1942 = vpop.f32.mrf.mxu0
  %v1943 = vadd.f32 %v1704, %v1942
  %1944 = vmatmul.bf16.gmra.mxu0 %v884
  %v1945 = vpop.f32.mrf.mxu0
  %v1946 = vadd.f32 %v1707, %v1945
  %v1947 = vpop.f32.mrf.mxu0
  %v1948 = vadd.f32 %v1709, %v1947
  %1949 = vmatmul.bf16.gmra.mxu0 %v888
  %v1950 = vpop.f32.mrf.mxu0
  %v1951 = vadd.f32 %v1712, %v1950
  %v1952 = vpop.f32.mrf.mxu0
  %v1953 = vadd.f32 %v1714, %v1952
  %1954 = vmatmul.bf16.gmra.mxu0 %v892
  %v1955 = vpop.f32.mrf.mxu0
  %v1956 = vadd.f32 %v1717, %v1955
  %v1957 = vpop.f32.mrf.mxu0
  %v1958 = vadd.f32 %v1719, %v1957
  %1959 = vmatmul.bf16.gmra.mxu0 %v896
  %v1960 = vpop.f32.mrf.mxu0
  %v1961 = vadd.f32 %v1722, %v1960
  %v1962 = vpop.f32.mrf.mxu0
  %v1963 = vadd.f32 %v1724, %v1962
  %1964 = vmatmul.bf16.gmra.mxu0 %v900
  %v1965 = vpop.f32.mrf.mxu0
  %v1966 = vadd.f32 %v1727, %v1965
  %v1967 = vpop.f32.mrf.mxu0
  %v1968 = vadd.f32 %v1729, %v1967
  %1969 = vmatmul.bf16.gmra.mxu0 %v904
  %v1970 = vpop.f32.mrf.mxu0
  %v1971 = vadd.f32 %v1732, %v1970
  %v1972 = vpop.f32.mrf.mxu0
  %v1973 = vadd.f32 %v1734, %v1972
  %1974 = vmatmul.bf16.gmra.mxu0 %v908
  %v1975 = vpop.f32.mrf.mxu0
  %v1976 = vadd.f32 %v1737, %v1975
  %v1977 = vpop.f32.mrf.mxu0
  %v1978 = vadd.f32 %v1739, %v1977
  %1979 = vmatmul.bf16.gmra.mxu0 %v912
  %v1980 = vpop.f32.mrf.mxu0
  %v1981 = vadd.f32 %v1742, %v1980
  %v1982 = vpop.f32.mrf.mxu0
  %v1983 = vadd.f32 %v1744, %v1982
  %1984 = vmatmul.bf16.gmra.mxu0 %v916
  %v1985 = vpop.f32.mrf.mxu0
  %v1986 = vadd.f32 %v1747, %v1985
  %v1987 = vpop.f32.mrf.mxu0
  %v1988 = vadd.f32 %v1749, %v1987
  %1989 = vmatmul.bf16.gmra.mxu0 %v920
  %v1990 = vpop.f32.mrf.mxu0
  %v1991 = vadd.f32 %v1752, %v1990
  %v1992 = vpop.f32.mrf.mxu0
  %v1993 = vadd.f32 %v1754, %v1992
  %1994 = vmatmul.bf16.gmra.mxu0 %v924
  %v1995 = vpop.f32.mrf.mxu0
  %v1996 = vadd.f32 %v1757, %v1995
  %v1997 = vpop.f32.mrf.mxu0
  %v1998 = vadd.f32 %v1759, %v1997
  %1999 = vmatmul.bf16.gmra.mxu0 %v928
  %v2000 = vpop.f32.mrf.mxu0
  %v2001 = vadd.f32 %v1762, %v2000
  %v2002 = vpop.f32.mrf.mxu0
  %v2003 = vadd.f32 %v1764, %v2002
  %2004 = vmatmul.bf16.gmra.mxu0 %v932
  %v2005 = vpop.f32.mrf.mxu0
  %v2006 = vadd.f32 %v1767, %v2005
  %v2007 = vpop.f32.mrf.mxu0
  %v2008 = vadd.f32 %v1769, %v2007
  %2009 = vmatmul.bf16.gmra.mxu0 %v936
  %v2010 = vpop.f32.mrf.mxu0
  %v2011 = vadd.f32 %v1772, %v2010
  %v2012 = vpop.f32.mrf.mxu0
  %v2013 = vadd.f32 %v1774, %v2012
  %2014 = vmatmul.bf16.gmra.mxu0 %v940
  %v2015 = vpop.f32.mrf.mxu0
  %v2016 = vadd.f32 %v1777, %v2015
  %v2017 = vpop.f32.mrf.mxu0
  %v2018 = vadd.f32 %v1779, %v2017
  %2019 = vmatmul.bf16.gmra.mxu0 %v944
  %v2020 = vpop.f32.mrf.mxu0
  %v2021 = vadd.f32 %v1782, %v2020
  %v2022 = vpop.f32.mrf.mxu0
  %v2023 = vadd.f32 %v1784, %v2022
  %2024 = vmatmul.bf16.gmra.mxu0 %v948
  %v2025 = vpop.f32.mrf.mxu0
  %v2026 = vadd.f32 %v1787, %v2025
  %v2027 = vpop.f32.mrf.mxu0
  %v2028 = vadd.f32 %v1789, %v2027
  %2029 = vmatmul.bf16.gmra.mxu0 %v952
  %v2030 = vpop.f32.mrf.mxu0
  %v2031 = vadd.f32 %v1792, %v2030
  %v2032 = vpop.f32.mrf.mxu0
  %v2033 = vadd.f32 %v1794, %v2032
  %2034 = vmatmul.bf16.gmra.mxu0 %v956
  %v2035 = vpop.f32.mrf.mxu0
  %v2036 = vadd.f32 %v1797, %v2035
  %v2037 = vpop.f32.mrf.mxu0
  %v2038 = vadd.f32 %v1799, %v2037
  %2039 = vmatmul.bf16.gmra.mxu0 %v960
  %v2040 = vpop.f32.mrf.mxu0
  %v2041 = vadd.f32 %v1802, %v2040
  %v2042 = vpop.f32.mrf.mxu0
  %v2043 = vadd.f32 %v1804, %v2042
  %2044 = vmatmul.bf16.gmra.mxu0 %v964
  %v2045 = vpop.f32.mrf.mxu0
  %v2046 = vadd.f32 %v1807, %v2045
  %v2047 = vpop.f32.mrf.mxu0
  %v2048 = vadd.f32 %v1809, %v2047
  %2049 = vmatmul.bf16.gmra.mxu0 %v968
  %v2050 = vpop.f32.mrf.mxu0
  %v2051 = vadd.f32 %v1812, %v2050
  %v2052 = vpop.f32.mrf.mxu0
  %v2053 = vadd.f32 %v1814, %v2052
  %2054 = vmatmul.bf16.gmra.mxu0 %v972
  %v2055 = vpop.f32.mrf.mxu0
  %v2056 = vadd.f32 %v1817, %v2055
  %v2057 = vpop.f32.mrf.mxu0
  %v2058 = vadd.f32 %v1819, %v2057
  %2059 = vmatmul.bf16.gmra.mxu0 %v976
  %v2060 = vpop.f32.mrf.mxu0
  %v2061 = vadd.f32 %v1822, %v2060
  %v2062 = vpop.f32.mrf.mxu0
  %v2063 = vadd.f32 %v1824, %v2062
  %2064 = vmatmul.bf16.gmra.mxu0 %v980
  %v2065 = vpop.f32.mrf.mxu0
  %v2066 = vadd.f32 %v1827, %v2065
  %v2067 = vpop.f32.mrf.mxu0
  %v2068 = vadd.f32 %v1829, %v2067
  %2069 = vmatmul.bf16.gmra.mxu0 %v984
  %v2070 = vpop.f32.mrf.mxu0
  %v2071 = vadd.f32 %v1832, %v2070
  %v2072 = vpop.f32.mrf.mxu0
  %v2073 = vadd.f32 %v1834, %v2072
  %2074 = vmatmul.bf16.gmra.mxu0 %v988
  %v2075 = vpop.f32.mrf.mxu0
  %v2076 = vadd.f32 %v1837, %v2075
  %v2077 = vpop.f32.mrf.mxu0
  %v2078 = vadd.f32 %v1839, %v2077
  %2079 = vmatmul.bf16.gmra.mxu0 %v992
  %v2080 = vpop.f32.mrf.mxu0
  %v2081 = vadd.f32 %v1842, %v2080
  %v2082 = vpop.f32.mrf.mxu0
  %v2083 = vadd.f32 %v1844, %v2082
  %2084 = vmatmul.bf16.gmra.mxu0 %v996
  %v2085 = vpop.f32.mrf.mxu0
  %v2086 = vadd.f32 %v1847, %v2085
  %v2087 = vpop.f32.mrf.mxu0
  %v2088 = vadd.f32 %v1849, %v2087
  %2089 = vmatmul.bf16.gmra.mxu0 %v1000
  %v2090 = vpop.f32.mrf.mxu0
  %v2091 = vadd.f32 %v1852, %v2090
  %v2092 = vpop.f32.mrf.mxu0
  %v2093 = vadd.f32 %v1854, %v2092
  %2094 = vdwg.mxu0
  %2095 = vmatpush.bf16.msra.mxu0 %v1345
  %2096 = vmatpush.bf16.msra.mxu0 %v1344
  %2097 = vmatpush.bf16.msra.mxu0 %v1343
  %2098 = vmatpush.bf16.msra.mxu0 %v1342
  %2099 = vmatpush.bf16.msra.mxu0 %v1341
  %2100 = vmatpush.bf16.msra.mxu0 %v1340
  %2101 = vmatpush.bf16.msra.mxu0 %v1339
  %2102 = vmatpush.bf16.msra.mxu0 %v1338
  %2103 = vmatmul.bf16.gmra.mxu0 %v821
  %v2104 = vpop.f32.mrf.mxu0
  %v2105 = vadd.f32 %v1866, %v2104
  %v2106 = vpop.f32.mrf.mxu0
  %v2107 = vadd.f32 %v1868, %v2106
  %2108 = vmatmul.bf16.gmra.mxu0 %v825
  %v2109 = vpop.f32.mrf.mxu0
  %v2110 = vadd.f32 %v1871, %v2109
  %v2111 = vpop.f32.mrf.mxu0
  %v2112 = vadd.f32 %v1873, %v2111
  %2113 = vmatmul.bf16.gmra.mxu0 %v829
  %v2114 = vpop.f32.mrf.mxu0
  %v2115 = vadd.f32 %v1876, %v2114
  %v2116 = vpop.f32.mrf.mxu0
  %v2117 = vadd.f32 %v1878, %v2116
  %2118 = vmatmul.bf16.gmra.mxu0 %v833
  %v2119 = vpop.f32.mrf.mxu0
  %v2120 = vadd.f32 %v1881, %v2119
  %v2121 = vpop.f32.mrf.mxu0
  %v2122 = vadd.f32 %v1883, %v2121
  %2123 = vmatmul.bf16.gmra.mxu0 %v837
  %v2124 = vpop.f32.mrf.mxu0
  %v2125 = vadd.f32 %v1886, %v2124
  %v2126 = vpop.f32.mrf.mxu0
  %v2127 = vadd.f32 %v1888, %v2126
  %2128 = vmatmul.bf16.gmra.mxu0 %v841
  %v2129 = vpop.f32.mrf.mxu0
  %v2130 = vadd.f32 %v1891, %v2129
  %v2131 = vpop.f32.mrf.mxu0
  %v2132 = vadd.f32 %v1893, %v2131
  %2133 = vmatmul.bf16.gmra.mxu0 %v845
  %v2134 = vpop.f32.mrf.mxu0
  %v2135 = vadd.f32 %v1896, %v2134
  %v2136 = vpop.f32.mrf.mxu0
  %v2137 = vadd.f32 %v1898, %v2136
  %2138 = vmatmul.bf16.gmra.mxu0 %v849
  %v2139 = vpop.f32.mrf.mxu0
  %v2140 = vadd.f32 %v1901, %v2139
  %v2141 = vpop.f32.mrf.mxu0
  %v2142 = vadd.f32 %v1903, %v2141
  %2143 = vmatmul.bf16.gmra.mxu0 %v853
  %v2144 = vpop.f32.mrf.mxu0
  %v2145 = vadd.f32 %v1906, %v2144
  %v2146 = vpop.f32.mrf.mxu0
  %v2147 = vadd.f32 %v1908, %v2146
  %2148 = vmatmul.bf16.gmra.mxu0 %v857
  %v2149 = vpop.f32.mrf.mxu0
  %v2150 = vadd.f32 %v1911, %v2149
  %v2151 = vpop.f32.mrf.mxu0
  %v2152 = vadd.f32 %v1913, %v2151
  %2153 = vmatmul.bf16.gmra.mxu0 %v861
  %v2154 = vpop.f32.mrf.mxu0
  %v2155 = vadd.f32 %v1916, %v2154
  %v2156 = vpop.f32.mrf.mxu0
  %v2157 = vadd.f32 %v1918, %v2156
  %2158 = vmatmul.bf16.gmra.mxu0 %v865
  %v2159 = vpop.f32.mrf.mxu0
  %v2160 = vadd.f32 %v1921, %v2159
  %v2161 = vpop.f32.mrf.mxu0
  %v2162 = vadd.f32 %v1923, %v2161
  %2163 = vmatmul.bf16.gmra.mxu0 %v869
  %v2164 = vpop.f32.mrf.mxu0
  %v2165 = vadd.f32 %v1926, %v2164
  %v2166 = vpop.f32.mrf.mxu0
  %v2167 = vadd.f32 %v1928, %v2166
  %2168 = vmatmul.bf16.gmra.mxu0 %v873
  %v2169 = vpop.f32.mrf.mxu0
  %v2170 = vadd.f32 %v1931, %v2169
  %v2171 = vpop.f32.mrf.mxu0
  %v2172 = vadd.f32 %v1933, %v2171
  %2173 = vmatmul.bf16.gmra.mxu0 %v877
  %v2174 = vpop.f32.mrf.mxu0
  %v2175 = vadd.f32 %v1936, %v2174
  %v2176 = vpop.f32.mrf.mxu0
  %v2177 = vadd.f32 %v1938, %v2176
  %2178 = vmatmul.bf16.gmra.mxu0 %v881
  %v2179 = vpop.f32.mrf.mxu0
  %v2180 = vadd.f32 %v1941, %v2179
  %v2181 = vpop.f32.mrf.mxu0
  %v2182 = vadd.f32 %v1943, %v2181
  %2183 = vmatmul.bf16.gmra.mxu0 %v885
  %v2184 = vpop.f32.mrf.mxu0
  %v2185 = vadd.f32 %v1946, %v2184
  %v2186 = vpop.f32.mrf.mxu0
  %v2187 = vadd.f32 %v1948, %v2186
  %2188 = vmatmul.bf16.gmra.mxu0 %v889
  %v2189 = vpop.f32.mrf.mxu0
  %v2190 = vadd.f32 %v1951, %v2189
  %v2191 = vpop.f32.mrf.mxu0
  %v2192 = vadd.f32 %v1953, %v2191
  %2193 = vmatmul.bf16.gmra.mxu0 %v893
  %v2194 = vpop.f32.mrf.mxu0
  %v2195 = vadd.f32 %v1956, %v2194
  %v2196 = vpop.f32.mrf.mxu0
  %v2197 = vadd.f32 %v1958, %v2196
  %2198 = vmatmul.bf16.gmra.mxu0 %v897
  %v2199 = vpop.f32.mrf.mxu0
  %v2200 = vadd.f32 %v1961, %v2199
  %v2201 = vpop.f32.mrf.mxu0
  %v2202 = vadd.f32 %v1963, %v2201
  %2203 = vmatmul.bf16.gmra.mxu0 %v901
  %v2204 = vpop.f32.mrf.mxu0
  %v2205 = vadd.f32 %v1966, %v2204
  %v2206 = vpop.f32.mrf.mxu0
  %v2207 = vadd.f32 %v1968, %v2206
  %2208 = vmatmul.bf16.gmra.mxu0 %v905
  %v2209 = vpop.f32.mrf.mxu0
  %v2210 = vadd.f32 %v1971, %v2209
  %v2211 = vpop.f32.mrf.mxu0
  %v2212 = vadd.f32 %v1973, %v2211
  %2213 = vmatmul.bf16.gmra.mxu0 %v909
  %v2214 = vpop.f32.mrf.mxu0
  %v2215 = vadd.f32 %v1976, %v2214
  %v2216 = vpop.f32.mrf.mxu0
  %v2217 = vadd.f32 %v1978, %v2216
  %2218 = vmatmul.bf16.gmra.mxu0 %v913
  %v2219 = vpop.f32.mrf.mxu0
  %v2220 = vadd.f32 %v1981, %v2219
  %v2221 = vpop.f32.mrf.mxu0
  %v2222 = vadd.f32 %v1983, %v2221
  %2223 = vmatmul.bf16.gmra.mxu0 %v917
  %v2224 = vpop.f32.mrf.mxu0
  %v2225 = vadd.f32 %v1986, %v2224
  %v2226 = vpop.f32.mrf.mxu0
  %v2227 = vadd.f32 %v1988, %v2226
  %2228 = vmatmul.bf16.gmra.mxu0 %v921
  %v2229 = vpop.f32.mrf.mxu0
  %v2230 = vadd.f32 %v1991, %v2229
  %v2231 = vpop.f32.mrf.mxu0
  %v2232 = vadd.f32 %v1993, %v2231
  %2233 = vmatmul.bf16.gmra.mxu0 %v925
  %v2234 = vpop.f32.mrf.mxu0
  %v2235 = vadd.f32 %v1996, %v2234
  %v2236 = vpop.f32.mrf.mxu0
  %v2237 = vadd.f32 %v1998, %v2236
  %2238 = vmatmul.bf16.gmra.mxu0 %v929
  %v2239 = vpop.f32.mrf.mxu0
  %v2240 = vadd.f32 %v2001, %v2239
  %v2241 = vpop.f32.mrf.mxu0
  %v2242 = vadd.f32 %v2003, %v2241
  %2243 = vmatmul.bf16.gmra.mxu0 %v933
  %v2244 = vpop.f32.mrf.mxu0
  %v2245 = vadd.f32 %v2006, %v2244
  %v2246 = vpop.f32.mrf.mxu0
  %v2247 = vadd.f32 %v2008, %v2246
  %2248 = vmatmul.bf16.gmra.mxu0 %v937
  %v2249 = vpop.f32.mrf.mxu0
  %v2250 = vadd.f32 %v2011, %v2249
  %v2251 = vpop.f32.mrf.mxu0
  %v2252 = vadd.f32 %v2013, %v2251
  %2253 = vmatmul.bf16.gmra.mxu0 %v941
  %v2254 = vpop.f32.mrf.mxu0
  %v2255 = vadd.f32 %v2016, %v2254
  %v2256 = vpop.f32.mrf.mxu0
  %v2257 = vadd.f32 %v2018, %v2256
  %2258 = vmatmul.bf16.gmra.mxu0 %v945
  %v2259 = vpop.f32.mrf.mxu0
  %v2260 = vadd.f32 %v2021, %v2259
  %v2261 = vpop.f32.mrf.mxu0
  %v2262 = vadd.f32 %v2023, %v2261
  %2263 = vmatmul.bf16.gmra.mxu0 %v949
  %v2264 = vpop.f32.mrf.mxu0
  %v2265 = vadd.f32 %v2026, %v2264
  %v2266 = vpop.f32.mrf.mxu0
  %v2267 = vadd.f32 %v2028, %v2266
  %2268 = vmatmul.bf16.gmra.mxu0 %v953
  %v2269 = vpop.f32.mrf.mxu0
  %v2270 = vadd.f32 %v2031, %v2269
  %v2271 = vpop.f32.mrf.mxu0
  %v2272 = vadd.f32 %v2033, %v2271
  %2273 = vmatmul.bf16.gmra.mxu0 %v957
  %v2274 = vpop.f32.mrf.mxu0
  %v2275 = vadd.f32 %v2036, %v2274
  %v2276 = vpop.f32.mrf.mxu0
  %v2277 = vadd.f32 %v2038, %v2276
  %2278 = vmatmul.bf16.gmra.mxu0 %v961
  %v2279 = vpop.f32.mrf.mxu0
  %v2280 = vadd.f32 %v2041, %v2279
  %v2281 = vpop.f32.mrf.mxu0
  %v2282 = vadd.f32 %v2043, %v2281
  %2283 = vmatmul.bf16.gmra.mxu0 %v965
  %v2284 = vpop.f32.mrf.mxu0
  %v2285 = vadd.f32 %v2046, %v2284
  %v2286 = vpop.f32.mrf.mxu0
  %v2287 = vadd.f32 %v2048, %v2286
  %2288 = vmatmul.bf16.gmra.mxu0 %v969
  %v2289 = vpop.f32.mrf.mxu0
  %v2290 = vadd.f32 %v2051, %v2289
  %v2291 = vpop.f32.mrf.mxu0
  %v2292 = vadd.f32 %v2053, %v2291
  %2293 = vmatmul.bf16.gmra.mxu0 %v973
  %v2294 = vpop.f32.mrf.mxu0
  %v2295 = vadd.f32 %v2056, %v2294
  %v2296 = vpop.f32.mrf.mxu0
  %v2297 = vadd.f32 %v2058, %v2296
  %2298 = vmatmul.bf16.gmra.mxu0 %v977
  %v2299 = vpop.f32.mrf.mxu0
  %v2300 = vadd.f32 %v2061, %v2299
  %v2301 = vpop.f32.mrf.mxu0
  %v2302 = vadd.f32 %v2063, %v2301
  %2303 = vmatmul.bf16.gmra.mxu0 %v981
  %v2304 = vpop.f32.mrf.mxu0
  %v2305 = vadd.f32 %v2066, %v2304
  %v2306 = vpop.f32.mrf.mxu0
  %v2307 = vadd.f32 %v2068, %v2306
  %2308 = vmatmul.bf16.gmra.mxu0 %v985
  %v2309 = vpop.f32.mrf.mxu0
  %v2310 = vadd.f32 %v2071, %v2309
  %v2311 = vpop.f32.mrf.mxu0
  %v2312 = vadd.f32 %v2073, %v2311
  %2313 = vmatmul.bf16.gmra.mxu0 %v989
  %v2314 = vpop.f32.mrf.mxu0
  %v2315 = vadd.f32 %v2076, %v2314
  %v2316 = vpop.f32.mrf.mxu0
  %v2317 = vadd.f32 %v2078, %v2316
  %2318 = vmatmul.bf16.gmra.mxu0 %v993
  %v2319 = vpop.f32.mrf.mxu0
  %v2320 = vadd.f32 %v2081, %v2319
  %v2321 = vpop.f32.mrf.mxu0
  %v2322 = vadd.f32 %v2083, %v2321
  %2323 = vmatmul.bf16.gmra.mxu0 %v997
  %v2324 = vpop.f32.mrf.mxu0
  %v2325 = vadd.f32 %v2086, %v2324
  %v2326 = vpop.f32.mrf.mxu0
  %v2327 = vadd.f32 %v2088, %v2326
  %2328 = vmatmul.bf16.gmra.mxu0 %v1001
  %v2329 = vpop.f32.mrf.mxu0
  %v2330 = vadd.f32 %v2091, %v2329
  %v2331 = vpop.f32.mrf.mxu0
  %v2332 = vadd.f32 %v2093, %v2331
  %2333 = vdwg.mxu0
  %v2334 = vmax.f32 %v2105, 0.0
  %v2335 = vmax.f32 %v2107, 0.0
  %v2336 = vmax.f32 %v2110, 0.0
  %v2337 = vmax.f32 %v2112, 0.0
  %v2338 = vmax.f32 %v2115, 0.0
  %v2339 = vmax.f32 %v2117, 0.0
  %v2340 = vmax.f32 %v2120, 0.0
  %v2341 = vmax.f32 %v2122, 0.0
  %v2342 = vmax.f32 %v2125, 0.0
  %v2343 = vmax.f32 %v2127, 0.0
  %v2344 = vmax.f32 %v2130, 0.0
  %v2345 = vmax.f32 %v2132, 0.0
  %v2346 = vmax.f32 %v2135, 0.0
  %v2347 = vmax.f32 %v2137, 0.0
  %v2348 = vmax.f32 %v2140, 0.0
  %v2349 = vmax.f32 %v2142, 0.0
  %v2350 = vmax.f32 %v2145, 0.0
  %v2351 = vmax.f32 %v2147, 0.0
  %v2352 = vmax.f32 %v2150, 0.0
  %v2353 = vmax.f32 %v2152, 0.0
  %v2354 = vmax.f32 %v2155, 0.0
  %v2355 = vmax.f32 %v2157, 0.0
  %v2356 = vmax.f32 %v2160, 0.0
  %v2357 = vmax.f32 %v2162, 0.0
  %v2358 = vmax.f32 %v2165, 0.0
  %v2359 = vmax.f32 %v2167, 0.0
  %v2360 = vmax.f32 %v2170, 0.0
  %v2361 = vmax.f32 %v2172, 0.0
  %v2362 = vmax.f32 %v2175, 0.0
  %v2363 = vmax.f32 %v2177, 0.0
  %v2364 = vmax.f32 %v2180, 0.0
  %v2365 = vmax.f32 %v2182, 0.0
  %v2366 = vmax.f32 %v2185, 0.0
  %v2367 = vmax.f32 %v2187, 0.0
  %v2368 = vmax.f32 %v2190, 0.0
  %v2369 = vmax.f32 %v2192, 0.0
  %v2370 = vmax.f32 %v2195, 0.0
  %v2371 = vmax.f32 %v2197, 0.0
  %v2372 = vmax.f32 %v2200, 0.0
  %v2373 = vmax.f32 %v2202, 0.0
  %v2374 = vmax.f32 %v2205, 0.0
  %v2375 = vmax.f32 %v2207, 0.0
  %v2376 = vmax.f32 %v2210, 0.0
  %v2377 = vmax.f32 %v2212, 0.0
  %v2378 = vmax.f32 %v2215, 0.0
  %v2379 = vmax.f32 %v2217, 0.0
  %v2380 = vmax.f32 %v2220, 0.0
  %v2381 = vmax.f32 %v2222, 0.0
  %v2382 = vmax.f32 %v2225, 0.0
  %v2383 = vmax.f32 %v2227, 0.0
  %v2384 = vmax.f32 %v2230, 0.0
  %v2385 = vmax.f32 %v2232, 0.0
  %v2386 = vmax.f32 %v2235, 0.0
  %v2387 = vmax.f32 %v2237, 0.0
  %v2388 = vmax.f32 %v2240, 0.0
  %v2389 = vmax.f32 %v2242, 0.0
  %v2390 = vmax.f32 %v2245, 0.0
  %v2391 = vmax.f32 %v2247, 0.0
  %v2392 = vmax.f32 %v2250, 0.0
  %v2393 = vmax.f32 %v2252, 0.0
  %v2394 = vmax.f32 %v2255, 0.0
  %v2395 = vmax.f32 %v2257, 0.0
  %v2396 = vmax.f32 %v2260, 0.0
  %v2397 = vmax.f32 %v2262, 0.0
  %v2398 = vmax.f32 %v2265, 0.0
  %v2399 = vmax.f32 %v2267, 0.0
  %v2400 = vmax.f32 %v2270, 0.0
  %v2401 = vmax.f32 %v2272, 0.0
  %v2402 = vmax.f32 %v2275, 0.0
  %v2403 = vmax.f32 %v2277, 0.0
  %v2404 = vmax.f32 %v2280, 0.0
  %v2405 = vmax.f32 %v2282, 0.0
  %v2406 = vmax.f32 %v2285, 0.0
  %v2407 = vmax.f32 %v2287, 0.0
  %v2408 = vmax.f32 %v2290, 0.0
  %v2409 = vmax.f32 %v2292, 0.0
  %v2410 = vmax.f32 %v2295, 0.0
  %v2411 = vmax.f32 %v2297, 0.0
  %v2412 = vmax.f32 %v2300, 0.0
  %v2413 = vmax.f32 %v2302, 0.0
  %v2414 = vmax.f32 %v2305, 0.0
  %v2415 = vmax.f32 %v2307, 0.0
  %v2416 = vmax.f32 %v2310, 0.0
  %v2417 = vmax.f32 %v2312, 0.0
  %v2418 = vmax.f32 %v2315, 0.0
  %v2419 = vmax.f32 %v2317, 0.0
  %v2420 = vmax.f32 %v2320, 0.0
  %v2421 = vmax.f32 %v2322, 0.0
  %v2422 = vmax.f32 %v2325, 0.0
  %v2423 = vmax.f32 %v2327, 0.0
  %v2424 = vmax.f32 %v2330, 0.0
  %v2425 = vmax.f32 %v2332, 0.0
  %v2426 = vpack.c.bf16 %v2334, %v2334
  %v2427 = vpack.c.bf16 %v2335, %v2335
  %v2428 = vpack.c.bf16 %v2336, %v2336
  %v2429 = vpack.c.bf16 %v2337, %v2337
  %v2430 = vpack.c.bf16 %v2338, %v2338
  %v2431 = vpack.c.bf16 %v2339, %v2339
  %v2432 = vpack.c.bf16 %v2340, %v2340
  %v2433 = vpack.c.bf16 %v2341, %v2341
  %v2434 = vpack.c.bf16 %v2342, %v2342
  %v2435 = vpack.c.bf16 %v2343, %v2343
  %v2436 = vpack.c.bf16 %v2344, %v2344
  %v2437 = vpack.c.bf16 %v2345, %v2345
  %v2438 = vpack.c.bf16 %v2346, %v2346
  %v2439 = vpack.c.bf16 %v2347, %v2347
  %v2440 = vpack.c.bf16 %v2348, %v2348
  %v2441 = vpack.c.bf16 %v2349, %v2349
  %v2442 = vpack.c.bf16 %v2350, %v2350
  %v2443 = vpack.c.bf16 %v2351, %v2351
  %v2444 = vpack.c.bf16 %v2352, %v2352
  %v2445 = vpack.c.bf16 %v2353, %v2353
  %v2446 = vpack.c.bf16 %v2354, %v2354
  %v2447 = vpack.c.bf16 %v2355, %v2355
  %v2448 = vpack.c.bf16 %v2356, %v2356
  %v2449 = vpack.c.bf16 %v2357, %v2357
  %v2450 = vpack.c.bf16 %v2358, %v2358
  %v2451 = vpack.c.bf16 %v2359, %v2359
  %v2452 = vpack.c.bf16 %v2360, %v2360
  %v2453 = vpack.c.bf16 %v2361, %v2361
  %v2454 = vpack.c.bf16 %v2362, %v2362
  %v2455 = vpack.c.bf16 %v2363, %v2363
  %v2456 = vpack.c.bf16 %v2364, %v2364
  %v2457 = vpack.c.bf16 %v2365, %v2365
  %v2458 = vpack.c.bf16 %v2366, %v2366
  %v2459 = vpack.c.bf16 %v2367, %v2367
  %v2460 = vpack.c.bf16 %v2368, %v2368
  %v2461 = vpack.c.bf16 %v2369, %v2369
  %v2462 = vpack.c.bf16 %v2370, %v2370
  %v2463 = vpack.c.bf16 %v2371, %v2371
  %v2464 = vpack.c.bf16 %v2372, %v2372
  %v2465 = vpack.c.bf16 %v2373, %v2373
  %v2466 = vpack.c.bf16 %v2374, %v2374
  %v2467 = vpack.c.bf16 %v2375, %v2375
  %v2468 = vpack.c.bf16 %v2376, %v2376
  %v2469 = vpack.c.bf16 %v2377, %v2377
  %v2470 = vpack.c.bf16 %v2378, %v2378
  %v2471 = vpack.c.bf16 %v2379, %v2379
  %v2472 = vpack.c.bf16 %v2380, %v2380
  %v2473 = vpack.c.bf16 %v2381, %v2381
  %v2474 = vpack.c.bf16 %v2382, %v2382
  %v2475 = vpack.c.bf16 %v2383, %v2383
  %v2476 = vpack.c.bf16 %v2384, %v2384
  %v2477 = vpack.c.bf16 %v2385, %v2385
  %v2478 = vpack.c.bf16 %v2386, %v2386
  %v2479 = vpack.c.bf16 %v2387, %v2387
  %v2480 = vpack.c.bf16 %v2388, %v2388
  %v2481 = vpack.c.bf16 %v2389, %v2389
  %v2482 = vpack.c.bf16 %v2390, %v2390
  %v2483 = vpack.c.bf16 %v2391, %v2391
  %v2484 = vpack.c.bf16 %v2392, %v2392
  %v2485 = vpack.c.bf16 %v2393, %v2393
  %v2486 = vpack.c.bf16 %v2394, %v2394
  %v2487 = vpack.c.bf16 %v2395, %v2395
  %v2488 = vpack.c.bf16 %v2396, %v2396
  %v2489 = vpack.c.bf16 %v2397, %v2397
  %v2490 = vpack.c.bf16 %v2398, %v2398
  %v2491 = vpack.c.bf16 %v2399, %v2399
  %v2492 = vpack.c.bf16 %v2400, %v2400
  %v2493 = vpack.c.bf16 %v2401, %v2401
  %v2494 = vpack.c.bf16 %v2402, %v2402
  %v2495 = vpack.c.bf16 %v2403, %v2403
  %v2496 = vpack.c.bf16 %v2404, %v2404
  %v2497 = vpack.c.bf16 %v2405, %v2405
  %v2498 = vpack.c.bf16 %v2406, %v2406
  %v2499 = vpack.c.bf16 %v2407, %v2407
  %v2500 = vpack.c.bf16 %v2408, %v2408
  %v2501 = vpack.c.bf16 %v2409, %v2409
  %v2502 = vpack.c.bf16 %v2410, %v2410
  %v2503 = vpack.c.bf16 %v2411, %v2411
  %v2504 = vpack.c.bf16 %v2412, %v2412
  %v2505 = vpack.c.bf16 %v2413, %v2413
  %v2506 = vpack.c.bf16 %v2414, %v2414
  %v2507 = vpack.c.bf16 %v2415, %v2415
  %v2508 = vpack.c.bf16 %v2416, %v2416
  %v2509 = vpack.c.bf16 %v2417, %v2417
  %v2510 = vpack.c.bf16 %v2418, %v2418
  %v2511 = vpack.c.bf16 %v2419, %v2419
  %v2512 = vpack.c.bf16 %v2420, %v2420
  %v2513 = vpack.c.bf16 %v2421, %v2421
  %v2514 = vpack.c.bf16 %v2422, %v2422
  %v2515 = vpack.c.bf16 %v2423, %v2423
  %v2516 = vpack.c.bf16 %v2424, %v2424
  %v2517 = vpack.c.bf16 %v2425, %v2425
  %2518 = vst [vmem:[%s3] sm:$0xf] %v2426
  %2519 = vst [vmem:[%s3 + $0x4] sm:$0xf] %v2427
  %2520 = vst [vmem:[%s3 + $0x8] sm:$0xf] %v2428
  %2521 = vst [vmem:[%s3 + $0xc] sm:$0xf] %v2429
  %2522 = vst [vmem:[%s3 + $0x10] sm:$0xf] %v2430
  %2523 = vst [vmem:[%s3 + $0x14] sm:$0xf] %v2431
  %2524 = vst [vmem:[%s3 + $0x18] sm:$0xf] %v2432
  %2525 = vst [vmem:[%s3 + $0x1c] sm:$0xf] %v2433
  %2526 = vst [vmem:[%s3 + $0x20] sm:$0xf] %v2434
  %2527 = vst [vmem:[%s3 + $0x24] sm:$0xf] %v2435
  %2528 = vst [vmem:[%s3 + $0x28] sm:$0xf] %v2436
  %2529 = vst [vmem:[%s3 + $0x2c] sm:$0xf] %v2437
  %2530 = vst [vmem:[%s3 + $0x30] sm:$0xf] %v2438
  %2531 = vst [vmem:[%s3 + $0x34] sm:$0xf] %v2439
  %2532 = vst [vmem:[%s3 + $0x38] sm:$0xf] %v2440
  %2533 = vst [vmem:[%s3 + $0x3c] sm:$0xf] %v2441
  %2534 = vst [vmem:[%s3 + $0x40] sm:$0xf] %v2442
  %2535 = vst [vmem:[%s3 + $0x44] sm:$0xf] %v2443
  %2536 = vst [vmem:[%s3 + $0x48] sm:$0xf] %v2444
  %2537 = vst [vmem:[%s3 + $0x4c] sm:$0xf] %v2445
  %2538 = vst [vmem:[%s3 + $0x50] sm:$0xf] %v2446
  %2539 = vst [vmem:[%s3 + $0x54] sm:$0xf] %v2447
  %2540 = vst [vmem:[%s3 + $0x58] sm:$0xf] %v2448
  %2541 = vst [vmem:[%s3 + $0x5c] sm:$0xf] %v2449
  %2542 = vst [vmem:[%s3 + $0x60] sm:$0xf] %v2450
  %2543 = vst [vmem:[%s3 + $0x64] sm:$0xf] %v2451
  %2544 = vst [vmem:[%s3 + $0x68] sm:$0xf] %v2452
  %2545 = vst [vmem:[%s3 + $0x6c] sm:$0xf] %v2453
  %2546 = vst [vmem:[%s3 + $0x70] sm:$0xf] %v2454
  %2547 = vst [vmem:[%s3 + $0x74] sm:$0xf] %v2455
  %2548 = vst [vmem:[%s3 + $0x78] sm:$0xf] %v2456
  %2549 = vst [vmem:[%s3 + $0x7c] sm:$0xf] %v2457
  %2550 = vst [vmem:[%s3 + $0x80] sm:$0xf] %v2458
  %2551 = vst [vmem:[%s3 + $0x84] sm:$0xf] %v2459
  %2552 = vst [vmem:[%s3 + $0x88] sm:$0xf] %v2460
  %2553 = vst [vmem:[%s3 + $0x8c] sm:$0xf] %v2461
  %2554 = vst [vmem:[%s3 + $0x90] sm:$0xf] %v2462
  %2555 = vst [vmem:[%s3 + $0x94] sm:$0xf] %v2463
  %2556 = vst [vmem:[%s3 + $0x98] sm:$0xf] %v2464
  %2557 = vst [vmem:[%s3 + $0x9c] sm:$0xf] %v2465
  %2558 = vst [vmem:[%s3 + $0xa0] sm:$0xf] %v2466
  %2559 = vst [vmem:[%s3 + $0xa4] sm:$0xf] %v2467
  %2560 = vst [vmem:[%s3 + $0xa8] sm:$0xf] %v2468
  %2561 = vst [vmem:[%s3 + $0xac] sm:$0xf] %v2469
  %2562 = vst [vmem:[%s3 + $0xb0] sm:$0xf] %v2470
  %2563 = vst [vmem:[%s3 + $0xb4] sm:$0xf] %v2471
  %2564 = vst [vmem:[%s3 + $0xb8] sm:$0xf] %v2472
  %2565 = vst [vmem:[%s3 + $0xbc] sm:$0xf] %v2473
  %2566 = vst [vmem:[%s3 + $0xc0] sm:$0xf] %v2474
  %2567 = vst [vmem:[%s3 + $0xc4] sm:$0xf] %v2475
  %2568 = vst [vmem:[%s3 + $0xc8] sm:$0xf] %v2476
  %2569 = vst [vmem:[%s3 + $0xcc] sm:$0xf] %v2477
  %2570 = vst [vmem:[%s3 + $0xd0] sm:$0xf] %v2478
  %2571 = vst [vmem:[%s3 + $0xd4] sm:$0xf] %v2479
  %2572 = vst [vmem:[%s3 + $0xd8] sm:$0xf] %v2480
  %2573 = vst [vmem:[%s3 + $0xdc] sm:$0xf] %v2481
  %2574 = vst [vmem:[%s3 + $0xe0] sm:$0xf] %v2482
  %2575 = vst [vmem:[%s3 + $0xe4] sm:$0xf] %v2483
  %2576 = vst [vmem:[%s3 + $0xe8] sm:$0xf] %v2484
  %2577 = vst [vmem:[%s3 + $0xec] sm:$0xf] %v2485
  %2578 = vst [vmem:[%s3 + $0xf0] sm:$0xf] %v2486
  %2579 = vst [vmem:[%s3 + $0xf4] sm:$0xf] %v2487
  %2580 = vst [vmem:[%s3 + $0xf8] sm:$0xf] %v2488
  %2581 = vst [vmem:[%s3 + $0xfc] sm:$0xf] %v2489
  %2582 = vst [vmem:[%s3 + $0x100] sm:$0xf] %v2490
  %2583 = vst [vmem:[%s3 + $0x104] sm:$0xf] %v2491
  %2584 = vst [vmem:[%s3 + $0x108] sm:$0xf] %v2492
  %2585 = vst [vmem:[%s3 + $0x10c] sm:$0xf] %v2493
  %2586 = vst [vmem:[%s3 + $0x110] sm:$0xf] %v2494
  %2587 = vst [vmem:[%s3 + $0x114] sm:$0xf] %v2495
  %2588 = vst [vmem:[%s3 + $0x118] sm:$0xf] %v2496
  %2589 = vst [vmem:[%s3 + $0x11c] sm:$0xf] %v2497
  %2590 = vst [vmem:[%s3 + $0x120] sm:$0xf] %v2498
  %2591 = vst [vmem:[%s3 + $0x124] sm:$0xf] %v2499
  %2592 = vst [vmem:[%s3 + $0x128] sm:$0xf] %v2500
  %2593 = vst [vmem:[%s3 + $0x12c] sm:$0xf] %v2501
  %2594 = vst [vmem:[%s3 + $0x130] sm:$0xf] %v2502
  %2595 = vst [vmem:[%s3 + $0x134] sm:$0xf] %v2503
  %2596 = vst [vmem:[%s3 + $0x138] sm:$0xf] %v2504
  %2597 = vst [vmem:[%s3 + $0x13c] sm:$0xf] %v2505
  %2598 = vst [vmem:[%s3 + $0x140] sm:$0xf] %v2506
  %2599 = vst [vmem:[%s3 + $0x144] sm:$0xf] %v2507
  %2600 = vst [vmem:[%s3 + $0x148] sm:$0xf] %v2508
  %2601 = vst [vmem:[%s3 + $0x14c] sm:$0xf] %v2509
  %2602 = vst [vmem:[%s3 + $0x150] sm:$0xf] %v2510
  %2603 = vst [vmem:[%s3 + $0x154] sm:$0xf] %v2511
  %2604 = vst [vmem:[%s3 + $0x158] sm:$0xf] %v2512
  %2605 = vst [vmem:[%s3 + $0x15c] sm:$0xf] %v2513
  %2606 = vst [vmem:[%s3 + $0x160] sm:$0xf] %v2514
  %2607 = vst [vmem:[%s3 + $0x164] sm:$0xf] %v2515
  %2608 = vst [vmem:[%s3 + $0x168] sm:$0xf] %v2516
  %2609 = vst [vmem:[%s3 + $0x16c] sm:$0xf] %v2517
  // Predicated region
  $region14: #{forward.22} parent=0 // pred_check
    _
  $region15: #{forward.22} parent=0 // pred_check_branch
    %2611 = sbr.rel (0) target = $region17
  $region16: #{forward.22} parent=0 // pred_region
    _
  $region17: #{forward.22} parent=0 // pred_fallthru
    _
  // Predicated region
  $region18: #{forward.22} parent=0 // pred_check
    _
  $region19: #{forward.22} parent=0 // pred_check_branch
    %2613 = sbr.rel (0) target = $region21
  $region20: #{forward.22} parent=0 // pred_region
    _
  $region21: #{forward.22} parent=0 // pred_fallthru
    _

// kernel: forward.23
$region0: #{forward.23}
  #allocation0 [shape = 'u32[]', space=smem, size = 0x4, offset = 0x4, fixed_abs, tag = 'smem constant byte address 0x4 - core index']
  #allocation1 [shape = 'u32[72,128]{1,0:T(1,128)}', space=vmem, size = 0x9000, scoped, tag = 'internal scratch']
  %s0 = inlined_call_operand.vmem [shape: bf16[800,64], index: 0, kind: input, shape index: {}]
  %s1 = inlined_call_operand.vmem [shape: bf16[64,128], index: 1, kind: input, shape index: {}]
  %s2 = inlined_call_operand.vmem [shape: f32[1,128], index: 2, kind: input, shape index: {}]
  %s3 = inlined_call_operand.vmem [shape: f32[800,128], index: 3, kind: output, shape index: {}]
  %s4 = sld [smem:[#allocation0]]
  $region22: #{forward.23} parent=0
    _
  %s6 = ssub.s32 1, %s4
  %s7 = scalar_select 0, %s6, %s4
  // Predicated region
  $region2: #{forward.23} parent=0 // pred_check
    _
  $region3: #{forward.23} parent=0 // pred_check_branch
    %9 = sbr.rel (0) target = $region5
  $region4: #{forward.23} parent=0 // pred_region
    _
  $region5: #{forward.23} parent=0 // pred_fallthru
    _
  // Predicated region
  $region6: #{forward.23} parent=0 // pred_check
    _
  $region7: #{forward.23} parent=0 // pred_check_branch
    %11 = sbr.rel (0) target = $region9
  $region8: #{forward.23} parent=0 // pred_region
    _
  $region9: #{forward.23} parent=0 // pred_fallthru
    _
  // Predicated region
  $region10: #{forward.23} parent=0 // pred_check
    _
  $region11: #{forward.23} parent=0 // pred_check_branch
    %13 = sbr.rel (0) target = $region13
  $region12: #{forward.23} parent=0 // pred_region
    _
  $region13: #{forward.23} parent=0 // pred_fallthru
    _
  %v15 = vld [vmem:[%s0] sm:$0xf]
  %v16 = vld [vmem:[%s0 + $0x4] sm:$0xf]
  %v17 = vld [vmem:[%s0 + $0x8] sm:$0xf]
  %v18 = vld [vmem:[%s0 + $0xc] sm:$0xf]
  %v19 = vld [vmem:[%s0 + $0x10] sm:$0xf]
  %v20 = vld [vmem:[%s0 + $0x14] sm:$0xf]
  %v21 = vld [vmem:[%s0 + $0x18] sm:$0xf]
  %v22 = vld [vmem:[%s0 + $0x1c] sm:$0xf]
  %v23 = vld [vmem:[%s0 + $0x20] sm:$0xf]
  %v24 = vld [vmem:[%s0 + $0x24] sm:$0xf]
  %v25 = vld [vmem:[%s0 + $0x28] sm:$0xf]
  %v26 = vld [vmem:[%s0 + $0x2c] sm:$0xf]
  %v27 = vld [vmem:[%s0 + $0x30] sm:$0xf]
  %v28 = vld [vmem:[%s0 + $0x34] sm:$0xf]
  %v29 = vld [vmem:[%s0 + $0x38] sm:$0xf]
  %v30 = vld [vmem:[%s0 + $0x3c] sm:$0xf]
  %v31 = vld [vmem:[%s0 + $0x40] sm:$0xf]
  %v32 = vld [vmem:[%s0 + $0x44] sm:$0xf]
  %v33 = vld [vmem:[%s0 + $0x48] sm:$0xf]
  %v34 = vld [vmem:[%s0 + $0x4c] sm:$0xf]
  %v35 = vld [vmem:[%s0 + $0x50] sm:$0xf]
  %v36 = vld [vmem:[%s0 + $0x54] sm:$0xf]
  %v37 = vld [vmem:[%s0 + $0x58] sm:$0xf]
  %v38 = vld [vmem:[%s0 + $0x5c] sm:$0xf]
  %v39 = vld [vmem:[%s0 + $0x60] sm:$0xf]
  %v40 = vld [vmem:[%s0 + $0x64] sm:$0xf]
  %v41 = vld [vmem:[%s0 + $0x68] sm:$0xf]
  %v42 = vld [vmem:[%s0 + $0x6c] sm:$0xf]
  %v43 = vld [vmem:[%s0 + $0x70] sm:$0xf]
  %v44 = vld [vmem:[%s0 + $0x74] sm:$0xf]
  %v45 = vld [vmem:[%s0 + $0x78] sm:$0xf]
  %v46 = vld [vmem:[%s0 + $0x7c] sm:$0xf]
  %v47 = vld [vmem:[%s0 + $0x80] sm:$0xf]
  %v48 = vld [vmem:[%s0 + $0x84] sm:$0xf]
  %v49 = vld [vmem:[%s0 + $0x88] sm:$0xf]
  %v50 = vld [vmem:[%s0 + $0x8c] sm:$0xf]
  %v51 = vld [vmem:[%s0 + $0x90] sm:$0xf]
  %v52 = vld [vmem:[%s0 + $0x94] sm:$0xf]
  %v53 = vld [vmem:[%s0 + $0x98] sm:$0xf]
  %v54 = vld [vmem:[%s0 + $0x9c] sm:$0xf]
  %v55 = vld [vmem:[%s0 + $0xa0] sm:$0xf]
  %v56 = vld [vmem:[%s0 + $0xa4] sm:$0xf]
  %v57 = vld [vmem:[%s0 + $0xa8] sm:$0xf]
  %v58 = vld [vmem:[%s0 + $0xac] sm:$0xf]
  %v59 = vld [vmem:[%s0 + $0xb0] sm:$0xf]
  %v60 = vld [vmem:[%s0 + $0xb4] sm:$0xf]
  %v61 = vld [vmem:[%s0 + $0xb8] sm:$0xf]
  %v62 = vld [vmem:[%s0 + $0xbc] sm:$0xf]
  %v63 = vld [vmem:[%s0 + $0xc0] sm:$0xf]
  %v64 = vld [vmem:[%s0 + $0xc4] sm:$0xf]
  %v65 = vld [vmem:[%s0 + $0xc8] sm:$0xf]
  %v66 = vld [vmem:[%s0 + $0xcc] sm:$0xf]
  %v67 = vld [vmem:[%s0 + $0xd0] sm:$0xf]
  %v68 = vld [vmem:[%s0 + $0xd4] sm:$0xf]
  %v69 = vld [vmem:[%s0 + $0xd8] sm:$0xf]
  %v70 = vld [vmem:[%s0 + $0xdc] sm:$0xf]
  %v71 = vld [vmem:[%s0 + $0xe0] sm:$0xf]
  %v72 = vld [vmem:[%s0 + $0xe4] sm:$0xf]
  %v73 = vld [vmem:[%s0 + $0xe8] sm:$0xf]
  %v74 = vld [vmem:[%s0 + $0xec] sm:$0xf]
  %v75 = vld [vmem:[%s0 + $0xf0] sm:$0xf]
  %v76 = vld [vmem:[%s0 + $0xf4] sm:$0xf]
  %v77 = vld [vmem:[%s0 + $0xf8] sm:$0xf]
  %v78 = vld [vmem:[%s0 + $0xfc] sm:$0xf]
  %v79 = vld [vmem:[%s0 + $0x100] sm:$0xf]
  %v80 = vld [vmem:[%s0 + $0x104] sm:$0xf]
  %v81 = vld [vmem:[%s0 + $0x108] sm:$0xf]
  %v82 = vld [vmem:[%s0 + $0x10c] sm:$0xf]
  %v83 = vld [vmem:[%s0 + $0x110] sm:$0xf]
  %v84 = vld [vmem:[%s0 + $0x114] sm:$0xf]
  %v85 = vld [vmem:[%s0 + $0x118] sm:$0xf]
  %v86 = vld [vmem:[%s0 + $0x11c] sm:$0xf]
  %v87 = vld [vmem:[%s0 + $0x120] sm:$0xf]
  %v88 = vld [vmem:[%s0 + $0x124] sm:$0xf]
  %v89 = vld [vmem:[%s0 + $0x128] sm:$0xf]
  %v90 = vld [vmem:[%s0 + $0x12c] sm:$0xf]
  %v91 = vld [vmem:[%s0 + $0x130] sm:$0xf]
  %v92 = vld [vmem:[%s0 + $0x134] sm:$0xf]
  %v93 = vld [vmem:[%s0 + $0x138] sm:$0xf]
  %v94 = vld [vmem:[%s0 + $0x13c] sm:$0xf]
  %v95 = vld [vmem:[%s0 + $0x140] sm:$0xf]
  %v96 = vld [vmem:[%s0 + $0x144] sm:$0xf]
  %v97 = vld [vmem:[%s0 + $0x148] sm:$0xf]
  %v98 = vld [vmem:[%s0 + $0x14c] sm:$0xf]
  %v99 = vld [vmem:[%s0 + $0x150] sm:$0xf]
  %v100 = vld [vmem:[%s0 + $0x154] sm:$0xf]
  %v101 = vld [vmem:[%s0 + $0x158] sm:$0xf]
  %v102 = vld [vmem:[%s0 + $0x15c] sm:$0xf]
  %v103 = vld [vmem:[%s0 + $0x160] sm:$0xf]
  %v104 = vld [vmem:[%s0 + $0x164] sm:$0xf]
  %v105 = vld [vmem:[%s0 + $0x168] sm:$0xf]
  %v106 = vld [vmem:[%s0 + $0x16c] sm:$0xf]
  %v107 = vld [vmem:[%s0 + $0x170] sm:$0xf]
  %v108 = vld [vmem:[%s0 + $0x174] sm:$0xf]
  %v109 = vld [vmem:[%s0 + $0x178] sm:$0xf]
  %v110 = vld [vmem:[%s0 + $0x17c] sm:$0xf]
  %v111 = vld [vmem:[%s0 + $0x180] sm:$0xf]
  %v112 = vld [vmem:[%s0 + $0x184] sm:$0xf]
  %v113 = vld [vmem:[%s0 + $0x188] sm:$0xf]
  %v114 = vld [vmem:[%s0 + $0x18c] sm:$0xf]
  %v115 = vld [vmem:[%s1] sm:$0xf]
  %v116 = vld [vmem:[%s1 + $0x4] sm:$0xf]
  %v117 = vld [vmem:[%s1 + $0x8] sm:$0xf]
  %v118 = vld [vmem:[%s1 + $0xc] sm:$0xf]
  %v119 = vld [vmem:[%s1 + $0x10] sm:$0xf]
  %v120 = vld [vmem:[%s1 + $0x14] sm:$0xf]
  %v121 = vld [vmem:[%s1 + $0x18] sm:$0xf]
  %v122 = vld [vmem:[%s1 + $0x1c] sm:$0xf]
  %v123 = vld [vmem:[%s2] sm:$0x1]
  %v125 = vperm.slane %v123, 0
  %v227 = vunpack.c.l.b16 %v15
  %v228 = vunpack.c.l.b16 %v16
  %v229 = vunpack.c.l.b16 %v17
  %v230 = vunpack.c.l.b16 %v18
  %v231 = vunpack.c.l.b16 %v19
  %v232 = vunpack.c.l.b16 %v20
  %v233 = vunpack.c.l.b16 %v21
  %v234 = vunpack.c.l.b16 %v22
  %v235 = vunpack.c.l.b16 %v23
  %v236 = vunpack.c.l.b16 %v24
  %v237 = vunpack.c.l.b16 %v25
  %v238 = vunpack.c.l.b16 %v26
  %v239 = vunpack.c.l.b16 %v27
  %v240 = vunpack.c.l.b16 %v28
  %v241 = vunpack.c.l.b16 %v29
  %v242 = vunpack.c.l.b16 %v30
  %v243 = vunpack.c.l.b16 %v31
  %v244 = vunpack.c.l.b16 %v32
  %v245 = vunpack.c.l.b16 %v33
  %v246 = vunpack.c.l.b16 %v34
  %v247 = vunpack.c.l.b16 %v35
  %v248 = vunpack.c.l.b16 %v36
  %v249 = vunpack.c.l.b16 %v37
  %v250 = vunpack.c.l.b16 %v38
  %v251 = vunpack.c.l.b16 %v39
  %v252 = vunpack.c.l.b16 %v40
  %v253 = vunpack.c.l.b16 %v41
  %v254 = vunpack.c.l.b16 %v42
  %v255 = vunpack.c.l.b16 %v43
  %v256 = vunpack.c.l.b16 %v44
  %v257 = vunpack.c.l.b16 %v45
  %v258 = vunpack.c.l.b16 %v46
  %v259 = vunpack.c.l.b16 %v47
  %v260 = vunpack.c.l.b16 %v48
  %v261 = vunpack.c.l.b16 %v49
  %v262 = vunpack.c.l.b16 %v50
  %v263 = vunpack.c.l.b16 %v51
  %v264 = vunpack.c.l.b16 %v52
  %v265 = vunpack.c.l.b16 %v53
  %v266 = vunpack.c.l.b16 %v54
  %v267 = vunpack.c.l.b16 %v55
  %v268 = vunpack.c.l.b16 %v56
  %v269 = vunpack.c.l.b16 %v57
  %v270 = vunpack.c.l.b16 %v58
  %v271 = vunpack.c.l.b16 %v59
  %v272 = vunpack.c.l.b16 %v60
  %v273 = vunpack.c.l.b16 %v61
  %v274 = vunpack.c.l.b16 %v62
  %v275 = vunpack.c.l.b16 %v63
  %v276 = vunpack.c.l.b16 %v64
  %v277 = vunpack.c.l.b16 %v65
  %v278 = vunpack.c.l.b16 %v66
  %v279 = vunpack.c.l.b16 %v67
  %v280 = vunpack.c.l.b16 %v68
  %v281 = vunpack.c.l.b16 %v69
  %v282 = vunpack.c.l.b16 %v70
  %v283 = vunpack.c.l.b16 %v71
  %v284 = vunpack.c.l.b16 %v72
  %v285 = vunpack.c.l.b16 %v73
  %v286 = vunpack.c.l.b16 %v74
  %v287 = vunpack.c.l.b16 %v75
  %v288 = vunpack.c.l.b16 %v76
  %v289 = vunpack.c.l.b16 %v77
  %v290 = vunpack.c.l.b16 %v78
  %v291 = vunpack.c.l.b16 %v79
  %v292 = vunpack.c.l.b16 %v80
  %v293 = vunpack.c.l.b16 %v81
  %v294 = vunpack.c.l.b16 %v82
  %v295 = vunpack.c.l.b16 %v83
  %v296 = vunpack.c.l.b16 %v84
  %v297 = vunpack.c.l.b16 %v85
  %v298 = vunpack.c.l.b16 %v86
  %v299 = vunpack.c.l.b16 %v87
  %v300 = vunpack.c.l.b16 %v88
  %v301 = vunpack.c.l.b16 %v89
  %v302 = vunpack.c.l.b16 %v90
  %v303 = vunpack.c.l.b16 %v91
  %v304 = vunpack.c.l.b16 %v92
  %v305 = vunpack.c.l.b16 %v93
  %v306 = vunpack.c.l.b16 %v94
  %v307 = vunpack.c.l.b16 %v95
  %v308 = vunpack.c.l.b16 %v96
  %v309 = vunpack.c.l.b16 %v97
  %v310 = vunpack.c.l.b16 %v98
  %v311 = vunpack.c.l.b16 %v99
  %v312 = vunpack.c.l.b16 %v100
  %v313 = vunpack.c.l.b16 %v101
  %v314 = vunpack.c.l.b16 %v102
  %v315 = vunpack.c.l.b16 %v103
  %v316 = vunpack.c.l.b16 %v104
  %v317 = vunpack.c.l.b16 %v105
  %v318 = vunpack.c.l.b16 %v106
  %v319 = vunpack.c.l.b16 %v107
  %v320 = vunpack.c.l.b16 %v108
  %v321 = vunpack.c.l.b16 %v109
  %v322 = vunpack.c.l.b16 %v110
  %v323 = vunpack.c.l.b16 %v111
  %v324 = vunpack.c.l.b16 %v112
  %v325 = vunpack.c.l.b16 %v113
  %v326 = vunpack.c.l.b16 %v114
  %v327 = vpack.c.b16 %v228, %v227
  %v328 = vpack.c.b16 %v230, %v229
  %v329 = vpack.c.b16 %v232, %v231
  %v330 = vpack.c.b16 %v234, %v233
  %v331 = vpack.c.b16 %v236, %v235
  %v332 = vpack.c.b16 %v238, %v237
  %v333 = vpack.c.b16 %v240, %v239
  %v334 = vpack.c.b16 %v242, %v241
  %v335 = vpack.c.b16 %v244, %v243
  %v336 = vpack.c.b16 %v246, %v245
  %v337 = vpack.c.b16 %v248, %v247
  %v338 = vpack.c.b16 %v250, %v249
  %v339 = vpack.c.b16 %v252, %v251
  %v340 = vpack.c.b16 %v254, %v253
  %v341 = vpack.c.b16 %v256, %v255
  %v342 = vpack.c.b16 %v258, %v257
  %v343 = vpack.c.b16 %v260, %v259
  %v344 = vpack.c.b16 %v262, %v261
  %v345 = vpack.c.b16 %v264, %v263
  %v346 = vpack.c.b16 %v266, %v265
  %v347 = vpack.c.b16 %v268, %v267
  %v348 = vpack.c.b16 %v270, %v269
  %v349 = vpack.c.b16 %v272, %v271
  %v350 = vpack.c.b16 %v274, %v273
  %v351 = vpack.c.b16 %v276, %v275
  %v352 = vpack.c.b16 %v278, %v277
  %v353 = vpack.c.b16 %v280, %v279
  %v354 = vpack.c.b16 %v282, %v281
  %v355 = vpack.c.b16 %v284, %v283
  %v356 = vpack.c.b16 %v286, %v285
  %v357 = vpack.c.b16 %v288, %v287
  %v358 = vpack.c.b16 %v290, %v289
  %v359 = vpack.c.b16 %v292, %v291
  %v360 = vpack.c.b16 %v294, %v293
  %v361 = vpack.c.b16 %v296, %v295
  %v362 = vpack.c.b16 %v298, %v297
  %v363 = vpack.c.b16 %v300, %v299
  %v364 = vpack.c.b16 %v302, %v301
  %v365 = vpack.c.b16 %v304, %v303
  %v366 = vpack.c.b16 %v306, %v305
  %v367 = vpack.c.b16 %v308, %v307
  %v368 = vpack.c.b16 %v310, %v309
  %v369 = vpack.c.b16 %v312, %v311
  %v370 = vpack.c.b16 %v314, %v313
  %v371 = vpack.c.b16 %v316, %v315
  %v372 = vpack.c.b16 %v318, %v317
  %v373 = vpack.c.b16 %v320, %v319
  %v374 = vpack.c.b16 %v322, %v321
  %v375 = vpack.c.b16 %v324, %v323
  %v376 = vpack.c.b16 %v326, %v325
  %v385 = vunpack.c.l.b16 %v115
  %v386 = vunpack.c.l.b16 %v116
  %v387 = vunpack.c.l.b16 %v117
  %v388 = vunpack.c.l.b16 %v118
  %v389 = vunpack.c.l.b16 %v119
  %v390 = vunpack.c.l.b16 %v120
  %v391 = vunpack.c.l.b16 %v121
  %v392 = vunpack.c.l.b16 %v122
  %v393 = vpack.c.b16 %v386, %v385
  %v394 = vpack.c.b16 %v388, %v387
  %v395 = vpack.c.b16 %v390, %v389
  %v396 = vpack.c.b16 %v392, %v391
  %vm401 = vcmask 523264
  %v403 = vsel %vm401, %v327, 0
  %v406 = vsel %vm401, %v328, 0
  %v409 = vsel %vm401, %v329, 0
  %v412 = vsel %vm401, %v330, 0
  %v415 = vsel %vm401, %v331, 0
  %v418 = vsel %vm401, %v332, 0
  %v421 = vsel %vm401, %v333, 0
  %v424 = vsel %vm401, %v334, 0
  %v427 = vsel %vm401, %v335, 0
  %v430 = vsel %vm401, %v336, 0
  %v433 = vsel %vm401, %v337, 0
  %v436 = vsel %vm401, %v338, 0
  %v439 = vsel %vm401, %v339, 0
  %v442 = vsel %vm401, %v340, 0
  %v445 = vsel %vm401, %v341, 0
  %v448 = vsel %vm401, %v342, 0
  %v451 = vsel %vm401, %v343, 0
  %v454 = vsel %vm401, %v344, 0
  %v457 = vsel %vm401, %v345, 0
  %v460 = vsel %vm401, %v346, 0
  %v463 = vsel %vm401, %v347, 0
  %v466 = vsel %vm401, %v348, 0
  %v469 = vsel %vm401, %v349, 0
  %v472 = vsel %vm401, %v350, 0
  %v475 = vsel %vm401, %v351, 0
  %v478 = vsel %vm401, %v352, 0
  %v481 = vsel %vm401, %v353, 0
  %v484 = vsel %vm401, %v354, 0
  %v487 = vsel %vm401, %v355, 0
  %v490 = vsel %vm401, %v356, 0
  %v493 = vsel %vm401, %v357, 0
  %v496 = vsel %vm401, %v358, 0
  %v499 = vsel %vm401, %v359, 0
  %v502 = vsel %vm401, %v360, 0
  %v505 = vsel %vm401, %v361, 0
  %v508 = vsel %vm401, %v362, 0
  %v511 = vsel %vm401, %v363, 0
  %v514 = vsel %vm401, %v364, 0
  %v517 = vsel %vm401, %v365, 0
  %v520 = vsel %vm401, %v366, 0
  %v523 = vsel %vm401, %v367, 0
  %v526 = vsel %vm401, %v368, 0
  %v529 = vsel %vm401, %v369, 0
  %v532 = vsel %vm401, %v370, 0
  %v535 = vsel %vm401, %v371, 0
  %v538 = vsel %vm401, %v372, 0
  %v541 = vsel %vm401, %v373, 0
  %v544 = vsel %vm401, %v374, 0
  %v547 = vsel %vm401, %v375, 0
  %v550 = vsel %vm401, %v376, 0
  %552 = vmatpush.bf16.msra.mxu0 0
  %553 = vmatpush.bf16.msra.mxu0 0
  %554 = vmatpush.bf16.msra.mxu0 0
  %555 = vmatpush.bf16.msra.mxu0 0
  %556 = vmatpush.bf16.msra.mxu0 %v396
  %557 = vmatpush.bf16.msra.mxu0 %v395
  %558 = vmatpush.bf16.msra.mxu0 %v394
  %559 = vmatpush.bf16.msra.mxu0 %v393
  %560 = vmatmul.bf16.gmra.mxu0 %v403
  %v561 = vpop.f32.mrf.mxu0
  %v562 = vadd.f32 %v125, %v561
  %v563 = vpop.f32.mrf.mxu0
  %v564 = vadd.f32 %v125, %v563
  %565 = vmatmul.bf16.gmra.mxu0 %v406
  %v566 = vpop.f32.mrf.mxu0
  %v567 = vadd.f32 %v125, %v566
  %v568 = vpop.f32.mrf.mxu0
  %v569 = vadd.f32 %v125, %v568
  %570 = vmatmul.bf16.gmra.mxu0 %v409
  %v571 = vpop.f32.mrf.mxu0
  %v572 = vadd.f32 %v125, %v571
  %v573 = vpop.f32.mrf.mxu0
  %v574 = vadd.f32 %v125, %v573
  %575 = vmatmul.bf16.gmra.mxu0 %v412
  %v576 = vpop.f32.mrf.mxu0
  %v577 = vadd.f32 %v125, %v576
  %v578 = vpop.f32.mrf.mxu0
  %v579 = vadd.f32 %v125, %v578
  %580 = vmatmul.bf16.gmra.mxu0 %v415
  %v581 = vpop.f32.mrf.mxu0
  %v582 = vadd.f32 %v125, %v581
  %v583 = vpop.f32.mrf.mxu0
  %v584 = vadd.f32 %v125, %v583
  %585 = vmatmul.bf16.gmra.mxu0 %v418
  %v586 = vpop.f32.mrf.mxu0
  %v587 = vadd.f32 %v125, %v586
  %v588 = vpop.f32.mrf.mxu0
  %v589 = vadd.f32 %v125, %v588
  %590 = vmatmul.bf16.gmra.mxu0 %v421
  %v591 = vpop.f32.mrf.mxu0
  %v592 = vadd.f32 %v125, %v591
  %v593 = vpop.f32.mrf.mxu0
  %v594 = vadd.f32 %v125, %v593
  %595 = vmatmul.bf16.gmra.mxu0 %v424
  %v596 = vpop.f32.mrf.mxu0
  %v597 = vadd.f32 %v125, %v596
  %v598 = vpop.f32.mrf.mxu0
  %v599 = vadd.f32 %v125, %v598
  %600 = vmatmul.bf16.gmra.mxu0 %v427
  %v601 = vpop.f32.mrf.mxu0
  %v602 = vadd.f32 %v125, %v601
  %v603 = vpop.f32.mrf.mxu0
  %v604 = vadd.f32 %v125, %v603
  %605 = vmatmul.bf16.gmra.mxu0 %v430
  %v606 = vpop.f32.mrf.mxu0
  %v607 = vadd.f32 %v125, %v606
  %v608 = vpop.f32.mrf.mxu0
  %v609 = vadd.f32 %v125, %v608
  %610 = vmatmul.bf16.gmra.mxu0 %v433
  %v611 = vpop.f32.mrf.mxu0
  %v612 = vadd.f32 %v125, %v611
  %v613 = vpop.f32.mrf.mxu0
  %v614 = vadd.f32 %v125, %v613
  %615 = vmatmul.bf16.gmra.mxu0 %v436
  %v616 = vpop.f32.mrf.mxu0
  %v617 = vadd.f32 %v125, %v616
  %v618 = vpop.f32.mrf.mxu0
  %v619 = vadd.f32 %v125, %v618
  %620 = vmatmul.bf16.gmra.mxu0 %v439
  %v621 = vpop.f32.mrf.mxu0
  %v622 = vadd.f32 %v125, %v621
  %v623 = vpop.f32.mrf.mxu0
  %v624 = vadd.f32 %v125, %v623
  %625 = vmatmul.bf16.gmra.mxu0 %v442
  %v626 = vpop.f32.mrf.mxu0
  %v627 = vadd.f32 %v125, %v626
  %v628 = vpop.f32.mrf.mxu0
  %v629 = vadd.f32 %v125, %v628
  %630 = vmatmul.bf16.gmra.mxu0 %v445
  %v631 = vpop.f32.mrf.mxu0
  %v632 = vadd.f32 %v125, %v631
  %v633 = vpop.f32.mrf.mxu0
  %v634 = vadd.f32 %v125, %v633
  %635 = vmatmul.bf16.gmra.mxu0 %v448
  %v636 = vpop.f32.mrf.mxu0
  %v637 = vadd.f32 %v125, %v636
  %v638 = vpop.f32.mrf.mxu0
  %v639 = vadd.f32 %v125, %v638
  %640 = vmatmul.bf16.gmra.mxu0 %v451
  %v641 = vpop.f32.mrf.mxu0
  %v642 = vadd.f32 %v125, %v641
  %v643 = vpop.f32.mrf.mxu0
  %v644 = vadd.f32 %v125, %v643
  %645 = vmatmul.bf16.gmra.mxu0 %v454
  %v646 = vpop.f32.mrf.mxu0
  %v647 = vadd.f32 %v125, %v646
  %v648 = vpop.f32.mrf.mxu0
  %v649 = vadd.f32 %v125, %v648
  %650 = vmatmul.bf16.gmra.mxu0 %v457
  %v651 = vpop.f32.mrf.mxu0
  %v652 = vadd.f32 %v125, %v651
  %v653 = vpop.f32.mrf.mxu0
  %v654 = vadd.f32 %v125, %v653
  %655 = vmatmul.bf16.gmra.mxu0 %v460
  %v656 = vpop.f32.mrf.mxu0
  %v657 = vadd.f32 %v125, %v656
  %v658 = vpop.f32.mrf.mxu0
  %v659 = vadd.f32 %v125, %v658
  %660 = vmatmul.bf16.gmra.mxu0 %v463
  %v661 = vpop.f32.mrf.mxu0
  %v662 = vadd.f32 %v125, %v661
  %v663 = vpop.f32.mrf.mxu0
  %v664 = vadd.f32 %v125, %v663
  %665 = vmatmul.bf16.gmra.mxu0 %v466
  %v666 = vpop.f32.mrf.mxu0
  %v667 = vadd.f32 %v125, %v666
  %v668 = vpop.f32.mrf.mxu0
  %v669 = vadd.f32 %v125, %v668
  %670 = vmatmul.bf16.gmra.mxu0 %v469
  %v671 = vpop.f32.mrf.mxu0
  %v672 = vadd.f32 %v125, %v671
  %v673 = vpop.f32.mrf.mxu0
  %v674 = vadd.f32 %v125, %v673
  %675 = vmatmul.bf16.gmra.mxu0 %v472
  %v676 = vpop.f32.mrf.mxu0
  %v677 = vadd.f32 %v125, %v676
  %v678 = vpop.f32.mrf.mxu0
  %v679 = vadd.f32 %v125, %v678
  %680 = vmatmul.bf16.gmra.mxu0 %v475
  %v681 = vpop.f32.mrf.mxu0
  %v682 = vadd.f32 %v125, %v681
  %v683 = vpop.f32.mrf.mxu0
  %v684 = vadd.f32 %v125, %v683
  %685 = vmatmul.bf16.gmra.mxu0 %v478
  %v686 = vpop.f32.mrf.mxu0
  %v687 = vadd.f32 %v125, %v686
  %v688 = vpop.f32.mrf.mxu0
  %v689 = vadd.f32 %v125, %v688
  %690 = vmatmul.bf16.gmra.mxu0 %v481
  %v691 = vpop.f32.mrf.mxu0
  %v692 = vadd.f32 %v125, %v691
  %v693 = vpop.f32.mrf.mxu0
  %v694 = vadd.f32 %v125, %v693
  %695 = vmatmul.bf16.gmra.mxu0 %v484
  %v696 = vpop.f32.mrf.mxu0
  %v697 = vadd.f32 %v125, %v696
  %v698 = vpop.f32.mrf.mxu0
  %v699 = vadd.f32 %v125, %v698
  %700 = vmatmul.bf16.gmra.mxu0 %v487
  %v701 = vpop.f32.mrf.mxu0
  %v702 = vadd.f32 %v125, %v701
  %v703 = vpop.f32.mrf.mxu0
  %v704 = vadd.f32 %v125, %v703
  %705 = vmatmul.bf16.gmra.mxu0 %v490
  %v706 = vpop.f32.mrf.mxu0
  %v707 = vadd.f32 %v125, %v706
  %v708 = vpop.f32.mrf.mxu0
  %v709 = vadd.f32 %v125, %v708
  %710 = vmatmul.bf16.gmra.mxu0 %v493
  %v711 = vpop.f32.mrf.mxu0
  %v712 = vadd.f32 %v125, %v711
  %v713 = vpop.f32.mrf.mxu0
  %v714 = vadd.f32 %v125, %v713
  %715 = vmatmul.bf16.gmra.mxu0 %v496
  %v716 = vpop.f32.mrf.mxu0
  %v717 = vadd.f32 %v125, %v716
  %v718 = vpop.f32.mrf.mxu0
  %v719 = vadd.f32 %v125, %v718
  %720 = vmatmul.bf16.gmra.mxu0 %v499
  %v721 = vpop.f32.mrf.mxu0
  %v722 = vadd.f32 %v125, %v721
  %v723 = vpop.f32.mrf.mxu0
  %v724 = vadd.f32 %v125, %v723
  %725 = vmatmul.bf16.gmra.mxu0 %v502
  %v726 = vpop.f32.mrf.mxu0
  %v727 = vadd.f32 %v125, %v726
  %v728 = vpop.f32.mrf.mxu0
  %v729 = vadd.f32 %v125, %v728
  %730 = vmatmul.bf16.gmra.mxu0 %v505
  %v731 = vpop.f32.mrf.mxu0
  %v732 = vadd.f32 %v125, %v731
  %v733 = vpop.f32.mrf.mxu0
  %v734 = vadd.f32 %v125, %v733
  %735 = vmatmul.bf16.gmra.mxu0 %v508
  %v736 = vpop.f32.mrf.mxu0
  %v737 = vadd.f32 %v125, %v736
  %v738 = vpop.f32.mrf.mxu0
  %v739 = vadd.f32 %v125, %v738
  %740 = vmatmul.bf16.gmra.mxu0 %v511
  %v741 = vpop.f32.mrf.mxu0
  %v742 = vadd.f32 %v125, %v741
  %v743 = vpop.f32.mrf.mxu0
  %v744 = vadd.f32 %v125, %v743
  %745 = vmatmul.bf16.gmra.mxu0 %v514
  %v746 = vpop.f32.mrf.mxu0
  %v747 = vadd.f32 %v125, %v746
  %v748 = vpop.f32.mrf.mxu0
  %v749 = vadd.f32 %v125, %v748
  %750 = vmatmul.bf16.gmra.mxu0 %v517
  %v751 = vpop.f32.mrf.mxu0
  %v752 = vadd.f32 %v125, %v751
  %v753 = vpop.f32.mrf.mxu0
  %v754 = vadd.f32 %v125, %v753
  %755 = vmatmul.bf16.gmra.mxu0 %v520
  %v756 = vpop.f32.mrf.mxu0
  %v757 = vadd.f32 %v125, %v756
  %v758 = vpop.f32.mrf.mxu0
  %v759 = vadd.f32 %v125, %v758
  %760 = vmatmul.bf16.gmra.mxu0 %v523
  %v761 = vpop.f32.mrf.mxu0
  %v762 = vadd.f32 %v125, %v761
  %v763 = vpop.f32.mrf.mxu0
  %v764 = vadd.f32 %v125, %v763
  %765 = vmatmul.bf16.gmra.mxu0 %v526
  %v766 = vpop.f32.mrf.mxu0
  %v767 = vadd.f32 %v125, %v766
  %v768 = vpop.f32.mrf.mxu0
  %v769 = vadd.f32 %v125, %v768
  %770 = vmatmul.bf16.gmra.mxu0 %v529
  %v771 = vpop.f32.mrf.mxu0
  %v772 = vadd.f32 %v125, %v771
  %v773 = vpop.f32.mrf.mxu0
  %v774 = vadd.f32 %v125, %v773
  %775 = vmatmul.bf16.gmra.mxu0 %v532
  %v776 = vpop.f32.mrf.mxu0
  %v777 = vadd.f32 %v125, %v776
  %v778 = vpop.f32.mrf.mxu0
  %v779 = vadd.f32 %v125, %v778
  %780 = vmatmul.bf16.gmra.mxu0 %v535
  %v781 = vpop.f32.mrf.mxu0
  %v782 = vadd.f32 %v125, %v781
  %v783 = vpop.f32.mrf.mxu0
  %v784 = vadd.f32 %v125, %v783
  %785 = vmatmul.bf16.gmra.mxu0 %v538
  %v786 = vpop.f32.mrf.mxu0
  %v787 = vadd.f32 %v125, %v786
  %v788 = vpop.f32.mrf.mxu0
  %v789 = vadd.f32 %v125, %v788
  %790 = vmatmul.bf16.gmra.mxu0 %v541
  %v791 = vpop.f32.mrf.mxu0
  %v792 = vadd.f32 %v125, %v791
  %v793 = vpop.f32.mrf.mxu0
  %v794 = vadd.f32 %v125, %v793
  %795 = vmatmul.bf16.gmra.mxu0 %v544
  %v796 = vpop.f32.mrf.mxu0
  %v797 = vadd.f32 %v125, %v796
  %v798 = vpop.f32.mrf.mxu0
  %v799 = vadd.f32 %v125, %v798
  %800 = vmatmul.bf16.gmra.mxu0 %v547
  %v801 = vpop.f32.mrf.mxu0
  %v802 = vadd.f32 %v125, %v801
  %v803 = vpop.f32.mrf.mxu0
  %v804 = vadd.f32 %v125, %v803
  %805 = vmatmul.bf16.gmra.mxu0 %v550
  %v806 = vpop.f32.mrf.mxu0
  %v807 = vadd.f32 %v125, %v806
  %v808 = vpop.f32.mrf.mxu0
  %v809 = vadd.f32 %v125, %v808
  %810 = vdwg.mxu0
  %v811 = vxor.u32 %v562, 2147483648
  %v812 = vxor.u32 %v564, 2147483648
  %v813 = vxor.u32 %v567, 2147483648
  %v814 = vxor.u32 %v569, 2147483648
  %v815 = vxor.u32 %v572, 2147483648
  %v816 = vxor.u32 %v574, 2147483648
  %v817 = vxor.u32 %v577, 2147483648
  %v818 = vxor.u32 %v579, 2147483648
  %v819 = vxor.u32 %v582, 2147483648
  %v820 = vxor.u32 %v584, 2147483648
  %v821 = vxor.u32 %v587, 2147483648
  %v822 = vxor.u32 %v589, 2147483648
  %v823 = vxor.u32 %v592, 2147483648
  %v824 = vxor.u32 %v594, 2147483648
  %v825 = vxor.u32 %v597, 2147483648
  %v826 = vxor.u32 %v599, 2147483648
  %v827 = vxor.u32 %v602, 2147483648
  %v828 = vxor.u32 %v604, 2147483648
  %v829 = vxor.u32 %v607, 2147483648
  %v830 = vxor.u32 %v609, 2147483648
  %v831 = vxor.u32 %v612, 2147483648
  %v832 = vxor.u32 %v614, 2147483648
  %v833 = vxor.u32 %v617, 2147483648
  %v834 = vxor.u32 %v619, 2147483648
  %v835 = vxor.u32 %v622, 2147483648
  %v836 = vxor.u32 %v624, 2147483648
  %v837 = vxor.u32 %v627, 2147483648
  %v838 = vxor.u32 %v629, 2147483648
  %v839 = vxor.u32 %v632, 2147483648
  %v840 = vxor.u32 %v634, 2147483648
  %v841 = vxor.u32 %v637, 2147483648
  %v842 = vxor.u32 %v639, 2147483648
  %v843 = vxor.u32 %v642, 2147483648
  %v844 = vxor.u32 %v644, 2147483648
  %v845 = vxor.u32 %v647, 2147483648
  %v846 = vxor.u32 %v649, 2147483648
  %v847 = vxor.u32 %v652, 2147483648
  %v848 = vxor.u32 %v654, 2147483648
  %v849 = vxor.u32 %v657, 2147483648
  %v850 = vxor.u32 %v659, 2147483648
  %v851 = vxor.u32 %v662, 2147483648
  %v852 = vxor.u32 %v664, 2147483648
  %v853 = vxor.u32 %v667, 2147483648
  %v854 = vxor.u32 %v669, 2147483648
  %v855 = vxor.u32 %v672, 2147483648
  %v856 = vxor.u32 %v674, 2147483648
  %v857 = vxor.u32 %v677, 2147483648
  %v858 = vxor.u32 %v679, 2147483648
  %v859 = vxor.u32 %v682, 2147483648
  %v860 = vxor.u32 %v684, 2147483648
  %v861 = vxor.u32 %v687, 2147483648
  %v862 = vxor.u32 %v689, 2147483648
  %v863 = vxor.u32 %v692, 2147483648
  %v864 = vxor.u32 %v694, 2147483648
  %v865 = vxor.u32 %v697, 2147483648
  %v866 = vxor.u32 %v699, 2147483648
  %v867 = vxor.u32 %v702, 2147483648
  %v868 = vxor.u32 %v704, 2147483648
  %v869 = vxor.u32 %v707, 2147483648
  %v870 = vxor.u32 %v709, 2147483648
  %v871 = vxor.u32 %v712, 2147483648
  %v872 = vxor.u32 %v714, 2147483648
  %v873 = vxor.u32 %v717, 2147483648
  %v874 = vxor.u32 %v719, 2147483648
  %v875 = vxor.u32 %v722, 2147483648
  %v876 = vxor.u32 %v724, 2147483648
  %v877 = vxor.u32 %v727, 2147483648
  %v878 = vxor.u32 %v729, 2147483648
  %v879 = vxor.u32 %v732, 2147483648
  %v880 = vxor.u32 %v734, 2147483648
  %v881 = vxor.u32 %v737, 2147483648
  %v882 = vxor.u32 %v739, 2147483648
  %v883 = vxor.u32 %v742, 2147483648
  %v884 = vxor.u32 %v744, 2147483648
  %v885 = vxor.u32 %v747, 2147483648
  %v886 = vxor.u32 %v749, 2147483648
  %v887 = vxor.u32 %v752, 2147483648
  %v888 = vxor.u32 %v754, 2147483648
  %v889 = vxor.u32 %v757, 2147483648
  %v890 = vxor.u32 %v759, 2147483648
  %v891 = vxor.u32 %v762, 2147483648
  %v892 = vxor.u32 %v764, 2147483648
  %v893 = vxor.u32 %v767, 2147483648
  %v894 = vxor.u32 %v769, 2147483648
  %v895 = vxor.u32 %v772, 2147483648
  %v896 = vxor.u32 %v774, 2147483648
  %v897 = vxor.u32 %v777, 2147483648
  %v898 = vxor.u32 %v779, 2147483648
  %v899 = vxor.u32 %v782, 2147483648
  %v900 = vxor.u32 %v784, 2147483648
  %v901 = vxor.u32 %v787, 2147483648
  %v902 = vxor.u32 %v789, 2147483648
  %v903 = vxor.u32 %v792, 2147483648
  %v904 = vxor.u32 %v794, 2147483648
  %v905 = vxor.u32 %v797, 2147483648
  %v906 = vxor.u32 %v799, 2147483648
  %v907 = vxor.u32 %v802, 2147483648
  %v908 = vxor.u32 %v804, 2147483648
  %v909 = vxor.u32 %v807, 2147483648
  %v910 = vxor.u32 %v809, 2147483648
  %v911 = vmul.f32 %v811, 1.442695
  %v912 = vpow.pop %v911
  %v913 = vmul.f32 %v812, 1.442695
  %v914 = vpow.pop %v913
  %v915 = vmul.f32 %v813, 1.442695
  %v916 = vpow.pop %v915
  %v917 = vmul.f32 %v814, 1.442695
  %v918 = vpow.pop %v917
  %v919 = vmul.f32 %v815, 1.442695
  %v920 = vpow.pop %v919
  %v921 = vmul.f32 %v816, 1.442695
  %v922 = vpow.pop %v921
  %v923 = vmul.f32 %v817, 1.442695
  %v924 = vpow.pop %v923
  %v925 = vmul.f32 %v818, 1.442695
  %v926 = vpow.pop %v925
  %v927 = vmul.f32 %v819, 1.442695
  %v928 = vpow.pop %v927
  %v929 = vmul.f32 %v820, 1.442695
  %v930 = vpow.pop %v929
  %v931 = vmul.f32 %v821, 1.442695
  %v932 = vpow.pop %v931
  %v933 = vmul.f32 %v822, 1.442695
  %v934 = vpow.pop %v933
  %v935 = vmul.f32 %v823, 1.442695
  %v936 = vpow.pop %v935
  %v937 = vmul.f32 %v824, 1.442695
  %v938 = vpow.pop %v937
  %v939 = vmul.f32 %v825, 1.442695
  %v940 = vpow.pop %v939
  %v941 = vmul.f32 %v826, 1.442695
  %v942 = vpow.pop %v941
  %v943 = vmul.f32 %v827, 1.442695
  %v944 = vpow.pop %v943
  %v945 = vmul.f32 %v828, 1.442695
  %v946 = vpow.pop %v945
  %v947 = vmul.f32 %v829, 1.442695
  %v948 = vpow.pop %v947
  %v949 = vmul.f32 %v830, 1.442695
  %v950 = vpow.pop %v949
  %v951 = vmul.f32 %v831, 1.442695
  %v952 = vpow.pop %v951
  %v953 = vmul.f32 %v832, 1.442695
  %v954 = vpow.pop %v953
  %v955 = vmul.f32 %v833, 1.442695
  %v956 = vpow.pop %v955
  %v957 = vmul.f32 %v834, 1.442695
  %v958 = vpow.pop %v957
  %v959 = vmul.f32 %v835, 1.442695
  %v960 = vpow.pop %v959
  %v961 = vmul.f32 %v836, 1.442695
  %v962 = vpow.pop %v961
  %v963 = vmul.f32 %v837, 1.442695
  %v964 = vpow.pop %v963
  %v965 = vmul.f32 %v838, 1.442695
  %v966 = vpow.pop %v965
  %v967 = vmul.f32 %v839, 1.442695
  %v968 = vpow.pop %v967
  %v969 = vmul.f32 %v840, 1.442695
  %v970 = vpow.pop %v969
  %v971 = vmul.f32 %v841, 1.442695
  %v972 = vpow.pop %v971
  %v973 = vmul.f32 %v842, 1.442695
  %v974 = vpow.pop %v973
  %v975 = vmul.f32 %v843, 1.442695
  %v976 = vpow.pop %v975
  %v977 = vmul.f32 %v844, 1.442695
  %v978 = vpow.pop %v977
  %v979 = vmul.f32 %v845, 1.442695
  %v980 = vpow.pop %v979
  %v981 = vmul.f32 %v846, 1.442695
  %v982 = vpow.pop %v981
  %v983 = vmul.f32 %v847, 1.442695
  %v984 = vpow.pop %v983
  %v985 = vmul.f32 %v848, 1.442695
  %v986 = vpow.pop %v985
  %v987 = vmul.f32 %v849, 1.442695
  %v988 = vpow.pop %v987
  %v989 = vmul.f32 %v850, 1.442695
  %v990 = vpow.pop %v989
  %v991 = vmul.f32 %v851, 1.442695
  %v992 = vpow.pop %v991
  %v993 = vmul.f32 %v852, 1.442695
  %v994 = vpow.pop %v993
  %v995 = vmul.f32 %v853, 1.442695
  %v996 = vpow.pop %v995
  %v997 = vmul.f32 %v854, 1.442695
  %v998 = vpow.pop %v997
  %v999 = vmul.f32 %v855, 1.442695
  %v1000 = vpow.pop %v999
  %v1001 = vmul.f32 %v856, 1.442695
  %v1002 = vpow.pop %v1001
  %v1003 = vmul.f32 %v857, 1.442695
  %v1004 = vpow.pop %v1003
  %v1005 = vmul.f32 %v858, 1.442695
  %v1006 = vpow.pop %v1005
  %v1007 = vmul.f32 %v859, 1.442695
  %v1008 = vpow.pop %v1007
  %v1009 = vmul.f32 %v860, 1.442695
  %v1010 = vpow.pop %v1009
  %v1011 = vmul.f32 %v861, 1.442695
  %v1012 = vpow.pop %v1011
  %v1013 = vmul.f32 %v862, 1.442695
  %v1014 = vpow.pop %v1013
  %v1015 = vmul.f32 %v863, 1.442695
  %v1016 = vpow.pop %v1015
  %v1017 = vmul.f32 %v864, 1.442695
  %v1018 = vpow.pop %v1017
  %v1019 = vmul.f32 %v865, 1.442695
  %v1020 = vpow.pop %v1019
  %v1021 = vmul.f32 %v866, 1.442695
  %v1022 = vpow.pop %v1021
  %v1023 = vmul.f32 %v867, 1.442695
  %v1024 = vpow.pop %v1023
  %v1025 = vmul.f32 %v868, 1.442695
  %v1026 = vpow.pop %v1025
  %v1027 = vmul.f32 %v869, 1.442695
  %v1028 = vpow.pop %v1027
  %v1029 = vmul.f32 %v870, 1.442695
  %v1030 = vpow.pop %v1029
  %v1031 = vmul.f32 %v871, 1.442695
  %v1032 = vpow.pop %v1031
  %v1033 = vmul.f32 %v872, 1.442695
  %v1034 = vpow.pop %v1033
  %v1035 = vmul.f32 %v873, 1.442695
  %v1036 = vpow.pop %v1035
  %v1037 = vmul.f32 %v874, 1.442695
  %v1038 = vpow.pop %v1037
  %v1039 = vmul.f32 %v875, 1.442695
  %v1040 = vpow.pop %v1039
  %v1041 = vmul.f32 %v876, 1.442695
  %v1042 = vpow.pop %v1041
  %v1043 = vmul.f32 %v877, 1.442695
  %v1044 = vpow.pop %v1043
  %v1045 = vmul.f32 %v878, 1.442695
  %v1046 = vpow.pop %v1045
  %v1047 = vmul.f32 %v879, 1.442695
  %v1048 = vpow.pop %v1047
  %v1049 = vmul.f32 %v880, 1.442695
  %v1050 = vpow.pop %v1049
  %v1051 = vmul.f32 %v881, 1.442695
  %v1052 = vpow.pop %v1051
  %v1053 = vmul.f32 %v882, 1.442695
  %v1054 = vpow.pop %v1053
  %v1055 = vmul.f32 %v883, 1.442695
  %v1056 = vpow.pop %v1055
  %v1057 = vmul.f32 %v884, 1.442695
  %v1058 = vpow.pop %v1057
  %v1059 = vmul.f32 %v885, 1.442695
  %v1060 = vpow.pop %v1059
  %v1061 = vmul.f32 %v886, 1.442695
  %v1062 = vpow.pop %v1061
  %v1063 = vmul.f32 %v887, 1.442695
  %v1064 = vpow.pop %v1063
  %v1065 = vmul.f32 %v888, 1.442695
  %v1066 = vpow.pop %v1065
  %v1067 = vmul.f32 %v889, 1.442695
  %v1068 = vpow.pop %v1067
  %v1069 = vmul.f32 %v890, 1.442695
  %v1070 = vpow.pop %v1069
  %v1071 = vmul.f32 %v891, 1.442695
  %v1072 = vpow.pop %v1071
  %v1073 = vmul.f32 %v892, 1.442695
  %v1074 = vpow.pop %v1073
  %v1075 = vmul.f32 %v893, 1.442695
  %v1076 = vpow.pop %v1075
  %v1077 = vmul.f32 %v894, 1.442695
  %v1078 = vpow.pop %v1077
  %v1079 = vmul.f32 %v895, 1.442695
  %v1080 = vpow.pop %v1079
  %v1081 = vmul.f32 %v896, 1.442695
  %v1082 = vpow.pop %v1081
  %v1083 = vmul.f32 %v897, 1.442695
  %v1084 = vpow.pop %v1083
  %v1085 = vmul.f32 %v898, 1.442695
  %v1086 = vpow.pop %v1085
  %v1087 = vmul.f32 %v899, 1.442695
  %v1088 = vpow.pop %v1087
  %v1089 = vmul.f32 %v900, 1.442695
  %v1090 = vpow.pop %v1089
  %v1091 = vmul.f32 %v901, 1.442695
  %v1092 = vpow.pop %v1091
  %v1093 = vmul.f32 %v902, 1.442695
  %v1094 = vpow.pop %v1093
  %v1095 = vmul.f32 %v903, 1.442695
  %v1096 = vpow.pop %v1095
  %v1097 = vmul.f32 %v904, 1.442695
  %v1098 = vpow.pop %v1097
  %v1099 = vmul.f32 %v905, 1.442695
  %v1100 = vpow.pop %v1099
  %v1101 = vmul.f32 %v906, 1.442695
  %v1102 = vpow.pop %v1101
  %v1103 = vmul.f32 %v907, 1.442695
  %v1104 = vpow.pop %v1103
  %v1105 = vmul.f32 %v908, 1.442695
  %v1106 = vpow.pop %v1105
  %v1107 = vmul.f32 %v909, 1.442695
  %v1108 = vpow.pop %v1107
  %v1109 = vmul.f32 %v910, 1.442695
  %v1110 = vpow.pop %v1109
  %v1111 = vadd.f32 %v912, 1.0
  %v1112 = vadd.f32 %v914, 1.0
  %v1113 = vadd.f32 %v916, 1.0
  %v1114 = vadd.f32 %v918, 1.0
  %v1115 = vadd.f32 %v920, 1.0
  %v1116 = vadd.f32 %v922, 1.0
  %v1117 = vadd.f32 %v924, 1.0
  %v1118 = vadd.f32 %v926, 1.0
  %v1119 = vadd.f32 %v928, 1.0
  %v1120 = vadd.f32 %v930, 1.0
  %v1121 = vadd.f32 %v932, 1.0
  %v1122 = vadd.f32 %v934, 1.0
  %v1123 = vadd.f32 %v936, 1.0
  %v1124 = vadd.f32 %v938, 1.0
  %v1125 = vadd.f32 %v940, 1.0
  %v1126 = vadd.f32 %v942, 1.0
  %v1127 = vadd.f32 %v944, 1.0
  %v1128 = vadd.f32 %v946, 1.0
  %v1129 = vadd.f32 %v948, 1.0
  %v1130 = vadd.f32 %v950, 1.0
  %v1131 = vadd.f32 %v952, 1.0
  %v1132 = vadd.f32 %v954, 1.0
  %v1133 = vadd.f32 %v956, 1.0
  %v1134 = vadd.f32 %v958, 1.0
  %v1135 = vadd.f32 %v960, 1.0
  %v1136 = vadd.f32 %v962, 1.0
  %v1137 = vadd.f32 %v964, 1.0
  %v1138 = vadd.f32 %v966, 1.0
  %v1139 = vadd.f32 %v968, 1.0
  %v1140 = vadd.f32 %v970, 1.0
  %v1141 = vadd.f32 %v972, 1.0
  %v1142 = vadd.f32 %v974, 1.0
  %v1143 = vadd.f32 %v976, 1.0
  %v1144 = vadd.f32 %v978, 1.0
  %v1145 = vadd.f32 %v980, 1.0
  %v1146 = vadd.f32 %v982, 1.0
  %v1147 = vadd.f32 %v984, 1.0
  %v1148 = vadd.f32 %v986, 1.0
  %v1149 = vadd.f32 %v988, 1.0
  %v1150 = vadd.f32 %v990, 1.0
  %v1151 = vadd.f32 %v992, 1.0
  %v1152 = vadd.f32 %v994, 1.0
  %v1153 = vadd.f32 %v996, 1.0
  %v1154 = vadd.f32 %v998, 1.0
  %v1155 = vadd.f32 %v1000, 1.0
  %v1156 = vadd.f32 %v1002, 1.0
  %v1157 = vadd.f32 %v1004, 1.0
  %v1158 = vadd.f32 %v1006, 1.0
  %v1159 = vadd.f32 %v1008, 1.0
  %v1160 = vadd.f32 %v1010, 1.0
  %v1161 = vadd.f32 %v1012, 1.0
  %v1162 = vadd.f32 %v1014, 1.0
  %v1163 = vadd.f32 %v1016, 1.0
  %v1164 = vadd.f32 %v1018, 1.0
  %v1165 = vadd.f32 %v1020, 1.0
  %v1166 = vadd.f32 %v1022, 1.0
  %v1167 = vadd.f32 %v1024, 1.0
  %v1168 = vadd.f32 %v1026, 1.0
  %v1169 = vadd.f32 %v1028, 1.0
  %v1170 = vadd.f32 %v1030, 1.0
  %v1171 = vadd.f32 %v1032, 1.0
  %v1172 = vadd.f32 %v1034, 1.0
  %v1173 = vadd.f32 %v1036, 1.0
  %v1174 = vadd.f32 %v1038, 1.0
  %v1175 = vadd.f32 %v1040, 1.0
  %v1176 = vadd.f32 %v1042, 1.0
  %v1177 = vadd.f32 %v1044, 1.0
  %v1178 = vadd.f32 %v1046, 1.0
  %v1179 = vadd.f32 %v1048, 1.0
  %v1180 = vadd.f32 %v1050, 1.0
  %v1181 = vadd.f32 %v1052, 1.0
  %v1182 = vadd.f32 %v1054, 1.0
  %v1183 = vadd.f32 %v1056, 1.0
  %v1184 = vadd.f32 %v1058, 1.0
  %v1185 = vadd.f32 %v1060, 1.0
  %v1186 = vadd.f32 %v1062, 1.0
  %v1187 = vadd.f32 %v1064, 1.0
  %v1188 = vadd.f32 %v1066, 1.0
  %v1189 = vadd.f32 %v1068, 1.0
  %v1190 = vadd.f32 %v1070, 1.0
  %v1191 = vadd.f32 %v1072, 1.0
  %v1192 = vadd.f32 %v1074, 1.0
  %v1193 = vadd.f32 %v1076, 1.0
  %v1194 = vadd.f32 %v1078, 1.0
  %v1195 = vadd.f32 %v1080, 1.0
  %v1196 = vadd.f32 %v1082, 1.0
  %v1197 = vadd.f32 %v1084, 1.0
  %v1198 = vadd.f32 %v1086, 1.0
  %v1199 = vadd.f32 %v1088, 1.0
  %v1200 = vadd.f32 %v1090, 1.0
  %v1201 = vadd.f32 %v1092, 1.0
  %v1202 = vadd.f32 %v1094, 1.0
  %v1203 = vadd.f32 %v1096, 1.0
  %v1204 = vadd.f32 %v1098, 1.0
  %v1205 = vadd.f32 %v1100, 1.0
  %v1206 = vadd.f32 %v1102, 1.0
  %v1207 = vadd.f32 %v1104, 1.0
  %v1208 = vadd.f32 %v1106, 1.0
  %v1209 = vadd.f32 %v1108, 1.0
  %v1210 = vadd.f32 %v1110, 1.0
  %v1211 = vrcp.pop %v1111
  %v1212 = vmul.f32 %v1111, %v1211
  %v1213 = vsub.f32 1.0, %v1212
  %v1214 = vmul.f32 %v1211, %v1213
  %v1215 = vadd.f32 %v1211, %v1214
  %vm1216 = vweird.f32 %v1111
  %vm1217 = vweird.f32 %v1211
  %vm1218 = vmor %vm1216, %vm1217
  %v1219 = vsel %vm1218, %v1211, %v1215
  %v1220 = vand.u32 2147483647, %v1111
  %vm1221 = vcmp.eq.f32.partialorder %v1220, 8.507059e+37
  %v1222 = vand.u32 %v1111, 2147483648
  %v1223 = vor.u32 1.1754944e-38, %v1222
  %v1224 = vsel %vm1221, %v1223, %v1219
  %v1225 = vmul.f32 1.0, %v1224
  %v1226 = vrcp.pop %v1112
  %v1227 = vmul.f32 %v1112, %v1226
  %v1228 = vsub.f32 1.0, %v1227
  %v1229 = vmul.f32 %v1226, %v1228
  %v1230 = vadd.f32 %v1226, %v1229
  %vm1231 = vweird.f32 %v1112
  %vm1232 = vweird.f32 %v1226
  %vm1233 = vmor %vm1231, %vm1232
  %v1234 = vsel %vm1233, %v1226, %v1230
  %v1235 = vand.u32 2147483647, %v1112
  %vm1236 = vcmp.eq.f32.partialorder %v1235, 8.507059e+37
  %v1237 = vand.u32 %v1112, 2147483648
  %v1238 = vor.u32 1.1754944e-38, %v1237
  %v1239 = vsel %vm1236, %v1238, %v1234
  %v1240 = vmul.f32 1.0, %v1239
  %v1241 = vrcp.pop %v1113
  %v1242 = vmul.f32 %v1113, %v1241
  %v1243 = vsub.f32 1.0, %v1242
  %v1244 = vmul.f32 %v1241, %v1243
  %v1245 = vadd.f32 %v1241, %v1244
  %vm1246 = vweird.f32 %v1113
  %vm1247 = vweird.f32 %v1241
  %vm1248 = vmor %vm1246, %vm1247
  %v1249 = vsel %vm1248, %v1241, %v1245
  %v1250 = vand.u32 2147483647, %v1113
  %vm1251 = vcmp.eq.f32.partialorder %v1250, 8.507059e+37
  %v1252 = vand.u32 %v1113, 2147483648
  %v1253 = vor.u32 1.1754944e-38, %v1252
  %v1254 = vsel %vm1251, %v1253, %v1249
  %v1255 = vmul.f32 1.0, %v1254
  %v1256 = vrcp.pop %v1114
  %v1257 = vmul.f32 %v1114, %v1256
  %v1258 = vsub.f32 1.0, %v1257
  %v1259 = vmul.f32 %v1256, %v1258
  %v1260 = vadd.f32 %v1256, %v1259
  %vm1261 = vweird.f32 %v1114
  %vm1262 = vweird.f32 %v1256
  %vm1263 = vmor %vm1261, %vm1262
  %v1264 = vsel %vm1263, %v1256, %v1260
  %v1265 = vand.u32 2147483647, %v1114
  %vm1266 = vcmp.eq.f32.partialorder %v1265, 8.507059e+37
  %v1267 = vand.u32 %v1114, 2147483648
  %v1268 = vor.u32 1.1754944e-38, %v1267
  %v1269 = vsel %vm1266, %v1268, %v1264
  %v1270 = vmul.f32 1.0, %v1269
  %v1271 = vrcp.pop %v1115
  %v1272 = vmul.f32 %v1115, %v1271
  %v1273 = vsub.f32 1.0, %v1272
  %v1274 = vmul.f32 %v1271, %v1273
  %v1275 = vadd.f32 %v1271, %v1274
  %vm1276 = vweird.f32 %v1115
  %vm1277 = vweird.f32 %v1271
  %vm1278 = vmor %vm1276, %vm1277
  %v1279 = vsel %vm1278, %v1271, %v1275
  %v1280 = vand.u32 2147483647, %v1115
  %vm1281 = vcmp.eq.f32.partialorder %v1280, 8.507059e+37
  %v1282 = vand.u32 %v1115, 2147483648
  %v1283 = vor.u32 1.1754944e-38, %v1282
  %v1284 = vsel %vm1281, %v1283, %v1279
  %v1285 = vmul.f32 1.0, %v1284
  %v1286 = vrcp.pop %v1116
  %v1287 = vmul.f32 %v1116, %v1286
  %v1288 = vsub.f32 1.0, %v1287
  %v1289 = vmul.f32 %v1286, %v1288
  %v1290 = vadd.f32 %v1286, %v1289
  %vm1291 = vweird.f32 %v1116
  %vm1292 = vweird.f32 %v1286
  %vm1293 = vmor %vm1291, %vm1292
  %v1294 = vsel %vm1293, %v1286, %v1290
  %v1295 = vand.u32 2147483647, %v1116
  %vm1296 = vcmp.eq.f32.partialorder %v1295, 8.507059e+37
  %v1297 = vand.u32 %v1116, 2147483648
  %v1298 = vor.u32 1.1754944e-38, %v1297
  %v1299 = vsel %vm1296, %v1298, %v1294
  %v1300 = vmul.f32 1.0, %v1299
  %v1301 = vrcp.pop %v1117
  %v1302 = vmul.f32 %v1117, %v1301
  %v1303 = vsub.f32 1.0, %v1302
  %v1304 = vmul.f32 %v1301, %v1303
  %v1305 = vadd.f32 %v1301, %v1304
  %vm1306 = vweird.f32 %v1117
  %vm1307 = vweird.f32 %v1301
  %vm1308 = vmor %vm1306, %vm1307
  %v1309 = vsel %vm1308, %v1301, %v1305
  %v1310 = vand.u32 2147483647, %v1117
  %vm1311 = vcmp.eq.f32.partialorder %v1310, 8.507059e+37
  %v1312 = vand.u32 %v1117, 2147483648
  %v1313 = vor.u32 1.1754944e-38, %v1312
  %v1314 = vsel %vm1311, %v1313, %v1309
  %v1315 = vmul.f32 1.0, %v1314
  %v1316 = vrcp.pop %v1118
  %v1317 = vmul.f32 %v1118, %v1316
  %v1318 = vsub.f32 1.0, %v1317
  %v1319 = vmul.f32 %v1316, %v1318
  %v1320 = vadd.f32 %v1316, %v1319
  %vm1321 = vweird.f32 %v1118
  %vm1322 = vweird.f32 %v1316
  %vm1323 = vmor %vm1321, %vm1322
  %v1324 = vsel %vm1323, %v1316, %v1320
  %v1325 = vand.u32 2147483647, %v1118
  %vm1326 = vcmp.eq.f32.partialorder %v1325, 8.507059e+37
  %v1327 = vand.u32 %v1118, 2147483648
  %v1328 = vor.u32 1.1754944e-38, %v1327
  %v1329 = vsel %vm1326, %v1328, %v1324
  %v1330 = vmul.f32 1.0, %v1329
  %v1331 = vrcp.pop %v1119
  %v1332 = vmul.f32 %v1119, %v1331
  %v1333 = vsub.f32 1.0, %v1332
  %v1334 = vmul.f32 %v1331, %v1333
  %v1335 = vadd.f32 %v1331, %v1334
  %vm1336 = vweird.f32 %v1119
  %vm1337 = vweird.f32 %v1331
  %vm1338 = vmor %vm1336, %vm1337
  %v1339 = vsel %vm1338, %v1331, %v1335
  %v1340 = vand.u32 2147483647, %v1119
  %vm1341 = vcmp.eq.f32.partialorder %v1340, 8.507059e+37
  %v1342 = vand.u32 %v1119, 2147483648
  %v1343 = vor.u32 1.1754944e-38, %v1342
  %v1344 = vsel %vm1341, %v1343, %v1339
  %v1345 = vmul.f32 1.0, %v1344
  %v1346 = vrcp.pop %v1120
  %v1347 = vmul.f32 %v1120, %v1346
  %v1348 = vsub.f32 1.0, %v1347
  %v1349 = vmul.f32 %v1346, %v1348
  %v1350 = vadd.f32 %v1346, %v1349
  %vm1351 = vweird.f32 %v1120
  %vm1352 = vweird.f32 %v1346
  %vm1353 = vmor %vm1351, %vm1352
  %v1354 = vsel %vm1353, %v1346, %v1350
  %v1355 = vand.u32 2147483647, %v1120
  %vm1356 = vcmp.eq.f32.partialorder %v1355, 8.507059e+37
  %v1357 = vand.u32 %v1120, 2147483648
  %v1358 = vor.u32 1.1754944e-38, %v1357
  %v1359 = vsel %vm1356, %v1358, %v1354
  %v1360 = vmul.f32 1.0, %v1359
  %v1361 = vrcp.pop %v1121
  %v1362 = vmul.f32 %v1121, %v1361
  %v1363 = vsub.f32 1.0, %v1362
  %v1364 = vmul.f32 %v1361, %v1363
  %v1365 = vadd.f32 %v1361, %v1364
  %vm1366 = vweird.f32 %v1121
  %vm1367 = vweird.f32 %v1361
  %vm1368 = vmor %vm1366, %vm1367
  %v1369 = vsel %vm1368, %v1361, %v1365
  %v1370 = vand.u32 2147483647, %v1121
  %vm1371 = vcmp.eq.f32.partialorder %v1370, 8.507059e+37
  %v1372 = vand.u32 %v1121, 2147483648
  %v1373 = vor.u32 1.1754944e-38, %v1372
  %v1374 = vsel %vm1371, %v1373, %v1369
  %v1375 = vmul.f32 1.0, %v1374
  %v1376 = vrcp.pop %v1122
  %v1377 = vmul.f32 %v1122, %v1376
  %v1378 = vsub.f32 1.0, %v1377
  %v1379 = vmul.f32 %v1376, %v1378
  %v1380 = vadd.f32 %v1376, %v1379
  %vm1381 = vweird.f32 %v1122
  %vm1382 = vweird.f32 %v1376
  %vm1383 = vmor %vm1381, %vm1382
  %v1384 = vsel %vm1383, %v1376, %v1380
  %v1385 = vand.u32 2147483647, %v1122
  %vm1386 = vcmp.eq.f32.partialorder %v1385, 8.507059e+37
  %v1387 = vand.u32 %v1122, 2147483648
  %v1388 = vor.u32 1.1754944e-38, %v1387
  %v1389 = vsel %vm1386, %v1388, %v1384
  %v1390 = vmul.f32 1.0, %v1389
  %v1391 = vrcp.pop %v1123
  %v1392 = vmul.f32 %v1123, %v1391
  %v1393 = vsub.f32 1.0, %v1392
  %v1394 = vmul.f32 %v1391, %v1393
  %v1395 = vadd.f32 %v1391, %v1394
  %vm1396 = vweird.f32 %v1123
  %vm1397 = vweird.f32 %v1391
  %vm1398 = vmor %vm1396, %vm1397
  %v1399 = vsel %vm1398, %v1391, %v1395
  %v1400 = vand.u32 2147483647, %v1123
  %vm1401 = vcmp.eq.f32.partialorder %v1400, 8.507059e+37
  %v1402 = vand.u32 %v1123, 2147483648
  %v1403 = vor.u32 1.1754944e-38, %v1402
  %v1404 = vsel %vm1401, %v1403, %v1399
  %v1405 = vmul.f32 1.0, %v1404
  %v1406 = vrcp.pop %v1124
  %v1407 = vmul.f32 %v1124, %v1406
  %v1408 = vsub.f32 1.0, %v1407
  %v1409 = vmul.f32 %v1406, %v1408
  %v1410 = vadd.f32 %v1406, %v1409
  %vm1411 = vweird.f32 %v1124
  %vm1412 = vweird.f32 %v1406
  %vm1413 = vmor %vm1411, %vm1412
  %v1414 = vsel %vm1413, %v1406, %v1410
  %v1415 = vand.u32 2147483647, %v1124
  %vm1416 = vcmp.eq.f32.partialorder %v1415, 8.507059e+37
  %v1417 = vand.u32 %v1124, 2147483648
  %v1418 = vor.u32 1.1754944e-38, %v1417
  %v1419 = vsel %vm1416, %v1418, %v1414
  %v1420 = vmul.f32 1.0, %v1419
  %v1421 = vrcp.pop %v1125
  %v1422 = vmul.f32 %v1125, %v1421
  %v1423 = vsub.f32 1.0, %v1422
  %v1424 = vmul.f32 %v1421, %v1423
  %v1425 = vadd.f32 %v1421, %v1424
  %vm1426 = vweird.f32 %v1125
  %vm1427 = vweird.f32 %v1421
  %vm1428 = vmor %vm1426, %vm1427
  %v1429 = vsel %vm1428, %v1421, %v1425
  %v1430 = vand.u32 2147483647, %v1125
  %vm1431 = vcmp.eq.f32.partialorder %v1430, 8.507059e+37
  %v1432 = vand.u32 %v1125, 2147483648
  %v1433 = vor.u32 1.1754944e-38, %v1432
  %v1434 = vsel %vm1431, %v1433, %v1429
  %v1435 = vmul.f32 1.0, %v1434
  %v1436 = vrcp.pop %v1126
  %v1437 = vmul.f32 %v1126, %v1436
  %v1438 = vsub.f32 1.0, %v1437
  %v1439 = vmul.f32 %v1436, %v1438
  %v1440 = vadd.f32 %v1436, %v1439
  %vm1441 = vweird.f32 %v1126
  %vm1442 = vweird.f32 %v1436
  %vm1443 = vmor %vm1441, %vm1442
  %v1444 = vsel %vm1443, %v1436, %v1440
  %v1445 = vand.u32 2147483647, %v1126
  %vm1446 = vcmp.eq.f32.partialorder %v1445, 8.507059e+37
  %v1447 = vand.u32 %v1126, 2147483648
  %v1448 = vor.u32 1.1754944e-38, %v1447
  %v1449 = vsel %vm1446, %v1448, %v1444
  %v1450 = vmul.f32 1.0, %v1449
  %v1451 = vrcp.pop %v1127
  %v1452 = vmul.f32 %v1127, %v1451
  %v1453 = vsub.f32 1.0, %v1452
  %v1454 = vmul.f32 %v1451, %v1453
  %v1455 = vadd.f32 %v1451, %v1454
  %vm1456 = vweird.f32 %v1127
  %vm1457 = vweird.f32 %v1451
  %vm1458 = vmor %vm1456, %vm1457
  %v1459 = vsel %vm1458, %v1451, %v1455
  %v1460 = vand.u32 2147483647, %v1127
  %vm1461 = vcmp.eq.f32.partialorder %v1460, 8.507059e+37
  %v1462 = vand.u32 %v1127, 2147483648
  %v1463 = vor.u32 1.1754944e-38, %v1462
  %v1464 = vsel %vm1461, %v1463, %v1459
  %v1465 = vmul.f32 1.0, %v1464
  %v1466 = vrcp.pop %v1128
  %v1467 = vmul.f32 %v1128, %v1466
  %v1468 = vsub.f32 1.0, %v1467
  %v1469 = vmul.f32 %v1466, %v1468
  %v1470 = vadd.f32 %v1466, %v1469
  %vm1471 = vweird.f32 %v1128
  %vm1472 = vweird.f32 %v1466
  %vm1473 = vmor %vm1471, %vm1472
  %v1474 = vsel %vm1473, %v1466, %v1470
  %v1475 = vand.u32 2147483647, %v1128
  %vm1476 = vcmp.eq.f32.partialorder %v1475, 8.507059e+37
  %v1477 = vand.u32 %v1128, 2147483648
  %v1478 = vor.u32 1.1754944e-38, %v1477
  %v1479 = vsel %vm1476, %v1478, %v1474
  %v1480 = vmul.f32 1.0, %v1479
  %v1481 = vrcp.pop %v1129
  %v1482 = vmul.f32 %v1129, %v1481
  %v1483 = vsub.f32 1.0, %v1482
  %v1484 = vmul.f32 %v1481, %v1483
  %v1485 = vadd.f32 %v1481, %v1484
  %vm1486 = vweird.f32 %v1129
  %vm1487 = vweird.f32 %v1481
  %vm1488 = vmor %vm1486, %vm1487
  %v1489 = vsel %vm1488, %v1481, %v1485
  %v1490 = vand.u32 2147483647, %v1129
  %vm1491 = vcmp.eq.f32.partialorder %v1490, 8.507059e+37
  %v1492 = vand.u32 %v1129, 2147483648
  %v1493 = vor.u32 1.1754944e-38, %v1492
  %v1494 = vsel %vm1491, %v1493, %v1489
  %v1495 = vmul.f32 1.0, %v1494
  %v1496 = vrcp.pop %v1130
  %v1497 = vmul.f32 %v1130, %v1496
  %v1498 = vsub.f32 1.0, %v1497
  %v1499 = vmul.f32 %v1496, %v1498
  %v1500 = vadd.f32 %v1496, %v1499
  %vm1501 = vweird.f32 %v1130
  %vm1502 = vweird.f32 %v1496
  %vm1503 = vmor %vm1501, %vm1502
  %v1504 = vsel %vm1503, %v1496, %v1500
  %v1505 = vand.u32 2147483647, %v1130
  %vm1506 = vcmp.eq.f32.partialorder %v1505, 8.507059e+37
  %v1507 = vand.u32 %v1130, 2147483648
  %v1508 = vor.u32 1.1754944e-38, %v1507
  %v1509 = vsel %vm1506, %v1508, %v1504
  %v1510 = vmul.f32 1.0, %v1509
  %v1511 = vrcp.pop %v1131
  %v1512 = vmul.f32 %v1131, %v1511
  %v1513 = vsub.f32 1.0, %v1512
  %v1514 = vmul.f32 %v1511, %v1513
  %v1515 = vadd.f32 %v1511, %v1514
  %vm1516 = vweird.f32 %v1131
  %vm1517 = vweird.f32 %v1511
  %vm1518 = vmor %vm1516, %vm1517
  %v1519 = vsel %vm1518, %v1511, %v1515
  %v1520 = vand.u32 2147483647, %v1131
  %vm1521 = vcmp.eq.f32.partialorder %v1520, 8.507059e+37
  %v1522 = vand.u32 %v1131, 2147483648
  %v1523 = vor.u32 1.1754944e-38, %v1522
  %v1524 = vsel %vm1521, %v1523, %v1519
  %v1525 = vmul.f32 1.0, %v1524
  %v1526 = vrcp.pop %v1132
  %v1527 = vmul.f32 %v1132, %v1526
  %v1528 = vsub.f32 1.0, %v1527
  %v1529 = vmul.f32 %v1526, %v1528
  %v1530 = vadd.f32 %v1526, %v1529
  %vm1531 = vweird.f32 %v1132
  %vm1532 = vweird.f32 %v1526
  %vm1533 = vmor %vm1531, %vm1532
  %v1534 = vsel %vm1533, %v1526, %v1530
  %v1535 = vand.u32 2147483647, %v1132
  %vm1536 = vcmp.eq.f32.partialorder %v1535, 8.507059e+37
  %v1537 = vand.u32 %v1132, 2147483648
  %v1538 = vor.u32 1.1754944e-38, %v1537
  %v1539 = vsel %vm1536, %v1538, %v1534
  %v1540 = vmul.f32 1.0, %v1539
  %v1541 = vrcp.pop %v1133
  %v1542 = vmul.f32 %v1133, %v1541
  %v1543 = vsub.f32 1.0, %v1542
  %v1544 = vmul.f32 %v1541, %v1543
  %v1545 = vadd.f32 %v1541, %v1544
  %vm1546 = vweird.f32 %v1133
  %vm1547 = vweird.f32 %v1541
  %vm1548 = vmor %vm1546, %vm1547
  %v1549 = vsel %vm1548, %v1541, %v1545
  %v1550 = vand.u32 2147483647, %v1133
  %vm1551 = vcmp.eq.f32.partialorder %v1550, 8.507059e+37
  %v1552 = vand.u32 %v1133, 2147483648
  %v1553 = vor.u32 1.1754944e-38, %v1552
  %v1554 = vsel %vm1551, %v1553, %v1549
  %v1555 = vmul.f32 1.0, %v1554
  %v1556 = vrcp.pop %v1134
  %v1557 = vmul.f32 %v1134, %v1556
  %v1558 = vsub.f32 1.0, %v1557
  %v1559 = vmul.f32 %v1556, %v1558
  %v1560 = vadd.f32 %v1556, %v1559
  %vm1561 = vweird.f32 %v1134
  %vm1562 = vweird.f32 %v1556
  %vm1563 = vmor %vm1561, %vm1562
  %v1564 = vsel %vm1563, %v1556, %v1560
  %v1565 = vand.u32 2147483647, %v1134
  %vm1566 = vcmp.eq.f32.partialorder %v1565, 8.507059e+37
  %v1567 = vand.u32 %v1134, 2147483648
  %v1568 = vor.u32 1.1754944e-38, %v1567
  %v1569 = vsel %vm1566, %v1568, %v1564
  %v1570 = vmul.f32 1.0, %v1569
  %v1571 = vrcp.pop %v1135
  %v1572 = vmul.f32 %v1135, %v1571
  %v1573 = vsub.f32 1.0, %v1572
  %v1574 = vmul.f32 %v1571, %v1573
  %v1575 = vadd.f32 %v1571, %v1574
  %vm1576 = vweird.f32 %v1135
  %vm1577 = vweird.f32 %v1571
  %vm1578 = vmor %vm1576, %vm1577
  %v1579 = vsel %vm1578, %v1571, %v1575
  %v1580 = vand.u32 2147483647, %v1135
  %vm1581 = vcmp.eq.f32.partialorder %v1580, 8.507059e+37
  %v1582 = vand.u32 %v1135, 2147483648
  %v1583 = vor.u32 1.1754944e-38, %v1582
  %v1584 = vsel %vm1581, %v1583, %v1579
  %v1585 = vmul.f32 1.0, %v1584
  %v1586 = vrcp.pop %v1136
  %v1587 = vmul.f32 %v1136, %v1586
  %v1588 = vsub.f32 1.0, %v1587
  %v1589 = vmul.f32 %v1586, %v1588
  %v1590 = vadd.f32 %v1586, %v1589
  %vm1591 = vweird.f32 %v1136
  %vm1592 = vweird.f32 %v1586
  %vm1593 = vmor %vm1591, %vm1592
  %v1594 = vsel %vm1593, %v1586, %v1590
  %v1595 = vand.u32 2147483647, %v1136
  %vm1596 = vcmp.eq.f32.partialorder %v1595, 8.507059e+37
  %v1597 = vand.u32 %v1136, 2147483648
  %v1598 = vor.u32 1.1754944e-38, %v1597
  %v1599 = vsel %vm1596, %v1598, %v1594
  %v1600 = vmul.f32 1.0, %v1599
  %v1601 = vrcp.pop %v1137
  %v1602 = vmul.f32 %v1137, %v1601
  %v1603 = vsub.f32 1.0, %v1602
  %v1604 = vmul.f32 %v1601, %v1603
  %v1605 = vadd.f32 %v1601, %v1604
  %vm1606 = vweird.f32 %v1137
  %vm1607 = vweird.f32 %v1601
  %vm1608 = vmor %vm1606, %vm1607
  %v1609 = vsel %vm1608, %v1601, %v1605
  %v1610 = vand.u32 2147483647, %v1137
  %vm1611 = vcmp.eq.f32.partialorder %v1610, 8.507059e+37
  %v1612 = vand.u32 %v1137, 2147483648
  %v1613 = vor.u32 1.1754944e-38, %v1612
  %v1614 = vsel %vm1611, %v1613, %v1609
  %v1615 = vmul.f32 1.0, %v1614
  %v1616 = vrcp.pop %v1138
  %v1617 = vmul.f32 %v1138, %v1616
  %v1618 = vsub.f32 1.0, %v1617
  %v1619 = vmul.f32 %v1616, %v1618
  %v1620 = vadd.f32 %v1616, %v1619
  %vm1621 = vweird.f32 %v1138
  %vm1622 = vweird.f32 %v1616
  %vm1623 = vmor %vm1621, %vm1622
  %v1624 = vsel %vm1623, %v1616, %v1620
  %v1625 = vand.u32 2147483647, %v1138
  %vm1626 = vcmp.eq.f32.partialorder %v1625, 8.507059e+37
  %v1627 = vand.u32 %v1138, 2147483648
  %v1628 = vor.u32 1.1754944e-38, %v1627
  %v1629 = vsel %vm1626, %v1628, %v1624
  %v1630 = vmul.f32 1.0, %v1629
  %v1631 = vrcp.pop %v1139
  %v1632 = vmul.f32 %v1139, %v1631
  %v1633 = vsub.f32 1.0, %v1632
  %v1634 = vmul.f32 %v1631, %v1633
  %v1635 = vadd.f32 %v1631, %v1634
  %vm1636 = vweird.f32 %v1139
  %vm1637 = vweird.f32 %v1631
  %vm1638 = vmor %vm1636, %vm1637
  %v1639 = vsel %vm1638, %v1631, %v1635
  %v1640 = vand.u32 2147483647, %v1139
  %vm1641 = vcmp.eq.f32.partialorder %v1640, 8.507059e+37
  %v1642 = vand.u32 %v1139, 2147483648
  %v1643 = vor.u32 1.1754944e-38, %v1642
  %v1644 = vsel %vm1641, %v1643, %v1639
  %v1645 = vmul.f32 1.0, %v1644
  %v1646 = vrcp.pop %v1140
  %v1647 = vmul.f32 %v1140, %v1646
  %v1648 = vsub.f32 1.0, %v1647
  %v1649 = vmul.f32 %v1646, %v1648
  %v1650 = vadd.f32 %v1646, %v1649
  %vm1651 = vweird.f32 %v1140
  %vm1652 = vweird.f32 %v1646
  %vm1653 = vmor %vm1651, %vm1652
  %v1654 = vsel %vm1653, %v1646, %v1650
  %v1655 = vand.u32 2147483647, %v1140
  %vm1656 = vcmp.eq.f32.partialorder %v1655, 8.507059e+37
  %v1657 = vand.u32 %v1140, 2147483648
  %v1658 = vor.u32 1.1754944e-38, %v1657
  %v1659 = vsel %vm1656, %v1658, %v1654
  %v1660 = vmul.f32 1.0, %v1659
  %v1661 = vrcp.pop %v1141
  %v1662 = vmul.f32 %v1141, %v1661
  %v1663 = vsub.f32 1.0, %v1662
  %v1664 = vmul.f32 %v1661, %v1663
  %v1665 = vadd.f32 %v1661, %v1664
  %vm1666 = vweird.f32 %v1141
  %vm1667 = vweird.f32 %v1661
  %vm1668 = vmor %vm1666, %vm1667
  %v1669 = vsel %vm1668, %v1661, %v1665
  %v1670 = vand.u32 2147483647, %v1141
  %vm1671 = vcmp.eq.f32.partialorder %v1670, 8.507059e+37
  %v1672 = vand.u32 %v1141, 2147483648
  %v1673 = vor.u32 1.1754944e-38, %v1672
  %v1674 = vsel %vm1671, %v1673, %v1669
  %v1675 = vmul.f32 1.0, %v1674
  %v1676 = vrcp.pop %v1142
  %v1677 = vmul.f32 %v1142, %v1676
  %v1678 = vsub.f32 1.0, %v1677
  %v1679 = vmul.f32 %v1676, %v1678
  %v1680 = vadd.f32 %v1676, %v1679
  %vm1681 = vweird.f32 %v1142
  %vm1682 = vweird.f32 %v1676
  %vm1683 = vmor %vm1681, %vm1682
  %v1684 = vsel %vm1683, %v1676, %v1680
  %v1685 = vand.u32 2147483647, %v1142
  %vm1686 = vcmp.eq.f32.partialorder %v1685, 8.507059e+37
  %v1687 = vand.u32 %v1142, 2147483648
  %v1688 = vor.u32 1.1754944e-38, %v1687
  %v1689 = vsel %vm1686, %v1688, %v1684
  %v1690 = vmul.f32 1.0, %v1689
  %v1691 = vrcp.pop %v1143
  %v1692 = vmul.f32 %v1143, %v1691
  %v1693 = vsub.f32 1.0, %v1692
  %v1694 = vmul.f32 %v1691, %v1693
  %v1695 = vadd.f32 %v1691, %v1694
  %vm1696 = vweird.f32 %v1143
  %vm1697 = vweird.f32 %v1691
  %vm1698 = vmor %vm1696, %vm1697
  %v1699 = vsel %vm1698, %v1691, %v1695
  %v1700 = vand.u32 2147483647, %v1143
  %vm1701 = vcmp.eq.f32.partialorder %v1700, 8.507059e+37
  %v1702 = vand.u32 %v1143, 2147483648
  %v1703 = vor.u32 1.1754944e-38, %v1702
  %v1704 = vsel %vm1701, %v1703, %v1699
  %v1705 = vmul.f32 1.0, %v1704
  %v1706 = vrcp.pop %v1144
  %v1707 = vmul.f32 %v1144, %v1706
  %v1708 = vsub.f32 1.0, %v1707
  %v1709 = vmul.f32 %v1706, %v1708
  %v1710 = vadd.f32 %v1706, %v1709
  %vm1711 = vweird.f32 %v1144
  %vm1712 = vweird.f32 %v1706
  %vm1713 = vmor %vm1711, %vm1712
  %v1714 = vsel %vm1713, %v1706, %v1710
  %v1715 = vand.u32 2147483647, %v1144
  %vm1716 = vcmp.eq.f32.partialorder %v1715, 8.507059e+37
  %v1717 = vand.u32 %v1144, 2147483648
  %v1718 = vor.u32 1.1754944e-38, %v1717
  %v1719 = vsel %vm1716, %v1718, %v1714
  %v1720 = vmul.f32 1.0, %v1719
  %v1721 = vrcp.pop %v1145
  %v1722 = vmul.f32 %v1145, %v1721
  %v1723 = vsub.f32 1.0, %v1722
  %v1724 = vmul.f32 %v1721, %v1723
  %v1725 = vadd.f32 %v1721, %v1724
  %vm1726 = vweird.f32 %v1145
  %vm1727 = vweird.f32 %v1721
  %vm1728 = vmor %vm1726, %vm1727
  %v1729 = vsel %vm1728, %v1721, %v1725
  %v1730 = vand.u32 2147483647, %v1145
  %vm1731 = vcmp.eq.f32.partialorder %v1730, 8.507059e+37
  %v1732 = vand.u32 %v1145, 2147483648
  %v1733 = vor.u32 1.1754944e-38, %v1732
  %v1734 = vsel %vm1731, %v1733, %v1729
  %v1735 = vmul.f32 1.0, %v1734
  %v1736 = vrcp.pop %v1146
  %v1737 = vmul.f32 %v1146, %v1736
  %v1738 = vsub.f32 1.0, %v1737
  %v1739 = vmul.f32 %v1736, %v1738
  %v1740 = vadd.f32 %v1736, %v1739
  %vm1741 = vweird.f32 %v1146
  %vm1742 = vweird.f32 %v1736
  %vm1743 = vmor %vm1741, %vm1742
  %v1744 = vsel %vm1743, %v1736, %v1740
  %v1745 = vand.u32 2147483647, %v1146
  %vm1746 = vcmp.eq.f32.partialorder %v1745, 8.507059e+37
  %v1747 = vand.u32 %v1146, 2147483648
  %v1748 = vor.u32 1.1754944e-38, %v1747
  %v1749 = vsel %vm1746, %v1748, %v1744
  %v1750 = vmul.f32 1.0, %v1749
  %v1751 = vrcp.pop %v1147
  %v1752 = vmul.f32 %v1147, %v1751
  %v1753 = vsub.f32 1.0, %v1752
  %v1754 = vmul.f32 %v1751, %v1753
  %v1755 = vadd.f32 %v1751, %v1754
  %vm1756 = vweird.f32 %v1147
  %vm1757 = vweird.f32 %v1751
  %vm1758 = vmor %vm1756, %vm1757
  %v1759 = vsel %vm1758, %v1751, %v1755
  %v1760 = vand.u32 2147483647, %v1147
  %vm1761 = vcmp.eq.f32.partialorder %v1760, 8.507059e+37
  %v1762 = vand.u32 %v1147, 2147483648
  %v1763 = vor.u32 1.1754944e-38, %v1762
  %v1764 = vsel %vm1761, %v1763, %v1759
  %v1765 = vmul.f32 1.0, %v1764
  %v1766 = vrcp.pop %v1148
  %v1767 = vmul.f32 %v1148, %v1766
  %v1768 = vsub.f32 1.0, %v1767
  %v1769 = vmul.f32 %v1766, %v1768
  %v1770 = vadd.f32 %v1766, %v1769
  %vm1771 = vweird.f32 %v1148
  %vm1772 = vweird.f32 %v1766
  %vm1773 = vmor %vm1771, %vm1772
  %v1774 = vsel %vm1773, %v1766, %v1770
  %v1775 = vand.u32 2147483647, %v1148
  %vm1776 = vcmp.eq.f32.partialorder %v1775, 8.507059e+37
  %v1777 = vand.u32 %v1148, 2147483648
  %v1778 = vor.u32 1.1754944e-38, %v1777
  %v1779 = vsel %vm1776, %v1778, %v1774
  %v1780 = vmul.f32 1.0, %v1779
  %v1781 = vrcp.pop %v1149
  %v1782 = vmul.f32 %v1149, %v1781
  %v1783 = vsub.f32 1.0, %v1782
  %v1784 = vmul.f32 %v1781, %v1783
  %v1785 = vadd.f32 %v1781, %v1784
  %vm1786 = vweird.f32 %v1149
  %vm1787 = vweird.f32 %v1781
  %vm1788 = vmor %vm1786, %vm1787
  %v1789 = vsel %vm1788, %v1781, %v1785
  %v1790 = vand.u32 2147483647, %v1149
  %vm1791 = vcmp.eq.f32.partialorder %v1790, 8.507059e+37
  %v1792 = vand.u32 %v1149, 2147483648
  %v1793 = vor.u32 1.1754944e-38, %v1792
  %v1794 = vsel %vm1791, %v1793, %v1789
  %v1795 = vmul.f32 1.0, %v1794
  %v1796 = vrcp.pop %v1150
  %v1797 = vmul.f32 %v1150, %v1796
  %v1798 = vsub.f32 1.0, %v1797
  %v1799 = vmul.f32 %v1796, %v1798
  %v1800 = vadd.f32 %v1796, %v1799
  %vm1801 = vweird.f32 %v1150
  %vm1802 = vweird.f32 %v1796
  %vm1803 = vmor %vm1801, %vm1802
  %v1804 = vsel %vm1803, %v1796, %v1800
  %v1805 = vand.u32 2147483647, %v1150
  %vm1806 = vcmp.eq.f32.partialorder %v1805, 8.507059e+37
  %v1807 = vand.u32 %v1150, 2147483648
  %v1808 = vor.u32 1.1754944e-38, %v1807
  %v1809 = vsel %vm1806, %v1808, %v1804
  %v1810 = vmul.f32 1.0, %v1809
  %v1811 = vrcp.pop %v1151
  %v1812 = vmul.f32 %v1151, %v1811
  %v1813 = vsub.f32 1.0, %v1812
  %v1814 = vmul.f32 %v1811, %v1813
  %v1815 = vadd.f32 %v1811, %v1814
  %vm1816 = vweird.f32 %v1151
  %vm1817 = vweird.f32 %v1811
  %vm1818 = vmor %vm1816, %vm1817
  %v1819 = vsel %vm1818, %v1811, %v1815
  %v1820 = vand.u32 2147483647, %v1151
  %vm1821 = vcmp.eq.f32.partialorder %v1820, 8.507059e+37
  %v1822 = vand.u32 %v1151, 2147483648
  %v1823 = vor.u32 1.1754944e-38, %v1822
  %v1824 = vsel %vm1821, %v1823, %v1819
  %v1825 = vmul.f32 1.0, %v1824
  %v1826 = vrcp.pop %v1152
  %v1827 = vmul.f32 %v1152, %v1826
  %v1828 = vsub.f32 1.0, %v1827
  %v1829 = vmul.f32 %v1826, %v1828
  %v1830 = vadd.f32 %v1826, %v1829
  %vm1831 = vweird.f32 %v1152
  %vm1832 = vweird.f32 %v1826
  %vm1833 = vmor %vm1831, %vm1832
  %v1834 = vsel %vm1833, %v1826, %v1830
  %v1835 = vand.u32 2147483647, %v1152
  %vm1836 = vcmp.eq.f32.partialorder %v1835, 8.507059e+37
  %v1837 = vand.u32 %v1152, 2147483648
  %v1838 = vor.u32 1.1754944e-38, %v1837
  %v1839 = vsel %vm1836, %v1838, %v1834
  %v1840 = vmul.f32 1.0, %v1839
  %v1841 = vrcp.pop %v1153
  %v1842 = vmul.f32 %v1153, %v1841
  %v1843 = vsub.f32 1.0, %v1842
  %v1844 = vmul.f32 %v1841, %v1843
  %v1845 = vadd.f32 %v1841, %v1844
  %vm1846 = vweird.f32 %v1153
  %vm1847 = vweird.f32 %v1841
  %vm1848 = vmor %vm1846, %vm1847
  %v1849 = vsel %vm1848, %v1841, %v1845
  %v1850 = vand.u32 2147483647, %v1153
  %vm1851 = vcmp.eq.f32.partialorder %v1850, 8.507059e+37
  %v1852 = vand.u32 %v1153, 2147483648
  %v1853 = vor.u32 1.1754944e-38, %v1852
  %v1854 = vsel %vm1851, %v1853, %v1849
  %v1855 = vmul.f32 1.0, %v1854
  %v1856 = vrcp.pop %v1154
  %v1857 = vmul.f32 %v1154, %v1856
  %v1858 = vsub.f32 1.0, %v1857
  %v1859 = vmul.f32 %v1856, %v1858
  %v1860 = vadd.f32 %v1856, %v1859
  %vm1861 = vweird.f32 %v1154
  %vm1862 = vweird.f32 %v1856
  %vm1863 = vmor %vm1861, %vm1862
  %v1864 = vsel %vm1863, %v1856, %v1860
  %v1865 = vand.u32 2147483647, %v1154
  %vm1866 = vcmp.eq.f32.partialorder %v1865, 8.507059e+37
  %v1867 = vand.u32 %v1154, 2147483648
  %v1868 = vor.u32 1.1754944e-38, %v1867
  %v1869 = vsel %vm1866, %v1868, %v1864
  %v1870 = vmul.f32 1.0, %v1869
  %v1871 = vrcp.pop %v1155
  %v1872 = vmul.f32 %v1155, %v1871
  %v1873 = vsub.f32 1.0, %v1872
  %v1874 = vmul.f32 %v1871, %v1873
  %v1875 = vadd.f32 %v1871, %v1874
  %vm1876 = vweird.f32 %v1155
  %vm1877 = vweird.f32 %v1871
  %vm1878 = vmor %vm1876, %vm1877
  %v1879 = vsel %vm1878, %v1871, %v1875
  %v1880 = vand.u32 2147483647, %v1155
  %vm1881 = vcmp.eq.f32.partialorder %v1880, 8.507059e+37
  %v1882 = vand.u32 %v1155, 2147483648
  %v1883 = vor.u32 1.1754944e-38, %v1882
  %v1884 = vsel %vm1881, %v1883, %v1879
  %v1885 = vmul.f32 1.0, %v1884
  %v1886 = vrcp.pop %v1156
  %v1887 = vmul.f32 %v1156, %v1886
  %v1888 = vsub.f32 1.0, %v1887
  %v1889 = vmul.f32 %v1886, %v1888
  %v1890 = vadd.f32 %v1886, %v1889
  %vm1891 = vweird.f32 %v1156
  %vm1892 = vweird.f32 %v1886
  %vm1893 = vmor %vm1891, %vm1892
  %v1894 = vsel %vm1893, %v1886, %v1890
  %v1895 = vand.u32 2147483647, %v1156
  %vm1896 = vcmp.eq.f32.partialorder %v1895, 8.507059e+37
  %v1897 = vand.u32 %v1156, 2147483648
  %v1898 = vor.u32 1.1754944e-38, %v1897
  %v1899 = vsel %vm1896, %v1898, %v1894
  %v1900 = vmul.f32 1.0, %v1899
  %v1901 = vrcp.pop %v1157
  %v1902 = vmul.f32 %v1157, %v1901
  %v1903 = vsub.f32 1.0, %v1902
  %v1904 = vmul.f32 %v1901, %v1903
  %v1905 = vadd.f32 %v1901, %v1904
  %vm1906 = vweird.f32 %v1157
  %vm1907 = vweird.f32 %v1901
  %vm1908 = vmor %vm1906, %vm1907
  %v1909 = vsel %vm1908, %v1901, %v1905
  %v1910 = vand.u32 2147483647, %v1157
  %vm1911 = vcmp.eq.f32.partialorder %v1910, 8.507059e+37
  %v1912 = vand.u32 %v1157, 2147483648
  %v1913 = vor.u32 1.1754944e-38, %v1912
  %v1914 = vsel %vm1911, %v1913, %v1909
  %v1915 = vmul.f32 1.0, %v1914
  %v1916 = vrcp.pop %v1158
  %v1917 = vmul.f32 %v1158, %v1916
  %v1918 = vsub.f32 1.0, %v1917
  %v1919 = vmul.f32 %v1916, %v1918
  %v1920 = vadd.f32 %v1916, %v1919
  %vm1921 = vweird.f32 %v1158
  %vm1922 = vweird.f32 %v1916
  %vm1923 = vmor %vm1921, %vm1922
  %v1924 = vsel %vm1923, %v1916, %v1920
  %v1925 = vand.u32 2147483647, %v1158
  %vm1926 = vcmp.eq.f32.partialorder %v1925, 8.507059e+37
  %v1927 = vand.u32 %v1158, 2147483648
  %v1928 = vor.u32 1.1754944e-38, %v1927
  %v1929 = vsel %vm1926, %v1928, %v1924
  %v1930 = vmul.f32 1.0, %v1929
  %v1931 = vrcp.pop %v1159
  %v1932 = vmul.f32 %v1159, %v1931
  %v1933 = vsub.f32 1.0, %v1932
  %v1934 = vmul.f32 %v1931, %v1933
  %v1935 = vadd.f32 %v1931, %v1934
  %vm1936 = vweird.f32 %v1159
  %vm1937 = vweird.f32 %v1931
  %vm1938 = vmor %vm1936, %vm1937
  %v1939 = vsel %vm1938, %v1931, %v1935
  %v1940 = vand.u32 2147483647, %v1159
  %vm1941 = vcmp.eq.f32.partialorder %v1940, 8.507059e+37
  %v1942 = vand.u32 %v1159, 2147483648
  %v1943 = vor.u32 1.1754944e-38, %v1942
  %v1944 = vsel %vm1941, %v1943, %v1939
  %v1945 = vmul.f32 1.0, %v1944
  %v1946 = vrcp.pop %v1160
  %v1947 = vmul.f32 %v1160, %v1946
  %v1948 = vsub.f32 1.0, %v1947
  %v1949 = vmul.f32 %v1946, %v1948
  %v1950 = vadd.f32 %v1946, %v1949
  %vm1951 = vweird.f32 %v1160
  %vm1952 = vweird.f32 %v1946
  %vm1953 = vmor %vm1951, %vm1952
  %v1954 = vsel %vm1953, %v1946, %v1950
  %v1955 = vand.u32 2147483647, %v1160
  %vm1956 = vcmp.eq.f32.partialorder %v1955, 8.507059e+37
  %v1957 = vand.u32 %v1160, 2147483648
  %v1958 = vor.u32 1.1754944e-38, %v1957
  %v1959 = vsel %vm1956, %v1958, %v1954
  %v1960 = vmul.f32 1.0, %v1959
  %v1961 = vrcp.pop %v1161
  %v1962 = vmul.f32 %v1161, %v1961
  %v1963 = vsub.f32 1.0, %v1962
  %v1964 = vmul.f32 %v1961, %v1963
  %v1965 = vadd.f32 %v1961, %v1964
  %vm1966 = vweird.f32 %v1161
  %vm1967 = vweird.f32 %v1961
  %vm1968 = vmor %vm1966, %vm1967
  %v1969 = vsel %vm1968, %v1961, %v1965
  %v1970 = vand.u32 2147483647, %v1161
  %vm1971 = vcmp.eq.f32.partialorder %v1970, 8.507059e+37
  %v1972 = vand.u32 %v1161, 2147483648
  %v1973 = vor.u32 1.1754944e-38, %v1972
  %v1974 = vsel %vm1971, %v1973, %v1969
  %v1975 = vmul.f32 1.0, %v1974
  %v1976 = vrcp.pop %v1162
  %v1977 = vmul.f32 %v1162, %v1976
  %v1978 = vsub.f32 1.0, %v1977
  %v1979 = vmul.f32 %v1976, %v1978
  %v1980 = vadd.f32 %v1976, %v1979
  %vm1981 = vweird.f32 %v1162
  %vm1982 = vweird.f32 %v1976
  %vm1983 = vmor %vm1981, %vm1982
  %v1984 = vsel %vm1983, %v1976, %v1980
  %v1985 = vand.u32 2147483647, %v1162
  %vm1986 = vcmp.eq.f32.partialorder %v1985, 8.507059e+37
  %v1987 = vand.u32 %v1162, 2147483648
  %v1988 = vor.u32 1.1754944e-38, %v1987
  %v1989 = vsel %vm1986, %v1988, %v1984
  %v1990 = vmul.f32 1.0, %v1989
  %v1991 = vrcp.pop %v1163
  %v1992 = vmul.f32 %v1163, %v1991
  %v1993 = vsub.f32 1.0, %v1992
  %v1994 = vmul.f32 %v1991, %v1993
  %v1995 = vadd.f32 %v1991, %v1994
  %vm1996 = vweird.f32 %v1163
  %vm1997 = vweird.f32 %v1991
  %vm1998 = vmor %vm1996, %vm1997
  %v1999 = vsel %vm1998, %v1991, %v1995
  %v2000 = vand.u32 2147483647, %v1163
  %vm2001 = vcmp.eq.f32.partialorder %v2000, 8.507059e+37
  %v2002 = vand.u32 %v1163, 2147483648
  %v2003 = vor.u32 1.1754944e-38, %v2002
  %v2004 = vsel %vm2001, %v2003, %v1999
  %v2005 = vmul.f32 1.0, %v2004
  %v2006 = vrcp.pop %v1164
  %v2007 = vmul.f32 %v1164, %v2006
  %v2008 = vsub.f32 1.0, %v2007
  %v2009 = vmul.f32 %v2006, %v2008
  %v2010 = vadd.f32 %v2006, %v2009
  %vm2011 = vweird.f32 %v1164
  %vm2012 = vweird.f32 %v2006
  %vm2013 = vmor %vm2011, %vm2012
  %v2014 = vsel %vm2013, %v2006, %v2010
  %v2015 = vand.u32 2147483647, %v1164
  %vm2016 = vcmp.eq.f32.partialorder %v2015, 8.507059e+37
  %v2017 = vand.u32 %v1164, 2147483648
  %v2018 = vor.u32 1.1754944e-38, %v2017
  %v2019 = vsel %vm2016, %v2018, %v2014
  %v2020 = vmul.f32 1.0, %v2019
  %v2021 = vrcp.pop %v1165
  %v2022 = vmul.f32 %v1165, %v2021
  %v2023 = vsub.f32 1.0, %v2022
  %v2024 = vmul.f32 %v2021, %v2023
  %v2025 = vadd.f32 %v2021, %v2024
  %vm2026 = vweird.f32 %v1165
  %vm2027 = vweird.f32 %v2021
  %vm2028 = vmor %vm2026, %vm2027
  %v2029 = vsel %vm2028, %v2021, %v2025
  %v2030 = vand.u32 2147483647, %v1165
  %vm2031 = vcmp.eq.f32.partialorder %v2030, 8.507059e+37
  %v2032 = vand.u32 %v1165, 2147483648
  %v2033 = vor.u32 1.1754944e-38, %v2032
  %v2034 = vsel %vm2031, %v2033, %v2029
  %v2035 = vmul.f32 1.0, %v2034
  %v2036 = vrcp.pop %v1166
  %v2037 = vmul.f32 %v1166, %v2036
  %v2038 = vsub.f32 1.0, %v2037
  %v2039 = vmul.f32 %v2036, %v2038
  %v2040 = vadd.f32 %v2036, %v2039
  %vm2041 = vweird.f32 %v1166
  %vm2042 = vweird.f32 %v2036
  %vm2043 = vmor %vm2041, %vm2042
  %v2044 = vsel %vm2043, %v2036, %v2040
  %v2045 = vand.u32 2147483647, %v1166
  %vm2046 = vcmp.eq.f32.partialorder %v2045, 8.507059e+37
  %v2047 = vand.u32 %v1166, 2147483648
  %v2048 = vor.u32 1.1754944e-38, %v2047
  %v2049 = vsel %vm2046, %v2048, %v2044
  %v2050 = vmul.f32 1.0, %v2049
  %v2051 = vrcp.pop %v1167
  %v2052 = vmul.f32 %v1167, %v2051
  %v2053 = vsub.f32 1.0, %v2052
  %v2054 = vmul.f32 %v2051, %v2053
  %v2055 = vadd.f32 %v2051, %v2054
  %vm2056 = vweird.f32 %v1167
  %vm2057 = vweird.f32 %v2051
  %vm2058 = vmor %vm2056, %vm2057
  %v2059 = vsel %vm2058, %v2051, %v2055
  %v2060 = vand.u32 2147483647, %v1167
  %vm2061 = vcmp.eq.f32.partialorder %v2060, 8.507059e+37
  %v2062 = vand.u32 %v1167, 2147483648
  %v2063 = vor.u32 1.1754944e-38, %v2062
  %v2064 = vsel %vm2061, %v2063, %v2059
  %v2065 = vmul.f32 1.0, %v2064
  %v2066 = vrcp.pop %v1168
  %v2067 = vmul.f32 %v1168, %v2066
  %v2068 = vsub.f32 1.0, %v2067
  %v2069 = vmul.f32 %v2066, %v2068
  %v2070 = vadd.f32 %v2066, %v2069
  %vm2071 = vweird.f32 %v1168
  %vm2072 = vweird.f32 %v2066
  %vm2073 = vmor %vm2071, %vm2072
  %v2074 = vsel %vm2073, %v2066, %v2070
  %v2075 = vand.u32 2147483647, %v1168
  %vm2076 = vcmp.eq.f32.partialorder %v2075, 8.507059e+37
  %v2077 = vand.u32 %v1168, 2147483648
  %v2078 = vor.u32 1.1754944e-38, %v2077
  %v2079 = vsel %vm2076, %v2078, %v2074
  %v2080 = vmul.f32 1.0, %v2079
  %v2081 = vrcp.pop %v1169
  %v2082 = vmul.f32 %v1169, %v2081
  %v2083 = vsub.f32 1.0, %v2082
  %v2084 = vmul.f32 %v2081, %v2083
  %v2085 = vadd.f32 %v2081, %v2084
  %vm2086 = vweird.f32 %v1169
  %vm2087 = vweird.f32 %v2081
  %vm2088 = vmor %vm2086, %vm2087
  %v2089 = vsel %vm2088, %v2081, %v2085
  %v2090 = vand.u32 2147483647, %v1169
  %vm2091 = vcmp.eq.f32.partialorder %v2090, 8.507059e+37
  %v2092 = vand.u32 %v1169, 2147483648
  %v2093 = vor.u32 1.1754944e-38, %v2092
  %v2094 = vsel %vm2091, %v2093, %v2089
  %v2095 = vmul.f32 1.0, %v2094
  %v2096 = vrcp.pop %v1170
  %v2097 = vmul.f32 %v1170, %v2096
  %v2098 = vsub.f32 1.0, %v2097
  %v2099 = vmul.f32 %v2096, %v2098
  %v2100 = vadd.f32 %v2096, %v2099
  %vm2101 = vweird.f32 %v1170
  %vm2102 = vweird.f32 %v2096
  %vm2103 = vmor %vm2101, %vm2102
  %v2104 = vsel %vm2103, %v2096, %v2100
  %v2105 = vand.u32 2147483647, %v1170
  %vm2106 = vcmp.eq.f32.partialorder %v2105, 8.507059e+37
  %v2107 = vand.u32 %v1170, 2147483648
  %v2108 = vor.u32 1.1754944e-38, %v2107
  %v2109 = vsel %vm2106, %v2108, %v2104
  %v2110 = vmul.f32 1.0, %v2109
  %v2111 = vrcp.pop %v1171
  %v2112 = vmul.f32 %v1171, %v2111
  %v2113 = vsub.f32 1.0, %v2112
  %v2114 = vmul.f32 %v2111, %v2113
  %v2115 = vadd.f32 %v2111, %v2114
  %vm2116 = vweird.f32 %v1171
  %vm2117 = vweird.f32 %v2111
  %vm2118 = vmor %vm2116, %vm2117
  %v2119 = vsel %vm2118, %v2111, %v2115
  %v2120 = vand.u32 2147483647, %v1171
  %vm2121 = vcmp.eq.f32.partialorder %v2120, 8.507059e+37
  %v2122 = vand.u32 %v1171, 2147483648
  %v2123 = vor.u32 1.1754944e-38, %v2122
  %v2124 = vsel %vm2121, %v2123, %v2119
  %v2125 = vmul.f32 1.0, %v2124
  %v2126 = vrcp.pop %v1172
  %v2127 = vmul.f32 %v1172, %v2126
  %v2128 = vsub.f32 1.0, %v2127
  %v2129 = vmul.f32 %v2126, %v2128
  %v2130 = vadd.f32 %v2126, %v2129
  %vm2131 = vweird.f32 %v1172
  %vm2132 = vweird.f32 %v2126
  %vm2133 = vmor %vm2131, %vm2132
  %v2134 = vsel %vm2133, %v2126, %v2130
  %v2135 = vand.u32 2147483647, %v1172
  %vm2136 = vcmp.eq.f32.partialorder %v2135, 8.507059e+37
  %v2137 = vand.u32 %v1172, 2147483648
  %v2138 = vor.u32 1.1754944e-38, %v2137
  %v2139 = vsel %vm2136, %v2138, %v2134
  %v2140 = vmul.f32 1.0, %v2139
  %v2141 = vrcp.pop %v1173
  %v2142 = vmul.f32 %v1173, %v2141
  %v2143 = vsub.f32 1.0, %v2142
  %v2144 = vmul.f32 %v2141, %v2143
  %v2145 = vadd.f32 %v2141, %v2144
  %vm2146 = vweird.f32 %v1173
  %vm2147 = vweird.f32 %v2141
  %vm2148 = vmor %vm2146, %vm2147
  %v2149 = vsel %vm2148, %v2141, %v2145
  %v2150 = vand.u32 2147483647, %v1173
  %vm2151 = vcmp.eq.f32.partialorder %v2150, 8.507059e+37
  %v2152 = vand.u32 %v1173, 2147483648
  %v2153 = vor.u32 1.1754944e-38, %v2152
  %v2154 = vsel %vm2151, %v2153, %v2149
  %v2155 = vmul.f32 1.0, %v2154
  %v2156 = vrcp.pop %v1174
  %v2157 = vmul.f32 %v1174, %v2156
  %v2158 = vsub.f32 1.0, %v2157
  %v2159 = vmul.f32 %v2156, %v2158
  %v2160 = vadd.f32 %v2156, %v2159
  %vm2161 = vweird.f32 %v1174
  %vm2162 = vweird.f32 %v2156
  %vm2163 = vmor %vm2161, %vm2162
  %v2164 = vsel %vm2163, %v2156, %v2160
  %v2165 = vand.u32 2147483647, %v1174
  %vm2166 = vcmp.eq.f32.partialorder %v2165, 8.507059e+37
  %v2167 = vand.u32 %v1174, 2147483648
  %v2168 = vor.u32 1.1754944e-38, %v2167
  %v2169 = vsel %vm2166, %v2168, %v2164
  %v2170 = vmul.f32 1.0, %v2169
  %v2171 = vrcp.pop %v1175
  %v2172 = vmul.f32 %v1175, %v2171
  %v2173 = vsub.f32 1.0, %v2172
  %v2174 = vmul.f32 %v2171, %v2173
  %v2175 = vadd.f32 %v2171, %v2174
  %vm2176 = vweird.f32 %v1175
  %vm2177 = vweird.f32 %v2171
  %vm2178 = vmor %vm2176, %vm2177
  %v2179 = vsel %vm2178, %v2171, %v2175
  %v2180 = vand.u32 2147483647, %v1175
  %vm2181 = vcmp.eq.f32.partialorder %v2180, 8.507059e+37
  %v2182 = vand.u32 %v1175, 2147483648
  %v2183 = vor.u32 1.1754944e-38, %v2182
  %v2184 = vsel %vm2181, %v2183, %v2179
  %v2185 = vmul.f32 1.0, %v2184
  %v2186 = vrcp.pop %v1176
  %v2187 = vmul.f32 %v1176, %v2186
  %v2188 = vsub.f32 1.0, %v2187
  %v2189 = vmul.f32 %v2186, %v2188
  %v2190 = vadd.f32 %v2186, %v2189
  %vm2191 = vweird.f32 %v1176
  %vm2192 = vweird.f32 %v2186
  %vm2193 = vmor %vm2191, %vm2192
  %v2194 = vsel %vm2193, %v2186, %v2190
  %v2195 = vand.u32 2147483647, %v1176
  %vm2196 = vcmp.eq.f32.partialorder %v2195, 8.507059e+37
  %v2197 = vand.u32 %v1176, 2147483648
  %v2198 = vor.u32 1.1754944e-38, %v2197
  %v2199 = vsel %vm2196, %v2198, %v2194
  %v2200 = vmul.f32 1.0, %v2199
  %v2201 = vrcp.pop %v1177
  %v2202 = vmul.f32 %v1177, %v2201
  %v2203 = vsub.f32 1.0, %v2202
  %v2204 = vmul.f32 %v2201, %v2203
  %v2205 = vadd.f32 %v2201, %v2204
  %vm2206 = vweird.f32 %v1177
  %vm2207 = vweird.f32 %v2201
  %vm2208 = vmor %vm2206, %vm2207
  %v2209 = vsel %vm2208, %v2201, %v2205
  %v2210 = vand.u32 2147483647, %v1177
  %vm2211 = vcmp.eq.f32.partialorder %v2210, 8.507059e+37
  %v2212 = vand.u32 %v1177, 2147483648
  %v2213 = vor.u32 1.1754944e-38, %v2212
  %v2214 = vsel %vm2211, %v2213, %v2209
  %v2215 = vmul.f32 1.0, %v2214
  %v2216 = vrcp.pop %v1178
  %v2217 = vmul.f32 %v1178, %v2216
  %v2218 = vsub.f32 1.0, %v2217
  %v2219 = vmul.f32 %v2216, %v2218
  %v2220 = vadd.f32 %v2216, %v2219
  %vm2221 = vweird.f32 %v1178
  %vm2222 = vweird.f32 %v2216
  %vm2223 = vmor %vm2221, %vm2222
  %v2224 = vsel %vm2223, %v2216, %v2220
  %v2225 = vand.u32 2147483647, %v1178
  %vm2226 = vcmp.eq.f32.partialorder %v2225, 8.507059e+37
  %v2227 = vand.u32 %v1178, 2147483648
  %v2228 = vor.u32 1.1754944e-38, %v2227
  %v2229 = vsel %vm2226, %v2228, %v2224
  %v2230 = vmul.f32 1.0, %v2229
  %v2231 = vrcp.pop %v1179
  %v2232 = vmul.f32 %v1179, %v2231
  %v2233 = vsub.f32 1.0, %v2232
  %v2234 = vmul.f32 %v2231, %v2233
  %v2235 = vadd.f32 %v2231, %v2234
  %vm2236 = vweird.f32 %v1179
  %vm2237 = vweird.f32 %v2231
  %vm2238 = vmor %vm2236, %vm2237
  %v2239 = vsel %vm2238, %v2231, %v2235
  %v2240 = vand.u32 2147483647, %v1179
  %vm2241 = vcmp.eq.f32.partialorder %v2240, 8.507059e+37
  %v2242 = vand.u32 %v1179, 2147483648
  %v2243 = vor.u32 1.1754944e-38, %v2242
  %v2244 = vsel %vm2241, %v2243, %v2239
  %v2245 = vmul.f32 1.0, %v2244
  %v2246 = vrcp.pop %v1180
  %v2247 = vmul.f32 %v1180, %v2246
  %v2248 = vsub.f32 1.0, %v2247
  %v2249 = vmul.f32 %v2246, %v2248
  %v2250 = vadd.f32 %v2246, %v2249
  %vm2251 = vweird.f32 %v1180
  %vm2252 = vweird.f32 %v2246
  %vm2253 = vmor %vm2251, %vm2252
  %v2254 = vsel %vm2253, %v2246, %v2250
  %v2255 = vand.u32 2147483647, %v1180
  %vm2256 = vcmp.eq.f32.partialorder %v2255, 8.507059e+37
  %v2257 = vand.u32 %v1180, 2147483648
  %v2258 = vor.u32 1.1754944e-38, %v2257
  %v2259 = vsel %vm2256, %v2258, %v2254
  %v2260 = vmul.f32 1.0, %v2259
  %v2261 = vrcp.pop %v1181
  %v2262 = vmul.f32 %v1181, %v2261
  %v2263 = vsub.f32 1.0, %v2262
  %v2264 = vmul.f32 %v2261, %v2263
  %v2265 = vadd.f32 %v2261, %v2264
  %vm2266 = vweird.f32 %v1181
  %vm2267 = vweird.f32 %v2261
  %vm2268 = vmor %vm2266, %vm2267
  %v2269 = vsel %vm2268, %v2261, %v2265
  %v2270 = vand.u32 2147483647, %v1181
  %vm2271 = vcmp.eq.f32.partialorder %v2270, 8.507059e+37
  %v2272 = vand.u32 %v1181, 2147483648
  %v2273 = vor.u32 1.1754944e-38, %v2272
  %v2274 = vsel %vm2271, %v2273, %v2269
  %v2275 = vmul.f32 1.0, %v2274
  %v2276 = vrcp.pop %v1182
  %v2277 = vmul.f32 %v1182, %v2276
  %v2278 = vsub.f32 1.0, %v2277
  %v2279 = vmul.f32 %v2276, %v2278
  %v2280 = vadd.f32 %v2276, %v2279
  %vm2281 = vweird.f32 %v1182
  %vm2282 = vweird.f32 %v2276
  %vm2283 = vmor %vm2281, %vm2282
  %v2284 = vsel %vm2283, %v2276, %v2280
  %v2285 = vand.u32 2147483647, %v1182
  %vm2286 = vcmp.eq.f32.partialorder %v2285, 8.507059e+37
  %v2287 = vand.u32 %v1182, 2147483648
  %v2288 = vor.u32 1.1754944e-38, %v2287
  %v2289 = vsel %vm2286, %v2288, %v2284
  %v2290 = vmul.f32 1.0, %v2289
  %v2291 = vrcp.pop %v1183
  %v2292 = vmul.f32 %v1183, %v2291
  %v2293 = vsub.f32 1.0, %v2292
  %v2294 = vmul.f32 %v2291, %v2293
  %v2295 = vadd.f32 %v2291, %v2294
  %vm2296 = vweird.f32 %v1183
  %vm2297 = vweird.f32 %v2291
  %vm2298 = vmor %vm2296, %vm2297
  %v2299 = vsel %vm2298, %v2291, %v2295
  %v2300 = vand.u32 2147483647, %v1183
  %vm2301 = vcmp.eq.f32.partialorder %v2300, 8.507059e+37
  %v2302 = vand.u32 %v1183, 2147483648
  %v2303 = vor.u32 1.1754944e-38, %v2302
  %v2304 = vsel %vm2301, %v2303, %v2299
  %v2305 = vmul.f32 1.0, %v2304
  %v2306 = vrcp.pop %v1184
  %v2307 = vmul.f32 %v1184, %v2306
  %v2308 = vsub.f32 1.0, %v2307
  %v2309 = vmul.f32 %v2306, %v2308
  %v2310 = vadd.f32 %v2306, %v2309
  %vm2311 = vweird.f32 %v1184
  %vm2312 = vweird.f32 %v2306
  %vm2313 = vmor %vm2311, %vm2312
  %v2314 = vsel %vm2313, %v2306, %v2310
  %v2315 = vand.u32 2147483647, %v1184
  %vm2316 = vcmp.eq.f32.partialorder %v2315, 8.507059e+37
  %v2317 = vand.u32 %v1184, 2147483648
  %v2318 = vor.u32 1.1754944e-38, %v2317
  %v2319 = vsel %vm2316, %v2318, %v2314
  %v2320 = vmul.f32 1.0, %v2319
  %v2321 = vrcp.pop %v1185
  %v2322 = vmul.f32 %v1185, %v2321
  %v2323 = vsub.f32 1.0, %v2322
  %v2324 = vmul.f32 %v2321, %v2323
  %v2325 = vadd.f32 %v2321, %v2324
  %vm2326 = vweird.f32 %v1185
  %vm2327 = vweird.f32 %v2321
  %vm2328 = vmor %vm2326, %vm2327
  %v2329 = vsel %vm2328, %v2321, %v2325
  %v2330 = vand.u32 2147483647, %v1185
  %vm2331 = vcmp.eq.f32.partialorder %v2330, 8.507059e+37
  %v2332 = vand.u32 %v1185, 2147483648
  %v2333 = vor.u32 1.1754944e-38, %v2332
  %v2334 = vsel %vm2331, %v2333, %v2329
  %v2335 = vmul.f32 1.0, %v2334
  %v2336 = vrcp.pop %v1186
  %v2337 = vmul.f32 %v1186, %v2336
  %v2338 = vsub.f32 1.0, %v2337
  %v2339 = vmul.f32 %v2336, %v2338
  %v2340 = vadd.f32 %v2336, %v2339
  %vm2341 = vweird.f32 %v1186
  %vm2342 = vweird.f32 %v2336
  %vm2343 = vmor %vm2341, %vm2342
  %v2344 = vsel %vm2343, %v2336, %v2340
  %v2345 = vand.u32 2147483647, %v1186
  %vm2346 = vcmp.eq.f32.partialorder %v2345, 8.507059e+37
  %v2347 = vand.u32 %v1186, 2147483648
  %v2348 = vor.u32 1.1754944e-38, %v2347
  %v2349 = vsel %vm2346, %v2348, %v2344
  %v2350 = vmul.f32 1.0, %v2349
  %v2351 = vrcp.pop %v1187
  %v2352 = vmul.f32 %v1187, %v2351
  %v2353 = vsub.f32 1.0, %v2352
  %v2354 = vmul.f32 %v2351, %v2353
  %v2355 = vadd.f32 %v2351, %v2354
  %vm2356 = vweird.f32 %v1187
  %vm2357 = vweird.f32 %v2351
  %vm2358 = vmor %vm2356, %vm2357
  %v2359 = vsel %vm2358, %v2351, %v2355
  %v2360 = vand.u32 2147483647, %v1187
  %vm2361 = vcmp.eq.f32.partialorder %v2360, 8.507059e+37
  %v2362 = vand.u32 %v1187, 2147483648
  %v2363 = vor.u32 1.1754944e-38, %v2362
  %v2364 = vsel %vm2361, %v2363, %v2359
  %v2365 = vmul.f32 1.0, %v2364
  %v2366 = vrcp.pop %v1188
  %v2367 = vmul.f32 %v1188, %v2366
  %v2368 = vsub.f32 1.0, %v2367
  %v2369 = vmul.f32 %v2366, %v2368
  %v2370 = vadd.f32 %v2366, %v2369
  %vm2371 = vweird.f32 %v1188
  %vm2372 = vweird.f32 %v2366
  %vm2373 = vmor %vm2371, %vm2372
  %v2374 = vsel %vm2373, %v2366, %v2370
  %v2375 = vand.u32 2147483647, %v1188
  %vm2376 = vcmp.eq.f32.partialorder %v2375, 8.507059e+37
  %v2377 = vand.u32 %v1188, 2147483648
  %v2378 = vor.u32 1.1754944e-38, %v2377
  %v2379 = vsel %vm2376, %v2378, %v2374
  %v2380 = vmul.f32 1.0, %v2379
  %v2381 = vrcp.pop %v1189
  %v2382 = vmul.f32 %v1189, %v2381
  %v2383 = vsub.f32 1.0, %v2382
  %v2384 = vmul.f32 %v2381, %v2383
  %v2385 = vadd.f32 %v2381, %v2384
  %vm2386 = vweird.f32 %v1189
  %vm2387 = vweird.f32 %v2381
  %vm2388 = vmor %vm2386, %vm2387
  %v2389 = vsel %vm2388, %v2381, %v2385
  %v2390 = vand.u32 2147483647, %v1189
  %vm2391 = vcmp.eq.f32.partialorder %v2390, 8.507059e+37
  %v2392 = vand.u32 %v1189, 2147483648
  %v2393 = vor.u32 1.1754944e-38, %v2392
  %v2394 = vsel %vm2391, %v2393, %v2389
  %v2395 = vmul.f32 1.0, %v2394
  %v2396 = vrcp.pop %v1190
  %v2397 = vmul.f32 %v1190, %v2396
  %v2398 = vsub.f32 1.0, %v2397
  %v2399 = vmul.f32 %v2396, %v2398
  %v2400 = vadd.f32 %v2396, %v2399
  %vm2401 = vweird.f32 %v1190
  %vm2402 = vweird.f32 %v2396
  %vm2403 = vmor %vm2401, %vm2402
  %v2404 = vsel %vm2403, %v2396, %v2400
  %v2405 = vand.u32 2147483647, %v1190
  %vm2406 = vcmp.eq.f32.partialorder %v2405, 8.507059e+37
  %v2407 = vand.u32 %v1190, 2147483648
  %v2408 = vor.u32 1.1754944e-38, %v2407
  %v2409 = vsel %vm2406, %v2408, %v2404
  %v2410 = vmul.f32 1.0, %v2409
  %v2411 = vrcp.pop %v1191
  %v2412 = vmul.f32 %v1191, %v2411
  %v2413 = vsub.f32 1.0, %v2412
  %v2414 = vmul.f32 %v2411, %v2413
  %v2415 = vadd.f32 %v2411, %v2414
  %vm2416 = vweird.f32 %v1191
  %vm2417 = vweird.f32 %v2411
  %vm2418 = vmor %vm2416, %vm2417
  %v2419 = vsel %vm2418, %v2411, %v2415
  %v2420 = vand.u32 2147483647, %v1191
  %vm2421 = vcmp.eq.f32.partialorder %v2420, 8.507059e+37
  %v2422 = vand.u32 %v1191, 2147483648
  %v2423 = vor.u32 1.1754944e-38, %v2422
  %v2424 = vsel %vm2421, %v2423, %v2419
  %v2425 = vmul.f32 1.0, %v2424
  %v2426 = vrcp.pop %v1192
  %v2427 = vmul.f32 %v1192, %v2426
  %v2428 = vsub.f32 1.0, %v2427
  %v2429 = vmul.f32 %v2426, %v2428
  %v2430 = vadd.f32 %v2426, %v2429
  %vm2431 = vweird.f32 %v1192
  %vm2432 = vweird.f32 %v2426
  %vm2433 = vmor %vm2431, %vm2432
  %v2434 = vsel %vm2433, %v2426, %v2430
  %v2435 = vand.u32 2147483647, %v1192
  %vm2436 = vcmp.eq.f32.partialorder %v2435, 8.507059e+37
  %v2437 = vand.u32 %v1192, 2147483648
  %v2438 = vor.u32 1.1754944e-38, %v2437
  %v2439 = vsel %vm2436, %v2438, %v2434
  %v2440 = vmul.f32 1.0, %v2439
  %v2441 = vrcp.pop %v1193
  %v2442 = vmul.f32 %v1193, %v2441
  %v2443 = vsub.f32 1.0, %v2442
  %v2444 = vmul.f32 %v2441, %v2443
  %v2445 = vadd.f32 %v2441, %v2444
  %vm2446 = vweird.f32 %v1193
  %vm2447 = vweird.f32 %v2441
  %vm2448 = vmor %vm2446, %vm2447
  %v2449 = vsel %vm2448, %v2441, %v2445
  %v2450 = vand.u32 2147483647, %v1193
  %vm2451 = vcmp.eq.f32.partialorder %v2450, 8.507059e+37
  %v2452 = vand.u32 %v1193, 2147483648
  %v2453 = vor.u32 1.1754944e-38, %v2452
  %v2454 = vsel %vm2451, %v2453, %v2449
  %v2455 = vmul.f32 1.0, %v2454
  %v2456 = vrcp.pop %v1194
  %v2457 = vmul.f32 %v1194, %v2456
  %v2458 = vsub.f32 1.0, %v2457
  %v2459 = vmul.f32 %v2456, %v2458
  %v2460 = vadd.f32 %v2456, %v2459
  %vm2461 = vweird.f32 %v1194
  %vm2462 = vweird.f32 %v2456
  %vm2463 = vmor %vm2461, %vm2462
  %v2464 = vsel %vm2463, %v2456, %v2460
  %v2465 = vand.u32 2147483647, %v1194
  %vm2466 = vcmp.eq.f32.partialorder %v2465, 8.507059e+37
  %v2467 = vand.u32 %v1194, 2147483648
  %v2468 = vor.u32 1.1754944e-38, %v2467
  %v2469 = vsel %vm2466, %v2468, %v2464
  %v2470 = vmul.f32 1.0, %v2469
  %v2471 = vrcp.pop %v1195
  %v2472 = vmul.f32 %v1195, %v2471
  %v2473 = vsub.f32 1.0, %v2472
  %v2474 = vmul.f32 %v2471, %v2473
  %v2475 = vadd.f32 %v2471, %v2474
  %vm2476 = vweird.f32 %v1195
  %vm2477 = vweird.f32 %v2471
  %vm2478 = vmor %vm2476, %vm2477
  %v2479 = vsel %vm2478, %v2471, %v2475
  %v2480 = vand.u32 2147483647, %v1195
  %vm2481 = vcmp.eq.f32.partialorder %v2480, 8.507059e+37
  %v2482 = vand.u32 %v1195, 2147483648
  %v2483 = vor.u32 1.1754944e-38, %v2482
  %v2484 = vsel %vm2481, %v2483, %v2479
  %v2485 = vmul.f32 1.0, %v2484
  %v2486 = vrcp.pop %v1196
  %v2487 = vmul.f32 %v1196, %v2486
  %v2488 = vsub.f32 1.0, %v2487
  %v2489 = vmul.f32 %v2486, %v2488
  %v2490 = vadd.f32 %v2486, %v2489
  %vm2491 = vweird.f32 %v1196
  %vm2492 = vweird.f32 %v2486
  %vm2493 = vmor %vm2491, %vm2492
  %v2494 = vsel %vm2493, %v2486, %v2490
  %v2495 = vand.u32 2147483647, %v1196
  %vm2496 = vcmp.eq.f32.partialorder %v2495, 8.507059e+37
  %v2497 = vand.u32 %v1196, 2147483648
  %v2498 = vor.u32 1.1754944e-38, %v2497
  %v2499 = vsel %vm2496, %v2498, %v2494
  %v2500 = vmul.f32 1.0, %v2499
  %v2501 = vrcp.pop %v1197
  %v2502 = vmul.f32 %v1197, %v2501
  %v2503 = vsub.f32 1.0, %v2502
  %v2504 = vmul.f32 %v2501, %v2503
  %v2505 = vadd.f32 %v2501, %v2504
  %vm2506 = vweird.f32 %v1197
  %vm2507 = vweird.f32 %v2501
  %vm2508 = vmor %vm2506, %vm2507
  %v2509 = vsel %vm2508, %v2501, %v2505
  %v2510 = vand.u32 2147483647, %v1197
  %vm2511 = vcmp.eq.f32.partialorder %v2510, 8.507059e+37
  %v2512 = vand.u32 %v1197, 2147483648
  %v2513 = vor.u32 1.1754944e-38, %v2512
  %v2514 = vsel %vm2511, %v2513, %v2509
  %v2515 = vmul.f32 1.0, %v2514
  %v2516 = vrcp.pop %v1198
  %v2517 = vmul.f32 %v1198, %v2516
  %v2518 = vsub.f32 1.0, %v2517
  %v2519 = vmul.f32 %v2516, %v2518
  %v2520 = vadd.f32 %v2516, %v2519
  %vm2521 = vweird.f32 %v1198
  %vm2522 = vweird.f32 %v2516
  %vm2523 = vmor %vm2521, %vm2522
  %v2524 = vsel %vm2523, %v2516, %v2520
  %v2525 = vand.u32 2147483647, %v1198
  %vm2526 = vcmp.eq.f32.partialorder %v2525, 8.507059e+37
  %v2527 = vand.u32 %v1198, 2147483648
  %v2528 = vor.u32 1.1754944e-38, %v2527
  %v2529 = vsel %vm2526, %v2528, %v2524
  %v2530 = vmul.f32 1.0, %v2529
  %v2531 = vrcp.pop %v1199
  %v2532 = vmul.f32 %v1199, %v2531
  %v2533 = vsub.f32 1.0, %v2532
  %v2534 = vmul.f32 %v2531, %v2533
  %v2535 = vadd.f32 %v2531, %v2534
  %vm2536 = vweird.f32 %v1199
  %vm2537 = vweird.f32 %v2531
  %vm2538 = vmor %vm2536, %vm2537
  %v2539 = vsel %vm2538, %v2531, %v2535
  %v2540 = vand.u32 2147483647, %v1199
  %vm2541 = vcmp.eq.f32.partialorder %v2540, 8.507059e+37
  %v2542 = vand.u32 %v1199, 2147483648
  %v2543 = vor.u32 1.1754944e-38, %v2542
  %v2544 = vsel %vm2541, %v2543, %v2539
  %v2545 = vmul.f32 1.0, %v2544
  %v2546 = vrcp.pop %v1200
  %v2547 = vmul.f32 %v1200, %v2546
  %v2548 = vsub.f32 1.0, %v2547
  %v2549 = vmul.f32 %v2546, %v2548
  %v2550 = vadd.f32 %v2546, %v2549
  %vm2551 = vweird.f32 %v1200
  %vm2552 = vweird.f32 %v2546
  %vm2553 = vmor %vm2551, %vm2552
  %v2554 = vsel %vm2553, %v2546, %v2550
  %v2555 = vand.u32 2147483647, %v1200
  %vm2556 = vcmp.eq.f32.partialorder %v2555, 8.507059e+37
  %v2557 = vand.u32 %v1200, 2147483648
  %v2558 = vor.u32 1.1754944e-38, %v2557
  %v2559 = vsel %vm2556, %v2558, %v2554
  %v2560 = vmul.f32 1.0, %v2559
  %v2561 = vrcp.pop %v1201
  %v2562 = vmul.f32 %v1201, %v2561
  %v2563 = vsub.f32 1.0, %v2562
  %v2564 = vmul.f32 %v2561, %v2563
  %v2565 = vadd.f32 %v2561, %v2564
  %vm2566 = vweird.f32 %v1201
  %vm2567 = vweird.f32 %v2561
  %vm2568 = vmor %vm2566, %vm2567
  %v2569 = vsel %vm2568, %v2561, %v2565
  %v2570 = vand.u32 2147483647, %v1201
  %vm2571 = vcmp.eq.f32.partialorder %v2570, 8.507059e+37
  %v2572 = vand.u32 %v1201, 2147483648
  %v2573 = vor.u32 1.1754944e-38, %v2572
  %v2574 = vsel %vm2571, %v2573, %v2569
  %v2575 = vmul.f32 1.0, %v2574
  %v2576 = vrcp.pop %v1202
  %v2577 = vmul.f32 %v1202, %v2576
  %v2578 = vsub.f32 1.0, %v2577
  %v2579 = vmul.f32 %v2576, %v2578
  %v2580 = vadd.f32 %v2576, %v2579
  %vm2581 = vweird.f32 %v1202
  %vm2582 = vweird.f32 %v2576
  %vm2583 = vmor %vm2581, %vm2582
  %v2584 = vsel %vm2583, %v2576, %v2580
  %v2585 = vand.u32 2147483647, %v1202
  %vm2586 = vcmp.eq.f32.partialorder %v2585, 8.507059e+37
  %v2587 = vand.u32 %v1202, 2147483648
  %v2588 = vor.u32 1.1754944e-38, %v2587
  %v2589 = vsel %vm2586, %v2588, %v2584
  %v2590 = vmul.f32 1.0, %v2589
  %v2591 = vrcp.pop %v1203
  %v2592 = vmul.f32 %v1203, %v2591
  %v2593 = vsub.f32 1.0, %v2592
  %v2594 = vmul.f32 %v2591, %v2593
  %v2595 = vadd.f32 %v2591, %v2594
  %vm2596 = vweird.f32 %v1203
  %vm2597 = vweird.f32 %v2591
  %vm2598 = vmor %vm2596, %vm2597
  %v2599 = vsel %vm2598, %v2591, %v2595
  %v2600 = vand.u32 2147483647, %v1203
  %vm2601 = vcmp.eq.f32.partialorder %v2600, 8.507059e+37
  %v2602 = vand.u32 %v1203, 2147483648
  %v2603 = vor.u32 1.1754944e-38, %v2602
  %v2604 = vsel %vm2601, %v2603, %v2599
  %v2605 = vmul.f32 1.0, %v2604
  %v2606 = vrcp.pop %v1204
  %v2607 = vmul.f32 %v1204, %v2606
  %v2608 = vsub.f32 1.0, %v2607
  %v2609 = vmul.f32 %v2606, %v2608
  %v2610 = vadd.f32 %v2606, %v2609
  %vm2611 = vweird.f32 %v1204
  %vm2612 = vweird.f32 %v2606
  %vm2613 = vmor %vm2611, %vm2612
  %v2614 = vsel %vm2613, %v2606, %v2610
  %v2615 = vand.u32 2147483647, %v1204
  %vm2616 = vcmp.eq.f32.partialorder %v2615, 8.507059e+37
  %v2617 = vand.u32 %v1204, 2147483648
  %v2618 = vor.u32 1.1754944e-38, %v2617
  %v2619 = vsel %vm2616, %v2618, %v2614
  %v2620 = vmul.f32 1.0, %v2619
  %v2621 = vrcp.pop %v1205
  %v2622 = vmul.f32 %v1205, %v2621
  %v2623 = vsub.f32 1.0, %v2622
  %v2624 = vmul.f32 %v2621, %v2623
  %v2625 = vadd.f32 %v2621, %v2624
  %vm2626 = vweird.f32 %v1205
  %vm2627 = vweird.f32 %v2621
  %vm2628 = vmor %vm2626, %vm2627
  %v2629 = vsel %vm2628, %v2621, %v2625
  %v2630 = vand.u32 2147483647, %v1205
  %vm2631 = vcmp.eq.f32.partialorder %v2630, 8.507059e+37
  %v2632 = vand.u32 %v1205, 2147483648
  %v2633 = vor.u32 1.1754944e-38, %v2632
  %v2634 = vsel %vm2631, %v2633, %v2629
  %v2635 = vmul.f32 1.0, %v2634
  %v2636 = vrcp.pop %v1206
  %v2637 = vmul.f32 %v1206, %v2636
  %v2638 = vsub.f32 1.0, %v2637
  %v2639 = vmul.f32 %v2636, %v2638
  %v2640 = vadd.f32 %v2636, %v2639
  %vm2641 = vweird.f32 %v1206
  %vm2642 = vweird.f32 %v2636
  %vm2643 = vmor %vm2641, %vm2642
  %v2644 = vsel %vm2643, %v2636, %v2640
  %v2645 = vand.u32 2147483647, %v1206
  %vm2646 = vcmp.eq.f32.partialorder %v2645, 8.507059e+37
  %v2647 = vand.u32 %v1206, 2147483648
  %v2648 = vor.u32 1.1754944e-38, %v2647
  %v2649 = vsel %vm2646, %v2648, %v2644
  %v2650 = vmul.f32 1.0, %v2649
  %v2651 = vrcp.pop %v1207
  %v2652 = vmul.f32 %v1207, %v2651
  %v2653 = vsub.f32 1.0, %v2652
  %v2654 = vmul.f32 %v2651, %v2653
  %v2655 = vadd.f32 %v2651, %v2654
  %vm2656 = vweird.f32 %v1207
  %vm2657 = vweird.f32 %v2651
  %vm2658 = vmor %vm2656, %vm2657
  %v2659 = vsel %vm2658, %v2651, %v2655
  %v2660 = vand.u32 2147483647, %v1207
  %vm2661 = vcmp.eq.f32.partialorder %v2660, 8.507059e+37
  %v2662 = vand.u32 %v1207, 2147483648
  %v2663 = vor.u32 1.1754944e-38, %v2662
  %v2664 = vsel %vm2661, %v2663, %v2659
  %v2665 = vmul.f32 1.0, %v2664
  %v2666 = vrcp.pop %v1208
  %v2667 = vmul.f32 %v1208, %v2666
  %v2668 = vsub.f32 1.0, %v2667
  %v2669 = vmul.f32 %v2666, %v2668
  %v2670 = vadd.f32 %v2666, %v2669
  %vm2671 = vweird.f32 %v1208
  %vm2672 = vweird.f32 %v2666
  %vm2673 = vmor %vm2671, %vm2672
  %v2674 = vsel %vm2673, %v2666, %v2670
  %v2675 = vand.u32 2147483647, %v1208
  %vm2676 = vcmp.eq.f32.partialorder %v2675, 8.507059e+37
  %v2677 = vand.u32 %v1208, 2147483648
  %v2678 = vor.u32 1.1754944e-38, %v2677
  %v2679 = vsel %vm2676, %v2678, %v2674
  %v2680 = vmul.f32 1.0, %v2679
  %v2681 = vrcp.pop %v1209
  %v2682 = vmul.f32 %v1209, %v2681
  %v2683 = vsub.f32 1.0, %v2682
  %v2684 = vmul.f32 %v2681, %v2683
  %v2685 = vadd.f32 %v2681, %v2684
  %vm2686 = vweird.f32 %v1209
  %vm2687 = vweird.f32 %v2681
  %vm2688 = vmor %vm2686, %vm2687
  %v2689 = vsel %vm2688, %v2681, %v2685
  %v2690 = vand.u32 2147483647, %v1209
  %vm2691 = vcmp.eq.f32.partialorder %v2690, 8.507059e+37
  %v2692 = vand.u32 %v1209, 2147483648
  %v2693 = vor.u32 1.1754944e-38, %v2692
  %v2694 = vsel %vm2691, %v2693, %v2689
  %v2695 = vmul.f32 1.0, %v2694
  %v2696 = vrcp.pop %v1210
  %v2697 = vmul.f32 %v1210, %v2696
  %v2698 = vsub.f32 1.0, %v2697
  %v2699 = vmul.f32 %v2696, %v2698
  %v2700 = vadd.f32 %v2696, %v2699
  %vm2701 = vweird.f32 %v1210
  %vm2702 = vweird.f32 %v2696
  %vm2703 = vmor %vm2701, %vm2702
  %v2704 = vsel %vm2703, %v2696, %v2700
  %v2705 = vand.u32 2147483647, %v1210
  %vm2706 = vcmp.eq.f32.partialorder %v2705, 8.507059e+37
  %v2707 = vand.u32 %v1210, 2147483648
  %v2708 = vor.u32 1.1754944e-38, %v2707
  %v2709 = vsel %vm2706, %v2708, %v2704
  %v2710 = vmul.f32 1.0, %v2709
  %2711 = vst [vmem:[%s3] sm:$0xff] %v1225
  %2712 = vst [vmem:[%s3 + $0x8] sm:$0xff] %v1240
  %2713 = vst [vmem:[%s3 + $0x10] sm:$0xff] %v1255
  %2714 = vst [vmem:[%s3 + $0x18] sm:$0xff] %v1270
  %2715 = vst [vmem:[%s3 + $0x20] sm:$0xff] %v1285
  %2716 = vst [vmem:[%s3 + $0x28] sm:$0xff] %v1300
  %2717 = vst [vmem:[%s3 + $0x30] sm:$0xff] %v1315
  %2718 = vst [vmem:[%s3 + $0x38] sm:$0xff] %v1330
  %2719 = vst [vmem:[%s3 + $0x40] sm:$0xff] %v1345
  %2720 = vst [vmem:[%s3 + $0x48] sm:$0xff] %v1360
  %2721 = vst [vmem:[%s3 + $0x50] sm:$0xff] %v1375
  %2722 = vst [vmem:[%s3 + $0x58] sm:$0xff] %v1390
  %2723 = vst [vmem:[%s3 + $0x60] sm:$0xff] %v1405
  %2724 = vst [vmem:[%s3 + $0x68] sm:$0xff] %v1420
  %2725 = vst [vmem:[%s3 + $0x70] sm:$0xff] %v1435
  %2726 = vst [vmem:[%s3 + $0x78] sm:$0xff] %v1450
  %2727 = vst [vmem:[%s3 + $0x80] sm:$0xff] %v1465
  %2728 = vst [vmem:[%s3 + $0x88] sm:$0xff] %v1480
  %2729 = vst [vmem:[%s3 + $0x90] sm:$0xff] %v1495
  %2730 = vst [vmem:[%s3 + $0x98] sm:$0xff] %v1510
  %2731 = vst [vmem:[%s3 + $0xa0] sm:$0xff] %v1525
  %2732 = vst [vmem:[%s3 + $0xa8] sm:$0xff] %v1540
  %2733 = vst [vmem:[%s3 + $0xb0] sm:$0xff] %v1555
  %2734 = vst [vmem:[%s3 + $0xb8] sm:$0xff] %v1570
  %2735 = vst [vmem:[%s3 + $0xc0] sm:$0xff] %v1585
  %2736 = vst [vmem:[%s3 + $0xc8] sm:$0xff] %v1600
  %2737 = vst [vmem:[%s3 + $0xd0] sm:$0xff] %v1615
  %2738 = vst [vmem:[%s3 + $0xd8] sm:$0xff] %v1630
  %2739 = vst [vmem:[%s3 + $0xe0] sm:$0xff] %v1645
  %2740 = vst [vmem:[%s3 + $0xe8] sm:$0xff] %v1660
  %2741 = vst [vmem:[%s3 + $0xf0] sm:$0xff] %v1675
  %2742 = vst [vmem:[%s3 + $0xf8] sm:$0xff] %v1690
  %2743 = vst [vmem:[%s3 + $0x100] sm:$0xff] %v1705
  %2744 = vst [vmem:[%s3 + $0x108] sm:$0xff] %v1720
  %2745 = vst [vmem:[%s3 + $0x110] sm:$0xff] %v1735
  %2746 = vst [vmem:[%s3 + $0x118] sm:$0xff] %v1750
  %2747 = vst [vmem:[%s3 + $0x120] sm:$0xff] %v1765
  %2748 = vst [vmem:[%s3 + $0x128] sm:$0xff] %v1780
  %2749 = vst [vmem:[%s3 + $0x130] sm:$0xff] %v1795
  %2750 = vst [vmem:[%s3 + $0x138] sm:$0xff] %v1810
  %2751 = vst [vmem:[%s3 + $0x140] sm:$0xff] %v1825
  %2752 = vst [vmem:[%s3 + $0x148] sm:$0xff] %v1840
  %2753 = vst [vmem:[%s3 + $0x150] sm:$0xff] %v1855
  %2754 = vst [vmem:[%s3 + $0x158] sm:$0xff] %v1870
  %2755 = vst [vmem:[%s3 + $0x160] sm:$0xff] %v1885
  %2756 = vst [vmem:[%s3 + $0x168] sm:$0xff] %v1900
  %2757 = vst [vmem:[%s3 + $0x170] sm:$0xff] %v1915
  %2758 = vst [vmem:[%s3 + $0x178] sm:$0xff] %v1930
  %2759 = vst [vmem:[%s3 + $0x180] sm:$0xff] %v1945
  %2760 = vst [vmem:[%s3 + $0x188] sm:$0xff] %v1960
  %2761 = vst [vmem:[%s3 + $0x190] sm:$0xff] %v1975
  %2762 = vst [vmem:[%s3 + $0x198] sm:$0xff] %v1990
  %2763 = vst [vmem:[%s3 + $0x1a0] sm:$0xff] %v2005
  %2764 = vst [vmem:[%s3 + $0x1a8] sm:$0xff] %v2020
  %2765 = vst [vmem:[%s3 + $0x1b0] sm:$0xff] %v2035
  %2766 = vst [vmem:[%s3 + $0x1b8] sm:$0xff] %v2050
  %2767 = vst [vmem:[%s3 + $0x1c0] sm:$0xff] %v2065
  %2768 = vst [vmem:[%s3 + $0x1c8] sm:$0xff] %v2080
  %2769 = vst [vmem:[%s3 + $0x1d0] sm:$0xff] %v2095
  %2770 = vst [vmem:[%s3 + $0x1d8] sm:$0xff] %v2110
  %2771 = vst [vmem:[%s3 + $0x1e0] sm:$0xff] %v2125
  %2772 = vst [vmem:[%s3 + $0x1e8] sm:$0xff] %v2140
  %2773 = vst [vmem:[%s3 + $0x1f0] sm:$0xff] %v2155
  %2774 = vst [vmem:[%s3 + $0x1f8] sm:$0xff] %v2170
  %2775 = vst [vmem:[%s3 + $0x200] sm:$0xff] %v2185
  %2776 = vst [vmem:[%s3 + $0x208] sm:$0xff] %v2200
  %2777 = vst [vmem:[%s3 + $0x210] sm:$0xff] %v2215
  %2778 = vst [vmem:[%s3 + $0x218] sm:$0xff] %v2230
  %2779 = vst [vmem:[%s3 + $0x220] sm:$0xff] %v2245
  %2780 = vst [vmem:[%s3 + $0x228] sm:$0xff] %v2260
  %2781 = vst [vmem:[%s3 + $0x230] sm:$0xff] %v2275
  %2782 = vst [vmem:[%s3 + $0x238] sm:$0xff] %v2290
  %2783 = vst [vmem:[%s3 + $0x240] sm:$0xff] %v2305
  %2784 = vst [vmem:[%s3 + $0x248] sm:$0xff] %v2320
  %2785 = vst [vmem:[%s3 + $0x250] sm:$0xff] %v2335
  %2786 = vst [vmem:[%s3 + $0x258] sm:$0xff] %v2350
  %2787 = vst [vmem:[%s3 + $0x260] sm:$0xff] %v2365
  %2788 = vst [vmem:[%s3 + $0x268] sm:$0xff] %v2380
  %2789 = vst [vmem:[%s3 + $0x270] sm:$0xff] %v2395
  %2790 = vst [vmem:[%s3 + $0x278] sm:$0xff] %v2410
  %2791 = vst [vmem:[%s3 + $0x280] sm:$0xff] %v2425
  %2792 = vst [vmem:[%s3 + $0x288] sm:$0xff] %v2440
  %2793 = vst [vmem:[%s3 + $0x290] sm:$0xff] %v2455
  %2794 = vst [vmem:[%s3 + $0x298] sm:$0xff] %v2470
  %2795 = vst [vmem:[%s3 + $0x2a0] sm:$0xff] %v2485
  %2796 = vst [vmem:[%s3 + $0x2a8] sm:$0xff] %v2500
  %2797 = vst [vmem:[%s3 + $0x2b0] sm:$0xff] %v2515
  %2798 = vst [vmem:[%s3 + $0x2b8] sm:$0xff] %v2530
  %2799 = vst [vmem:[%s3 + $0x2c0] sm:$0xff] %v2545
  %2800 = vst [vmem:[%s3 + $0x2c8] sm:$0xff] %v2560
  %2801 = vst [vmem:[%s3 + $0x2d0] sm:$0xff] %v2575
  %2802 = vst [vmem:[%s3 + $0x2d8] sm:$0xff] %v2590
  %2803 = vst [vmem:[%s3 + $0x2e0] sm:$0xff] %v2605
  %2804 = vst [vmem:[%s3 + $0x2e8] sm:$0xff] %v2620
  %2805 = vst [vmem:[%s3 + $0x2f0] sm:$0xff] %v2635
  %2806 = vst [vmem:[%s3 + $0x2f8] sm:$0xff] %v2650
  %2807 = vst [vmem:[%s3 + $0x300] sm:$0xff] %v2665
  %2808 = vst [vmem:[%s3 + $0x308] sm:$0xff] %v2680
  %2809 = vst [vmem:[%s3 + $0x310] sm:$0xff] %v2695
  %2810 = vst [vmem:[%s3 + $0x318] sm:$0xff] %v2710
  // Predicated region
  $region14: #{forward.23} parent=0 // pred_check
    _
  $region15: #{forward.23} parent=0 // pred_check_branch
    %2812 = sbr.rel (0) target = $region17
  $region16: #{forward.23} parent=0 // pred_region
    _
  $region17: #{forward.23} parent=0 // pred_fallthru
    _
  // Predicated region
  $region18: #{forward.23} parent=0 // pred_check
    _
  $region19: #{forward.23} parent=0 // pred_check_branch
    %2814 = sbr.rel (0) target = $region21
  $region20: #{forward.23} parent=0 // pred_region
    _
  $region21: #{forward.23} parent=0 // pred_fallthru
    _

</llo_original>
